<compile_context>
chip_gen: v7x
topology: tpu7x:2x2x1
jax: 0.10.0
libtpu: 0.0.40
codegen_flags: <defaults>
</compile_context>

<pallas_src>
import functools
import math

import jax
import jax.numpy as jnp
from jax.experimental import pallas as pl
from jax.experimental.pallas import tpu as pltpu

LN_EPS = 1e-5


# ------------------------------ Pallas kernel -------------------------------

def _decoder_stack_kernel(x0_ref, enc_ref, tmask_ref, smask_ref,
                          sa_wqkv_ref, sa_bqkv_ref, sa_wo_ref, sa_bo_ref,
                          ln1_g_ref, ln1_b_ref,
                          ea_wq_ref, ea_bq_ref, ea_wkv_ref, ea_bkv_ref,
                          ea_wo_ref, ea_bo_ref, ln2_g_ref, ln2_b_ref,
                          ff_w1_ref, ff_b1_ref, ff_w2_ref, ff_b2_ref,
                          ln3_g_ref, ln3_b_ref,
                          fc_w_ref, fc_b_ref,
                          out_ref, attn_ref,
                          x_scr, ctx_scr,
                          *, B, Lt, Ls, n_heads, inv_scale):
    """One decoder layer per grid step; x kept resident in x_scr.

    x0_ref:    (B*Lt, hid)   embedded target (read at layer 0 only)
    enc_ref:   (B, Ls, hid)  encoder output
    tmask_ref: (B, Lt, Lt)   float mask (0 = masked)
    smask_ref: (B, 1, Ls)    float padding mask (0 = masked)
    out_ref:   (B*Lt, 128)   fc_out result (lane padded), written at last layer
    attn_ref:  (B, H, Lt, Ls) encoder-attention probs (last layer wins)
    """
    layer = pl.program_id(0)
    hid = x_scr.shape[-1]
    hd = hid // n_heads

    @pl.when(layer == 0)
    def _():
        x_scr[...] = x0_ref[...].astype(jnp.float32)

    def layer_norm(z, g, b):
        mu = jnp.mean(z, axis=-1, keepdims=True)
        var = jnp.mean((z - mu) ** 2, axis=-1, keepdims=True)
        return (z - mu) * jax.lax.rsqrt(var + LN_EPS) * g + b

    def softmax(e):
        e = e - jnp.max(e, axis=-1, keepdims=True)
        p = jnp.exp(e)
        return p / jnp.sum(p, axis=-1, keepdims=True)

    x = x_scr[...]                                   # (B*Lt, hid), f32

    # ---------------- self attention (Q, K, V all from x) ----------------
    qkv = jnp.dot(x, sa_wqkv_ref[0],
                  preferred_element_type=jnp.float32) + sa_bqkv_ref[0]
    for bi in range(B):                              # static unroll (B small)
        r0 = bi * Lt
        mask_b = tmask_ref[bi]                       # (Lt, Lt)
        for h in range(n_heads):                     # static unroll
            c0 = h * hd
            qh = qkv[r0:r0 + Lt, c0:c0 + hd]
            kh = qkv[r0:r0 + Lt, hid + c0:hid + c0 + hd]
            vh = qkv[r0:r0 + Lt, 2 * hid + c0:2 * hid + c0 + hd]
            e = jax.lax.dot_general(qh, kh, (((1,), (1,)), ((), ())),
                                    preferred_element_type=jnp.float32)
            e = jnp.where(mask_b > 0, e * inv_scale, jnp.float32(-1e10))
            a = softmax(e)
            ctx_scr[r0:r0 + Lt, c0:c0 + hd] = jnp.dot(
                a, vh, preferred_element_type=jnp.float32)
    o = jnp.dot(ctx_scr[...], sa_wo_ref[0],
                preferred_element_type=jnp.float32) + sa_bo_ref[0]
    x = layer_norm(x + o, ln1_g_ref[0], ln1_b_ref[0])

    # ------------- encoder attention (Q from x, K/V from enc_src) --------
    q = jnp.dot(x, ea_wq_ref[0],
                preferred_element_type=jnp.float32) + ea_bq_ref[0]
    for bi in range(B):
        r0 = bi * Lt
        enc_b = enc_ref[bi].astype(jnp.float32)      # (Ls, hid)
        kv = jnp.dot(enc_b, ea_wkv_ref[0],
                     preferred_element_type=jnp.float32) + ea_bkv_ref[0]
        smask_b = smask_ref[bi]                      # (1, Ls)
        for h in range(n_heads):
            c0 = h * hd
            qh = q[r0:r0 + Lt, c0:c0 + hd]
            kh = kv[:, c0:c0 + hd]
            vh = kv[:, hid + c0:hid + c0 + hd]
            e = jax.lax.dot_general(qh, kh, (((1,), (1,)), ((), ())),
                                    preferred_element_type=jnp.float32)
            e = jnp.where(smask_b > 0, e * inv_scale, jnp.float32(-1e10))
            a = softmax(e)
            # Output block index is constant across the layer grid axis, so
            # the last layer's write is what lands in HBM (as in the ref).
            attn_ref[bi, h] = a.astype(attn_ref.dtype)
            ctx_scr[r0:r0 + Lt, c0:c0 + hd] = jnp.dot(
                a, vh, preferred_element_type=jnp.float32)
    o = jnp.dot(ctx_scr[...], ea_wo_ref[0],
                preferred_element_type=jnp.float32) + ea_bo_ref[0]
    x = layer_norm(x + o, ln2_g_ref[0], ln2_b_ref[0])

    # ---------------- positionwise feedforward ----------------
    hff = jnp.dot(x, ff_w1_ref[0],
                  preferred_element_type=jnp.float32) + ff_b1_ref[0]
    hff = jnp.maximum(hff, 0.0)
    f = jnp.dot(hff, ff_w2_ref[0],
                preferred_element_type=jnp.float32) + ff_b2_ref[0]
    x = layer_norm(x + f, ln3_g_ref[0], ln3_b_ref[0])

    x_scr[...] = x                                   # carry to next layer

    # ---------------- fused output head on the last layer ----------------
    @pl.when(layer == pl.num_programs(0) - 1)
    def _():
        y = jnp.dot(x, fc_w_ref[...],
                    preferred_element_type=jnp.float32) + fc_b_ref[...]
        out_ref[...] = y.astype(out_ref.dtype)


# ------------------------------ Pallas wrapper -------------------------------

def pallas_decoder_stack(x2d, enc, tmask, smask, prep):
    """Run the whole decoder stack + fc_out head in a single pallas_call."""
    m, hid = x2d.shape
    b, ls, _ = enc.shape
    lt = m // b
    n_heads = prep["n_heads"]
    n_layers = prep["n_layers"]
    npad = prep["fc_w_pad"].shape[-1]

    def const_spec(shape):
        nd = len(shape)
        return pl.BlockSpec(shape, lambda l, _n=nd: (0,) * _n)

    def layer_spec(shape):
        nd = len(shape)
        blk = (1,) + tuple(shape[1:])
        return pl.BlockSpec(blk, lambda l, _n=nd: (l,) + (0,) * (_n - 1))

    layer_arrays = [prep["sa_wqkv"], prep["sa_bqkv"], prep["sa_wo"], prep["sa_bo"],
                    prep["ln1_g"], prep["ln1_b"],
                    prep["ea_wq"], prep["ea_bq"], prep["ea_wkv"], prep["ea_bkv"],
                    prep["ea_wo"], prep["ea_bo"], prep["ln2_g"], prep["ln2_b"],
                    prep["ff_w1"], prep["ff_b1"], prep["ff_w2"], prep["ff_b2"],
                    prep["ln3_g"], prep["ln3_b"]]

    in_specs = [const_spec((m, hid)),          # x0
                const_spec((b, ls, hid)),      # enc
                const_spec((b, lt, lt)),       # trg mask
                const_spec((b, 1, ls))]        # src mask
    in_specs += [layer_spec(a.shape) for a in layer_arrays]
    in_specs += [const_spec(prep["fc_w_pad"].shape),
                 const_spec(prep["fc_b_pad"].shape)]

    out_shape = (jax.ShapeDtypeStruct((m, npad), jnp.float32),
                 jax.ShapeDtypeStruct((b, n_heads, lt, ls), jnp.float32))
    out_specs = (pl.BlockSpec((m, npad), lambda l: (0, 0)),
                 pl.BlockSpec((b, n_heads, lt, ls), lambda l: (0, 0, 0, 0)))

    kern = functools.partial(_decoder_stack_kernel, B=b, Lt=lt, Ls=ls,
                             n_heads=n_heads,
                             inv_scale=1.0 / math.sqrt(hid // n_heads))
    return pl.pallas_call(
        kern,
        grid=(n_layers,),
        in_specs=in_specs,
        out_specs=out_specs,
        out_shape=out_shape,
        scratch_shapes=[pltpu.VMEM((m, hid), jnp.float32),   # resident x
                        pltpu.VMEM((m, hid), jnp.float32)],  # per-head ctx
        compiler_params=pltpu.CompilerParams(
            dimension_semantics=("arbitrary",)),
    )(x2d, enc, tmask, smask, *layer_arrays,
      prep["fc_w_pad"], prep["fc_b_pad"])


# ------------------------------ model forward --------------------------------

def decoder_forward(trg_tokens, enc_src, trg_mask, src_mask, prep):
    b, lt = trg_tokens.shape
    hid = prep["hid"]
    ls = enc_src.shape[1]
    scale = jnp.float32(math.sqrt(hid))
    # TODO(synk): token/position embedding gathers + scale/add kept in plain
    # JAX glue (tiny gather; no clean Pallas win here).
    x = prep["tok_embedding"][trg_tokens] * scale \
        + prep["pos_embedding"][jnp.arange(lt)][None]
    x2d = x.reshape(b * lt, hid).astype(jnp.float32)

    tmask = trg_mask.reshape(b, lt, lt).astype(jnp.float32)   # squeeze head dim
    smask = src_mask.reshape(b, 1, ls).astype(jnp.float32)    # padding row only

    out_pad, attention = pallas_decoder_stack(
        x2d, enc_src.astype(jnp.float32), tmask, smask, prep)
    out = out_pad[:, :prep["output_dim"]].reshape(b, lt, prep["output_dim"])
    return out, attention


# ------------------------- parameter preparation ----------------------------

def prepare_params(params):
    """Stack per-layer weights, merge QKV, pad fc_out to 128 lanes (one-time)."""
    hid = params["tok_embedding"].shape[1]
    output_dim = params["fc_out_w"].shape[1]
    n_layers = len(params["layers"])

    def stack(fn):
        return jnp.stack([fn(lp) for lp in params["layers"]], axis=0)

    prep = dict(
        n_heads=params["n_heads"], n_layers=n_layers, hid=hid,
        output_dim=output_dim,
        tok_embedding=params["tok_embedding"],
        pos_embedding=params["pos_embedding"],
        sa_wqkv=stack(lambda lp: jnp.concatenate(
            [lp["self_attn"]["wq"], lp["self_attn"]["wk"],
             lp["self_attn"]["wv"]], axis=1)),
        sa_bqkv=stack(lambda lp: jnp.concatenate(
            [lp["self_attn"]["bq"], lp["self_attn"]["bk"],
             lp["self_attn"]["bv"]]).reshape(1, 3 * hid)),
        sa_wo=stack(lambda lp: lp["self_attn"]["wo"]),
        sa_bo=stack(lambda lp: lp["self_attn"]["bo"].reshape(1, hid)),
        ln1_g=stack(lambda lp: lp["ln1_g"].reshape(1, hid)),
        ln1_b=stack(lambda lp: lp["ln1_b"].reshape(1, hid)),
        ea_wq=stack(lambda lp: lp["enc_attn"]["wq"]),
        ea_bq=stack(lambda lp: lp["enc_attn"]["bq"].reshape(1, hid)),
        ea_wkv=stack(lambda lp: jnp.concatenate(
            [lp["enc_attn"]["wk"], lp["enc_attn"]["wv"]], axis=1)),
        ea_bkv=stack(lambda lp: jnp.concatenate(
            [lp["enc_attn"]["bk"], lp["enc_attn"]["bv"]]).reshape(1, 2 * hid)),
        ea_wo=stack(lambda lp: lp["enc_attn"]["wo"]),
        ea_bo=stack(lambda lp: lp["enc_attn"]["bo"].reshape(1, hid)),
        ln2_g=stack(lambda lp: lp["ln2_g"].reshape(1, hid)),
        ln2_b=stack(lambda lp: lp["ln2_b"].reshape(1, hid)),
        ff_w1=stack(lambda lp: lp["ff_w1"]),
        ff_b1=stack(lambda lp: lp["ff_b1"].reshape(1, -1)),
        ff_w2=stack(lambda lp: lp["ff_w2"]),
        ff_b2=stack(lambda lp: lp["ff_b2"].reshape(1, hid)),
        ln3_g=stack(lambda lp: lp["ln3_g"].reshape(1, hid)),
        ln3_b=stack(lambda lp: lp["ln3_b"].reshape(1, hid)),
    )
    npad = max(128, ((output_dim + 127) // 128) * 128)
    prep["fc_w_pad"] = jnp.zeros((hid, npad), jnp.float32).at[
        :, :output_dim].set(params["fc_out_w"])
    prep["fc_b_pad"] = jnp.zeros((1, npad), jnp.float32).at[
        :, :output_dim].set(params["fc_out_b"])
    return prep


# -------------------------- pure-JAX reference ------------------------------

def _ref_ln(z, g, b):
    mu = jnp.mean(z, axis=-1, keepdims=True)
    var = jnp.mean((z - mu) ** 2, axis=-1, keepdims=True)
    return (z - mu) * jax.lax.rsqrt(var + LN_EPS) * g + b


def _ref_mha(q_in, k_in, v_in, mask, p, n_heads):
    b, lq, hid = q_in.shape
    lk = k_in.shape[1]
    hd = hid // n_heads
    q = (q_in @ p["wq"] + p["bq"]).reshape(b, lq, n_heads, hd).transpose(0, 2, 1, 3)
    k = (k_in @ p["wk"] + p["bk"]).reshape(b, lk, n_heads, hd).transpose(0, 2, 1, 3)
    v = (v_in @ p["wv"] + p["bv"]).reshape(b, lk, n_heads, hd).transpose(0, 2, 1, 3)
    e = jnp.einsum("bhqd,bhkd->bhqk", q, k) / math.sqrt(hd)
    e = jnp.where(mask > 0, e, jnp.float32(-1e10))
    a = jax.nn.softmax(e, axis=-1)
    ctx = jnp.einsum("bhqk,bhkd->bhqd", a, v).transpose(0, 2, 1, 3).reshape(b, lq, hid)
    return ctx @ p["wo"] + p["bo"], a


def ref_decoder_forward(trg_tokens, enc_src, trg_mask, src_mask, params):
    b, lt = trg_tokens.shape
    hid = params["tok_embedding"].shape[1]
    n_heads = params["n_heads"]
    x = params["tok_embedding"][trg_tokens] * jnp.float32(math.sqrt(hid)) \
        + params["pos_embedding"][jnp.arange(lt)][None]
    attention = None
    for lp in params["layers"]:
        a, _ = _ref_mha(x, x, x, trg_mask, lp["self_attn"], n_heads)
        x = _ref_ln(x + a, lp["ln1_g"], lp["ln1_b"])
        a, attention = _ref_mha(x, enc_src, enc_src, src_mask, lp["enc_attn"], n_heads)
        x = _ref_ln(x + a, lp["ln2_g"], lp["ln2_b"])
        h = jnp.maximum(x @ lp["ff_w1"] + lp["ff_b1"], 0.0)
        f = h @ lp["ff_w2"] + lp["ff_b2"]
        x = _ref_ln(x + f, lp["ln3_g"], lp["ln3_b"])
    out = x @ params["fc_out_w"] + params["fc_out_b"]
    return out, attention


# ------------------------- deterministic parameters -------------------------

def init_params(key, output_dim, hid_dim, n_layers, n_heads, pf_dim,
                max_length=128):
    def nrm(k, shape, s=0.02):
        return jax.random.normal(k, shape, jnp.float32) * s

    keys = iter(jax.random.split(key, 4 + n_layers * 24))
    params = dict(
        n_heads=n_heads,
        tok_embedding=nrm(next(keys), (output_dim, hid_dim), 1.0),
        pos_embedding=nrm(next(keys), (max_length, hid_dim), 1.0),
        fc_out_w=nrm(next(keys), (hid_dim, output_dim)),
        fc_out_b=nrm(next(keys), (output_dim,)),
        layers=[],
    )
    for _ in range(n_layers):
        def attn_params():
            return dict(
                wq=nrm(next(keys), (hid_dim, hid_dim)), bq=nrm(next(keys), (hid_dim,)),
                wk=nrm(next(keys), (hid_dim, hid_dim)), bk=nrm(next(keys), (hid_dim,)),
                wv=nrm(next(keys), (hid_dim, hid_dim)), bv=nrm(next(keys), (hid_dim,)),
                wo=nrm(next(keys), (hid_dim, hid_dim)), bo=nrm(next(keys), (hid_dim,)),
            )
        params["layers"].append(dict(
            self_attn=attn_params(),
            enc_attn=attn_params(),
            ff_w1=nrm(next(keys), (hid_dim, pf_dim)), ff_b1=nrm(next(keys), (pf_dim,)),
            ff_w2=nrm(next(keys), (pf_dim, hid_dim)), ff_b2=nrm(next(keys), (hid_dim,)),
            ln1_g=jnp.ones((hid_dim,), jnp.float32), ln1_b=jnp.zeros((hid_dim,), jnp.float32),
            ln2_g=jnp.ones((hid_dim,), jnp.float32), ln2_b=jnp.zeros((hid_dim,), jnp.float32),
            ln3_g=jnp.ones((hid_dim,), jnp.float32), ln3_b=jnp.zeros((hid_dim,), jnp.float32),
        ))
    return params


# ---------------------------------- main ------------------------------------

if __name__ == "__main__":
    B, Lt, Ls = 2, 8, 10
    OUTPUT_DIM, HID, N_LAYERS, N_HEADS, PF_DIM = 20, 32, 2, 4, 64

    root = jax.random.PRNGKey(0)
    k_par, k_tok, k_enc = jax.random.split(root, 3)

    params = init_params(k_par, OUTPUT_DIM, HID, N_LAYERS, N_HEADS, PF_DIM)
    prep = prepare_params(params)          # one-time weight stacking / QKV merge

    trg_tokens = jax.random.randint(k_tok, (B, Lt), 0, OUTPUT_DIM)
    enc_src = jax.random.normal(k_enc, (B, Ls, HID), jnp.float32)

    # trg_mask: [B, 1, Lt, Lt] causal; src_mask: [B, 1, 1, Ls] padding mask.
    trg_mask = jnp.tril(jnp.ones((Lt, Lt), jnp.float32))[None, None]
    trg_mask = jnp.broadcast_to(trg_mask, (B, 1, Lt, Lt))
    src_mask = jnp.ones((B, 1, 1, Ls), jnp.float32).at[:, :, :, -2:].set(0.0)

    out, attn = decoder_forward(trg_tokens, enc_src, trg_mask, src_mask, prep)
    out = jax.block_until_ready(out)
    attn = jax.block_until_ready(attn)

    # sanity-check against the pure-JAX reference
    out_ref, attn_ref = ref_decoder_forward(trg_tokens, enc_src, trg_mask,
                                            src_mask, params)
    assert out.shape == (B, Lt, OUTPUT_DIM)
    assert attn.shape == (B, N_HEADS, Lt, Ls)
    assert jnp.allclose(out, out_ref, rtol=1e-2, atol=1e-2)
    assert jnp.allclose(attn, attn_ref, rtol=1e-2, atol=1e-2)

    print("KERNEL_OK")
</pallas_src>

<mosaic_0001>
module attributes {stable_mosaic.version = 11 : i64} {
  func.func @_decoder_stack_kernel(%arg0: i32, %arg1: memref<16x32xf32, #tpu.memory_space<vmem>>, %arg2: memref<2x10x32xf32, #tpu.memory_space<vmem>>, %arg3: memref<2x8x8xf32, #tpu.memory_space<vmem>>, %arg4: memref<2x1x10xf32, #tpu.memory_space<vmem>>, %arg5: memref<1x32x96xf32, #tpu.memory_space<vmem>>, %arg6: memref<1x1x96xf32, #tpu.memory_space<vmem>>, %arg7: memref<1x32x32xf32, #tpu.memory_space<vmem>>, %arg8: memref<1x1x32xf32, #tpu.memory_space<vmem>>, %arg9: memref<1x1x32xf32, #tpu.memory_space<vmem>>, %arg10: memref<1x1x32xf32, #tpu.memory_space<vmem>>, %arg11: memref<1x32x32xf32, #tpu.memory_space<vmem>>, %arg12: memref<1x1x32xf32, #tpu.memory_space<vmem>>, %arg13: memref<1x32x64xf32, #tpu.memory_space<vmem>>, %arg14: memref<1x1x64xf32, #tpu.memory_space<vmem>>, %arg15: memref<1x32x32xf32, #tpu.memory_space<vmem>>, %arg16: memref<1x1x32xf32, #tpu.memory_space<vmem>>, %arg17: memref<1x1x32xf32, #tpu.memory_space<vmem>>, %arg18: memref<1x1x32xf32, #tpu.memory_space<vmem>>, %arg19: memref<1x32x64xf32, #tpu.memory_space<vmem>>, %arg20: memref<1x1x64xf32, #tpu.memory_space<vmem>>, %arg21: memref<1x64x32xf32, #tpu.memory_space<vmem>>, %arg22: memref<1x1x32xf32, #tpu.memory_space<vmem>>, %arg23: memref<1x1x32xf32, #tpu.memory_space<vmem>>, %arg24: memref<1x1x32xf32, #tpu.memory_space<vmem>>, %arg25: memref<32x128xf32, #tpu.memory_space<vmem>>, %arg26: memref<1x128xf32, #tpu.memory_space<vmem>>, %arg27: memref<16x128xf32, #tpu.memory_space<vmem>>, %arg28: memref<2x4x8x10xf32, #tpu.memory_space<vmem>>, %arg29: memref<16x32xf32, #tpu.memory_space<vmem>>, %arg30: memref<16x32xf32, #tpu.memory_space<vmem>>) attributes {dimension_semantics = [#tpu.dimension_semantics<arbitrary>], iteration_bounds = array<i64: 2>, scalar_prefetch = 0 : i64, scratch_operands = 2 : i64, tpu.core_type = #tpu.core_type<tc>, window_params = [{pipeline_mode = #tpu.pipeline_mode<synchronous>, transform_indices = @transform_0, window_bounds = array<i64: 16, 32>}, {pipeline_mode = #tpu.pipeline_mode<synchronous>, transform_indices = @transform_1, window_bounds = array<i64: 2, 10, 32>}, {pipeline_mode = #tpu.pipeline_mode<synchronous>, transform_indices = @transform_2, window_bounds = array<i64: 2, 8, 8>}, {pipeline_mode = #tpu.pipeline_mode<synchronous>, transform_indices = @transform_3, window_bounds = array<i64: 2, 1, 10>}, {transform_indices = @transform_4, window_bounds = array<i64: 1, 32, 96>}, {transform_indices = @transform_5, window_bounds = array<i64: 1, 1, 96>}, {transform_indices = @transform_6, window_bounds = array<i64: 1, 32, 32>}, {transform_indices = @transform_7, window_bounds = array<i64: 1, 1, 32>}, {transform_indices = @transform_8, window_bounds = array<i64: 1, 1, 32>}, {transform_indices = @transform_9, window_bounds = array<i64: 1, 1, 32>}, {transform_indices = @transform_10, window_bounds = array<i64: 1, 32, 32>}, {transform_indices = @transform_11, window_bounds = array<i64: 1, 1, 32>}, {transform_indices = @transform_12, window_bounds = array<i64: 1, 32, 64>}, {transform_indices = @transform_13, window_bounds = array<i64: 1, 1, 64>}, {transform_indices = @transform_14, window_bounds = array<i64: 1, 32, 32>}, {transform_indices = @transform_15, window_bounds = array<i64: 1, 1, 32>}, {transform_indices = @transform_16, window_bounds = array<i64: 1, 1, 32>}, {transform_indices = @transform_17, window_bounds = array<i64: 1, 1, 32>}, {transform_indices = @transform_18, window_bounds = array<i64: 1, 32, 64>}, {transform_indices = @transform_19, window_bounds = array<i64: 1, 1, 64>}, {transform_indices = @transform_20, window_bounds = array<i64: 1, 64, 32>}, {transform_indices = @transform_21, window_bounds = array<i64: 1, 1, 32>}, {transform_indices = @transform_22, window_bounds = array<i64: 1, 1, 32>}, {transform_indices = @transform_23, window_bounds = array<i64: 1, 1, 32>}, {pipeline_mode = #tpu.pipeline_mode<synchronous>, transform_indices = @transform_24, window_bounds = array<i64: 32, 128>}, {pipeline_mode = #tpu.pipeline_mode<synchronous>, transform_indices = @transform_25, window_bounds = array<i64: 1, 128>}, {pipeline_mode = #tpu.pipeline_mode<synchronous>, transform_indices = @transform_26, window_bounds = array<i64: 16, 128>}, {pipeline_mode = #tpu.pipeline_mode<synchronous>, transform_indices = @transform_27, window_bounds = array<i64: 2, 4, 8, 10>}]} {
    %c0_i32 = arith.constant 0 : i32
    %0 = arith.cmpi eq, %arg0, %c0_i32 : i32
    %1 = arith.extui %0 : i1 to i32
    %c0_i32_0 = arith.constant 0 : i32
    %2 = arith.cmpi ne, %1, %c0_i32_0 : i32
    scf.if %2 {
      %c0_286 = arith.constant 0 : index
      %c0_287 = arith.constant 0 : index
      %537 = vector.load %arg1[%c0_286, %c0_287] : memref<16x32xf32, #tpu.memory_space<vmem>>, vector<16x32xf32>
      %c0_288 = arith.constant 0 : index
      %c0_289 = arith.constant 0 : index
      %538 = vector.load %arg29[%c0_288, %c0_289] : memref<16x32xf32, #tpu.memory_space<vmem>>, vector<16x32xf32>
      tpu.vector_store %arg29[%c0_288, %c0_289], %537 {strides = array<i32>} : memref<16x32xf32, #tpu.memory_space<vmem>>, vector<16x32xf32>,
    } else {
    }
    %c0 = arith.constant 0 : index
    %c0_1 = arith.constant 0 : index
    %3 = vector.load %arg29[%c0, %c0_1] : memref<16x32xf32, #tpu.memory_space<vmem>>, vector<16x32xf32>
    %c0_2 = arith.constant 0 : index
    %c0_3 = arith.constant 0 : index
    %c0_4 = arith.constant 0 : index
    %4 = vector.load %arg5[%c0_2, %c0_3, %c0_4] : memref<1x32x96xf32, #tpu.memory_space<vmem>>, vector<1x32x96xf32>
    %5 = vector.shape_cast %4 : vector<1x32x96xf32> to vector<32x96xf32>
    %cst = arith.constant dense<0.000000e+00> : vector<16x96xf32>
    %6 = tpu.matmul %3, %5, %cst {dimension_numbers = #tpu.dot_dimension_numbers<[1], [0], [0], [1], [0, 0, 1, 1], [], []>} : vector<16x32xf32>, vector<32x96xf32>, vector<16x96xf32> -> vector<16x96xf32>
    %c0_5 = arith.constant 0 : index
    %c0_6 = arith.constant 0 : index
    %c0_7 = arith.constant 0 : index
    %7 = vector.load %arg6[%c0_5, %c0_6, %c0_7] : memref<1x1x96xf32, #tpu.memory_space<vmem>>, vector<1x1x96xf32>
    %8 = vector.shape_cast %7 : vector<1x1x96xf32> to vector<1x96xf32>
    %9 = vector.broadcast %8 : vector<1x96xf32> to vector<16x96xf32>
    %10 = arith.addf %6, %9 : vector<16x96xf32>
    %c0_8 = arith.constant 0 : index
    %c0_9 = arith.constant 0 : index
    %c0_10 = arith.constant 0 : index
    %11 = vector.load %arg3[%c0_8, %c0_9, %c0_10] : memref<2x8x8xf32, #tpu.memory_space<vmem>>, vector<1x8x8xf32>
    %12 = vector.shape_cast %11 : vector<1x8x8xf32> to vector<8x8xf32>
    %13 = vector.extract_strided_slice %10 {offsets = [0, 0], sizes = [8, 8], strides = [1, 1]} : vector<16x96xf32> to vector<8x8xf32>
    %14 = vector.extract_strided_slice %10 {offsets = [0, 32], sizes = [8, 8], strides = [1, 1]} : vector<16x96xf32> to vector<8x8xf32>
    %15 = vector.extract_strided_slice %10 {offsets = [0, 64], sizes = [8, 8], strides = [1, 1]} : vector<16x96xf32> to vector<8x8xf32>
    %cst_11 = arith.constant dense<0.000000e+00> : vector<8x8xf32>
    %16 = tpu.matmul %13, %14, %cst_11 {dimension_numbers = #tpu.dot_dimension_numbers<[1], [1], [0], [0], [0, 0, 1, 0], [], []>} : vector<8x8xf32>, vector<8x8xf32>, vector<8x8xf32> -> vector<8x8xf32>
    %cst_12 = arith.constant 0.000000e+00 : f32
    %17 = vector.broadcast %cst_12 : f32 to vector<8x8xf32>
    %18 = arith.cmpf ogt, %12, %17 : vector<8x8xf32>
    %cst_13 = arith.constant 0.353553385 : f32
    %19 = vector.broadcast %cst_13 : f32 to vector<8x8xf32>
    %20 = arith.mulf %16, %19 : vector<8x8xf32>
    %cst_14 = arith.constant -1.000000e+10 : f32
    %21 = vector.broadcast %cst_14 : f32 to vector<8x8xf32>
    %22 = arith.select %18, %20, %21 : vector<8x8xi1>, vector<8x8xf32>
    %cst_15 = arith.constant dense<0xFF800000> : vector<8xf32>
    %23 = vector.multi_reduction <maximumf>, %22, %cst_15 [1] : vector<8x8xf32> to vector<8xf32>
    %24 = vector.shape_cast %23 : vector<8xf32> to vector<8x1xf32>
    %25 = vector.broadcast %24 : vector<8x1xf32> to vector<8x8xf32>
    %26 = arith.subf %22, %25 : vector<8x8xf32>
    %27 = math.exp %26 : vector<8x8xf32>
    %cst_16 = arith.constant dense<0.000000e+00> : vector<8xf32>
    %28 = vector.multi_reduction <add>, %27, %cst_16 [1] : vector<8x8xf32> to vector<8xf32>
    %29 = vector.shape_cast %28 : vector<8xf32> to vector<8x1xf32>
    %30 = vector.broadcast %29 : vector<8x1xf32> to vector<8x8xf32>
    %31 = arith.divf %27, %30 : vector<8x8xf32>
    %cst_17 = arith.constant dense<0.000000e+00> : vector<8x8xf32>
    %32 = tpu.matmul %31, %15, %cst_17 {dimension_numbers = #tpu.dot_dimension_numbers<[1], [0], [0], [1], [0, 0, 1, 1], [], []>} : vector<8x8xf32>, vector<8x8xf32>, vector<8x8xf32> -> vector<8x8xf32>
    %c0_18 = arith.constant 0 : index
    %c0_19 = arith.constant 0 : index
    %33 = vector.load %arg30[%c0_18, %c0_19] : memref<16x32xf32, #tpu.memory_space<vmem>>, vector<8x8xf32>
    tpu.vector_store %arg30[%c0_18, %c0_19], %32 {strides = array<i32>} : memref<16x32xf32, #tpu.memory_space<vmem>>, vector<8x8xf32>,
    %34 = vector.extract_strided_slice %10 {offsets = [0, 8], sizes = [8, 8], strides = [1, 1]} : vector<16x96xf32> to vector<8x8xf32>
    %35 = vector.extract_strided_slice %10 {offsets = [0, 40], sizes = [8, 8], strides = [1, 1]} : vector<16x96xf32> to vector<8x8xf32>
    %36 = vector.extract_strided_slice %10 {offsets = [0, 72], sizes = [8, 8], strides = [1, 1]} : vector<16x96xf32> to vector<8x8xf32>
    %cst_20 = arith.constant dense<0.000000e+00> : vector<8x8xf32>
    %37 = tpu.matmul %34, %35, %cst_20 {dimension_numbers = #tpu.dot_dimension_numbers<[1], [1], [0], [0], [0, 0, 1, 0], [], []>} : vector<8x8xf32>, vector<8x8xf32>, vector<8x8xf32> -> vector<8x8xf32>
    %cst_21 = arith.constant 0.000000e+00 : f32
    %38 = vector.broadcast %cst_21 : f32 to vector<8x8xf32>
    %39 = arith.cmpf ogt, %12, %38 : vector<8x8xf32>
    %cst_22 = arith.constant 0.353553385 : f32
    %40 = vector.broadcast %cst_22 : f32 to vector<8x8xf32>
    %41 = arith.mulf %37, %40 : vector<8x8xf32>
    %cst_23 = arith.constant -1.000000e+10 : f32
    %42 = vector.broadcast %cst_23 : f32 to vector<8x8xf32>
    %43 = arith.select %39, %41, %42 : vector<8x8xi1>, vector<8x8xf32>
    %cst_24 = arith.constant dense<0xFF800000> : vector<8xf32>
    %44 = vector.multi_reduction <maximumf>, %43, %cst_24 [1] : vector<8x8xf32> to vector<8xf32>
    %45 = vector.shape_cast %44 : vector<8xf32> to vector<8x1xf32>
    %46 = vector.broadcast %45 : vector<8x1xf32> to vector<8x8xf32>
    %47 = arith.subf %43, %46 : vector<8x8xf32>
    %48 = math.exp %47 : vector<8x8xf32>
    %cst_25 = arith.constant dense<0.000000e+00> : vector<8xf32>
    %49 = vector.multi_reduction <add>, %48, %cst_25 [1] : vector<8x8xf32> to vector<8xf32>
    %50 = vector.shape_cast %49 : vector<8xf32> to vector<8x1xf32>
    %51 = vector.broadcast %50 : vector<8x1xf32> to vector<8x8xf32>
    %52 = arith.divf %48, %51 : vector<8x8xf32>
    %cst_26 = arith.constant dense<0.000000e+00> : vector<8x8xf32>
    %53 = tpu.matmul %52, %36, %cst_26 {dimension_numbers = #tpu.dot_dimension_numbers<[1], [0], [0], [1], [0, 0, 1, 1], [], []>} : vector<8x8xf32>, vector<8x8xf32>, vector<8x8xf32> -> vector<8x8xf32>
    %c0_27 = arith.constant 0 : index
    %c8 = arith.constant 8 : index
    %54 = vector.load %arg30[%c0_27, %c8] : memref<16x32xf32, #tpu.memory_space<vmem>>, vector<8x8xf32>
    tpu.vector_store %arg30[%c0_27, %c8], %53 {strides = array<i32>} : memref<16x32xf32, #tpu.memory_space<vmem>>, vector<8x8xf32>,
    %55 = vector.extract_strided_slice %10 {offsets = [0, 16], sizes = [8, 8], strides = [1, 1]} : vector<16x96xf32> to vector<8x8xf32>
    %56 = vector.extract_strided_slice %10 {offsets = [0, 48], sizes = [8, 8], strides = [1, 1]} : vector<16x96xf32> to vector<8x8xf32>
    %57 = vector.extract_strided_slice %10 {offsets = [0, 80], sizes = [8, 8], strides = [1, 1]} : vector<16x96xf32> to vector<8x8xf32>
    %cst_28 = arith.constant dense<0.000000e+00> : vector<8x8xf32>
    %58 = tpu.matmul %55, %56, %cst_28 {dimension_numbers = #tpu.dot_dimension_numbers<[1], [1], [0], [0], [0, 0, 1, 0], [], []>} : vector<8x8xf32>, vector<8x8xf32>, vector<8x8xf32> -> vector<8x8xf32>
    %cst_29 = arith.constant 0.000000e+00 : f32
    %59 = vector.broadcast %cst_29 : f32 to vector<8x8xf32>
    %60 = arith.cmpf ogt, %12, %59 : vector<8x8xf32>
    %cst_30 = arith.constant 0.353553385 : f32
    %61 = vector.broadcast %cst_30 : f32 to vector<8x8xf32>
    %62 = arith.mulf %58, %61 : vector<8x8xf32>
    %cst_31 = arith.constant -1.000000e+10 : f32
    %63 = vector.broadcast %cst_31 : f32 to vector<8x8xf32>
    %64 = arith.select %60, %62, %63 : vector<8x8xi1>, vector<8x8xf32>
    %cst_32 = arith.constant dense<0xFF800000> : vector<8xf32>
    %65 = vector.multi_reduction <maximumf>, %64, %cst_32 [1] : vector<8x8xf32> to vector<8xf32>
    %66 = vector.shape_cast %65 : vector<8xf32> to vector<8x1xf32>
    %67 = vector.broadcast %66 : vector<8x1xf32> to vector<8x8xf32>
    %68 = arith.subf %64, %67 : vector<8x8xf32>
    %69 = math.exp %68 : vector<8x8xf32>
    %cst_33 = arith.constant dense<0.000000e+00> : vector<8xf32>
    %70 = vector.multi_reduction <add>, %69, %cst_33 [1] : vector<8x8xf32> to vector<8xf32>
    %71 = vector.shape_cast %70 : vector<8xf32> to vector<8x1xf32>
    %72 = vector.broadcast %71 : vector<8x1xf32> to vector<8x8xf32>
    %73 = arith.divf %69, %72 : vector<8x8xf32>
    %cst_34 = arith.constant dense<0.000000e+00> : vector<8x8xf32>
    %74 = tpu.matmul %73, %57, %cst_34 {dimension_numbers = #tpu.dot_dimension_numbers<[1], [0], [0], [1], [0, 0, 1, 1], [], []>} : vector<8x8xf32>, vector<8x8xf32>, vector<8x8xf32> -> vector<8x8xf32>
    %c0_35 = arith.constant 0 : index
    %c16 = arith.constant 16 : index
    %75 = vector.load %arg30[%c0_35, %c16] : memref<16x32xf32, #tpu.memory_space<vmem>>, vector<8x8xf32>
    tpu.vector_store %arg30[%c0_35, %c16], %74 {strides = array<i32>} : memref<16x32xf32, #tpu.memory_space<vmem>>, vector<8x8xf32>,
    %76 = vector.extract_strided_slice %10 {offsets = [0, 24], sizes = [8, 8], strides = [1, 1]} : vector<16x96xf32> to vector<8x8xf32>
    %77 = vector.extract_strided_slice %10 {offsets = [0, 56], sizes = [8, 8], strides = [1, 1]} : vector<16x96xf32> to vector<8x8xf32>
    %78 = vector.extract_strided_slice %10 {offsets = [0, 88], sizes = [8, 8], strides = [1, 1]} : vector<16x96xf32> to vector<8x8xf32>
    %cst_36 = arith.constant dense<0.000000e+00> : vector<8x8xf32>
    %79 = tpu.matmul %76, %77, %cst_36 {dimension_numbers = #tpu.dot_dimension_numbers<[1], [1], [0], [0], [0, 0, 1, 0], [], []>} : vector<8x8xf32>, vector<8x8xf32>, vector<8x8xf32> -> vector<8x8xf32>
    %cst_37 = arith.constant 0.000000e+00 : f32
    %80 = vector.broadcast %cst_37 : f32 to vector<8x8xf32>
    %81 = arith.cmpf ogt, %12, %80 : vector<8x8xf32>
    %cst_38 = arith.constant 0.353553385 : f32
    %82 = vector.broadcast %cst_38 : f32 to vector<8x8xf32>
    %83 = arith.mulf %79, %82 : vector<8x8xf32>
    %cst_39 = arith.constant -1.000000e+10 : f32
    %84 = vector.broadcast %cst_39 : f32 to vector<8x8xf32>
    %85 = arith.select %81, %83, %84 : vector<8x8xi1>, vector<8x8xf32>
    %cst_40 = arith.constant dense<0xFF800000> : vector<8xf32>
    %86 = vector.multi_reduction <maximumf>, %85, %cst_40 [1] : vector<8x8xf32> to vector<8xf32>
    %87 = vector.shape_cast %86 : vector<8xf32> to vector<8x1xf32>
    %88 = vector.broadcast %87 : vector<8x1xf32> to vector<8x8xf32>
    %89 = arith.subf %85, %88 : vector<8x8xf32>
    %90 = math.exp %89 : vector<8x8xf32>
    %cst_41 = arith.constant dense<0.000000e+00> : vector<8xf32>
    %91 = vector.multi_reduction <add>, %90, %cst_41 [1] : vector<8x8xf32> to vector<8xf32>
    %92 = vector.shape_cast %91 : vector<8xf32> to vector<8x1xf32>
    %93 = vector.broadcast %92 : vector<8x1xf32> to vector<8x8xf32>
    %94 = arith.divf %90, %93 : vector<8x8xf32>
    %cst_42 = arith.constant dense<0.000000e+00> : vector<8x8xf32>
    %95 = tpu.matmul %94, %78, %cst_42 {dimension_numbers = #tpu.dot_dimension_numbers<[1], [0], [0], [1], [0, 0, 1, 1], [], []>} : vector<8x8xf32>, vector<8x8xf32>, vector<8x8xf32> -> vector<8x8xf32>
    %c0_43 = arith.constant 0 : index
    %c24 = arith.constant 24 : index
    %96 = vector.load %arg30[%c0_43, %c24] : memref<16x32xf32, #tpu.memory_space<vmem>>, vector<8x8xf32>
    tpu.vector_store %arg30[%c0_43, %c24], %95 {strides = array<i32>} : memref<16x32xf32, #tpu.memory_space<vmem>>, vector<8x8xf32>,
    %c1 = arith.constant 1 : index
    %c0_44 = arith.constant 0 : index
    %c0_45 = arith.constant 0 : index
    %97 = vector.load %arg3[%c1, %c0_44, %c0_45] : memref<2x8x8xf32, #tpu.memory_space<vmem>>, vector<1x8x8xf32>
    %98 = vector.shape_cast %97 : vector<1x8x8xf32> to vector<8x8xf32>
    %99 = vector.extract_strided_slice %10 {offsets = [8, 0], sizes = [8, 8], strides = [1, 1]} : vector<16x96xf32> to vector<8x8xf32>
    %100 = vector.extract_strided_slice %10 {offsets = [8, 32], sizes = [8, 8], strides = [1, 1]} : vector<16x96xf32> to vector<8x8xf32>
    %101 = vector.extract_strided_slice %10 {offsets = [8, 64], sizes = [8, 8], strides = [1, 1]} : vector<16x96xf32> to vector<8x8xf32>
    %cst_46 = arith.constant dense<0.000000e+00> : vector<8x8xf32>
    %102 = tpu.matmul %99, %100, %cst_46 {dimension_numbers = #tpu.dot_dimension_numbers<[1], [1], [0], [0], [0, 0, 1, 0], [], []>} : vector<8x8xf32>, vector<8x8xf32>, vector<8x8xf32> -> vector<8x8xf32>
    %cst_47 = arith.constant 0.000000e+00 : f32
    %103 = vector.broadcast %cst_47 : f32 to vector<8x8xf32>
    %104 = arith.cmpf ogt, %98, %103 : vector<8x8xf32>
    %cst_48 = arith.constant 0.353553385 : f32
    %105 = vector.broadcast %cst_48 : f32 to vector<8x8xf32>
    %106 = arith.mulf %102, %105 : vector<8x8xf32>
    %cst_49 = arith.constant -1.000000e+10 : f32
    %107 = vector.broadcast %cst_49 : f32 to vector<8x8xf32>
    %108 = arith.select %104, %106, %107 : vector<8x8xi1>, vector<8x8xf32>
    %cst_50 = arith.constant dense<0xFF800000> : vector<8xf32>
    %109 = vector.multi_reduction <maximumf>, %108, %cst_50 [1] : vector<8x8xf32> to vector<8xf32>
    %110 = vector.shape_cast %109 : vector<8xf32> to vector<8x1xf32>
    %111 = vector.broadcast %110 : vector<8x1xf32> to vector<8x8xf32>
    %112 = arith.subf %108, %111 : vector<8x8xf32>
    %113 = math.exp %112 : vector<8x8xf32>
    %cst_51 = arith.constant dense<0.000000e+00> : vector<8xf32>
    %114 = vector.multi_reduction <add>, %113, %cst_51 [1] : vector<8x8xf32> to vector<8xf32>
    %115 = vector.shape_cast %114 : vector<8xf32> to vector<8x1xf32>
    %116 = vector.broadcast %115 : vector<8x1xf32> to vector<8x8xf32>
    %117 = arith.divf %113, %116 : vector<8x8xf32>
    %cst_52 = arith.constant dense<0.000000e+00> : vector<8x8xf32>
    %118 = tpu.matmul %117, %101, %cst_52 {dimension_numbers = #tpu.dot_dimension_numbers<[1], [0], [0], [1], [0, 0, 1, 1], [], []>} : vector<8x8xf32>, vector<8x8xf32>, vector<8x8xf32> -> vector<8x8xf32>
    %c8_53 = arith.constant 8 : index
    %c0_54 = arith.constant 0 : index
    %119 = vector.load %arg30[%c8_53, %c0_54] : memref<16x32xf32, #tpu.memory_space<vmem>>, vector<8x8xf32>
    tpu.vector_store %arg30[%c8_53, %c0_54], %118 {strides = array<i32>} : memref<16x32xf32, #tpu.memory_space<vmem>>, vector<8x8xf32>,
    %120 = vector.extract_strided_slice %10 {offsets = [8, 8], sizes = [8, 8], strides = [1, 1]} : vector<16x96xf32> to vector<8x8xf32>
    %121 = vector.extract_strided_slice %10 {offsets = [8, 40], sizes = [8, 8], strides = [1, 1]} : vector<16x96xf32> to vector<8x8xf32>
    %122 = vector.extract_strided_slice %10 {offsets = [8, 72], sizes = [8, 8], strides = [1, 1]} : vector<16x96xf32> to vector<8x8xf32>
    %cst_55 = arith.constant dense<0.000000e+00> : vector<8x8xf32>
    %123 = tpu.matmul %120, %121, %cst_55 {dimension_numbers = #tpu.dot_dimension_numbers<[1], [1], [0], [0], [0, 0, 1, 0], [], []>} : vector<8x8xf32>, vector<8x8xf32>, vector<8x8xf32> -> vector<8x8xf32>
    %cst_56 = arith.constant 0.000000e+00 : f32
    %124 = vector.broadcast %cst_56 : f32 to vector<8x8xf32>
    %125 = arith.cmpf ogt, %98, %124 : vector<8x8xf32>
    %cst_57 = arith.constant 0.353553385 : f32
    %126 = vector.broadcast %cst_57 : f32 to vector<8x8xf32>
    %127 = arith.mulf %123, %126 : vector<8x8xf32>
    %cst_58 = arith.constant -1.000000e+10 : f32
    %128 = vector.broadcast %cst_58 : f32 to vector<8x8xf32>
    %129 = arith.select %125, %127, %128 : vector<8x8xi1>, vector<8x8xf32>
    %cst_59 = arith.constant dense<0xFF800000> : vector<8xf32>
    %130 = vector.multi_reduction <maximumf>, %129, %cst_59 [1] : vector<8x8xf32> to vector<8xf32>
    %131 = vector.shape_cast %130 : vector<8xf32> to vector<8x1xf32>
    %132 = vector.broadcast %131 : vector<8x1xf32> to vector<8x8xf32>
    %133 = arith.subf %129, %132 : vector<8x8xf32>
    %134 = math.exp %133 : vector<8x8xf32>
    %cst_60 = arith.constant dense<0.000000e+00> : vector<8xf32>
    %135 = vector.multi_reduction <add>, %134, %cst_60 [1] : vector<8x8xf32> to vector<8xf32>
    %136 = vector.shape_cast %135 : vector<8xf32> to vector<8x1xf32>
    %137 = vector.broadcast %136 : vector<8x1xf32> to vector<8x8xf32>
    %138 = arith.divf %134, %137 : vector<8x8xf32>
    %cst_61 = arith.constant dense<0.000000e+00> : vector<8x8xf32>
    %139 = tpu.matmul %138, %122, %cst_61 {dimension_numbers = #tpu.dot_dimension_numbers<[1], [0], [0], [1], [0, 0, 1, 1], [], []>} : vector<8x8xf32>, vector<8x8xf32>, vector<8x8xf32> -> vector<8x8xf32>
    %c8_62 = arith.constant 8 : index
    %c8_63 = arith.constant 8 : index
    %140 = vector.load %arg30[%c8_62, %c8_63] : memref<16x32xf32, #tpu.memory_space<vmem>>, vector<8x8xf32>
    tpu.vector_store %arg30[%c8_62, %c8_63], %139 {strides = array<i32>} : memref<16x32xf32, #tpu.memory_space<vmem>>, vector<8x8xf32>,
    %141 = vector.extract_strided_slice %10 {offsets = [8, 16], sizes = [8, 8], strides = [1, 1]} : vector<16x96xf32> to vector<8x8xf32>
    %142 = vector.extract_strided_slice %10 {offsets = [8, 48], sizes = [8, 8], strides = [1, 1]} : vector<16x96xf32> to vector<8x8xf32>
    %143 = vector.extract_strided_slice %10 {offsets = [8, 80], sizes = [8, 8], strides = [1, 1]} : vector<16x96xf32> to vector<8x8xf32>
    %cst_64 = arith.constant dense<0.000000e+00> : vector<8x8xf32>
    %144 = tpu.matmul %141, %142, %cst_64 {dimension_numbers = #tpu.dot_dimension_numbers<[1], [1], [0], [0], [0, 0, 1, 0], [], []>} : vector<8x8xf32>, vector<8x8xf32>, vector<8x8xf32> -> vector<8x8xf32>
    %cst_65 = arith.constant 0.000000e+00 : f32
    %145 = vector.broadcast %cst_65 : f32 to vector<8x8xf32>
    %146 = arith.cmpf ogt, %98, %145 : vector<8x8xf32>
    %cst_66 = arith.constant 0.353553385 : f32
    %147 = vector.broadcast %cst_66 : f32 to vector<8x8xf32>
    %148 = arith.mulf %144, %147 : vector<8x8xf32>
    %cst_67 = arith.constant -1.000000e+10 : f32
    %149 = vector.broadcast %cst_67 : f32 to vector<8x8xf32>
    %150 = arith.select %146, %148, %149 : vector<8x8xi1>, vector<8x8xf32>
    %cst_68 = arith.constant dense<0xFF800000> : vector<8xf32>
    %151 = vector.multi_reduction <maximumf>, %150, %cst_68 [1] : vector<8x8xf32> to vector<8xf32>
    %152 = vector.shape_cast %151 : vector<8xf32> to vector<8x1xf32>
    %153 = vector.broadcast %152 : vector<8x1xf32> to vector<8x8xf32>
    %154 = arith.subf %150, %153 : vector<8x8xf32>
    %155 = math.exp %154 : vector<8x8xf32>
    %cst_69 = arith.constant dense<0.000000e+00> : vector<8xf32>
    %156 = vector.multi_reduction <add>, %155, %cst_69 [1] : vector<8x8xf32> to vector<8xf32>
    %157 = vector.shape_cast %156 : vector<8xf32> to vector<8x1xf32>
    %158 = vector.broadcast %157 : vector<8x1xf32> to vector<8x8xf32>
    %159 = arith.divf %155, %158 : vector<8x8xf32>
    %cst_70 = arith.constant dense<0.000000e+00> : vector<8x8xf32>
    %160 = tpu.matmul %159, %143, %cst_70 {dimension_numbers = #tpu.dot_dimension_numbers<[1], [0], [0], [1], [0, 0, 1, 1], [], []>} : vector<8x8xf32>, vector<8x8xf32>, vector<8x8xf32> -> vector<8x8xf32>
    %c8_71 = arith.constant 8 : index
    %c16_72 = arith.constant 16 : index
    %161 = vector.load %arg30[%c8_71, %c16_72] : memref<16x32xf32, #tpu.memory_space<vmem>>, vector<8x8xf32>
    tpu.vector_store %arg30[%c8_71, %c16_72], %160 {strides = array<i32>} : memref<16x32xf32, #tpu.memory_space<vmem>>, vector<8x8xf32>,
    %162 = vector.extract_strided_slice %10 {offsets = [8, 24], sizes = [8, 8], strides = [1, 1]} : vector<16x96xf32> to vector<8x8xf32>
    %163 = vector.extract_strided_slice %10 {offsets = [8, 56], sizes = [8, 8], strides = [1, 1]} : vector<16x96xf32> to vector<8x8xf32>
    %164 = vector.extract_strided_slice %10 {offsets = [8, 88], sizes = [8, 8], strides = [1, 1]} : vector<16x96xf32> to vector<8x8xf32>
    %cst_73 = arith.constant dense<0.000000e+00> : vector<8x8xf32>
    %165 = tpu.matmul %162, %163, %cst_73 {dimension_numbers = #tpu.dot_dimension_numbers<[1], [1], [0], [0], [0, 0, 1, 0], [], []>} : vector<8x8xf32>, vector<8x8xf32>, vector<8x8xf32> -> vector<8x8xf32>
    %cst_74 = arith.constant 0.000000e+00 : f32
    %166 = vector.broadcast %cst_74 : f32 to vector<8x8xf32>
    %167 = arith.cmpf ogt, %98, %166 : vector<8x8xf32>
    %cst_75 = arith.constant 0.353553385 : f32
    %168 = vector.broadcast %cst_75 : f32 to vector<8x8xf32>
    %169 = arith.mulf %165, %168 : vector<8x8xf32>
    %cst_76 = arith.constant -1.000000e+10 : f32
    %170 = vector.broadcast %cst_76 : f32 to vector<8x8xf32>
    %171 = arith.select %167, %169, %170 : vector<8x8xi1>, vector<8x8xf32>
    %cst_77 = arith.constant dense<0xFF800000> : vector<8xf32>
    %172 = vector.multi_reduction <maximumf>, %171, %cst_77 [1] : vector<8x8xf32> to vector<8xf32>
    %173 = vector.shape_cast %172 : vector<8xf32> to vector<8x1xf32>
    %174 = vector.broadcast %173 : vector<8x1xf32> to vector<8x8xf32>
    %175 = arith.subf %171, %174 : vector<8x8xf32>
    %176 = math.exp %175 : vector<8x8xf32>
    %cst_78 = arith.constant dense<0.000000e+00> : vector<8xf32>
    %177 = vector.multi_reduction <add>, %176, %cst_78 [1] : vector<8x8xf32> to vector<8xf32>
    %178 = vector.shape_cast %177 : vector<8xf32> to vector<8x1xf32>
    %179 = vector.broadcast %178 : vector<8x1xf32> to vector<8x8xf32>
    %180 = arith.divf %176, %179 : vector<8x8xf32>
    %cst_79 = arith.constant dense<0.000000e+00> : vector<8x8xf32>
    %181 = tpu.matmul %180, %164, %cst_79 {dimension_numbers = #tpu.dot_dimension_numbers<[1], [0], [0], [1], [0, 0, 1, 1], [], []>} : vector<8x8xf32>, vector<8x8xf32>, vector<8x8xf32> -> vector<8x8xf32>
    %c8_80 = arith.constant 8 : index
    %c24_81 = arith.constant 24 : index
    %182 = vector.load %arg30[%c8_80, %c24_81] : memref<16x32xf32, #tpu.memory_space<vmem>>, vector<8x8xf32>
    tpu.vector_store %arg30[%c8_80, %c24_81], %181 {strides = array<i32>} : memref<16x32xf32, #tpu.memory_space<vmem>>, vector<8x8xf32>,
    %c0_82 = arith.constant 0 : index
    %c0_83 = arith.constant 0 : index
    %183 = vector.load %arg30[%c0_82, %c0_83] : memref<16x32xf32, #tpu.memory_space<vmem>>, vector<16x32xf32>
    %c0_84 = arith.constant 0 : index
    %c0_85 = arith.constant 0 : index
    %c0_86 = arith.constant 0 : index
    %184 = vector.load %arg7[%c0_84, %c0_85, %c0_86] : memref<1x32x32xf32, #tpu.memory_space<vmem>>, vector<1x32x32xf32>
    %185 = vector.shape_cast %184 : vector<1x32x32xf32> to vector<32x32xf32>
    %cst_87 = arith.constant dense<0.000000e+00> : vector<16x32xf32>
    %186 = tpu.matmul %183, %185, %cst_87 {dimension_numbers = #tpu.dot_dimension_numbers<[1], [0], [0], [1], [0, 0, 1, 1], [], []>} : vector<16x32xf32>, vector<32x32xf32>, vector<16x32xf32> -> vector<16x32xf32>
    %c0_88 = arith.constant 0 : index
    %c0_89 = arith.constant 0 : index
    %c0_90 = arith.constant 0 : index
    %187 = vector.load %arg8[%c0_88, %c0_89, %c0_90] : memref<1x1x32xf32, #tpu.memory_space<vmem>>, vector<1x1x32xf32>
    %188 = vector.shape_cast %187 : vector<1x1x32xf32> to vector<1x32xf32>
    %189 = vector.broadcast %188 : vector<1x32xf32> to vector<16x32xf32>
    %190 = arith.addf %186, %189 : vector<16x32xf32>
    %191 = arith.addf %3, %190 : vector<16x32xf32>
    %c0_91 = arith.constant 0 : index
    %c0_92 = arith.constant 0 : index
    %c0_93 = arith.constant 0 : index
    %192 = vector.load %arg9[%c0_91, %c0_92, %c0_93] : memref<1x1x32xf32, #tpu.memory_space<vmem>>, vector<1x1x32xf32>
    %193 = vector.shape_cast %192 : vector<1x1x32xf32> to vector<1x32xf32>
    %c0_94 = arith.constant 0 : index
    %c0_95 = arith.constant 0 : index
    %c0_96 = arith.constant 0 : index
    %194 = vector.load %arg10[%c0_94, %c0_95, %c0_96] : memref<1x1x32xf32, #tpu.memory_space<vmem>>, vector<1x1x32xf32>
    %195 = vector.shape_cast %194 : vector<1x1x32xf32> to vector<1x32xf32>
    %cst_97 = arith.constant dense<0.000000e+00> : vector<16xf32>
    %196 = vector.multi_reduction <add>, %191, %cst_97 [1] : vector<16x32xf32> to vector<16xf32>
    %197 = vector.shape_cast %196 : vector<16xf32> to vector<16x1xf32>
    %cst_98 = arith.constant 3.200000e+01 : f32
    %198 = vector.broadcast %cst_98 : f32 to vector<16x1xf32>
    %199 = arith.divf %197, %198 : vector<16x1xf32>
    %200 = vector.broadcast %199 : vector<16x1xf32> to vector<16x32xf32>
    %201 = arith.subf %191, %200 : vector<16x32xf32>
    %202 = arith.mulf %201, %201 : vector<16x32xf32>
    %cst_99 = arith.constant dense<0.000000e+00> : vector<16xf32>
    %203 = vector.multi_reduction <add>, %202, %cst_99 [1] : vector<16x32xf32> to vector<16xf32>
    %204 = vector.shape_cast %203 : vector<16xf32> to vector<16x1xf32>
    %cst_100 = arith.constant 3.200000e+01 : f32
    %205 = vector.broadcast %cst_100 : f32 to vector<16x1xf32>
    %206 = arith.divf %204, %205 : vector<16x1xf32>
    %207 = vector.broadcast %199 : vector<16x1xf32> to vector<16x32xf32>
    %208 = arith.subf %191, %207 : vector<16x32xf32>
    %cst_101 = arith.constant 9.99999974E-6 : f32
    %209 = vector.broadcast %cst_101 : f32 to vector<16x1xf32>
    %210 = arith.addf %206, %209 : vector<16x1xf32>
    %211 = math.rsqrt %210 : vector<16x1xf32>
    %212 = vector.broadcast %211 : vector<16x1xf32> to vector<16x32xf32>
    %213 = arith.mulf %208, %212 : vector<16x32xf32>
    %214 = vector.broadcast %193 : vector<1x32xf32> to vector<16x32xf32>
    %215 = arith.mulf %213, %214 : vector<16x32xf32>
    %216 = vector.broadcast %195 : vector<1x32xf32> to vector<16x32xf32>
    %217 = arith.addf %215, %216 : vector<16x32xf32>
    %c0_102 = arith.constant 0 : index
    %c0_103 = arith.constant 0 : index
    %c0_104 = arith.constant 0 : index
    %218 = vector.load %arg11[%c0_102, %c0_103, %c0_104] : memref<1x32x32xf32, #tpu.memory_space<vmem>>, vector<1x32x32xf32>
    %219 = vector.shape_cast %218 : vector<1x32x32xf32> to vector<32x32xf32>
    %cst_105 = arith.constant dense<0.000000e+00> : vector<16x32xf32>
    %220 = tpu.matmul %217, %219, %cst_105 {dimension_numbers = #tpu.dot_dimension_numbers<[1], [0], [0], [1], [0, 0, 1, 1], [], []>} : vector<16x32xf32>, vector<32x32xf32>, vector<16x32xf32> -> vector<16x32xf32>
    %c0_106 = arith.constant 0 : index
    %c0_107 = arith.constant 0 : index
    %c0_108 = arith.constant 0 : index
    %221 = vector.load %arg12[%c0_106, %c0_107, %c0_108] : memref<1x1x32xf32, #tpu.memory_space<vmem>>, vector<1x1x32xf32>
    %222 = vector.shape_cast %221 : vector<1x1x32xf32> to vector<1x32xf32>
    %223 = vector.broadcast %222 : vector<1x32xf32> to vector<16x32xf32>
    %224 = arith.addf %220, %223 : vector<16x32xf32>
    %c0_109 = arith.constant 0 : index
    %c0_110 = arith.constant 0 : index
    %c0_111 = arith.constant 0 : index
    %225 = vector.load %arg2[%c0_109, %c0_110, %c0_111] : memref<2x10x32xf32, #tpu.memory_space<vmem>>, vector<1x10x32xf32>
    %226 = vector.shape_cast %225 : vector<1x10x32xf32> to vector<10x32xf32>
    %c0_112 = arith.constant 0 : index
    %c0_113 = arith.constant 0 : index
    %c0_114 = arith.constant 0 : index
    %227 = vector.load %arg13[%c0_112, %c0_113, %c0_114] : memref<1x32x64xf32, #tpu.memory_space<vmem>>, vector<1x32x64xf32>
    %228 = vector.shape_cast %227 : vector<1x32x64xf32> to vector<32x64xf32>
    %cst_115 = arith.constant dense<0.000000e+00> : vector<10x64xf32>
    %229 = tpu.matmul %226, %228, %cst_115 {dimension_numbers = #tpu.dot_dimension_numbers<[1], [0], [0], [1], [0, 0, 1, 1], [], []>} : vector<10x32xf32>, vector<32x64xf32>, vector<10x64xf32> -> vector<10x64xf32>
    %c0_116 = arith.constant 0 : index
    %c0_117 = arith.constant 0 : index
    %c0_118 = arith.constant 0 : index
    %230 = vector.load %arg14[%c0_116, %c0_117, %c0_118] : memref<1x1x64xf32, #tpu.memory_space<vmem>>, vector<1x1x64xf32>
    %231 = vector.shape_cast %230 : vector<1x1x64xf32> to vector<1x64xf32>
    %232 = vector.broadcast %231 : vector<1x64xf32> to vector<10x64xf32>
    %233 = arith.addf %229, %232 : vector<10x64xf32>
    %c0_119 = arith.constant 0 : index
    %c0_120 = arith.constant 0 : index
    %c0_121 = arith.constant 0 : index
    %234 = vector.load %arg4[%c0_119, %c0_120, %c0_121] : memref<2x1x10xf32, #tpu.memory_space<vmem>>, vector<1x1x10xf32>
    %235 = vector.shape_cast %234 : vector<1x1x10xf32> to vector<1x10xf32>
    %236 = vector.extract_strided_slice %224 {offsets = [0, 0], sizes = [8, 8], strides = [1, 1]} : vector<16x32xf32> to vector<8x8xf32>
    %237 = vector.extract_strided_slice %233 {offsets = [0, 0], sizes = [10, 8], strides = [1, 1]} : vector<10x64xf32> to vector<10x8xf32>
    %238 = vector.extract_strided_slice %233 {offsets = [0, 32], sizes = [10, 8], strides = [1, 1]} : vector<10x64xf32> to vector<10x8xf32>
    %cst_122 = arith.constant dense<0.000000e+00> : vector<8x10xf32>
    %239 = tpu.matmul %236, %237, %cst_122 {dimension_numbers = #tpu.dot_dimension_numbers<[1], [1], [0], [0], [0, 0, 1, 0], [], []>} : vector<8x8xf32>, vector<10x8xf32>, vector<8x10xf32> -> vector<8x10xf32>
    %cst_123 = arith.constant 0.000000e+00 : f32
    %240 = vector.broadcast %cst_123 : f32 to vector<1x10xf32>
    %241 = arith.cmpf ogt, %235, %240 : vector<1x10xf32>
    %cst_124 = arith.constant 0.353553385 : f32
    %242 = vector.broadcast %cst_124 : f32 to vector<8x10xf32>
    %243 = arith.mulf %239, %242 : vector<8x10xf32>
    %cst_125 = arith.constant -1.000000e+10 : f32
    %244 = vector.shape_cast %241 : vector<1x10xi1> to vector<1x10xi1>
    %245 = vector.broadcast %244 : vector<1x10xi1> to vector<8x10xi1>
    %246 = vector.broadcast %cst_125 : f32 to vector<8x10xf32>
    %247 = arith.select %245, %243, %246 : vector<8x10xi1>, vector<8x10xf32>
    %cst_126 = arith.constant dense<0xFF800000> : vector<8xf32>
    %248 = vector.multi_reduction <maximumf>, %247, %cst_126 [1] : vector<8x10xf32> to vector<8xf32>
    %249 = vector.shape_cast %248 : vector<8xf32> to vector<8x1xf32>
    %250 = vector.broadcast %249 : vector<8x1xf32> to vector<8x10xf32>
    %251 = arith.subf %247, %250 : vector<8x10xf32>
    %252 = math.exp %251 : vector<8x10xf32>
    %cst_127 = arith.constant dense<0.000000e+00> : vector<8xf32>
    %253 = vector.multi_reduction <add>, %252, %cst_127 [1] : vector<8x10xf32> to vector<8xf32>
    %254 = vector.shape_cast %253 : vector<8xf32> to vector<8x1xf32>
    %255 = vector.broadcast %254 : vector<8x1xf32> to vector<8x10xf32>
    %256 = arith.divf %252, %255 : vector<8x10xf32>
    %c0_128 = arith.constant 0 : index
    %c0_129 = arith.constant 0 : index
    %c0_130 = arith.constant 0 : index
    %c0_131 = arith.constant 0 : index
    %257 = vector.load %arg28[%c0_128, %c0_129, %c0_130, %c0_131] : memref<2x4x8x10xf32, #tpu.memory_space<vmem>>, vector<1x1x8x10xf32>
    %258 = vector.shape_cast %257 : vector<1x1x8x10xf32> to vector<8x10xf32>
    %259 = vector.shape_cast %256 : vector<8x10xf32> to vector<1x1x8x10xf32>
    tpu.vector_store %arg28[%c0_128, %c0_129, %c0_130, %c0_131], %259 {strides = array<i32>} : memref<2x4x8x10xf32, #tpu.memory_space<vmem>>, vector<1x1x8x10xf32>,
    %cst_132 = arith.constant dense<0.000000e+00> : vector<8x8xf32>
    %260 = tpu.matmul %256, %238, %cst_132 {dimension_numbers = #tpu.dot_dimension_numbers<[1], [0], [0], [1], [0, 0, 1, 1], [], []>} : vector<8x10xf32>, vector<10x8xf32>, vector<8x8xf32> -> vector<8x8xf32>
    %c0_133 = arith.constant 0 : index
    %c0_134 = arith.constant 0 : index
    %261 = vector.load %arg30[%c0_133, %c0_134] : memref<16x32xf32, #tpu.memory_space<vmem>>, vector<8x8xf32>
    tpu.vector_store %arg30[%c0_133, %c0_134], %260 {strides = array<i32>} : memref<16x32xf32, #tpu.memory_space<vmem>>, vector<8x8xf32>,
    %262 = vector.extract_strided_slice %224 {offsets = [0, 8], sizes = [8, 8], strides = [1, 1]} : vector<16x32xf32> to vector<8x8xf32>
    %263 = vector.extract_strided_slice %233 {offsets = [0, 8], sizes = [10, 8], strides = [1, 1]} : vector<10x64xf32> to vector<10x8xf32>
    %264 = vector.extract_strided_slice %233 {offsets = [0, 40], sizes = [10, 8], strides = [1, 1]} : vector<10x64xf32> to vector<10x8xf32>
    %cst_135 = arith.constant dense<0.000000e+00> : vector<8x10xf32>
    %265 = tpu.matmul %262, %263, %cst_135 {dimension_numbers = #tpu.dot_dimension_numbers<[1], [1], [0], [0], [0, 0, 1, 0], [], []>} : vector<8x8xf32>, vector<10x8xf32>, vector<8x10xf32> -> vector<8x10xf32>
    %cst_136 = arith.constant 0.000000e+00 : f32
    %266 = vector.broadcast %cst_136 : f32 to vector<1x10xf32>
    %267 = arith.cmpf ogt, %235, %266 : vector<1x10xf32>
    %cst_137 = arith.constant 0.353553385 : f32
    %268 = vector.broadcast %cst_137 : f32 to vector<8x10xf32>
    %269 = arith.mulf %265, %268 : vector<8x10xf32>
    %cst_138 = arith.constant -1.000000e+10 : f32
    %270 = vector.shape_cast %267 : vector<1x10xi1> to vector<1x10xi1>
    %271 = vector.broadcast %270 : vector<1x10xi1> to vector<8x10xi1>
    %272 = vector.broadcast %cst_138 : f32 to vector<8x10xf32>
    %273 = arith.select %271, %269, %272 : vector<8x10xi1>, vector<8x10xf32>
    %cst_139 = arith.constant dense<0xFF800000> : vector<8xf32>
    %274 = vector.multi_reduction <maximumf>, %273, %cst_139 [1] : vector<8x10xf32> to vector<8xf32>
    %275 = vector.shape_cast %274 : vector<8xf32> to vector<8x1xf32>
    %276 = vector.broadcast %275 : vector<8x1xf32> to vector<8x10xf32>
    %277 = arith.subf %273, %276 : vector<8x10xf32>
    %278 = math.exp %277 : vector<8x10xf32>
    %cst_140 = arith.constant dense<0.000000e+00> : vector<8xf32>
    %279 = vector.multi_reduction <add>, %278, %cst_140 [1] : vector<8x10xf32> to vector<8xf32>
    %280 = vector.shape_cast %279 : vector<8xf32> to vector<8x1xf32>
    %281 = vector.broadcast %280 : vector<8x1xf32> to vector<8x10xf32>
    %282 = arith.divf %278, %281 : vector<8x10xf32>
    %c0_141 = arith.constant 0 : index
    %c1_142 = arith.constant 1 : index
    %c0_143 = arith.constant 0 : index
    %c0_144 = arith.constant 0 : index
    %283 = vector.load %arg28[%c0_141, %c1_142, %c0_143, %c0_144] : memref<2x4x8x10xf32, #tpu.memory_space<vmem>>, vector<1x1x8x10xf32>
    %284 = vector.shape_cast %283 : vector<1x1x8x10xf32> to vector<8x10xf32>
    %285 = vector.shape_cast %282 : vector<8x10xf32> to vector<1x1x8x10xf32>
    tpu.vector_store %arg28[%c0_141, %c1_142, %c0_143, %c0_144], %285 {strides = array<i32>} : memref<2x4x8x10xf32, #tpu.memory_space<vmem>>, vector<1x1x8x10xf32>,
    %cst_145 = arith.constant dense<0.000000e+00> : vector<8x8xf32>
    %286 = tpu.matmul %282, %264, %cst_145 {dimension_numbers = #tpu.dot_dimension_numbers<[1], [0], [0], [1], [0, 0, 1, 1], [], []>} : vector<8x10xf32>, vector<10x8xf32>, vector<8x8xf32> -> vector<8x8xf32>
    %c0_146 = arith.constant 0 : index
    %c8_147 = arith.constant 8 : index
    %287 = vector.load %arg30[%c0_146, %c8_147] : memref<16x32xf32, #tpu.memory_space<vmem>>, vector<8x8xf32>
    tpu.vector_store %arg30[%c0_146, %c8_147], %286 {strides = array<i32>} : memref<16x32xf32, #tpu.memory_space<vmem>>, vector<8x8xf32>,
    %288 = vector.extract_strided_slice %224 {offsets = [0, 16], sizes = [8, 8], strides = [1, 1]} : vector<16x32xf32> to vector<8x8xf32>
    %289 = vector.extract_strided_slice %233 {offsets = [0, 16], sizes = [10, 8], strides = [1, 1]} : vector<10x64xf32> to vector<10x8xf32>
    %290 = vector.extract_strided_slice %233 {offsets = [0, 48], sizes = [10, 8], strides = [1, 1]} : vector<10x64xf32> to vector<10x8xf32>
    %cst_148 = arith.constant dense<0.000000e+00> : vector<8x10xf32>
    %291 = tpu.matmul %288, %289, %cst_148 {dimension_numbers = #tpu.dot_dimension_numbers<[1], [1], [0], [0], [0, 0, 1, 0], [], []>} : vector<8x8xf32>, vector<10x8xf32>, vector<8x10xf32> -> vector<8x10xf32>
    %cst_149 = arith.constant 0.000000e+00 : f32
    %292 = vector.broadcast %cst_149 : f32 to vector<1x10xf32>
    %293 = arith.cmpf ogt, %235, %292 : vector<1x10xf32>
    %cst_150 = arith.constant 0.353553385 : f32
    %294 = vector.broadcast %cst_150 : f32 to vector<8x10xf32>
    %295 = arith.mulf %291, %294 : vector<8x10xf32>
    %cst_151 = arith.constant -1.000000e+10 : f32
    %296 = vector.shape_cast %293 : vector<1x10xi1> to vector<1x10xi1>
    %297 = vector.broadcast %296 : vector<1x10xi1> to vector<8x10xi1>
    %298 = vector.broadcast %cst_151 : f32 to vector<8x10xf32>
    %299 = arith.select %297, %295, %298 : vector<8x10xi1>, vector<8x10xf32>
    %cst_152 = arith.constant dense<0xFF800000> : vector<8xf32>
    %300 = vector.multi_reduction <maximumf>, %299, %cst_152 [1] : vector<8x10xf32> to vector<8xf32>
    %301 = vector.shape_cast %300 : vector<8xf32> to vector<8x1xf32>
    %302 = vector.broadcast %301 : vector<8x1xf32> to vector<8x10xf32>
    %303 = arith.subf %299, %302 : vector<8x10xf32>
    %304 = math.exp %303 : vector<8x10xf32>
    %cst_153 = arith.constant dense<0.000000e+00> : vector<8xf32>
    %305 = vector.multi_reduction <add>, %304, %cst_153 [1] : vector<8x10xf32> to vector<8xf32>
    %306 = vector.shape_cast %305 : vector<8xf32> to vector<8x1xf32>
    %307 = vector.broadcast %306 : vector<8x1xf32> to vector<8x10xf32>
    %308 = arith.divf %304, %307 : vector<8x10xf32>
    %c0_154 = arith.constant 0 : index
    %c2 = arith.constant 2 : index
    %c0_155 = arith.constant 0 : index
    %c0_156 = arith.constant 0 : index
    %309 = vector.load %arg28[%c0_154, %c2, %c0_155, %c0_156] : memref<2x4x8x10xf32, #tpu.memory_space<vmem>>, vector<1x1x8x10xf32>
    %310 = vector.shape_cast %309 : vector<1x1x8x10xf32> to vector<8x10xf32>
    %311 = vector.shape_cast %308 : vector<8x10xf32> to vector<1x1x8x10xf32>
    tpu.vector_store %arg28[%c0_154, %c2, %c0_155, %c0_156], %311 {strides = array<i32>} : memref<2x4x8x10xf32, #tpu.memory_space<vmem>>, vector<1x1x8x10xf32>,
    %cst_157 = arith.constant dense<0.000000e+00> : vector<8x8xf32>
    %312 = tpu.matmul %308, %290, %cst_157 {dimension_numbers = #tpu.dot_dimension_numbers<[1], [0], [0], [1], [0, 0, 1, 1], [], []>} : vector<8x10xf32>, vector<10x8xf32>, vector<8x8xf32> -> vector<8x8xf32>
    %c0_158 = arith.constant 0 : index
    %c16_159 = arith.constant 16 : index
    %313 = vector.load %arg30[%c0_158, %c16_159] : memref<16x32xf32, #tpu.memory_space<vmem>>, vector<8x8xf32>
    tpu.vector_store %arg30[%c0_158, %c16_159], %312 {strides = array<i32>} : memref<16x32xf32, #tpu.memory_space<vmem>>, vector<8x8xf32>,
    %314 = vector.extract_strided_slice %224 {offsets = [0, 24], sizes = [8, 8], strides = [1, 1]} : vector<16x32xf32> to vector<8x8xf32>
    %315 = vector.extract_strided_slice %233 {offsets = [0, 24], sizes = [10, 8], strides = [1, 1]} : vector<10x64xf32> to vector<10x8xf32>
    %316 = vector.extract_strided_slice %233 {offsets = [0, 56], sizes = [10, 8], strides = [1, 1]} : vector<10x64xf32> to vector<10x8xf32>
    %cst_160 = arith.constant dense<0.000000e+00> : vector<8x10xf32>
    %317 = tpu.matmul %314, %315, %cst_160 {dimension_numbers = #tpu.dot_dimension_numbers<[1], [1], [0], [0], [0, 0, 1, 0], [], []>} : vector<8x8xf32>, vector<10x8xf32>, vector<8x10xf32> -> vector<8x10xf32>
    %cst_161 = arith.constant 0.000000e+00 : f32
    %318 = vector.broadcast %cst_161 : f32 to vector<1x10xf32>
    %319 = arith.cmpf ogt, %235, %318 : vector<1x10xf32>
    %cst_162 = arith.constant 0.353553385 : f32
    %320 = vector.broadcast %cst_162 : f32 to vector<8x10xf32>
    %321 = arith.mulf %317, %320 : vector<8x10xf32>
    %cst_163 = arith.constant -1.000000e+10 : f32
    %322 = vector.shape_cast %319 : vector<1x10xi1> to vector<1x10xi1>
    %323 = vector.broadcast %322 : vector<1x10xi1> to vector<8x10xi1>
    %324 = vector.broadcast %cst_163 : f32 to vector<8x10xf32>
    %325 = arith.select %323, %321, %324 : vector<8x10xi1>, vector<8x10xf32>
    %cst_164 = arith.constant dense<0xFF800000> : vector<8xf32>
    %326 = vector.multi_reduction <maximumf>, %325, %cst_164 [1] : vector<8x10xf32> to vector<8xf32>
    %327 = vector.shape_cast %326 : vector<8xf32> to vector<8x1xf32>
    %328 = vector.broadcast %327 : vector<8x1xf32> to vector<8x10xf32>
    %329 = arith.subf %325, %328 : vector<8x10xf32>
    %330 = math.exp %329 : vector<8x10xf32>
    %cst_165 = arith.constant dense<0.000000e+00> : vector<8xf32>
    %331 = vector.multi_reduction <add>, %330, %cst_165 [1] : vector<8x10xf32> to vector<8xf32>
    %332 = vector.shape_cast %331 : vector<8xf32> to vector<8x1xf32>
    %333 = vector.broadcast %332 : vector<8x1xf32> to vector<8x10xf32>
    %334 = arith.divf %330, %333 : vector<8x10xf32>
    %c0_166 = arith.constant 0 : index
    %c3 = arith.constant 3 : index
    %c0_167 = arith.constant 0 : index
    %c0_168 = arith.constant 0 : index
    %335 = vector.load %arg28[%c0_166, %c3, %c0_167, %c0_168] : memref<2x4x8x10xf32, #tpu.memory_space<vmem>>, vector<1x1x8x10xf32>
    %336 = vector.shape_cast %335 : vector<1x1x8x10xf32> to vector<8x10xf32>
    %337 = vector.shape_cast %334 : vector<8x10xf32> to vector<1x1x8x10xf32>
    tpu.vector_store %arg28[%c0_166, %c3, %c0_167, %c0_168], %337 {strides = array<i32>} : memref<2x4x8x10xf32, #tpu.memory_space<vmem>>, vector<1x1x8x10xf32>,
    %cst_169 = arith.constant dense<0.000000e+00> : vector<8x8xf32>
    %338 = tpu.matmul %334, %316, %cst_169 {dimension_numbers = #tpu.dot_dimension_numbers<[1], [0], [0], [1], [0, 0, 1, 1], [], []>} : vector<8x10xf32>, vector<10x8xf32>, vector<8x8xf32> -> vector<8x8xf32>
    %c0_170 = arith.constant 0 : index
    %c24_171 = arith.constant 24 : index
    %339 = vector.load %arg30[%c0_170, %c24_171] : memref<16x32xf32, #tpu.memory_space<vmem>>, vector<8x8xf32>
    tpu.vector_store %arg30[%c0_170, %c24_171], %338 {strides = array<i32>} : memref<16x32xf32, #tpu.memory_space<vmem>>, vector<8x8xf32>,
    %c1_172 = arith.constant 1 : index
    %c0_173 = arith.constant 0 : index
    %c0_174 = arith.constant 0 : index
    %340 = vector.load %arg2[%c1_172, %c0_173, %c0_174] : memref<2x10x32xf32, #tpu.memory_space<vmem>>, vector<1x10x32xf32>
    %341 = vector.shape_cast %340 : vector<1x10x32xf32> to vector<10x32xf32>
    %c0_175 = arith.constant 0 : index
    %c0_176 = arith.constant 0 : index
    %c0_177 = arith.constant 0 : index
    %342 = vector.load %arg13[%c0_175, %c0_176, %c0_177] : memref<1x32x64xf32, #tpu.memory_space<vmem>>, vector<1x32x64xf32>
    %343 = vector.shape_cast %342 : vector<1x32x64xf32> to vector<32x64xf32>
    %cst_178 = arith.constant dense<0.000000e+00> : vector<10x64xf32>
    %344 = tpu.matmul %341, %343, %cst_178 {dimension_numbers = #tpu.dot_dimension_numbers<[1], [0], [0], [1], [0, 0, 1, 1], [], []>} : vector<10x32xf32>, vector<32x64xf32>, vector<10x64xf32> -> vector<10x64xf32>
    %c0_179 = arith.constant 0 : index
    %c0_180 = arith.constant 0 : index
    %c0_181 = arith.constant 0 : index
    %345 = vector.load %arg14[%c0_179, %c0_180, %c0_181] : memref<1x1x64xf32, #tpu.memory_space<vmem>>, vector<1x1x64xf32>
    %346 = vector.shape_cast %345 : vector<1x1x64xf32> to vector<1x64xf32>
    %347 = vector.broadcast %346 : vector<1x64xf32> to vector<10x64xf32>
    %348 = arith.addf %344, %347 : vector<10x64xf32>
    %c1_182 = arith.constant 1 : index
    %c0_183 = arith.constant 0 : index
    %c0_184 = arith.constant 0 : index
    %349 = vector.load %arg4[%c1_182, %c0_183, %c0_184] : memref<2x1x10xf32, #tpu.memory_space<vmem>>, vector<1x1x10xf32>
    %350 = vector.shape_cast %349 : vector<1x1x10xf32> to vector<1x10xf32>
    %351 = vector.extract_strided_slice %224 {offsets = [8, 0], sizes = [8, 8], strides = [1, 1]} : vector<16x32xf32> to vector<8x8xf32>
    %352 = vector.extract_strided_slice %348 {offsets = [0, 0], sizes = [10, 8], strides = [1, 1]} : vector<10x64xf32> to vector<10x8xf32>
    %353 = vector.extract_strided_slice %348 {offsets = [0, 32], sizes = [10, 8], strides = [1, 1]} : vector<10x64xf32> to vector<10x8xf32>
    %cst_185 = arith.constant dense<0.000000e+00> : vector<8x10xf32>
    %354 = tpu.matmul %351, %352, %cst_185 {dimension_numbers = #tpu.dot_dimension_numbers<[1], [1], [0], [0], [0, 0, 1, 0], [], []>} : vector<8x8xf32>, vector<10x8xf32>, vector<8x10xf32> -> vector<8x10xf32>
    %cst_186 = arith.constant 0.000000e+00 : f32
    %355 = vector.broadcast %cst_186 : f32 to vector<1x10xf32>
    %356 = arith.cmpf ogt, %350, %355 : vector<1x10xf32>
    %cst_187 = arith.constant 0.353553385 : f32
    %357 = vector.broadcast %cst_187 : f32 to vector<8x10xf32>
    %358 = arith.mulf %354, %357 : vector<8x10xf32>
    %cst_188 = arith.constant -1.000000e+10 : f32
    %359 = vector.shape_cast %356 : vector<1x10xi1> to vector<1x10xi1>
    %360 = vector.broadcast %359 : vector<1x10xi1> to vector<8x10xi1>
    %361 = vector.broadcast %cst_188 : f32 to vector<8x10xf32>
    %362 = arith.select %360, %358, %361 : vector<8x10xi1>, vector<8x10xf32>
    %cst_189 = arith.constant dense<0xFF800000> : vector<8xf32>
    %363 = vector.multi_reduction <maximumf>, %362, %cst_189 [1] : vector<8x10xf32> to vector<8xf32>
    %364 = vector.shape_cast %363 : vector<8xf32> to vector<8x1xf32>
    %365 = vector.broadcast %364 : vector<8x1xf32> to vector<8x10xf32>
    %366 = arith.subf %362, %365 : vector<8x10xf32>
    %367 = math.exp %366 : vector<8x10xf32>
    %cst_190 = arith.constant dense<0.000000e+00> : vector<8xf32>
    %368 = vector.multi_reduction <add>, %367, %cst_190 [1] : vector<8x10xf32> to vector<8xf32>
    %369 = vector.shape_cast %368 : vector<8xf32> to vector<8x1xf32>
    %370 = vector.broadcast %369 : vector<8x1xf32> to vector<8x10xf32>
    %371 = arith.divf %367, %370 : vector<8x10xf32>
    %c1_191 = arith.constant 1 : index
    %c0_192 = arith.constant 0 : index
    %c0_193 = arith.constant 0 : index
    %c0_194 = arith.constant 0 : index
    %372 = vector.load %arg28[%c1_191, %c0_192, %c0_193, %c0_194] : memref<2x4x8x10xf32, #tpu.memory_space<vmem>>, vector<1x1x8x10xf32>
    %373 = vector.shape_cast %372 : vector<1x1x8x10xf32> to vector<8x10xf32>
    %374 = vector.shape_cast %371 : vector<8x10xf32> to vector<1x1x8x10xf32>
    tpu.vector_store %arg28[%c1_191, %c0_192, %c0_193, %c0_194], %374 {strides = array<i32>} : memref<2x4x8x10xf32, #tpu.memory_space<vmem>>, vector<1x1x8x10xf32>,
    %cst_195 = arith.constant dense<0.000000e+00> : vector<8x8xf32>
    %375 = tpu.matmul %371, %353, %cst_195 {dimension_numbers = #tpu.dot_dimension_numbers<[1], [0], [0], [1], [0, 0, 1, 1], [], []>} : vector<8x10xf32>, vector<10x8xf32>, vector<8x8xf32> -> vector<8x8xf32>
    %c8_196 = arith.constant 8 : index
    %c0_197 = arith.constant 0 : index
    %376 = vector.load %arg30[%c8_196, %c0_197] : memref<16x32xf32, #tpu.memory_space<vmem>>, vector<8x8xf32>
    tpu.vector_store %arg30[%c8_196, %c0_197], %375 {strides = array<i32>} : memref<16x32xf32, #tpu.memory_space<vmem>>, vector<8x8xf32>,
    %377 = vector.extract_strided_slice %224 {offsets = [8, 8], sizes = [8, 8], strides = [1, 1]} : vector<16x32xf32> to vector<8x8xf32>
    %378 = vector.extract_strided_slice %348 {offsets = [0, 8], sizes = [10, 8], strides = [1, 1]} : vector<10x64xf32> to vector<10x8xf32>
    %379 = vector.extract_strided_slice %348 {offsets = [0, 40], sizes = [10, 8], strides = [1, 1]} : vector<10x64xf32> to vector<10x8xf32>
    %cst_198 = arith.constant dense<0.000000e+00> : vector<8x10xf32>
    %380 = tpu.matmul %377, %378, %cst_198 {dimension_numbers = #tpu.dot_dimension_numbers<[1], [1], [0], [0], [0, 0, 1, 0], [], []>} : vector<8x8xf32>, vector<10x8xf32>, vector<8x10xf32> -> vector<8x10xf32>
    %cst_199 = arith.constant 0.000000e+00 : f32
    %381 = vector.broadcast %cst_199 : f32 to vector<1x10xf32>
    %382 = arith.cmpf ogt, %350, %381 : vector<1x10xf32>
    %cst_200 = arith.constant 0.353553385 : f32
    %383 = vector.broadcast %cst_200 : f32 to vector<8x10xf32>
    %384 = arith.mulf %380, %383 : vector<8x10xf32>
    %cst_201 = arith.constant -1.000000e+10 : f32
    %385 = vector.shape_cast %382 : vector<1x10xi1> to vector<1x10xi1>
    %386 = vector.broadcast %385 : vector<1x10xi1> to vector<8x10xi1>
    %387 = vector.broadcast %cst_201 : f32 to vector<8x10xf32>
    %388 = arith.select %386, %384, %387 : vector<8x10xi1>, vector<8x10xf32>
    %cst_202 = arith.constant dense<0xFF800000> : vector<8xf32>
    %389 = vector.multi_reduction <maximumf>, %388, %cst_202 [1] : vector<8x10xf32> to vector<8xf32>
    %390 = vector.shape_cast %389 : vector<8xf32> to vector<8x1xf32>
    %391 = vector.broadcast %390 : vector<8x1xf32> to vector<8x10xf32>
    %392 = arith.subf %388, %391 : vector<8x10xf32>
    %393 = math.exp %392 : vector<8x10xf32>
    %cst_203 = arith.constant dense<0.000000e+00> : vector<8xf32>
    %394 = vector.multi_reduction <add>, %393, %cst_203 [1] : vector<8x10xf32> to vector<8xf32>
    %395 = vector.shape_cast %394 : vector<8xf32> to vector<8x1xf32>
    %396 = vector.broadcast %395 : vector<8x1xf32> to vector<8x10xf32>
    %397 = arith.divf %393, %396 : vector<8x10xf32>
    %c1_204 = arith.constant 1 : index
    %c1_205 = arith.constant 1 : index
    %c0_206 = arith.constant 0 : index
    %c0_207 = arith.constant 0 : index
    %398 = vector.load %arg28[%c1_204, %c1_205, %c0_206, %c0_207] : memref<2x4x8x10xf32, #tpu.memory_space<vmem>>, vector<1x1x8x10xf32>
    %399 = vector.shape_cast %398 : vector<1x1x8x10xf32> to vector<8x10xf32>
    %400 = vector.shape_cast %397 : vector<8x10xf32> to vector<1x1x8x10xf32>
    tpu.vector_store %arg28[%c1_204, %c1_205, %c0_206, %c0_207], %400 {strides = array<i32>} : memref<2x4x8x10xf32, #tpu.memory_space<vmem>>, vector<1x1x8x10xf32>,
    %cst_208 = arith.constant dense<0.000000e+00> : vector<8x8xf32>
    %401 = tpu.matmul %397, %379, %cst_208 {dimension_numbers = #tpu.dot_dimension_numbers<[1], [0], [0], [1], [0, 0, 1, 1], [], []>} : vector<8x10xf32>, vector<10x8xf32>, vector<8x8xf32> -> vector<8x8xf32>
    %c8_209 = arith.constant 8 : index
    %c8_210 = arith.constant 8 : index
    %402 = vector.load %arg30[%c8_209, %c8_210] : memref<16x32xf32, #tpu.memory_space<vmem>>, vector<8x8xf32>
    tpu.vector_store %arg30[%c8_209, %c8_210], %401 {strides = array<i32>} : memref<16x32xf32, #tpu.memory_space<vmem>>, vector<8x8xf32>,
    %403 = vector.extract_strided_slice %224 {offsets = [8, 16], sizes = [8, 8], strides = [1, 1]} : vector<16x32xf32> to vector<8x8xf32>
    %404 = vector.extract_strided_slice %348 {offsets = [0, 16], sizes = [10, 8], strides = [1, 1]} : vector<10x64xf32> to vector<10x8xf32>
    %405 = vector.extract_strided_slice %348 {offsets = [0, 48], sizes = [10, 8], strides = [1, 1]} : vector<10x64xf32> to vector<10x8xf32>
    %cst_211 = arith.constant dense<0.000000e+00> : vector<8x10xf32>
    %406 = tpu.matmul %403, %404, %cst_211 {dimension_numbers = #tpu.dot_dimension_numbers<[1], [1], [0], [0], [0, 0, 1, 0], [], []>} : vector<8x8xf32>, vector<10x8xf32>, vector<8x10xf32> -> vector<8x10xf32>
    %cst_212 = arith.constant 0.000000e+00 : f32
    %407 = vector.broadcast %cst_212 : f32 to vector<1x10xf32>
    %408 = arith.cmpf ogt, %350, %407 : vector<1x10xf32>
    %cst_213 = arith.constant 0.353553385 : f32
    %409 = vector.broadcast %cst_213 : f32 to vector<8x10xf32>
    %410 = arith.mulf %406, %409 : vector<8x10xf32>
    %cst_214 = arith.constant -1.000000e+10 : f32
    %411 = vector.shape_cast %408 : vector<1x10xi1> to vector<1x10xi1>
    %412 = vector.broadcast %411 : vector<1x10xi1> to vector<8x10xi1>
    %413 = vector.broadcast %cst_214 : f32 to vector<8x10xf32>
    %414 = arith.select %412, %410, %413 : vector<8x10xi1>, vector<8x10xf32>
    %cst_215 = arith.constant dense<0xFF800000> : vector<8xf32>
    %415 = vector.multi_reduction <maximumf>, %414, %cst_215 [1] : vector<8x10xf32> to vector<8xf32>
    %416 = vector.shape_cast %415 : vector<8xf32> to vector<8x1xf32>
    %417 = vector.broadcast %416 : vector<8x1xf32> to vector<8x10xf32>
    %418 = arith.subf %414, %417 : vector<8x10xf32>
    %419 = math.exp %418 : vector<8x10xf32>
    %cst_216 = arith.constant dense<0.000000e+00> : vector<8xf32>
    %420 = vector.multi_reduction <add>, %419, %cst_216 [1] : vector<8x10xf32> to vector<8xf32>
    %421 = vector.shape_cast %420 : vector<8xf32> to vector<8x1xf32>
    %422 = vector.broadcast %421 : vector<8x1xf32> to vector<8x10xf32>
    %423 = arith.divf %419, %422 : vector<8x10xf32>
    %c1_217 = arith.constant 1 : index
    %c2_218 = arith.constant 2 : index
    %c0_219 = arith.constant 0 : index
    %c0_220 = arith.constant 0 : index
    %424 = vector.load %arg28[%c1_217, %c2_218, %c0_219, %c0_220] : memref<2x4x8x10xf32, #tpu.memory_space<vmem>>, vector<1x1x8x10xf32>
    %425 = vector.shape_cast %424 : vector<1x1x8x10xf32> to vector<8x10xf32>
    %426 = vector.shape_cast %423 : vector<8x10xf32> to vector<1x1x8x10xf32>
    tpu.vector_store %arg28[%c1_217, %c2_218, %c0_219, %c0_220], %426 {strides = array<i32>} : memref<2x4x8x10xf32, #tpu.memory_space<vmem>>, vector<1x1x8x10xf32>,
    %cst_221 = arith.constant dense<0.000000e+00> : vector<8x8xf32>
    %427 = tpu.matmul %423, %405, %cst_221 {dimension_numbers = #tpu.dot_dimension_numbers<[1], [0], [0], [1], [0, 0, 1, 1], [], []>} : vector<8x10xf32>, vector<10x8xf32>, vector<8x8xf32> -> vector<8x8xf32>
    %c8_222 = arith.constant 8 : index
    %c16_223 = arith.constant 16 : index
    %428 = vector.load %arg30[%c8_222, %c16_223] : memref<16x32xf32, #tpu.memory_space<vmem>>, vector<8x8xf32>
    tpu.vector_store %arg30[%c8_222, %c16_223], %427 {strides = array<i32>} : memref<16x32xf32, #tpu.memory_space<vmem>>, vector<8x8xf32>,
    %429 = vector.extract_strided_slice %224 {offsets = [8, 24], sizes = [8, 8], strides = [1, 1]} : vector<16x32xf32> to vector<8x8xf32>
    %430 = vector.extract_strided_slice %348 {offsets = [0, 24], sizes = [10, 8], strides = [1, 1]} : vector<10x64xf32> to vector<10x8xf32>
    %431 = vector.extract_strided_slice %348 {offsets = [0, 56], sizes = [10, 8], strides = [1, 1]} : vector<10x64xf32> to vector<10x8xf32>
    %cst_224 = arith.constant dense<0.000000e+00> : vector<8x10xf32>
    %432 = tpu.matmul %429, %430, %cst_224 {dimension_numbers = #tpu.dot_dimension_numbers<[1], [1], [0], [0], [0, 0, 1, 0], [], []>} : vector<8x8xf32>, vector<10x8xf32>, vector<8x10xf32> -> vector<8x10xf32>
    %cst_225 = arith.constant 0.000000e+00 : f32
    %433 = vector.broadcast %cst_225 : f32 to vector<1x10xf32>
    %434 = arith.cmpf ogt, %350, %433 : vector<1x10xf32>
    %cst_226 = arith.constant 0.353553385 : f32
    %435 = vector.broadcast %cst_226 : f32 to vector<8x10xf32>
    %436 = arith.mulf %432, %435 : vector<8x10xf32>
    %cst_227 = arith.constant -1.000000e+10 : f32
    %437 = vector.shape_cast %434 : vector<1x10xi1> to vector<1x10xi1>
    %438 = vector.broadcast %437 : vector<1x10xi1> to vector<8x10xi1>
    %439 = vector.broadcast %cst_227 : f32 to vector<8x10xf32>
    %440 = arith.select %438, %436, %439 : vector<8x10xi1>, vector<8x10xf32>
    %cst_228 = arith.constant dense<0xFF800000> : vector<8xf32>
    %441 = vector.multi_reduction <maximumf>, %440, %cst_228 [1] : vector<8x10xf32> to vector<8xf32>
    %442 = vector.shape_cast %441 : vector<8xf32> to vector<8x1xf32>
    %443 = vector.broadcast %442 : vector<8x1xf32> to vector<8x10xf32>
    %444 = arith.subf %440, %443 : vector<8x10xf32>
    %445 = math.exp %444 : vector<8x10xf32>
    %cst_229 = arith.constant dense<0.000000e+00> : vector<8xf32>
    %446 = vector.multi_reduction <add>, %445, %cst_229 [1] : vector<8x10xf32> to vector<8xf32>
    %447 = vector.shape_cast %446 : vector<8xf32> to vector<8x1xf32>
    %448 = vector.broadcast %447 : vector<8x1xf32> to vector<8x10xf32>
    %449 = arith.divf %445, %448 : vector<8x10xf32>
    %c1_230 = arith.constant 1 : index
    %c3_231 = arith.constant 3 : index
    %c0_232 = arith.constant 0 : index
    %c0_233 = arith.constant 0 : index
    %450 = vector.load %arg28[%c1_230, %c3_231, %c0_232, %c0_233] : memref<2x4x8x10xf32, #tpu.memory_space<vmem>>, vector<1x1x8x10xf32>
    %451 = vector.shape_cast %450 : vector<1x1x8x10xf32> to vector<8x10xf32>
    %452 = vector.shape_cast %449 : vector<8x10xf32> to vector<1x1x8x10xf32>
    tpu.vector_store %arg28[%c1_230, %c3_231, %c0_232, %c0_233], %452 {strides = array<i32>} : memref<2x4x8x10xf32, #tpu.memory_space<vmem>>, vector<1x1x8x10xf32>,
    %cst_234 = arith.constant dense<0.000000e+00> : vector<8x8xf32>
    %453 = tpu.matmul %449, %431, %cst_234 {dimension_numbers = #tpu.dot_dimension_numbers<[1], [0], [0], [1], [0, 0, 1, 1], [], []>} : vector<8x10xf32>, vector<10x8xf32>, vector<8x8xf32> -> vector<8x8xf32>
    %c8_235 = arith.constant 8 : index
    %c24_236 = arith.constant 24 : index
    %454 = vector.load %arg30[%c8_235, %c24_236] : memref<16x32xf32, #tpu.memory_space<vmem>>, vector<8x8xf32>
    tpu.vector_store %arg30[%c8_235, %c24_236], %453 {strides = array<i32>} : memref<16x32xf32, #tpu.memory_space<vmem>>, vector<8x8xf32>,
    %c0_237 = arith.constant 0 : index
    %c0_238 = arith.constant 0 : index
    %455 = vector.load %arg30[%c0_237, %c0_238] : memref<16x32xf32, #tpu.memory_space<vmem>>, vector<16x32xf32>
    %c0_239 = arith.constant 0 : index
    %c0_240 = arith.constant 0 : index
    %c0_241 = arith.constant 0 : index
    %456 = vector.load %arg15[%c0_239, %c0_240, %c0_241] : memref<1x32x32xf32, #tpu.memory_space<vmem>>, vector<1x32x32xf32>
    %457 = vector.shape_cast %456 : vector<1x32x32xf32> to vector<32x32xf32>
    %cst_242 = arith.constant dense<0.000000e+00> : vector<16x32xf32>
    %458 = tpu.matmul %455, %457, %cst_242 {dimension_numbers = #tpu.dot_dimension_numbers<[1], [0], [0], [1], [0, 0, 1, 1], [], []>} : vector<16x32xf32>, vector<32x32xf32>, vector<16x32xf32> -> vector<16x32xf32>
    %c0_243 = arith.constant 0 : index
    %c0_244 = arith.constant 0 : index
    %c0_245 = arith.constant 0 : index
    %459 = vector.load %arg16[%c0_243, %c0_244, %c0_245] : memref<1x1x32xf32, #tpu.memory_space<vmem>>, vector<1x1x32xf32>
    %460 = vector.shape_cast %459 : vector<1x1x32xf32> to vector<1x32xf32>
    %461 = vector.broadcast %460 : vector<1x32xf32> to vector<16x32xf32>
    %462 = arith.addf %458, %461 : vector<16x32xf32>
    %463 = arith.addf %217, %462 : vector<16x32xf32>
    %c0_246 = arith.constant 0 : index
    %c0_247 = arith.constant 0 : index
    %c0_248 = arith.constant 0 : index
    %464 = vector.load %arg17[%c0_246, %c0_247, %c0_248] : memref<1x1x32xf32, #tpu.memory_space<vmem>>, vector<1x1x32xf32>
    %465 = vector.shape_cast %464 : vector<1x1x32xf32> to vector<1x32xf32>
    %c0_249 = arith.constant 0 : index
    %c0_250 = arith.constant 0 : index
    %c0_251 = arith.constant 0 : index
    %466 = vector.load %arg18[%c0_249, %c0_250, %c0_251] : memref<1x1x32xf32, #tpu.memory_space<vmem>>, vector<1x1x32xf32>
    %467 = vector.shape_cast %466 : vector<1x1x32xf32> to vector<1x32xf32>
    %cst_252 = arith.constant dense<0.000000e+00> : vector<16xf32>
    %468 = vector.multi_reduction <add>, %463, %cst_252 [1] : vector<16x32xf32> to vector<16xf32>
    %469 = vector.shape_cast %468 : vector<16xf32> to vector<16x1xf32>
    %cst_253 = arith.constant 3.200000e+01 : f32
    %470 = vector.broadcast %cst_253 : f32 to vector<16x1xf32>
    %471 = arith.divf %469, %470 : vector<16x1xf32>
    %472 = vector.broadcast %471 : vector<16x1xf32> to vector<16x32xf32>
    %473 = arith.subf %463, %472 : vector<16x32xf32>
    %474 = arith.mulf %473, %473 : vector<16x32xf32>
    %cst_254 = arith.constant dense<0.000000e+00> : vector<16xf32>
    %475 = vector.multi_reduction <add>, %474, %cst_254 [1] : vector<16x32xf32> to vector<16xf32>
    %476 = vector.shape_cast %475 : vector<16xf32> to vector<16x1xf32>
    %cst_255 = arith.constant 3.200000e+01 : f32
    %477 = vector.broadcast %cst_255 : f32 to vector<16x1xf32>
    %478 = arith.divf %476, %477 : vector<16x1xf32>
    %479 = vector.broadcast %471 : vector<16x1xf32> to vector<16x32xf32>
    %480 = arith.subf %463, %479 : vector<16x32xf32>
    %cst_256 = arith.constant 9.99999974E-6 : f32
    %481 = vector.broadcast %cst_256 : f32 to vector<16x1xf32>
    %482 = arith.addf %478, %481 : vector<16x1xf32>
    %483 = math.rsqrt %482 : vector<16x1xf32>
    %484 = vector.broadcast %483 : vector<16x1xf32> to vector<16x32xf32>
    %485 = arith.mulf %480, %484 : vector<16x32xf32>
    %486 = vector.broadcast %465 : vector<1x32xf32> to vector<16x32xf32>
    %487 = arith.mulf %485, %486 : vector<16x32xf32>
    %488 = vector.broadcast %467 : vector<1x32xf32> to vector<16x32xf32>
    %489 = arith.addf %487, %488 : vector<16x32xf32>
    %c0_257 = arith.constant 0 : index
    %c0_258 = arith.constant 0 : index
    %c0_259 = arith.constant 0 : index
    %490 = vector.load %arg19[%c0_257, %c0_258, %c0_259] : memref<1x32x64xf32, #tpu.memory_space<vmem>>, vector<1x32x64xf32>
    %491 = vector.shape_cast %490 : vector<1x32x64xf32> to vector<32x64xf32>
    %cst_260 = arith.constant dense<0.000000e+00> : vector<16x64xf32>
    %492 = tpu.matmul %489, %491, %cst_260 {dimension_numbers = #tpu.dot_dimension_numbers<[1], [0], [0], [1], [0, 0, 1, 1], [], []>} : vector<16x32xf32>, vector<32x64xf32>, vector<16x64xf32> -> vector<16x64xf32>
    %c0_261 = arith.constant 0 : index
    %c0_262 = arith.constant 0 : index
    %c0_263 = arith.constant 0 : index
    %493 = vector.load %arg20[%c0_261, %c0_262, %c0_263] : memref<1x1x64xf32, #tpu.memory_space<vmem>>, vector<1x1x64xf32>
    %494 = vector.shape_cast %493 : vector<1x1x64xf32> to vector<1x64xf32>
    %495 = vector.broadcast %494 : vector<1x64xf32> to vector<16x64xf32>
    %496 = arith.addf %492, %495 : vector<16x64xf32>
    %cst_264 = arith.constant 0.000000e+00 : f32
    %497 = vector.broadcast %cst_264 : f32 to vector<16x64xf32>
    %498 = arith.maximumf %496, %497 : vector<16x64xf32>
    %c0_265 = arith.constant 0 : index
    %c0_266 = arith.constant 0 : index
    %c0_267 = arith.constant 0 : index
    %499 = vector.load %arg21[%c0_265, %c0_266, %c0_267] : memref<1x64x32xf32, #tpu.memory_space<vmem>>, vector<1x64x32xf32>
    %500 = vector.shape_cast %499 : vector<1x64x32xf32> to vector<64x32xf32>
    %cst_268 = arith.constant dense<0.000000e+00> : vector<16x32xf32>
    %501 = tpu.matmul %498, %500, %cst_268 {dimension_numbers = #tpu.dot_dimension_numbers<[1], [0], [0], [1], [0, 0, 1, 1], [], []>} : vector<16x64xf32>, vector<64x32xf32>, vector<16x32xf32> -> vector<16x32xf32>
    %c0_269 = arith.constant 0 : index
    %c0_270 = arith.constant 0 : index
    %c0_271 = arith.constant 0 : index
    %502 = vector.load %arg22[%c0_269, %c0_270, %c0_271] : memref<1x1x32xf32, #tpu.memory_space<vmem>>, vector<1x1x32xf32>
    %503 = vector.shape_cast %502 : vector<1x1x32xf32> to vector<1x32xf32>
    %504 = vector.broadcast %503 : vector<1x32xf32> to vector<16x32xf32>
    %505 = arith.addf %501, %504 : vector<16x32xf32>
    %506 = arith.addf %489, %505 : vector<16x32xf32>
    %c0_272 = arith.constant 0 : index
    %c0_273 = arith.constant 0 : index
    %c0_274 = arith.constant 0 : index
    %507 = vector.load %arg23[%c0_272, %c0_273, %c0_274] : memref<1x1x32xf32, #tpu.memory_space<vmem>>, vector<1x1x32xf32>
    %508 = vector.shape_cast %507 : vector<1x1x32xf32> to vector<1x32xf32>
    %c0_275 = arith.constant 0 : index
    %c0_276 = arith.constant 0 : index
    %c0_277 = arith.constant 0 : index
    %509 = vector.load %arg24[%c0_275, %c0_276, %c0_277] : memref<1x1x32xf32, #tpu.memory_space<vmem>>, vector<1x1x32xf32>
    %510 = vector.shape_cast %509 : vector<1x1x32xf32> to vector<1x32xf32>
    %cst_278 = arith.constant dense<0.000000e+00> : vector<16xf32>
    %511 = vector.multi_reduction <add>, %506, %cst_278 [1] : vector<16x32xf32> to vector<16xf32>
    %512 = vector.shape_cast %511 : vector<16xf32> to vector<16x1xf32>
    %cst_279 = arith.constant 3.200000e+01 : f32
    %513 = vector.broadcast %cst_279 : f32 to vector<16x1xf32>
    %514 = arith.divf %512, %513 : vector<16x1xf32>
    %515 = vector.broadcast %514 : vector<16x1xf32> to vector<16x32xf32>
    %516 = arith.subf %506, %515 : vector<16x32xf32>
    %517 = arith.mulf %516, %516 : vector<16x32xf32>
    %cst_280 = arith.constant dense<0.000000e+00> : vector<16xf32>
    %518 = vector.multi_reduction <add>, %517, %cst_280 [1] : vector<16x32xf32> to vector<16xf32>
    %519 = vector.shape_cast %518 : vector<16xf32> to vector<16x1xf32>
    %cst_281 = arith.constant 3.200000e+01 : f32
    %520 = vector.broadcast %cst_281 : f32 to vector<16x1xf32>
    %521 = arith.divf %519, %520 : vector<16x1xf32>
    %522 = vector.broadcast %514 : vector<16x1xf32> to vector<16x32xf32>
    %523 = arith.subf %506, %522 : vector<16x32xf32>
    %cst_282 = arith.constant 9.99999974E-6 : f32
    %524 = vector.broadcast %cst_282 : f32 to vector<16x1xf32>
    %525 = arith.addf %521, %524 : vector<16x1xf32>
    %526 = math.rsqrt %525 : vector<16x1xf32>
    %527 = vector.broadcast %526 : vector<16x1xf32> to vector<16x32xf32>
    %528 = arith.mulf %523, %527 : vector<16x32xf32>
    %529 = vector.broadcast %508 : vector<1x32xf32> to vector<16x32xf32>
    %530 = arith.mulf %528, %529 : vector<16x32xf32>
    %531 = vector.broadcast %510 : vector<1x32xf32> to vector<16x32xf32>
    %532 = arith.addf %530, %531 : vector<16x32xf32>
    %c0_283 = arith.constant 0 : index
    %c0_284 = arith.constant 0 : index
    %533 = vector.load %arg29[%c0_283, %c0_284] : memref<16x32xf32, #tpu.memory_space<vmem>>, vector<16x32xf32>
    tpu.vector_store %arg29[%c0_283, %c0_284], %532 {strides = array<i32>} : memref<16x32xf32, #tpu.memory_space<vmem>>, vector<16x32xf32>,
    %c1_i32 = arith.constant 1 : i32
    %534 = arith.cmpi eq, %arg0, %c1_i32 : i32
    %535 = arith.extui %534 : i1 to i32
    %c0_i32_285 = arith.constant 0 : i32
    %536 = arith.cmpi ne, %535, %c0_i32_285 : i32
    scf.if %536 {
      %c0_286 = arith.constant 0 : index
      %c0_287 = arith.constant 0 : index
      %537 = vector.load %arg25[%c0_286, %c0_287] : memref<32x128xf32, #tpu.memory_space<vmem>>, vector<32x128xf32>
      %cst_288 = arith.constant dense<0.000000e+00> : vector<16x128xf32>
      %538 = tpu.matmul %532, %537, %cst_288 {dimension_numbers = #tpu.dot_dimension_numbers<[1], [0], [0], [1], [0, 0, 1, 1], [], []>} : vector<16x32xf32>, vector<32x128xf32>, vector<16x128xf32> -> vector<16x128xf32>
      %c0_289 = arith.constant 0 : index
      %c0_290 = arith.constant 0 : index
      %539 = vector.load %arg26[%c0_289, %c0_290] : memref<1x128xf32, #tpu.memory_space<vmem>>, vector<1x128xf32>
      %540 = vector.broadcast %539 : vector<1x128xf32> to vector<16x128xf32>
      %541 = arith.addf %538, %540 : vector<16x128xf32>
      %c0_291 = arith.constant 0 : index
      %c0_292 = arith.constant 0 : index
      %542 = vector.load %arg27[%c0_291, %c0_292] : memref<16x128xf32, #tpu.memory_space<vmem>>, vector<16x128xf32>
      tpu.vector_store %arg27[%c0_291, %c0_292], %541 {strides = array<i32>} : memref<16x128xf32, #tpu.memory_space<vmem>>, vector<16x128xf32>,
    } else {
    }
    return
  }
  func.func @transform_0(%arg0: i32) -> (i32, i32) {
    %c0_i32 = arith.constant 0 : i32
    %c0_i32_0 = arith.constant 0 : i32
    %c0_i32_1 = arith.constant 0 : i32
    return %c0_i32, %c0_i32_0 : i32, i32
  }
  func.func @transform_1(%arg0: i32) -> (i32, i32, i32) {
    %c0_i32 = arith.constant 0 : i32
    %c0_i32_0 = arith.constant 0 : i32
    %c0_i32_1 = arith.constant 0 : i32
    %c0_i32_2 = arith.constant 0 : i32
    return %c0_i32, %c0_i32_0, %c0_i32_1 : i32, i32, i32
  }
  func.func @transform_2(%arg0: i32) -> (i32, i32, i32) {
    %c0_i32 = arith.constant 0 : i32
    %c0_i32_0 = arith.constant 0 : i32
    %c0_i32_1 = arith.constant 0 : i32
    %c0_i32_2 = arith.constant 0 : i32
    return %c0_i32, %c0_i32_0, %c0_i32_1 : i32, i32, i32
  }
  func.func @transform_3(%arg0: i32) -> (i32, i32, i32) {
    %c0_i32 = arith.constant 0 : i32
    %c0_i32_0 = arith.constant 0 : i32
    %c0_i32_1 = arith.constant 0 : i32
    %c0_i32_2 = arith.constant 0 : i32
    return %c0_i32, %c0_i32_0, %c0_i32_1 : i32, i32, i32
  }
  func.func @transform_4(%arg0: i32) -> (i32, i32, i32) {
    %c0_i32 = arith.constant 0 : i32
    %c0_i32_0 = arith.constant 0 : i32
    %c0_i32_1 = arith.constant 0 : i32
    return %arg0, %c0_i32, %c0_i32_0 : i32, i32, i32
  }
  func.func @transform_5(%arg0: i32) -> (i32, i32, i32) {
    %c0_i32 = arith.constant 0 : i32
    %c0_i32_0 = arith.constant 0 : i32
    %c0_i32_1 = arith.constant 0 : i32
    return %arg0, %c0_i32, %c0_i32_0 : i32, i32, i32
  }
  func.func @transform_6(%arg0: i32) -> (i32, i32, i32) {
    %c0_i32 = arith.constant 0 : i32
    %c0_i32_0 = arith.constant 0 : i32
    %c0_i32_1 = arith.constant 0 : i32
    return %arg0, %c0_i32, %c0_i32_0 : i32, i32, i32
  }
  func.func @transform_7(%arg0: i32) -> (i32, i32, i32) {
    %c0_i32 = arith.constant 0 : i32
    %c0_i32_0 = arith.constant 0 : i32
    %c0_i32_1 = arith.constant 0 : i32
    return %arg0, %c0_i32, %c0_i32_0 : i32, i32, i32
  }
  func.func @transform_8(%arg0: i32) -> (i32, i32, i32) {
    %c0_i32 = arith.constant 0 : i32
    %c0_i32_0 = arith.constant 0 : i32
    %c0_i32_1 = arith.constant 0 : i32
    return %arg0, %c0_i32, %c0_i32_0 : i32, i32, i32
  }
  func.func @transform_9(%arg0: i32) -> (i32, i32, i32) {
    %c0_i32 = arith.constant 0 : i32
    %c0_i32_0 = arith.constant 0 : i32
    %c0_i32_1 = arith.constant 0 : i32
    return %arg0, %c0_i32, %c0_i32_0 : i32, i32, i32
  }
  func.func @transform_10(%arg0: i32) -> (i32, i32, i32) {
    %c0_i32 = arith.constant 0 : i32
    %c0_i32_0 = arith.constant 0 : i32
    %c0_i32_1 = arith.constant 0 : i32
    return %arg0, %c0_i32, %c0_i32_0 : i32, i32, i32
  }
  func.func @transform_11(%arg0: i32) -> (i32, i32, i32) {
    %c0_i32 = arith.constant 0 : i32
    %c0_i32_0 = arith.constant 0 : i32
    %c0_i32_1 = arith.constant 0 : i32
    return %arg0, %c0_i32, %c0_i32_0 : i32, i32, i32
  }
  func.func @transform_12(%arg0: i32) -> (i32, i32, i32) {
    %c0_i32 = arith.constant 0 : i32
    %c0_i32_0 = arith.constant 0 : i32
    %c0_i32_1 = arith.constant 0 : i32
    return %arg0, %c0_i32, %c0_i32_0 : i32, i32, i32
  }
  func.func @transform_13(%arg0: i32) -> (i32, i32, i32) {
    %c0_i32 = arith.constant 0 : i32
    %c0_i32_0 = arith.constant 0 : i32
    %c0_i32_1 = arith.constant 0 : i32
    return %arg0, %c0_i32, %c0_i32_0 : i32, i32, i32
  }
  func.func @transform_14(%arg0: i32) -> (i32, i32, i32) {
    %c0_i32 = arith.constant 0 : i32
    %c0_i32_0 = arith.constant 0 : i32
    %c0_i32_1 = arith.constant 0 : i32
    return %arg0, %c0_i32, %c0_i32_0 : i32, i32, i32
  }
  func.func @transform_15(%arg0: i32) -> (i32, i32, i32) {
    %c0_i32 = arith.constant 0 : i32
    %c0_i32_0 = arith.constant 0 : i32
    %c0_i32_1 = arith.constant 0 : i32
    return %arg0, %c0_i32, %c0_i32_0 : i32, i32, i32
  }
  func.func @transform_16(%arg0: i32) -> (i32, i32, i32) {
    %c0_i32 = arith.constant 0 : i32
    %c0_i32_0 = arith.constant 0 : i32
    %c0_i32_1 = arith.constant 0 : i32
    return %arg0, %c0_i32, %c0_i32_0 : i32, i32, i32
  }
  func.func @transform_17(%arg0: i32) -> (i32, i32, i32) {
    %c0_i32 = arith.constant 0 : i32
    %c0_i32_0 = arith.constant 0 : i32
    %c0_i32_1 = arith.constant 0 : i32
    return %arg0, %c0_i32, %c0_i32_0 : i32, i32, i32
  }
  func.func @transform_18(%arg0: i32) -> (i32, i32, i32) {
    %c0_i32 = arith.constant 0 : i32
    %c0_i32_0 = arith.constant 0 : i32
    %c0_i32_1 = arith.constant 0 : i32
    return %arg0, %c0_i32, %c0_i32_0 : i32, i32, i32
  }
  func.func @transform_19(%arg0: i32) -> (i32, i32, i32) {
    %c0_i32 = arith.constant 0 : i32
    %c0_i32_0 = arith.constant 0 : i32
    %c0_i32_1 = arith.constant 0 : i32
    return %arg0, %c0_i32, %c0_i32_0 : i32, i32, i32
  }
  func.func @transform_20(%arg0: i32) -> (i32, i32, i32) {
    %c0_i32 = arith.constant 0 : i32
    %c0_i32_0 = arith.constant 0 : i32
    %c0_i32_1 = arith.constant 0 : i32
    return %arg0, %c0_i32, %c0_i32_0 : i32, i32, i32
  }
  func.func @transform_21(%arg0: i32) -> (i32, i32, i32) {
    %c0_i32 = arith.constant 0 : i32
    %c0_i32_0 = arith.constant 0 : i32
    %c0_i32_1 = arith.constant 0 : i32
    return %arg0, %c0_i32, %c0_i32_0 : i32, i32, i32
  }
  func.func @transform_22(%arg0: i32) -> (i32, i32, i32) {
    %c0_i32 = arith.constant 0 : i32
    %c0_i32_0 = arith.constant 0 : i32
    %c0_i32_1 = arith.constant 0 : i32
    return %arg0, %c0_i32, %c0_i32_0 : i32, i32, i32
  }
  func.func @transform_23(%arg0: i32) -> (i32, i32, i32) {
    %c0_i32 = arith.constant 0 : i32
    %c0_i32_0 = arith.constant 0 : i32
    %c0_i32_1 = arith.constant 0 : i32
    return %arg0, %c0_i32, %c0_i32_0 : i32, i32, i32
  }
  func.func @transform_24(%arg0: i32) -> (i32, i32) {
    %c0_i32 = arith.constant 0 : i32
    %c0_i32_0 = arith.constant 0 : i32
    %c0_i32_1 = arith.constant 0 : i32
    return %c0_i32, %c0_i32_0 : i32, i32
  }
  func.func @transform_25(%arg0: i32) -> (i32, i32) {
    %c0_i32 = arith.constant 0 : i32
    %c0_i32_0 = arith.constant 0 : i32
    %c0_i32_1 = arith.constant 0 : i32
    return %c0_i32, %c0_i32_0 : i32, i32
  }
  func.func @transform_26(%arg0: i32) -> (i32, i32) {
    %c0_i32 = arith.constant 0 : i32
    %c0_i32_0 = arith.constant 0 : i32
    %c0_i32_1 = arith.constant 0 : i32
    return %c0_i32, %c0_i32_0 : i32, i32
  }
  func.func @transform_27(%arg0: i32) -> (i32, i32, i32, i32) {
    %c0_i32 = arith.constant 0 : i32
    %c0_i32_0 = arith.constant 0 : i32
    %c0_i32_1 = arith.constant 0 : i32
    %c0_i32_2 = arith.constant 0 : i32
    %c0_i32_3 = arith.constant 0 : i32
    return %c0_i32, %c0_i32_0, %c0_i32_1, %c0_i32_2 : i32, i32, i32, i32
  }
}

</mosaic_0001>

<llo_original>
// kernel: tpu_custom_call.1
$region0: #{tpu_custom_call.1}
  #allocation0 [shape = 'u32[]', space=smem, size = 0x4, offset = 0x4, fixed_abs, tag = 'smem constant byte address 0x4 - core index']
  #allocation1 [shape = 'u32[144,128]{1,0:T(1,128)}', space=vmem, size = 0x12000, scoped, tag = 'internal scratch']
  #allocation2 [shape = 'f32[16,32]{1,0:T(8,128)}', space=vmem, size = 0x2000, scoped, tag = 'scratch operand']
  #allocation3 [shape = 'f32[16,32]{1,0:T(8,128)}', space=vmem, size = 0x2000, scoped, tag = 'scratch operand']
  %s0 = inlined_call_operand.vmem [shape: f32[16,32], index: 0, kind: input, shape index: {}]
  %s1 = inlined_call_operand.vmem [shape: f32[2,10,32], index: 1, kind: input, shape index: {}]
  %s2 = inlined_call_operand.hbm [shape: f32[2,8,8], index: 2, kind: input, shape index: {}]
  %s3 = inlined_call_operand.vmem [shape: f32[2,1,10], index: 3, kind: input, shape index: {}]
  %s4 = inlined_call_operand.vmem [shape: f32[2,32,96], index: 4, kind: input, shape index: {}]
  %s5 = inlined_call_operand.vmem [shape: f32[2,1,96], index: 5, kind: input, shape index: {}]
  %s6 = inlined_call_operand.vmem [shape: f32[2,32,32], index: 6, kind: input, shape index: {}]
  %s7 = inlined_call_operand.vmem [shape: f32[2,1,32], index: 7, kind: input, shape index: {}]
  %s8 = inlined_call_operand.vmem [shape: f32[2,1,32], index: 8, kind: input, shape index: {}]
  %s9 = inlined_call_operand.vmem [shape: f32[2,1,32], index: 9, kind: input, shape index: {}]
  %s10 = inlined_call_operand.vmem [shape: f32[2,32,32], index: 10, kind: input, shape index: {}]
  %s11 = inlined_call_operand.vmem [shape: f32[2,1,32], index: 11, kind: input, shape index: {}]
  %s12 = inlined_call_operand.hbm [shape: f32[2,32,64], index: 12, kind: input, shape index: {}]
  %s13 = inlined_call_operand.vmem [shape: f32[2,1,64], index: 13, kind: input, shape index: {}]
  %s14 = inlined_call_operand.hbm [shape: f32[2,32,32], index: 14, kind: input, shape index: {}]
  %s15 = inlined_call_operand.hbm [shape: f32[2,1,32], index: 15, kind: input, shape index: {}]
  %s16 = inlined_call_operand.hbm [shape: f32[2,1,32], index: 16, kind: input, shape index: {}]
  %s17 = inlined_call_operand.hbm [shape: f32[2,1,32], index: 17, kind: input, shape index: {}]
  %s18 = inlined_call_operand.hbm [shape: f32[2,32,64], index: 18, kind: input, shape index: {}]
  %s19 = inlined_call_operand.hbm [shape: f32[2,1,64], index: 19, kind: input, shape index: {}]
  %s20 = inlined_call_operand.vmem [shape: f32[2,64,32], index: 20, kind: input, shape index: {}]
  %s21 = inlined_call_operand.vmem [shape: f32[2,1,32], index: 21, kind: input, shape index: {}]
  %s22 = inlined_call_operand.vmem [shape: f32[2,1,32], index: 22, kind: input, shape index: {}]
  %s23 = inlined_call_operand.vmem [shape: f32[2,1,32], index: 23, kind: input, shape index: {}]
  %s24 = inlined_call_operand.vmem [shape: f32[32,128], index: 24, kind: input, shape index: {}]
  %s25 = inlined_call_operand.vmem [shape: f32[1,128], index: 25, kind: input, shape index: {}]
  %s26 = inlined_call_operand.hbm [shape: f32[16,128], index: 26, kind: output, shape index: {0}]
  %s27 = inlined_call_operand.hbm [shape: f32[2,4,8,10], index: 27, kind: output, shape index: {1}]
  %28 = xla_tuple %s26, %s27
  %s29 = sld [smem:[#allocation0]]
  $region185: #{tpu_custom_call.1} parent=0
    _
  %s31 = ssub.s32 1, %s29
  %s32 = scalar_select 0, %s31, %s29
  $region1: #{tpu_custom_call.1} parent=0
    #allocation4 [shape = 'u8[8192]{0}', space=vmem, size = 0x2000, scoped, tag = 'input window, operand 2, single buffered']
    #allocation5 [shape = 's32[2]{0}', space=sflag, size = 0x8, scoped, tag = 'scoped memory for tpu_custom_call.1']
    #allocation6 [shape = 's32[2]{0}', space=sflag, size = 0x8, scoped, tag = 'scoped memory for tpu_custom_call.1']
    #allocation7 [shape = 'u8[32768]{0}', space=vmem, size = 0x8000, scoped, tag = 'input window, operand 12']
    #allocation8 [shape = 's32[2]{0}', space=sflag, size = 0x8, scoped, tag = 'scoped memory for tpu_custom_call.1']
    #allocation9 [shape = 'u8[32768]{0}', space=vmem, size = 0x8000, scoped, tag = 'input window, operand 14']
    #allocation10 [shape = 'u8[1024]{0}', space=vmem, size = 0x400, scoped, tag = 'input window, operand 15']
    #allocation11 [shape = 's32[2]{0}', space=sflag, size = 0x8, scoped, tag = 'scoped memory for tpu_custom_call.1']
    #allocation12 [shape = 'u8[1024]{0}', space=vmem, size = 0x400, scoped, tag = 'input window, operand 16']
    #allocation13 [shape = 'u8[1024]{0}', space=vmem, size = 0x400, scoped, tag = 'input window, operand 17']
    #allocation14 [shape = 's32[2]{0}', space=sflag, size = 0x8, scoped, tag = 'scoped memory for tpu_custom_call.1']
    #allocation15 [shape = 'u8[32768]{0}', space=vmem, size = 0x8000, scoped, tag = 'input window, operand 18']
    #allocation16 [shape = 'u8[1024]{0}', space=vmem, size = 0x400, scoped, tag = 'input window, operand 19']
    #allocation17 [shape = 's32[2]{0}', space=sflag, size = 0x8, scoped, tag = 'scoped memory for tpu_custom_call.1']
    #allocation18 [shape = 'u8[8192]{0}', space=vmem, size = 0x2000, scoped, tag = 'output window, operand 0, single buffered']
    #allocation19 [shape = 'u8[32768]{0}', space=vmem, size = 0x8000, scoped, tag = 'output window, operand 1, single buffered']
    #allocation20 [shape = 's32[1]{0}', space=sflag, size = 0x4, scoped, tag = 'scoped memory for tpu_custom_call.1']
    %33 = vsyncpa [#allocation5], 0
    %34 = vsyncpa [#allocation8], 0
    %s35 = scalar_lea.sflag [#allocation8], 1
    %36 = vsyncpa %s35, 0
    %37 = vsyncpa [#allocation11], 0
    %s38 = scalar_lea.sflag [#allocation11], 1
    %39 = vsyncpa %s38, 0
    %40 = vsyncpa [#allocation14], 0
    %s41 = scalar_lea.sflag [#allocation14], 1
    %42 = vsyncpa %s41, 0
    %43 = vsyncpa [#allocation17], 0
    %s44 = scalar_lea.sflag [#allocation17], 1
    %45 = vsyncpa %s44, 0
    %46 = vsyncpa [#allocation6], 0
    %47 = vsyncpa [#allocation20], 0
    loop: start=0, step=1, limit=4
    $region2: #{tpu_custom_call.1} parent=1 // loop_pre_header
      _
    $region3: #{tpu_custom_call.1} parent=1 // loop_header
      %s49 = sphi 0, %s53
      %p50 = scmp.ge.s32.totalorder %s49, 4
      %s57 = sphi 0, %s57
      %s59 = sphi 0, %s57
      %s60 = sphi 0, %s59
      %s74 = sphi 0, %s60
      %s78 = sphi 0, %s78
      %s80 = sphi 0, %s78
      %s81 = sphi 0, %s80
      %s95 = sphi 0, %s81
      %s99 = sphi 0, %s99
      %s101 = sphi 0, %s99
      %s102 = sphi 0, %s101
      %s116 = sphi 0, %s102
      %s120 = sphi 0, %s120
      %s122 = sphi 0, %s120
      %s123 = sphi 0, %s122
      %s137 = sphi 0, %s123
      %s143 = sphi 0, %s145
      %s146 = sphi 0, %s143
      %s147 = sphi 0, %s146
      %s163 = sphi 0, %s147
      %s169 = sphi 0, %s171
      %s172 = sphi 0, %s169
      %s173 = sphi 0, %s172
      %s189 = sphi 0, %s173
      %s195 = sphi 0, %s197
      %s198 = sphi 0, %s195
      %s199 = sphi 0, %s198
      %s215 = sphi 0, %s199
      %s221 = sphi 0, %s223
      %s224 = sphi 0, %s221
      %s225 = sphi 0, %s224
      %s241 = sphi 0, %s225
      %s247 = sphi 0, %s249
      %s250 = sphi 0, %s247
      %s251 = sphi 0, %s250
      %s267 = sphi 0, %s251
      %s273 = sphi 0, %s275
      %s276 = sphi 0, %s273
      %s277 = sphi 0, %s276
      %s293 = sphi 0, %s277
      %s299 = sphi 0, %s301
      %s302 = sphi 0, %s299
      %s303 = sphi 0, %s302
      %s319 = sphi 0, %s303
      %s325 = sphi 0, %s327
      %s328 = sphi 0, %s325
      %s329 = sphi 0, %s328
      %s345 = sphi 0, %s329
      %s351 = sphi 0, %s353
      %s354 = sphi 0, %s351
      %s355 = sphi 0, %s354
      %s371 = sphi 0, %s355
      %s377 = sphi 0, %s379
      %s380 = sphi 0, %s377
      %s381 = sphi 0, %s380
      %s397 = sphi 0, %s381
      %s403 = sphi 0, %s405
      %s406 = sphi 0, %s403
      %s407 = sphi 0, %s406
      %s423 = sphi 0, %s407
      %s429 = sphi 0, %s431
      %s432 = sphi 0, %s429
      %s433 = sphi 0, %s432
      %s449 = sphi 0, %s433
      %s455 = sphi 0, %s457
      %s458 = sphi 0, %s455
      %s459 = sphi 0, %s458
      %s475 = sphi 0, %s459
      %s481 = sphi 0, %s483
      %s484 = sphi 0, %s481
      %s485 = sphi 0, %s484
      %s501 = sphi 0, %s485
      %s507 = sphi 0, %s509
      %s510 = sphi 0, %s507
      %s511 = sphi 0, %s510
      %s527 = sphi 0, %s511
      %s533 = sphi 0, %s535
      %s536 = sphi 0, %s533
      %s537 = sphi 0, %s536
      %s553 = sphi 0, %s537
      %s559 = sphi 0, %s561
      %s562 = sphi 0, %s559
      %s563 = sphi 0, %s562
      %s579 = sphi 0, %s563
      %s585 = sphi 0, %s587
      %s588 = sphi 0, %s585
      %s589 = sphi 0, %s588
      %s605 = sphi 0, %s589
      %s611 = sphi 0, %s613
      %s614 = sphi 0, %s611
      %s615 = sphi 0, %s614
      %s631 = sphi 0, %s615
      %s637 = sphi 0, %s639
      %s640 = sphi 0, %s637
      %s641 = sphi 0, %s640
      %s657 = sphi 0, %s641
      %s661 = sphi 0, %s661
      %s663 = sphi 0, %s661
      %s664 = sphi 0, %s663
      %s678 = sphi 0, %s664
      %s682 = sphi 0, %s682
      %s684 = sphi 0, %s682
      %s685 = sphi 0, %s684
      %s699 = sphi 0, %s685
      %s703 = sphi 0, %s703
      %s705 = sphi 0, %s703
      %s706 = sphi 0, %s705
      %s720 = sphi 0, %s706
      %s724 = sphi 0, %s724
      %s726 = sphi 0, %s724
      %s727 = sphi 0, %s726
      %s741 = sphi 0, %s727
    $region4: #{tpu_custom_call.1} parent=1 // loop_header_branch
      %52 = sbr.rel (%p50) target = $region8
    $region5: #{tpu_custom_call.1} parent=1 // loop_body
      %s54 = ssub.s32 %s49, 1
      %s55 = ssub.s32 %s49, 2
      %s56 = sadd.s32 %s49, 1
      %s58 = sadd.s32 %s57, 1
      %p61 = scmp.eq.s32.totalorder %s49, 1
      %p62 = scmp.ne.s32.totalorder %s57, %s59
      %p63 = scmp.eq.s32.totalorder %s49, 0
      %p64 = por %p62, %p63
      %p65 = scmp.ne.s32.totalorder %s57, %s59
      %p66 = scmp.eq.s32.totalorder %s54, 1
      %p67 = por %p65, %p66
      %p68 = scmp.ne.s32.totalorder %s59, %s60
      %p69 = scmp.eq.s32.totalorder %s54, 0
      %p70 = por %p68, %p69
      %p71 = scmp.ne.s32.totalorder %s59, %s60
      %p72 = scmp.eq.s32.totalorder %s55, 1
      %p73 = por %p71, %p72
      %p75 = scmp.ne.s32.totalorder %s60, %s74
      %p76 = scmp.eq.s32.totalorder %s55, 0
      %p77 = por %p75, %p76
      %s79 = sadd.s32 %s78, 1
      %p82 = scmp.eq.s32.totalorder %s49, 1
      %p83 = scmp.ne.s32.totalorder %s78, %s80
      %p84 = scmp.eq.s32.totalorder %s49, 0
      %p85 = por %p83, %p84
      %p86 = scmp.ne.s32.totalorder %s78, %s80
      %p87 = scmp.eq.s32.totalorder %s54, 1
      %p88 = por %p86, %p87
      %p89 = scmp.ne.s32.totalorder %s80, %s81
      %p90 = scmp.eq.s32.totalorder %s54, 0
      %p91 = por %p89, %p90
      %p92 = scmp.ne.s32.totalorder %s80, %s81
      %p93 = scmp.eq.s32.totalorder %s55, 1
      %p94 = por %p92, %p93
      %p96 = scmp.ne.s32.totalorder %s81, %s95
      %p97 = scmp.eq.s32.totalorder %s55, 0
      %p98 = por %p96, %p97
      %s100 = sadd.s32 %s99, 1
      %p103 = scmp.eq.s32.totalorder %s49, 1
      %p104 = scmp.ne.s32.totalorder %s99, %s101
      %p105 = scmp.eq.s32.totalorder %s49, 0
      %p106 = por %p104, %p105
      %p107 = scmp.ne.s32.totalorder %s99, %s101
      %p108 = scmp.eq.s32.totalorder %s54, 1
      %p109 = por %p107, %p108
      %p110 = scmp.ne.s32.totalorder %s101, %s102
      %p111 = scmp.eq.s32.totalorder %s54, 0
      %p112 = por %p110, %p111
      %p113 = scmp.ne.s32.totalorder %s101, %s102
      %p114 = scmp.eq.s32.totalorder %s55, 1
      %p115 = por %p113, %p114
      %p117 = scmp.ne.s32.totalorder %s102, %s116
      %p118 = scmp.eq.s32.totalorder %s55, 0
      %p119 = por %p117, %p118
      %s121 = sadd.s32 %s120, 1
      %p124 = scmp.eq.s32.totalorder %s49, 1
      %p125 = scmp.ne.s32.totalorder %s120, %s122
      %p126 = scmp.eq.s32.totalorder %s49, 0
      %p127 = por %p125, %p126
      %p128 = scmp.ne.s32.totalorder %s120, %s122
      %p129 = scmp.eq.s32.totalorder %s54, 1
      %p130 = por %p128, %p129
      %p131 = scmp.ne.s32.totalorder %s122, %s123
      %p132 = scmp.eq.s32.totalorder %s54, 0
      %p133 = por %p131, %p132
      %p134 = scmp.ne.s32.totalorder %s122, %s123
      %p135 = scmp.eq.s32.totalorder %s55, 1
      %p136 = por %p134, %p135
      %p138 = scmp.ne.s32.totalorder %s123, %s137
      %p139 = scmp.eq.s32.totalorder %s55, 0
      %p140 = por %p138, %p139
      %s141 = ssub.s32 %s49, %s56
      %p142 = scmp.eq.s32.totalorder %s141, 0
      %s144 = sadd.s32 %s143, 1
      %s145 = scalar_select %p142, %s143, %s144
      %p148 = pneg %p142
      %p149 = scmp.eq.s32.totalorder %s49, 1
      %p150 = por %p148, %p149
      %p151 = scmp.ne.s32.totalorder %s143, %s146
      %p152 = scmp.eq.s32.totalorder %s49, 0
      %p153 = por %p151, %p152
      %p154 = scmp.ne.s32.totalorder %s143, %s146
      %p155 = scmp.eq.s32.totalorder %s54, 1
      %p156 = por %p154, %p155
      %p157 = scmp.ne.s32.totalorder %s146, %s147
      %p158 = scmp.eq.s32.totalorder %s54, 0
      %p159 = por %p157, %p158
      %p160 = scmp.ne.s32.totalorder %s146, %s147
      %p161 = scmp.eq.s32.totalorder %s55, 1
      %p162 = por %p160, %p161
      %p164 = scmp.ne.s32.totalorder %s147, %s163
      %p165 = scmp.eq.s32.totalorder %s55, 0
      %p166 = por %p164, %p165
      %s167 = ssub.s32 %s49, %s56
      %p168 = scmp.eq.s32.totalorder %s167, 0
      %s170 = sadd.s32 %s169, 1
      %s171 = scalar_select %p168, %s169, %s170
      %p174 = pneg %p168
      %p175 = scmp.eq.s32.totalorder %s49, 1
      %p176 = por %p174, %p175
      %p177 = scmp.ne.s32.totalorder %s169, %s172
      %p178 = scmp.eq.s32.totalorder %s49, 0
      %p179 = por %p177, %p178
      %p180 = scmp.ne.s32.totalorder %s169, %s172
      %p181 = scmp.eq.s32.totalorder %s54, 1
      %p182 = por %p180, %p181
      %p183 = scmp.ne.s32.totalorder %s172, %s173
      %p184 = scmp.eq.s32.totalorder %s54, 0
      %p185 = por %p183, %p184
      %p186 = scmp.ne.s32.totalorder %s172, %s173
      %p187 = scmp.eq.s32.totalorder %s55, 1
      %p188 = por %p186, %p187
      %p190 = scmp.ne.s32.totalorder %s173, %s189
      %p191 = scmp.eq.s32.totalorder %s55, 0
      %p192 = por %p190, %p191
      %s193 = ssub.s32 %s49, %s56
      %p194 = scmp.eq.s32.totalorder %s193, 0
      %s196 = sadd.s32 %s195, 1
      %s197 = scalar_select %p194, %s195, %s196
      %p200 = pneg %p194
      %p201 = scmp.eq.s32.totalorder %s49, 1
      %p202 = por %p200, %p201
      %p203 = scmp.ne.s32.totalorder %s195, %s198
      %p204 = scmp.eq.s32.totalorder %s49, 0
      %p205 = por %p203, %p204
      %p206 = scmp.ne.s32.totalorder %s195, %s198
      %p207 = scmp.eq.s32.totalorder %s54, 1
      %p208 = por %p206, %p207
      %p209 = scmp.ne.s32.totalorder %s198, %s199
      %p210 = scmp.eq.s32.totalorder %s54, 0
      %p211 = por %p209, %p210
      %p212 = scmp.ne.s32.totalorder %s198, %s199
      %p213 = scmp.eq.s32.totalorder %s55, 1
      %p214 = por %p212, %p213
      %p216 = scmp.ne.s32.totalorder %s199, %s215
      %p217 = scmp.eq.s32.totalorder %s55, 0
      %p218 = por %p216, %p217
      %s219 = ssub.s32 %s49, %s56
      %p220 = scmp.eq.s32.totalorder %s219, 0
      %s222 = sadd.s32 %s221, 1
      %s223 = scalar_select %p220, %s221, %s222
      %p226 = pneg %p220
      %p227 = scmp.eq.s32.totalorder %s49, 1
      %p228 = por %p226, %p227
      %p229 = scmp.ne.s32.totalorder %s221, %s224
      %p230 = scmp.eq.s32.totalorder %s49, 0
      %p231 = por %p229, %p230
      %p232 = scmp.ne.s32.totalorder %s221, %s224
      %p233 = scmp.eq.s32.totalorder %s54, 1
      %p234 = por %p232, %p233
      %p235 = scmp.ne.s32.totalorder %s224, %s225
      %p236 = scmp.eq.s32.totalorder %s54, 0
      %p237 = por %p235, %p236
      %p238 = scmp.ne.s32.totalorder %s224, %s225
      %p239 = scmp.eq.s32.totalorder %s55, 1
      %p240 = por %p238, %p239
      %p242 = scmp.ne.s32.totalorder %s225, %s241
      %p243 = scmp.eq.s32.totalorder %s55, 0
      %p244 = por %p242, %p243
      %s245 = ssub.s32 %s49, %s56
      %p246 = scmp.eq.s32.totalorder %s245, 0
      %s248 = sadd.s32 %s247, 1
      %s249 = scalar_select %p246, %s247, %s248
      %p252 = pneg %p246
      %p253 = scmp.eq.s32.totalorder %s49, 1
      %p254 = por %p252, %p253
      %p255 = scmp.ne.s32.totalorder %s247, %s250
      %p256 = scmp.eq.s32.totalorder %s49, 0
      %p257 = por %p255, %p256
      %p258 = scmp.ne.s32.totalorder %s247, %s250
      %p259 = scmp.eq.s32.totalorder %s54, 1
      %p260 = por %p258, %p259
      %p261 = scmp.ne.s32.totalorder %s250, %s251
      %p262 = scmp.eq.s32.totalorder %s54, 0
      %p263 = por %p261, %p262
      %p264 = scmp.ne.s32.totalorder %s250, %s251
      %p265 = scmp.eq.s32.totalorder %s55, 1
      %p266 = por %p264, %p265
      %p268 = scmp.ne.s32.totalorder %s251, %s267
      %p269 = scmp.eq.s32.totalorder %s55, 0
      %p270 = por %p268, %p269
      %s271 = ssub.s32 %s49, %s56
      %p272 = scmp.eq.s32.totalorder %s271, 0
      %s274 = sadd.s32 %s273, 1
      %s275 = scalar_select %p272, %s273, %s274
      %p278 = pneg %p272
      %p279 = scmp.eq.s32.totalorder %s49, 1
      %p280 = por %p278, %p279
      %p281 = scmp.ne.s32.totalorder %s273, %s276
      %p282 = scmp.eq.s32.totalorder %s49, 0
      %p283 = por %p281, %p282
      %p284 = scmp.ne.s32.totalorder %s273, %s276
      %p285 = scmp.eq.s32.totalorder %s54, 1
      %p286 = por %p284, %p285
      %p287 = scmp.ne.s32.totalorder %s276, %s277
      %p288 = scmp.eq.s32.totalorder %s54, 0
      %p289 = por %p287, %p288
      %p290 = scmp.ne.s32.totalorder %s276, %s277
      %p291 = scmp.eq.s32.totalorder %s55, 1
      %p292 = por %p290, %p291
      %p294 = scmp.ne.s32.totalorder %s277, %s293
      %p295 = scmp.eq.s32.totalorder %s55, 0
      %p296 = por %p294, %p295
      %s297 = ssub.s32 %s49, %s56
      %p298 = scmp.eq.s32.totalorder %s297, 0
      %s300 = sadd.s32 %s299, 1
      %s301 = scalar_select %p298, %s299, %s300
      %p304 = pneg %p298
      %p305 = scmp.eq.s32.totalorder %s49, 1
      %p306 = por %p304, %p305
      %p307 = scmp.ne.s32.totalorder %s299, %s302
      %p308 = scmp.eq.s32.totalorder %s49, 0
      %p309 = por %p307, %p308
      %p310 = scmp.ne.s32.totalorder %s299, %s302
      %p311 = scmp.eq.s32.totalorder %s54, 1
      %p312 = por %p310, %p311
      %p313 = scmp.ne.s32.totalorder %s302, %s303
      %p314 = scmp.eq.s32.totalorder %s54, 0
      %p315 = por %p313, %p314
      %p316 = scmp.ne.s32.totalorder %s302, %s303
      %p317 = scmp.eq.s32.totalorder %s55, 1
      %p318 = por %p316, %p317
      %p320 = scmp.ne.s32.totalorder %s303, %s319
      %p321 = scmp.eq.s32.totalorder %s55, 0
      %p322 = por %p320, %p321
      %s323 = ssub.s32 %s49, %s56
      %p324 = scmp.eq.s32.totalorder %s323, 0
      %s326 = sadd.s32 %s325, 1
      %s327 = scalar_select %p324, %s325, %s326
      %p330 = pneg %p324
      %p331 = scmp.eq.s32.totalorder %s49, 1
      %p332 = por %p330, %p331
      %p333 = scmp.ne.s32.totalorder %s325, %s328
      %p334 = scmp.eq.s32.totalorder %s49, 0
      %p335 = por %p333, %p334
      %p336 = scmp.ne.s32.totalorder %s325, %s328
      %p337 = scmp.eq.s32.totalorder %s54, 1
      %p338 = por %p336, %p337
      %p339 = scmp.ne.s32.totalorder %s328, %s329
      %p340 = scmp.eq.s32.totalorder %s54, 0
      %p341 = por %p339, %p340
      %p342 = scmp.ne.s32.totalorder %s328, %s329
      %p343 = scmp.eq.s32.totalorder %s55, 1
      %p344 = por %p342, %p343
      %p346 = scmp.ne.s32.totalorder %s329, %s345
      %p347 = scmp.eq.s32.totalorder %s55, 0
      %p348 = por %p346, %p347
      %s349 = ssub.s32 %s49, %s56
      %p350 = scmp.eq.s32.totalorder %s349, 0
      %s352 = sadd.s32 %s351, 1
      %s353 = scalar_select %p350, %s351, %s352
      %p356 = pneg %p350
      %p357 = scmp.eq.s32.totalorder %s49, 1
      %p358 = por %p356, %p357
      %p359 = scmp.ne.s32.totalorder %s351, %s354
      %p360 = scmp.eq.s32.totalorder %s49, 0
      %p361 = por %p359, %p360
      %p362 = scmp.ne.s32.totalorder %s351, %s354
      %p363 = scmp.eq.s32.totalorder %s54, 1
      %p364 = por %p362, %p363
      %p365 = scmp.ne.s32.totalorder %s354, %s355
      %p366 = scmp.eq.s32.totalorder %s54, 0
      %p367 = por %p365, %p366
      %p368 = scmp.ne.s32.totalorder %s354, %s355
      %p369 = scmp.eq.s32.totalorder %s55, 1
      %p370 = por %p368, %p369
      %p372 = scmp.ne.s32.totalorder %s355, %s371
      %p373 = scmp.eq.s32.totalorder %s55, 0
      %p374 = por %p372, %p373
      %s375 = ssub.s32 %s49, %s56
      %p376 = scmp.eq.s32.totalorder %s375, 0
      %s378 = sadd.s32 %s377, 1
      %s379 = scalar_select %p376, %s377, %s378
      %p382 = pneg %p376
      %p383 = scmp.eq.s32.totalorder %s49, 1
      %p384 = por %p382, %p383
      %p385 = scmp.ne.s32.totalorder %s377, %s380
      %p386 = scmp.eq.s32.totalorder %s49, 0
      %p387 = por %p385, %p386
      %p388 = scmp.ne.s32.totalorder %s377, %s380
      %p389 = scmp.eq.s32.totalorder %s54, 1
      %p390 = por %p388, %p389
      %p391 = scmp.ne.s32.totalorder %s380, %s381
      %p392 = scmp.eq.s32.totalorder %s54, 0
      %p393 = por %p391, %p392
      %p394 = scmp.ne.s32.totalorder %s380, %s381
      %p395 = scmp.eq.s32.totalorder %s55, 1
      %p396 = por %p394, %p395
      %p398 = scmp.ne.s32.totalorder %s381, %s397
      %p399 = scmp.eq.s32.totalorder %s55, 0
      %p400 = por %p398, %p399
      %s401 = ssub.s32 %s49, %s56
      %p402 = scmp.eq.s32.totalorder %s401, 0
      %s404 = sadd.s32 %s403, 1
      %s405 = scalar_select %p402, %s403, %s404
      %p408 = pneg %p402
      %p409 = scmp.eq.s32.totalorder %s49, 1
      %p410 = por %p408, %p409
      %p411 = scmp.ne.s32.totalorder %s403, %s406
      %p412 = scmp.eq.s32.totalorder %s49, 0
      %p413 = por %p411, %p412
      %p414 = scmp.ne.s32.totalorder %s403, %s406
      %p415 = scmp.eq.s32.totalorder %s54, 1
      %p416 = por %p414, %p415
      %p417 = scmp.ne.s32.totalorder %s406, %s407
      %p418 = scmp.eq.s32.totalorder %s54, 0
      %p419 = por %p417, %p418
      %p420 = scmp.ne.s32.totalorder %s406, %s407
      %p421 = scmp.eq.s32.totalorder %s55, 1
      %p422 = por %p420, %p421
      %p424 = scmp.ne.s32.totalorder %s407, %s423
      %p425 = scmp.eq.s32.totalorder %s55, 0
      %p426 = por %p424, %p425
      %s427 = ssub.s32 %s49, %s56
      %p428 = scmp.eq.s32.totalorder %s427, 0
      %s430 = sadd.s32 %s429, 1
      %s431 = scalar_select %p428, %s429, %s430
      %p434 = pneg %p428
      %p435 = scmp.eq.s32.totalorder %s49, 1
      %p436 = por %p434, %p435
      %p437 = scmp.ne.s32.totalorder %s429, %s432
      %p438 = scmp.eq.s32.totalorder %s49, 0
      %p439 = por %p437, %p438
      %p440 = scmp.ne.s32.totalorder %s429, %s432
      %p441 = scmp.eq.s32.totalorder %s54, 1
      %p442 = por %p440, %p441
      %p443 = scmp.ne.s32.totalorder %s432, %s433
      %p444 = scmp.eq.s32.totalorder %s54, 0
      %p445 = por %p443, %p444
      %p446 = scmp.ne.s32.totalorder %s432, %s433
      %p447 = scmp.eq.s32.totalorder %s55, 1
      %p448 = por %p446, %p447
      %p450 = scmp.ne.s32.totalorder %s433, %s449
      %p451 = scmp.eq.s32.totalorder %s55, 0
      %p452 = por %p450, %p451
      %s453 = ssub.s32 %s49, %s56
      %p454 = scmp.eq.s32.totalorder %s453, 0
      %s456 = sadd.s32 %s455, 1
      %s457 = scalar_select %p454, %s455, %s456
      %p460 = pneg %p454
      %p461 = scmp.eq.s32.totalorder %s49, 1
      %p462 = por %p460, %p461
      %p463 = scmp.ne.s32.totalorder %s455, %s458
      %p464 = scmp.eq.s32.totalorder %s49, 0
      %p465 = por %p463, %p464
      %p466 = scmp.ne.s32.totalorder %s455, %s458
      %p467 = scmp.eq.s32.totalorder %s54, 1
      %p468 = por %p466, %p467
      %p469 = scmp.ne.s32.totalorder %s458, %s459
      %p470 = scmp.eq.s32.totalorder %s54, 0
      %p471 = por %p469, %p470
      %p472 = scmp.ne.s32.totalorder %s458, %s459
      %p473 = scmp.eq.s32.totalorder %s55, 1
      %p474 = por %p472, %p473
      %p476 = scmp.ne.s32.totalorder %s459, %s475
      %p477 = scmp.eq.s32.totalorder %s55, 0
      %p478 = por %p476, %p477
      %s479 = ssub.s32 %s49, %s56
      %p480 = scmp.eq.s32.totalorder %s479, 0
      %s482 = sadd.s32 %s481, 1
      %s483 = scalar_select %p480, %s481, %s482
      %p486 = pneg %p480
      %p487 = scmp.eq.s32.totalorder %s49, 1
      %p488 = por %p486, %p487
      %p489 = scmp.ne.s32.totalorder %s481, %s484
      %p490 = scmp.eq.s32.totalorder %s49, 0
      %p491 = por %p489, %p490
      %p492 = scmp.ne.s32.totalorder %s481, %s484
      %p493 = scmp.eq.s32.totalorder %s54, 1
      %p494 = por %p492, %p493
      %p495 = scmp.ne.s32.totalorder %s484, %s485
      %p496 = scmp.eq.s32.totalorder %s54, 0
      %p497 = por %p495, %p496
      %p498 = scmp.ne.s32.totalorder %s484, %s485
      %p499 = scmp.eq.s32.totalorder %s55, 1
      %p500 = por %p498, %p499
      %p502 = scmp.ne.s32.totalorder %s485, %s501
      %p503 = scmp.eq.s32.totalorder %s55, 0
      %p504 = por %p502, %p503
      %s505 = ssub.s32 %s49, %s56
      %p506 = scmp.eq.s32.totalorder %s505, 0
      %s508 = sadd.s32 %s507, 1
      %s509 = scalar_select %p506, %s507, %s508
      %p512 = pneg %p506
      %p513 = scmp.eq.s32.totalorder %s49, 1
      %p514 = por %p512, %p513
      %p515 = scmp.ne.s32.totalorder %s507, %s510
      %p516 = scmp.eq.s32.totalorder %s49, 0
      %p517 = por %p515, %p516
      %p518 = scmp.ne.s32.totalorder %s507, %s510
      %p519 = scmp.eq.s32.totalorder %s54, 1
      %p520 = por %p518, %p519
      %p521 = scmp.ne.s32.totalorder %s510, %s511
      %p522 = scmp.eq.s32.totalorder %s54, 0
      %p523 = por %p521, %p522
      %p524 = scmp.ne.s32.totalorder %s510, %s511
      %p525 = scmp.eq.s32.totalorder %s55, 1
      %p526 = por %p524, %p525
      %p528 = scmp.ne.s32.totalorder %s511, %s527
      %p529 = scmp.eq.s32.totalorder %s55, 0
      %p530 = por %p528, %p529
      %s531 = ssub.s32 %s49, %s56
      %p532 = scmp.eq.s32.totalorder %s531, 0
      %s534 = sadd.s32 %s533, 1
      %s535 = scalar_select %p532, %s533, %s534
      %p538 = pneg %p532
      %p539 = scmp.eq.s32.totalorder %s49, 1
      %p540 = por %p538, %p539
      %p541 = scmp.ne.s32.totalorder %s533, %s536
      %p542 = scmp.eq.s32.totalorder %s49, 0
      %p543 = por %p541, %p542
      %p544 = scmp.ne.s32.totalorder %s533, %s536
      %p545 = scmp.eq.s32.totalorder %s54, 1
      %p546 = por %p544, %p545
      %p547 = scmp.ne.s32.totalorder %s536, %s537
      %p548 = scmp.eq.s32.totalorder %s54, 0
      %p549 = por %p547, %p548
      %p550 = scmp.ne.s32.totalorder %s536, %s537
      %p551 = scmp.eq.s32.totalorder %s55, 1
      %p552 = por %p550, %p551
      %p554 = scmp.ne.s32.totalorder %s537, %s553
      %p555 = scmp.eq.s32.totalorder %s55, 0
      %p556 = por %p554, %p555
      %s557 = ssub.s32 %s49, %s56
      %p558 = scmp.eq.s32.totalorder %s557, 0
      %s560 = sadd.s32 %s559, 1
      %s561 = scalar_select %p558, %s559, %s560
      %p564 = pneg %p558
      %p565 = scmp.eq.s32.totalorder %s49, 1
      %p566 = por %p564, %p565
      %p567 = scmp.ne.s32.totalorder %s559, %s562
      %p568 = scmp.eq.s32.totalorder %s49, 0
      %p569 = por %p567, %p568
      %p570 = scmp.ne.s32.totalorder %s559, %s562
      %p571 = scmp.eq.s32.totalorder %s54, 1
      %p572 = por %p570, %p571
      %p573 = scmp.ne.s32.totalorder %s562, %s563
      %p574 = scmp.eq.s32.totalorder %s54, 0
      %p575 = por %p573, %p574
      %p576 = scmp.ne.s32.totalorder %s562, %s563
      %p577 = scmp.eq.s32.totalorder %s55, 1
      %p578 = por %p576, %p577
      %p580 = scmp.ne.s32.totalorder %s563, %s579
      %p581 = scmp.eq.s32.totalorder %s55, 0
      %p582 = por %p580, %p581
      %s583 = ssub.s32 %s49, %s56
      %p584 = scmp.eq.s32.totalorder %s583, 0
      %s586 = sadd.s32 %s585, 1
      %s587 = scalar_select %p584, %s585, %s586
      %p590 = pneg %p584
      %p591 = scmp.eq.s32.totalorder %s49, 1
      %p592 = por %p590, %p591
      %p593 = scmp.ne.s32.totalorder %s585, %s588
      %p594 = scmp.eq.s32.totalorder %s49, 0
      %p595 = por %p593, %p594
      %p596 = scmp.ne.s32.totalorder %s585, %s588
      %p597 = scmp.eq.s32.totalorder %s54, 1
      %p598 = por %p596, %p597
      %p599 = scmp.ne.s32.totalorder %s588, %s589
      %p600 = scmp.eq.s32.totalorder %s54, 0
      %p601 = por %p599, %p600
      %p602 = scmp.ne.s32.totalorder %s588, %s589
      %p603 = scmp.eq.s32.totalorder %s55, 1
      %p604 = por %p602, %p603
      %p606 = scmp.ne.s32.totalorder %s589, %s605
      %p607 = scmp.eq.s32.totalorder %s55, 0
      %p608 = por %p606, %p607
      %s609 = ssub.s32 %s49, %s56
      %p610 = scmp.eq.s32.totalorder %s609, 0
      %s612 = sadd.s32 %s611, 1
      %s613 = scalar_select %p610, %s611, %s612
      %p616 = pneg %p610
      %p617 = scmp.eq.s32.totalorder %s49, 1
      %p618 = por %p616, %p617
      %p619 = scmp.ne.s32.totalorder %s611, %s614
      %p620 = scmp.eq.s32.totalorder %s49, 0
      %p621 = por %p619, %p620
      %p622 = scmp.ne.s32.totalorder %s611, %s614
      %p623 = scmp.eq.s32.totalorder %s54, 1
      %p624 = por %p622, %p623
      %p625 = scmp.ne.s32.totalorder %s614, %s615
      %p626 = scmp.eq.s32.totalorder %s54, 0
      %p627 = por %p625, %p626
      %p628 = scmp.ne.s32.totalorder %s614, %s615
      %p629 = scmp.eq.s32.totalorder %s55, 1
      %p630 = por %p628, %p629
      %p632 = scmp.ne.s32.totalorder %s615, %s631
      %p633 = scmp.eq.s32.totalorder %s55, 0
      %p634 = por %p632, %p633
      %s635 = ssub.s32 %s49, %s56
      %p636 = scmp.eq.s32.totalorder %s635, 0
      %s638 = sadd.s32 %s637, 1
      %s639 = scalar_select %p636, %s637, %s638
      %p642 = pneg %p636
      %p643 = scmp.eq.s32.totalorder %s49, 1
      %p644 = por %p642, %p643
      %p645 = scmp.ne.s32.totalorder %s637, %s640
      %p646 = scmp.eq.s32.totalorder %s49, 0
      %p647 = por %p645, %p646
      %p648 = scmp.ne.s32.totalorder %s637, %s640
      %p649 = scmp.eq.s32.totalorder %s54, 1
      %p650 = por %p648, %p649
      %p651 = scmp.ne.s32.totalorder %s640, %s641
      %p652 = scmp.eq.s32.totalorder %s54, 0
      %p653 = por %p651, %p652
      %p654 = scmp.ne.s32.totalorder %s640, %s641
      %p655 = scmp.eq.s32.totalorder %s55, 1
      %p656 = por %p654, %p655
      %p658 = scmp.ne.s32.totalorder %s641, %s657
      %p659 = scmp.eq.s32.totalorder %s55, 0
      %p660 = por %p658, %p659
      %s662 = sadd.s32 %s661, 1
      %p665 = scmp.eq.s32.totalorder %s49, 1
      %p666 = scmp.ne.s32.totalorder %s661, %s663
      %p667 = scmp.eq.s32.totalorder %s49, 0
      %p668 = por %p666, %p667
      %p669 = scmp.ne.s32.totalorder %s661, %s663
      %p670 = scmp.eq.s32.totalorder %s54, 1
      %p671 = por %p669, %p670
      %p672 = scmp.ne.s32.totalorder %s663, %s664
      %p673 = scmp.eq.s32.totalorder %s54, 0
      %p674 = por %p672, %p673
      %p675 = scmp.ne.s32.totalorder %s663, %s664
      %p676 = scmp.eq.s32.totalorder %s55, 1
      %p677 = por %p675, %p676
      %p679 = scmp.ne.s32.totalorder %s664, %s678
      %p680 = scmp.eq.s32.totalorder %s55, 0
      %p681 = por %p679, %p680
      %s683 = sadd.s32 %s682, 1
      %p686 = scmp.eq.s32.totalorder %s49, 1
      %p687 = scmp.ne.s32.totalorder %s682, %s684
      %p688 = scmp.eq.s32.totalorder %s49, 0
      %p689 = por %p687, %p688
      %p690 = scmp.ne.s32.totalorder %s682, %s684
      %p691 = scmp.eq.s32.totalorder %s54, 1
      %p692 = por %p690, %p691
      %p693 = scmp.ne.s32.totalorder %s684, %s685
      %p694 = scmp.eq.s32.totalorder %s54, 0
      %p695 = por %p693, %p694
      %p696 = scmp.ne.s32.totalorder %s684, %s685
      %p697 = scmp.eq.s32.totalorder %s55, 1
      %p698 = por %p696, %p697
      %p700 = scmp.ne.s32.totalorder %s685, %s699
      %p701 = scmp.eq.s32.totalorder %s55, 0
      %p702 = por %p700, %p701
      %s704 = sadd.s32 %s703, 1
      %p707 = scmp.eq.s32.totalorder %s49, 1
      %p708 = scmp.ne.s32.totalorder %s703, %s705
      %p709 = scmp.eq.s32.totalorder %s49, 0
      %p710 = por %p708, %p709
      %p711 = scmp.ne.s32.totalorder %s703, %s705
      %p712 = scmp.eq.s32.totalorder %s54, 1
      %p713 = por %p711, %p712
      %p714 = scmp.ne.s32.totalorder %s705, %s706
      %p715 = scmp.eq.s32.totalorder %s54, 0
      %p716 = por %p714, %p715
      %p717 = scmp.ne.s32.totalorder %s705, %s706
      %p718 = scmp.eq.s32.totalorder %s55, 1
      %p719 = por %p717, %p718
      %p721 = scmp.ne.s32.totalorder %s706, %s720
      %p722 = scmp.eq.s32.totalorder %s55, 0
      %p723 = por %p721, %p722
      %s725 = sadd.s32 %s724, 1
      %p728 = scmp.eq.s32.totalorder %s49, 1
      %p729 = scmp.ne.s32.totalorder %s724, %s726
      %p730 = scmp.eq.s32.totalorder %s49, 0
      %p731 = por %p729, %p730
      %p732 = scmp.ne.s32.totalorder %s724, %s726
      %p733 = scmp.eq.s32.totalorder %s54, 1
      %p734 = por %p732, %p733
      %p735 = scmp.ne.s32.totalorder %s726, %s727
      %p736 = scmp.eq.s32.totalorder %s54, 0
      %p737 = por %p735, %p736
      %p738 = scmp.ne.s32.totalorder %s726, %s727
      %p739 = scmp.eq.s32.totalorder %s55, 1
      %p740 = por %p738, %p739
      %p742 = scmp.ne.s32.totalorder %s727, %s741
      %p743 = scmp.eq.s32.totalorder %s55, 0
      %p744 = por %p742, %p743
      %p745 = scmp.le.s32.totalorder 1, %s49
      %p746 = scmp.lt.s32.totalorder %s49, 3
      %p747 = pnand %p745, %p746
      %p748 = pneg %p747
      // Predicated region
      $region9: #{tpu_custom_call.1} parent=5 // pred_check
        _
      $region10: #{tpu_custom_call.1} parent=5 // pred_check_branch
        %750 = sbr.rel (%p747) target = $region12
      $region11: #{tpu_custom_call.1} parent=5 // pred_region
        %s751 = ssub.s32 %s49, 1
        // Predicated region
        $region13: #{tpu_custom_call.1} parent=11 // pred_check
          %p752 = pneg %p70
        $region14: #{tpu_custom_call.1} parent=11 // pred_check_branch
          %754 = sbr.rel (%p752) target = $region16
        $region15: #{tpu_custom_call.1} parent=11 // pred_region
          _
        $region16: #{tpu_custom_call.1} parent=11 // pred_fallthru
          _
        // Predicated region
        $region17: #{tpu_custom_call.1} parent=11 // pred_check
          %p755 = pneg %p91
        $region18: #{tpu_custom_call.1} parent=11 // pred_check_branch
          %757 = sbr.rel (%p755) target = $region20
        $region19: #{tpu_custom_call.1} parent=11 // pred_region
          _
        $region20: #{tpu_custom_call.1} parent=11 // pred_fallthru
          _
        // Predicated region
        $region21: #{tpu_custom_call.1} parent=11 // pred_check
          %p758 = pneg %p112
        $region22: #{tpu_custom_call.1} parent=11 // pred_check_branch
          %760 = sbr.rel (%p758) target = $region24
        $region23: #{tpu_custom_call.1} parent=11 // pred_region
          %s762 = ssub.s32 256, 256
          %763 = vsyncadd [#allocation5], %s762
          %s764 = sshll.u32 [#allocation4], 4
          %s765 = int_to_ptr.vmem [resolvable:$true] %s764
          %770 = dma.hbm_to_vmem [thread:$0]  %s2, 256, %s765, [#allocation5], 128, 128, 8
        $region24: #{tpu_custom_call.1} parent=11 // pred_fallthru
          _
        // Predicated region
        $region25: #{tpu_custom_call.1} parent=11 // pred_check
          %p771 = pneg %p133
        $region26: #{tpu_custom_call.1} parent=11 // pred_check_branch
          %773 = sbr.rel (%p771) target = $region28
        $region27: #{tpu_custom_call.1} parent=11 // pred_region
          _
        $region28: #{tpu_custom_call.1} parent=11 // pred_fallthru
          _
        // Predicated region
        $region29: #{tpu_custom_call.1} parent=11 // pred_check
          %p774 = pneg %p674
        $region30: #{tpu_custom_call.1} parent=11 // pred_check_branch
          %776 = sbr.rel (%p774) target = $region32
        $region31: #{tpu_custom_call.1} parent=11 // pred_region
          _
        $region32: #{tpu_custom_call.1} parent=11 // pred_fallthru
          _
        // Predicated region
        $region33: #{tpu_custom_call.1} parent=11 // pred_check
          %p777 = pneg %p695
        $region34: #{tpu_custom_call.1} parent=11 // pred_check_branch
          %779 = sbr.rel (%p777) target = $region36
        $region35: #{tpu_custom_call.1} parent=11 // pred_region
          _
        $region36: #{tpu_custom_call.1} parent=11 // pred_fallthru
          _
      $region12: #{tpu_custom_call.1} parent=5 // pred_fallthru
        _
      %p780 = scmp.lt.s32.totalorder %s49, 2
      // Predicated region
      $region37: #{tpu_custom_call.1} parent=5 // pred_check
        %p781 = pneg %p780
      $region38: #{tpu_custom_call.1} parent=5 // pred_check_branch
        %783 = sbr.rel (%p781) target = $region40
      $region39: #{tpu_custom_call.1} parent=5 // pred_region
        // Predicated region
        $region41: #{tpu_custom_call.1} parent=39 // pred_check
          %p784 = pneg %p153
        $region42: #{tpu_custom_call.1} parent=39 // pred_check_branch
          %786 = sbr.rel (%p784) target = $region44
        $region43: #{tpu_custom_call.1} parent=39 // pred_region
          %p787 = scmp.lt.s32.totalorder %s49, 1
          %s788 = scalar_select %p787, %s49, 1
          %s789 = smul.addr %s788, 4
          %s790 = smul.addr %s789, 8
          %s791 = scalar_lea.vmem %s4, %s790
        $region44: #{tpu_custom_call.1} parent=39 // pred_fallthru
          _
        // Predicated region
        $region45: #{tpu_custom_call.1} parent=39 // pred_check
          %p792 = pneg %p179
        $region46: #{tpu_custom_call.1} parent=39 // pred_check_branch
          %794 = sbr.rel (%p792) target = $region48
        $region47: #{tpu_custom_call.1} parent=39 // pred_region
          %p795 = scmp.lt.s32.totalorder %s49, 1
          %s796 = scalar_select %p795, %s49, 1
          %s797 = scalar_lea.vmem %s5, %s796
        $region48: #{tpu_custom_call.1} parent=39 // pred_fallthru
          _
        // Predicated region
        $region49: #{tpu_custom_call.1} parent=39 // pred_check
          %p798 = pneg %p205
        $region50: #{tpu_custom_call.1} parent=39 // pred_check_branch
          %800 = sbr.rel (%p798) target = $region52
        $region51: #{tpu_custom_call.1} parent=39 // pred_region
          %p801 = scmp.lt.s32.totalorder %s49, 1
          %s802 = scalar_select %p801, %s49, 1
          %s803 = smul.addr %s802, 4
          %s804 = smul.addr %s803, 8
          %s805 = scalar_lea.vmem %s6, %s804
        $region52: #{tpu_custom_call.1} parent=39 // pred_fallthru
          _
        // Predicated region
        $region53: #{tpu_custom_call.1} parent=39 // pred_check
          %p806 = pneg %p231
        $region54: #{tpu_custom_call.1} parent=39 // pred_check_branch
          %808 = sbr.rel (%p806) target = $region56
        $region55: #{tpu_custom_call.1} parent=39 // pred_region
          %p809 = scmp.lt.s32.totalorder %s49, 1
          %s810 = scalar_select %p809, %s49, 1
          %s811 = scalar_lea.vmem %s7, %s810
        $region56: #{tpu_custom_call.1} parent=39 // pred_fallthru
          _
        // Predicated region
        $region57: #{tpu_custom_call.1} parent=39 // pred_check
          %p812 = pneg %p257
        $region58: #{tpu_custom_call.1} parent=39 // pred_check_branch
          %814 = sbr.rel (%p812) target = $region60
        $region59: #{tpu_custom_call.1} parent=39 // pred_region
          %p815 = scmp.lt.s32.totalorder %s49, 1
          %s816 = scalar_select %p815, %s49, 1
          %s817 = scalar_lea.vmem %s8, %s816
        $region60: #{tpu_custom_call.1} parent=39 // pred_fallthru
          _
        // Predicated region
        $region61: #{tpu_custom_call.1} parent=39 // pred_check
          %p818 = pneg %p283
        $region62: #{tpu_custom_call.1} parent=39 // pred_check_branch
          %820 = sbr.rel (%p818) target = $region64
        $region63: #{tpu_custom_call.1} parent=39 // pred_region
          %p821 = scmp.lt.s32.totalorder %s49, 1
          %s822 = scalar_select %p821, %s49, 1
          %s823 = scalar_lea.vmem %s9, %s822
        $region64: #{tpu_custom_call.1} parent=39 // pred_fallthru
          _
        // Predicated region
        $region65: #{tpu_custom_call.1} parent=39 // pred_check
          %p824 = pneg %p309
        $region66: #{tpu_custom_call.1} parent=39 // pred_check_branch
          %826 = sbr.rel (%p824) target = $region68
        $region67: #{tpu_custom_call.1} parent=39 // pred_region
          %p827 = scmp.lt.s32.totalorder %s49, 1
          %s828 = scalar_select %p827, %s49, 1
          %s829 = smul.addr %s828, 4
          %s830 = smul.addr %s829, 8
          %s831 = scalar_lea.vmem %s10, %s830
        $region68: #{tpu_custom_call.1} parent=39 // pred_fallthru
          _
        // Predicated region
        $region69: #{tpu_custom_call.1} parent=39 // pred_check
          %p832 = pneg %p335
        $region70: #{tpu_custom_call.1} parent=39 // pred_check_branch
          %834 = sbr.rel (%p832) target = $region72
        $region71: #{tpu_custom_call.1} parent=39 // pred_region
          %p835 = scmp.lt.s32.totalorder %s49, 1
          %s836 = scalar_select %p835, %s49, 1
          %s837 = scalar_lea.vmem %s11, %s836
        $region72: #{tpu_custom_call.1} parent=39 // pred_fallthru
          _
        // Predicated region
        $region73: #{tpu_custom_call.1} parent=39 // pred_check
          %p838 = pneg %p361
        $region74: #{tpu_custom_call.1} parent=39 // pred_check_branch
          %840 = sbr.rel (%p838) target = $region76
        $region75: #{tpu_custom_call.1} parent=39 // pred_region
          %s841 = sand.u32 %s49, 1
          %s842 = scalar_lea.sflag [#allocation8], %s841
          %s843 = sand.u32 %s351, 1
          %s844 = smul.addr %s843, 32
          %s845 = scalar_lea.vmem [#allocation7], %s844
          %s847 = ssub.s32 512, 512
          %848 = vsyncadd %s842, %s847
          %s849 = smul.addr %s49, 4
          %s850 = smul.addr %s849, 128
          %s851 = scalar_lea.hbm %s12, %s850
          %s852 = sshll.u32 %s845, 4
          %s853 = int_to_ptr.vmem [resolvable:$true] %s852
          %858 = dma.hbm_to_vmem [thread:$0]  %s851, 512, %s853, %s842, 128, 128, 8
        $region76: #{tpu_custom_call.1} parent=39 // pred_fallthru
          _
        // Predicated region
        $region77: #{tpu_custom_call.1} parent=39 // pred_check
          %p859 = pneg %p387
        $region78: #{tpu_custom_call.1} parent=39 // pred_check_branch
          %861 = sbr.rel (%p859) target = $region80
        $region79: #{tpu_custom_call.1} parent=39 // pred_region
          %p862 = scmp.lt.s32.totalorder %s49, 1
          %s863 = scalar_select %p862, %s49, 1
          %s864 = scalar_lea.vmem %s13, %s863
        $region80: #{tpu_custom_call.1} parent=39 // pred_fallthru
          _
        // Predicated region
        $region81: #{tpu_custom_call.1} parent=39 // pred_check
          %p865 = pneg %p413
        $region82: #{tpu_custom_call.1} parent=39 // pred_check_branch
          %867 = sbr.rel (%p865) target = $region84
        $region83: #{tpu_custom_call.1} parent=39 // pred_region
          %s868 = sand.u32 %s49, 1
          %s869 = scalar_lea.sflag [#allocation8], %s868
          %s870 = sand.u32 %s403, 1
          %s871 = smul.addr %s870, 32
          %s872 = scalar_lea.vmem [#allocation9], %s871
          %s874 = ssub.s32 512, 512
          %875 = vsyncadd %s869, %s874
          %s876 = smul.addr %s49, 4
          %s877 = smul.addr %s876, 128
          %s878 = scalar_lea.hbm %s14, %s877
          %s879 = sshll.u32 %s872, 4
          %s880 = int_to_ptr.vmem [resolvable:$true] %s879
          %885 = dma.hbm_to_vmem [thread:$0]  %s878, 512, %s880, %s869, 128, 128, 8
        $region84: #{tpu_custom_call.1} parent=39 // pred_fallthru
          _
        // Predicated region
        $region85: #{tpu_custom_call.1} parent=39 // pred_check
          %p886 = pneg %p439
        $region86: #{tpu_custom_call.1} parent=39 // pred_check_branch
          %888 = sbr.rel (%p886) target = $region88
        $region87: #{tpu_custom_call.1} parent=39 // pred_region
          %s889 = sand.u32 %s49, 1
          %s890 = scalar_lea.sflag [#allocation11], %s889
          %s891 = sand.u32 %s429, 1
          %s892 = scalar_lea.vmem [#allocation10], %s891
          %s894 = ssub.s32 16, 16
          %895 = vsyncadd %s890, %s894
          %s896 = smul.addr %s49, 16
          %s897 = scalar_lea.hbm %s15, %s896
          %s899 = sshll.u32 %s892, 4
          %s900 = int_to_ptr.vmem [resolvable:$true] %s899
          %902 = dma.hbm_to_vmem [thread:$0]  %s897, 16, %s900, %s890
        $region88: #{tpu_custom_call.1} parent=39 // pred_fallthru
          _
        // Predicated region
        $region89: #{tpu_custom_call.1} parent=39 // pred_check
          %p903 = pneg %p465
        $region90: #{tpu_custom_call.1} parent=39 // pred_check_branch
          %905 = sbr.rel (%p903) target = $region92
        $region91: #{tpu_custom_call.1} parent=39 // pred_region
          %s906 = sand.u32 %s49, 1
          %s907 = scalar_lea.sflag [#allocation11], %s906
          %s908 = sand.u32 %s455, 1
          %s909 = scalar_lea.vmem [#allocation12], %s908
          %s911 = ssub.s32 16, 16
          %912 = vsyncadd %s907, %s911
          %s913 = smul.addr %s49, 16
          %s914 = scalar_lea.hbm %s16, %s913
          %s916 = sshll.u32 %s909, 4
          %s917 = int_to_ptr.vmem [resolvable:$true] %s916
          %919 = dma.hbm_to_vmem [thread:$0]  %s914, 16, %s917, %s907
        $region92: #{tpu_custom_call.1} parent=39 // pred_fallthru
          _
        // Predicated region
        $region93: #{tpu_custom_call.1} parent=39 // pred_check
          %p920 = pneg %p491
        $region94: #{tpu_custom_call.1} parent=39 // pred_check_branch
          %922 = sbr.rel (%p920) target = $region96
        $region95: #{tpu_custom_call.1} parent=39 // pred_region
          %s923 = sand.u32 %s49, 1
          %s924 = scalar_lea.sflag [#allocation14], %s923
          %s925 = sand.u32 %s481, 1
          %s926 = scalar_lea.vmem [#allocation13], %s925
          %s928 = ssub.s32 16, 16
          %929 = vsyncadd %s924, %s928
          %s930 = smul.addr %s49, 16
          %s931 = scalar_lea.hbm %s17, %s930
          %s933 = sshll.u32 %s926, 4
          %s934 = int_to_ptr.vmem [resolvable:$true] %s933
          %936 = dma.hbm_to_vmem [thread:$0]  %s931, 16, %s934, %s924
        $region96: #{tpu_custom_call.1} parent=39 // pred_fallthru
          _
        // Predicated region
        $region97: #{tpu_custom_call.1} parent=39 // pred_check
          %p937 = pneg %p517
        $region98: #{tpu_custom_call.1} parent=39 // pred_check_branch
          %939 = sbr.rel (%p937) target = $region100
        $region99: #{tpu_custom_call.1} parent=39 // pred_region
          %s940 = sand.u32 %s49, 1
          %s941 = scalar_lea.sflag [#allocation14], %s940
          %s942 = sand.u32 %s507, 1
          %s943 = smul.addr %s942, 32
          %s944 = scalar_lea.vmem [#allocation15], %s943
          %s946 = ssub.s32 512, 512
          %947 = vsyncadd %s941, %s946
          %s948 = smul.addr %s49, 4
          %s949 = smul.addr %s948, 128
          %s950 = scalar_lea.hbm %s18, %s949
          %s951 = sshll.u32 %s944, 4
          %s952 = int_to_ptr.vmem [resolvable:$true] %s951
          %957 = dma.hbm_to_vmem [thread:$0]  %s950, 512, %s952, %s941, 128, 128, 8
        $region100: #{tpu_custom_call.1} parent=39 // pred_fallthru
          _
        // Predicated region
        $region101: #{tpu_custom_call.1} parent=39 // pred_check
          %p958 = pneg %p543
        $region102: #{tpu_custom_call.1} parent=39 // pred_check_branch
          %960 = sbr.rel (%p958) target = $region104
        $region103: #{tpu_custom_call.1} parent=39 // pred_region
          %s961 = sand.u32 %s533, 1
          %s962 = scalar_lea.sflag [#allocation17], %s961
          %s963 = sand.u32 %s533, 1
          %s964 = scalar_lea.vmem [#allocation16], %s963
          %s966 = ssub.s32 16, 16
          %967 = vsyncadd %s962, %s966
          %s968 = smul.addr %s49, 16
          %s969 = scalar_lea.hbm %s19, %s968
          %s971 = sshll.u32 %s964, 4
          %s972 = int_to_ptr.vmem [resolvable:$true] %s971
          %974 = dma.hbm_to_vmem [thread:$0]  %s969, 16, %s972, %s962
        $region104: #{tpu_custom_call.1} parent=39 // pred_fallthru
          _
        // Predicated region
        $region105: #{tpu_custom_call.1} parent=39 // pred_check
          %p975 = pneg %p569
        $region106: #{tpu_custom_call.1} parent=39 // pred_check_branch
          %977 = sbr.rel (%p975) target = $region108
        $region107: #{tpu_custom_call.1} parent=39 // pred_region
          %p978 = scmp.lt.s32.totalorder %s49, 1
          %s979 = scalar_select %p978, %s49, 1
          %s980 = smul.addr %s979, 8
          %s981 = smul.addr %s980, 8
          %s982 = scalar_lea.vmem %s20, %s981
        $region108: #{tpu_custom_call.1} parent=39 // pred_fallthru
          _
        // Predicated region
        $region109: #{tpu_custom_call.1} parent=39 // pred_check
          %p983 = pneg %p595
        $region110: #{tpu_custom_call.1} parent=39 // pred_check_branch
          %985 = sbr.rel (%p983) target = $region112
        $region111: #{tpu_custom_call.1} parent=39 // pred_region
          %p986 = scmp.lt.s32.totalorder %s49, 1
          %s987 = scalar_select %p986, %s49, 1
          %s988 = scalar_lea.vmem %s21, %s987
        $region112: #{tpu_custom_call.1} parent=39 // pred_fallthru
          _
        // Predicated region
        $region113: #{tpu_custom_call.1} parent=39 // pred_check
          %p989 = pneg %p621
        $region114: #{tpu_custom_call.1} parent=39 // pred_check_branch
          %991 = sbr.rel (%p989) target = $region116
        $region115: #{tpu_custom_call.1} parent=39 // pred_region
          %p992 = scmp.lt.s32.totalorder %s49, 1
          %s993 = scalar_select %p992, %s49, 1
          %s994 = scalar_lea.vmem %s22, %s993
        $region116: #{tpu_custom_call.1} parent=39 // pred_fallthru
          _
        // Predicated region
        $region117: #{tpu_custom_call.1} parent=39 // pred_check
          %p995 = pneg %p647
        $region118: #{tpu_custom_call.1} parent=39 // pred_check_branch
          %997 = sbr.rel (%p995) target = $region120
        $region119: #{tpu_custom_call.1} parent=39 // pred_region
          %p998 = scmp.lt.s32.totalorder %s49, 1
          %s999 = scalar_select %p998, %s49, 1
          %s1000 = scalar_lea.vmem %s23, %s999
        $region120: #{tpu_custom_call.1} parent=39 // pred_fallthru
          _
      $region40: #{tpu_custom_call.1} parent=5 // pred_fallthru
        _
      %p1001 = scmp.le.s32.totalorder 1, %s49
      %p1002 = scmp.lt.s32.totalorder %s49, 3
      %p1003 = pnand %p1001, %p1002
      %p1004 = pneg %p1003
      // Predicated region
      $region121: #{tpu_custom_call.1} parent=5 // pred_check
        _
      $region122: #{tpu_custom_call.1} parent=5 // pred_check_branch
        %1006 = sbr.rel (%p1003) target = $region124
      $region123: #{tpu_custom_call.1} parent=5 // pred_region
        %s1007 = ssub.s32 %s49, 1
        // Predicated region
        $region125: #{tpu_custom_call.1} parent=123 // pred_check
          %p1008 = pneg %p112
        $region126: #{tpu_custom_call.1} parent=123 // pred_check_branch
          %1010 = sbr.rel (%p1008) target = $region128
        $region127: #{tpu_custom_call.1} parent=123 // pred_region
          %1011 = dma.done [#allocation5], 256
        $region128: #{tpu_custom_call.1} parent=123 // pred_fallthru
          _
        %s1012 = sand.u32 %s54, 1
        %s1013 = scalar_lea.sflag [#allocation8], %s1012
        %s1014 = sand.u32 %s354, 1
        %s1015 = smul.addr %s1014, 32
        %s1016 = scalar_lea.vmem [#allocation7], %s1015
        // Predicated region
        $region129: #{tpu_custom_call.1} parent=123 // pred_check
          %p1017 = pneg %p367
        $region130: #{tpu_custom_call.1} parent=123 // pred_check_branch
          %1019 = sbr.rel (%p1017) target = $region132
        $region131: #{tpu_custom_call.1} parent=123 // pred_region
          %1020 = dma.done %s1013, 512
        $region132: #{tpu_custom_call.1} parent=123 // pred_fallthru
          _
        %s1021 = sand.u32 %s54, 1
        %s1022 = scalar_lea.sflag [#allocation8], %s1021
        %s1023 = sand.u32 %s406, 1
        %s1024 = smul.addr %s1023, 32
        %s1025 = scalar_lea.vmem [#allocation9], %s1024
        // Predicated region
        $region133: #{tpu_custom_call.1} parent=123 // pred_check
          %p1026 = pneg %p419
        $region134: #{tpu_custom_call.1} parent=123 // pred_check_branch
          %1028 = sbr.rel (%p1026) target = $region136
        $region135: #{tpu_custom_call.1} parent=123 // pred_region
          %1029 = dma.done %s1022, 512
        $region136: #{tpu_custom_call.1} parent=123 // pred_fallthru
          _
        %s1030 = sand.u32 %s54, 1
        %s1031 = scalar_lea.sflag [#allocation11], %s1030
        %s1032 = sand.u32 %s432, 1
        %s1033 = scalar_lea.vmem [#allocation10], %s1032
        // Predicated region
        $region137: #{tpu_custom_call.1} parent=123 // pred_check
          %p1034 = pneg %p445
        $region138: #{tpu_custom_call.1} parent=123 // pred_check_branch
          %1036 = sbr.rel (%p1034) target = $region140
        $region139: #{tpu_custom_call.1} parent=123 // pred_region
          %1037 = dma.done %s1031, 16
        $region140: #{tpu_custom_call.1} parent=123 // pred_fallthru
          _
        %s1038 = sand.u32 %s54, 1
        %s1039 = scalar_lea.sflag [#allocation11], %s1038
        %s1040 = sand.u32 %s458, 1
        %s1041 = scalar_lea.vmem [#allocation12], %s1040
        // Predicated region
        $region141: #{tpu_custom_call.1} parent=123 // pred_check
          %p1042 = pneg %p471
        $region142: #{tpu_custom_call.1} parent=123 // pred_check_branch
          %1044 = sbr.rel (%p1042) target = $region144
        $region143: #{tpu_custom_call.1} parent=123 // pred_region
          %1045 = dma.done %s1039, 16
        $region144: #{tpu_custom_call.1} parent=123 // pred_fallthru
          _
        %s1046 = sand.u32 %s54, 1
        %s1047 = scalar_lea.sflag [#allocation14], %s1046
        %s1048 = sand.u32 %s484, 1
        %s1049 = scalar_lea.vmem [#allocation13], %s1048
        // Predicated region
        $region145: #{tpu_custom_call.1} parent=123 // pred_check
          %p1050 = pneg %p497
        $region146: #{tpu_custom_call.1} parent=123 // pred_check_branch
          %1052 = sbr.rel (%p1050) target = $region148
        $region147: #{tpu_custom_call.1} parent=123 // pred_region
          %1053 = dma.done %s1047, 16
        $region148: #{tpu_custom_call.1} parent=123 // pred_fallthru
          _
        %s1054 = sand.u32 %s54, 1
        %s1055 = scalar_lea.sflag [#allocation14], %s1054
        %s1056 = sand.u32 %s510, 1
        %s1057 = smul.addr %s1056, 32
        %s1058 = scalar_lea.vmem [#allocation15], %s1057
        // Predicated region
        $region149: #{tpu_custom_call.1} parent=123 // pred_check
          %p1059 = pneg %p523
        $region150: #{tpu_custom_call.1} parent=123 // pred_check_branch
          %1061 = sbr.rel (%p1059) target = $region152
        $region151: #{tpu_custom_call.1} parent=123 // pred_region
          %1062 = dma.done %s1055, 512
        $region152: #{tpu_custom_call.1} parent=123 // pred_fallthru
          _
        %s1063 = sand.u32 %s536, 1
        %s1064 = scalar_lea.sflag [#allocation17], %s1063
        %s1065 = sand.u32 %s536, 1
        %s1066 = scalar_lea.vmem [#allocation16], %s1065
        // Predicated region
        $region153: #{tpu_custom_call.1} parent=123 // pred_check
          %p1067 = pneg %p549
        $region154: #{tpu_custom_call.1} parent=123 // pred_check_branch
          %1069 = sbr.rel (%p1067) target = $region156
        $region155: #{tpu_custom_call.1} parent=123 // pred_region
          %1070 = dma.done %s1064, 16
        $region156: #{tpu_custom_call.1} parent=123 // pred_fallthru
          _
        %p1071 = pneg %p70
        %p1072 = pneg %p67
        %p1073 = pneg %p91
        %p1074 = pneg %p88
        %p1075 = pneg %p112
        %p1076 = pneg %p109
        %p1077 = pneg %p133
        %p1078 = pneg %p130
        %p1079 = scmp.lt.s32.totalorder %s54, 1
        %s1080 = scalar_select %p1079, %s54, 1
        %s1081 = smul.addr %s1080, 4
        %s1082 = smul.addr %s1081, 8
        %s1083 = scalar_lea.vmem %s4, %s1082
        %p1084 = pneg %p159
        %p1085 = pneg %p156
        %p1086 = scmp.lt.s32.totalorder %s54, 1
        %s1087 = scalar_select %p1086, %s54, 1
        %s1088 = scalar_lea.vmem %s5, %s1087
        %p1089 = pneg %p185
        %p1090 = pneg %p182
        %p1091 = scmp.lt.s32.totalorder %s54, 1
        %s1092 = scalar_select %p1091, %s54, 1
        %s1093 = smul.addr %s1092, 4
        %s1094 = smul.addr %s1093, 8
        %s1095 = scalar_lea.vmem %s6, %s1094
        %p1096 = pneg %p211
        %p1097 = pneg %p208
        %p1098 = scmp.lt.s32.totalorder %s54, 1
        %s1099 = scalar_select %p1098, %s54, 1
        %s1100 = scalar_lea.vmem %s7, %s1099
        %p1101 = pneg %p237
        %p1102 = pneg %p234
        %p1103 = scmp.lt.s32.totalorder %s54, 1
        %s1104 = scalar_select %p1103, %s54, 1
        %s1105 = scalar_lea.vmem %s8, %s1104
        %p1106 = pneg %p263
        %p1107 = pneg %p260
        %p1108 = scmp.lt.s32.totalorder %s54, 1
        %s1109 = scalar_select %p1108, %s54, 1
        %s1110 = scalar_lea.vmem %s9, %s1109
        %p1111 = pneg %p289
        %p1112 = pneg %p286
        %p1113 = scmp.lt.s32.totalorder %s54, 1
        %s1114 = scalar_select %p1113, %s54, 1
        %s1115 = smul.addr %s1114, 4
        %s1116 = smul.addr %s1115, 8
        %s1117 = scalar_lea.vmem %s10, %s1116
        %p1118 = pneg %p315
        %p1119 = pneg %p312
        %p1120 = scmp.lt.s32.totalorder %s54, 1
        %s1121 = scalar_select %p1120, %s54, 1
        %s1122 = scalar_lea.vmem %s11, %s1121
        %p1123 = pneg %p341
        %p1124 = pneg %p338
        %s1125 = sand.u32 %s54, 1
        %s1126 = scalar_lea.sflag [#allocation8], %s1125
        %s1127 = sand.u32 %s354, 1
        %s1128 = smul.addr %s1127, 32
        %s1129 = scalar_lea.vmem [#allocation7], %s1128
        %p1130 = pneg %p367
        %p1131 = pneg %p364
        %p1132 = scmp.lt.s32.totalorder %s54, 1
        %s1133 = scalar_select %p1132, %s54, 1
        %s1134 = scalar_lea.vmem %s13, %s1133
        %p1135 = pneg %p393
        %p1136 = pneg %p390
        %s1137 = sand.u32 %s54, 1
        %s1138 = scalar_lea.sflag [#allocation8], %s1137
        %s1139 = sand.u32 %s406, 1
        %s1140 = smul.addr %s1139, 32
        %s1141 = scalar_lea.vmem [#allocation9], %s1140
        %p1142 = pneg %p419
        %p1143 = pneg %p416
        %s1144 = sand.u32 %s54, 1
        %s1145 = scalar_lea.sflag [#allocation11], %s1144
        %s1146 = sand.u32 %s432, 1
        %s1147 = scalar_lea.vmem [#allocation10], %s1146
        %p1148 = pneg %p445
        %p1149 = pneg %p442
        %s1150 = sand.u32 %s54, 1
        %s1151 = scalar_lea.sflag [#allocation11], %s1150
        %s1152 = sand.u32 %s458, 1
        %s1153 = scalar_lea.vmem [#allocation12], %s1152
        %p1154 = pneg %p471
        %p1155 = pneg %p468
        %s1156 = sand.u32 %s54, 1
        %s1157 = scalar_lea.sflag [#allocation14], %s1156
        %s1158 = sand.u32 %s484, 1
        %s1159 = scalar_lea.vmem [#allocation13], %s1158
        %p1160 = pneg %p497
        %p1161 = pneg %p494
        %s1162 = sand.u32 %s54, 1
        %s1163 = scalar_lea.sflag [#allocation14], %s1162
        %s1164 = sand.u32 %s510, 1
        %s1165 = smul.addr %s1164, 32
        %s1166 = scalar_lea.vmem [#allocation15], %s1165
        %p1167 = pneg %p523
        %p1168 = pneg %p520
        %s1169 = sand.u32 %s536, 1
        %s1170 = scalar_lea.sflag [#allocation17], %s1169
        %s1171 = sand.u32 %s536, 1
        %s1172 = scalar_lea.vmem [#allocation16], %s1171
        %p1173 = pneg %p549
        %p1174 = pneg %p546
        %p1175 = scmp.lt.s32.totalorder %s54, 1
        %s1176 = scalar_select %p1175, %s54, 1
        %s1177 = smul.addr %s1176, 8
        %s1178 = smul.addr %s1177, 8
        %s1179 = scalar_lea.vmem %s20, %s1178
        %p1180 = pneg %p575
        %p1181 = pneg %p572
        %p1182 = scmp.lt.s32.totalorder %s54, 1
        %s1183 = scalar_select %p1182, %s54, 1
        %s1184 = scalar_lea.vmem %s21, %s1183
        %p1185 = pneg %p601
        %p1186 = pneg %p598
        %p1187 = scmp.lt.s32.totalorder %s54, 1
        %s1188 = scalar_select %p1187, %s54, 1
        %s1189 = scalar_lea.vmem %s22, %s1188
        %p1190 = pneg %p627
        %p1191 = pneg %p624
        %p1192 = scmp.lt.s32.totalorder %s54, 1
        %s1193 = scalar_select %p1192, %s54, 1
        %s1194 = scalar_lea.vmem %s23, %s1193
        %p1195 = pneg %p653
        %p1196 = pneg %p650
        %p1197 = pneg %p674
        %p1198 = pneg %p671
        %p1199 = pneg %p695
        %p1200 = pneg %p692
        %p1201 = pneg %p716
        %p1202 = pneg %p713
        %p1203 = pneg %p737
        %p1204 = pneg %p734
        %p1205 = scmp.lt.s32.totalorder %s54, 1
        %s1206 = scalar_select %p1205, %s54, 1
        %s1207 = smul.addr %s1206, 4
        %s1208 = smul.addr %s1207, 8
        %s1209 = scalar_lea.vmem %s4, %s1208
        %p1210 = scmp.lt.s32.totalorder %s54, 1
        %s1211 = scalar_select %p1210, %s54, 1
        %s1212 = scalar_lea.vmem %s5, %s1211
        %p1213 = scmp.lt.s32.totalorder %s54, 1
        %s1214 = scalar_select %p1213, %s54, 1
        %s1215 = smul.addr %s1214, 4
        %s1216 = smul.addr %s1215, 8
        %s1217 = scalar_lea.vmem %s6, %s1216
        %p1218 = scmp.lt.s32.totalorder %s54, 1
        %s1219 = scalar_select %p1218, %s54, 1
        %s1220 = scalar_lea.vmem %s7, %s1219
        %p1221 = scmp.lt.s32.totalorder %s54, 1
        %s1222 = scalar_select %p1221, %s54, 1
        %s1223 = scalar_lea.vmem %s8, %s1222
        %p1224 = scmp.lt.s32.totalorder %s54, 1
        %s1225 = scalar_select %p1224, %s54, 1
        %s1226 = scalar_lea.vmem %s9, %s1225
        %p1227 = scmp.lt.s32.totalorder %s54, 1
        %s1228 = scalar_select %p1227, %s54, 1
        %s1229 = smul.addr %s1228, 4
        %s1230 = smul.addr %s1229, 8
        %s1231 = scalar_lea.vmem %s10, %s1230
        %p1232 = scmp.lt.s32.totalorder %s54, 1
        %s1233 = scalar_select %p1232, %s54, 1
        %s1234 = scalar_lea.vmem %s11, %s1233
        %p1235 = scmp.lt.s32.totalorder %s54, 1
        %s1236 = scalar_select %p1235, %s54, 1
        %s1237 = scalar_lea.vmem %s13, %s1236
        %p1238 = scmp.lt.s32.totalorder %s54, 1
        %s1239 = scalar_select %p1238, %s54, 1
        %s1240 = smul.addr %s1239, 8
        %s1241 = smul.addr %s1240, 8
        %s1242 = scalar_lea.vmem %s20, %s1241
        %p1243 = scmp.lt.s32.totalorder %s54, 1
        %s1244 = scalar_select %p1243, %s54, 1
        %s1245 = scalar_lea.vmem %s21, %s1244
        %p1246 = scmp.lt.s32.totalorder %s54, 1
        %s1247 = scalar_select %p1246, %s54, 1
        %s1248 = scalar_lea.vmem %s22, %s1247
        %p1249 = scmp.lt.s32.totalorder %s54, 1
        %s1250 = scalar_select %p1249, %s54, 1
        %s1251 = scalar_lea.vmem %s23, %s1250
        %p1252 = scmp.eq.s32.totalorder %s54, 0
        // Predicated region
        $region157: #{tpu_custom_call.1} parent=123 // pred_check
          %p1253 = pneg %p1252
        $region158: #{tpu_custom_call.1} parent=123 // pred_check_branch
          %1255 = sbr.rel (%p1253) target = $region160
        $region159: #{tpu_custom_call.1} parent=123 // pred_region
          %v1256 = vld [vmem:[%s0] sm:$0xff]
          %v1257 = vld [vmem:[%s0 + $0x8] sm:$0xff]
          %vm1258 = vcmask 261120
          %1259 = vst.msk [vmem:[#allocation2] sm:$0xff] %vm1258, %v1256
          %1260 = vst.msk [vmem:[#allocation2 + $0x8] sm:$0xff] %vm1258, %v1257
        $region160: #{tpu_custom_call.1} parent=123 // pred_fallthru
          _
        %v1261 = vld [vmem:[#allocation2] sm:$0xff]
        %v1262 = vld [vmem:[#allocation2 + $0x8] sm:$0xff]
        %v1263 = vld [vmem:[%s1209] sm:$0xff]
        %v1264 = vld [vmem:[%s1209 + $0x8] sm:$0xff]
        %v1265 = vld [vmem:[%s1209 + $0x10] sm:$0xff]
        %v1266 = vld [vmem:[%s1209 + $0x18] sm:$0xff]
        %v1267 = vld [vmem:[%s1212] sm:$0x1]
        %v1269 = vlaneseq
        %v1270 = vshrl.u32 %v1269, 7
        %v1271 = vsub.s32 0, %v1270
        %v1272 = vrot.slane %v1267, %v1271
        %vm1274 = vcmask 261120
        %v1276 = vsel %vm1274, %v1261, 0
        %v1279 = vsel %vm1274, %v1262, 0
        %1281 = vmatprep.subr.mxu0 0.0
        %1282 = vmatpush1.msra.mxu0 %v1263
        %1283 = vmatprep.subr.mxu0 0.0
        %1284 = vmatpush1.msra.mxu0 %v1264
        %1285 = vmatprep.subr.mxu0 0.0
        %1286 = vmatpush1.msra.mxu0 %v1265
        %1287 = vmatprep.subr.mxu0 0.0
        %1288 = vmatpush1.msra.mxu0 %v1266
        %1289 = vmatprep.subr.mxu0 0.0
        %1290 = vmatpush1.msra.mxu0 0.0
        %1291 = vmatprep.subr.mxu0 0.0
        %1292 = vmatpush1.msra.mxu0 0.0
        %1293 = vmatprep.subr.mxu0 0.0
        %1294 = vmatpush1.msra.mxu0 0.0
        %1295 = vmatprep.subr.mxu0 0.0
        %1296 = vmatpush1.msra.mxu0 0.0
        %1297 = vmatprep.subr.mxu0 0.0
        %1298 = vmatpush1.msra.mxu0 0.0
        %1299 = vmatprep.subr.mxu0 0.0
        %1300 = vmatpush1.msra.mxu0 0.0
        %1301 = vmatprep.subr.mxu0 0.0
        %1302 = vmatpush1.msra.mxu0 0.0
        %1303 = vmatprep.subr.mxu0 0.0
        %1304 = vmatpush1.msra.mxu0 0.0
        %1305 = vmatprep.subr.mxu0 0.0
        %1306 = vmatpush1.msra.mxu0 0.0
        %1307 = vmatprep.subr.mxu0 0.0
        %1308 = vmatpush1.msra.mxu0 0.0
        %1309 = vmatprep.subr.mxu0 0.0
        %1310 = vmatpush1.msra.mxu0 0.0
        %1311 = vmatprep.subr.mxu0 0.0
        %1312 = vmatpush1.msra.mxu0 0.0
        %1313 = vmatprep.subr.mxu0 0.0
        %1314 = vmatpush1.msra.mxu0 0.0
        %1315 = vmatprep.subr.mxu0 0.0
        %1316 = vmatpush1.msra.mxu0 0.0
        %1317 = vmatprep.subr.mxu0 0.0
        %1318 = vmatpush1.msra.mxu0 0.0
        %1319 = vmatprep.subr.mxu0 0.0
        %1320 = vmatpush1.msra.mxu0 0.0
        %1321 = vmatprep.subr.mxu0 0.0
        %1322 = vmatpush1.msra.mxu0 0.0
        %1323 = vmatprep.subr.mxu0 0.0
        %1324 = vmatpush1.msra.mxu0 0.0
        %1325 = vmatprep.subr.mxu0 0.0
        %1326 = vmatpush1.msra.mxu0 0.0
        %1327 = vmatprep.subr.mxu0 0.0
        %1328 = vmatpush1.msra.mxu0 0.0
        %1329 = vmatprep.subr.mxu0 0.0
        %1330 = vmatpush1.msra.mxu0 0.0
        %1331 = vmatprep.subr.mxu0 0.0
        %1332 = vmatpush1.msra.mxu0 0.0
        %1333 = vmatprep.subr.mxu0 0.0
        %1334 = vmatpush1.msra.mxu0 0.0
        %1335 = vmatprep.subr.mxu0 0.0
        %1336 = vmatpush1.msra.mxu0 0.0
        %1337 = vmatprep.subr.mxu0 0.0
        %1338 = vmatpush1.msra.mxu0 0.0
        %1339 = vmatprep.subr.mxu0 0.0
        %1340 = vmatpush1.msra.mxu0 0.0
        %1341 = vmatprep.subr.mxu0 0.0
        %1342 = vmatpush1.msra.mxu0 0.0
        %1343 = vmatprep.subr.mxu0 0.0
        %1344 = vmatpush1.msra.mxu0 0.0
        %1345 = vmatprep.mubr.f32.mxu0 0.0
        %1346 = vmatmul.mubr.f32.gmra.mrb[0].mxu0 %v1276
        %v1347 = vpop.f32.mrb[0].mxu0
        %v1348 = vadd.f32 %v1272, %v1347
        %v1349 = vpop.f32.mrb[0].mxu0
        %1350 = vmatprep.mubr.f32.mxu0 0.0
        %1351 = vmatmul.mubr.f32.gmra.mrb[0].mxu0 %v1279
        %v1352 = vpop.f32.mrb[0].mxu0
        %v1353 = vadd.f32 %v1272, %v1352
        %v1354 = vpop.f32.mrb[0].mxu0
        %1355 = vdwg.mxu0
        %v1356 = vld [vmem:[#allocation4] sm:$0xff]
        %1358 = vrot.lane.b32.xlu0 %v1348, 96
        %v1359 = vpop.permute.xlu0 %1358
        %vm1360 = vcmask 64512
        %v1361 = vsel %vm1360, %v1348, 0
        %v1363 = vsel %vm1360, %v1359, 0
        %1365 = vmatprep.subr.mxu0 0.0
        %1366 = vmatpush1.xpose.msra.mxu0 %v1363
        %1367 = vmatprep.subr.mxu0 0.0
        %1368 = vmatpush1.xpose.msra.mxu0 0.0
        %1369 = vmatprep.subr.mxu0 0.0
        %1370 = vmatpush1.xpose.msra.mxu0 0.0
        %1371 = vmatprep.subr.mxu0 0.0
        %1372 = vmatpush1.xpose.msra.mxu0 0.0
        %1373 = vmatprep.subr.mxu0 0.0
        %1374 = vmatpush1.xpose.msra.mxu0 0.0
        %1375 = vmatprep.subr.mxu0 0.0
        %1376 = vmatpush1.xpose.msra.mxu0 0.0
        %1377 = vmatprep.subr.mxu0 0.0
        %1378 = vmatpush1.xpose.msra.mxu0 0.0
        %1379 = vmatprep.subr.mxu0 0.0
        %1380 = vmatpush1.xpose.msra.mxu0 0.0
        %1381 = vmatprep.subr.mxu0 0.0
        %1382 = vmatpush1.xpose.msra.mxu0 0.0
        %1383 = vmatprep.subr.mxu0 0.0
        %1384 = vmatpush1.xpose.msra.mxu0 0.0
        %1385 = vmatprep.subr.mxu0 0.0
        %1386 = vmatpush1.xpose.msra.mxu0 0.0
        %1387 = vmatprep.subr.mxu0 0.0
        %1388 = vmatpush1.xpose.msra.mxu0 0.0
        %1389 = vmatprep.subr.mxu0 0.0
        %1390 = vmatpush1.xpose.msra.mxu0 0.0
        %1391 = vmatprep.subr.mxu0 0.0
        %1392 = vmatpush1.xpose.msra.mxu0 0.0
        %1393 = vmatprep.subr.mxu0 0.0
        %1394 = vmatpush1.xpose.msra.mxu0 0.0
        %1395 = vmatprep.subr.mxu0 0.0
        %1396 = vmatpush1.xpose.msra.mxu0 0.0
        %1397 = vmatprep.subr.mxu0 0.0
        %1398 = vmatpush1.xpose.msra.mxu0 0.0
        %1399 = vmatprep.subr.mxu0 0.0
        %1400 = vmatpush1.xpose.msra.mxu0 0.0
        %1401 = vmatprep.subr.mxu0 0.0
        %1402 = vmatpush1.xpose.msra.mxu0 0.0
        %1403 = vmatprep.subr.mxu0 0.0
        %1404 = vmatpush1.xpose.msra.mxu0 0.0
        %1405 = vmatprep.subr.mxu0 0.0
        %1406 = vmatpush1.xpose.msra.mxu0 0.0
        %1407 = vmatprep.subr.mxu0 0.0
        %1408 = vmatpush1.xpose.msra.mxu0 0.0
        %1409 = vmatprep.subr.mxu0 0.0
        %1410 = vmatpush1.xpose.msra.mxu0 0.0
        %1411 = vmatprep.subr.mxu0 0.0
        %1412 = vmatpush1.xpose.msra.mxu0 0.0
        %1413 = vmatprep.subr.mxu0 0.0
        %1414 = vmatpush1.xpose.msra.mxu0 0.0
        %1415 = vmatprep.subr.mxu0 0.0
        %1416 = vmatpush1.xpose.msra.mxu0 0.0
        %1417 = vmatprep.subr.mxu0 0.0
        %1418 = vmatpush1.xpose.msra.mxu0 0.0
        %1419 = vmatprep.subr.mxu0 0.0
        %1420 = vmatpush1.xpose.msra.mxu0 0.0
        %1421 = vmatprep.subr.mxu0 0.0
        %1422 = vmatpush1.xpose.msra.mxu0 0.0
        %1423 = vmatprep.subr.mxu0 0.0
        %1424 = vmatpush1.xpose.msra.mxu0 0.0
        %1425 = vmatprep.subr.mxu0 0.0
        %1426 = vmatpush1.xpose.msra.mxu0 0.0
        %1427 = vmatprep.subr.mxu0 0.0
        %1428 = vmatpush1.xpose.msra.mxu0 0.0
        %1429 = vmatprep.mubr.f32.mxu0 0.0
        %1430 = vmatmul.mubr.f32.gmra.mrb[0].mxu0 %v1361
        %v1431 = vpop.f32.mrb[0].mxu0
        %v1432 = vadd.f32 0.0, %v1431
        %v1433 = vpop.f32.mrb[0].mxu0
        %1434 = vdwg.mxu0
        %vm1435 = vcmp.gt.f32.partialorder %v1356, 0.0
        %v1436 = vmul.f32 %v1432, 0.35355338
        %v1437 = vsel %vm1435, %v1436, -1e+10
        %v1438 = vsel %vm1360, %v1437, -inf
        %1439 = vmax.xlane.f32.xlu0 %v1438
        %v1440 = vpop.xlane.xlu0 %1439
        %v1441 = vsub.f32 %v1437, %v1440
        %v1442 = vmul.f32 %v1441, 1.442695
        %v1443 = vpow.pop %v1442
        %v1444 = vsel %vm1360, %v1443, 0.0
        %1445 = vadd.xlane.f32.xlu0 %v1444
        %v1446 = vpop.xlane.xlu0 %1445
        %v1447 = vrcp.pop %v1446
        %v1448 = vmul.f32 %v1443, %v1447
        %1449 = vrot.lane.b32.xlu0 %v1348, 64
        %v1450 = vpop.permute.xlu0 %1449
        %v1453 = vsel %vm1360, %v1448, 0
        %1455 = vmatprep.subr.mxu0 0.0
        %1456 = vmatpush1.msra.mxu0 %v1450
        %1457 = vmatprep.subr.mxu0 0.0
        %1458 = vmatpush1.msra.mxu0 0.0
        %1459 = vmatprep.subr.mxu0 0.0
        %1460 = vmatpush1.msra.mxu0 0.0
        %1461 = vmatprep.subr.mxu0 0.0
        %1462 = vmatpush1.msra.mxu0 0.0
        %1463 = vmatprep.subr.mxu0 0.0
        %1464 = vmatpush1.msra.mxu0 0.0
        %1465 = vmatprep.subr.mxu0 0.0
        %1466 = vmatpush1.msra.mxu0 0.0
        %1467 = vmatprep.subr.mxu0 0.0
        %1468 = vmatpush1.msra.mxu0 0.0
        %1469 = vmatprep.subr.mxu0 0.0
        %1470 = vmatpush1.msra.mxu0 0.0
        %1471 = vmatprep.subr.mxu0 0.0
        %1472 = vmatpush1.msra.mxu0 0.0
        %1473 = vmatprep.subr.mxu0 0.0
        %1474 = vmatpush1.msra.mxu0 0.0
        %1475 = vmatprep.subr.mxu0 0.0
        %1476 = vmatpush1.msra.mxu0 0.0
        %1477 = vmatprep.subr.mxu0 0.0
        %1478 = vmatpush1.msra.mxu0 0.0
        %1479 = vmatprep.subr.mxu0 0.0
        %1480 = vmatpush1.msra.mxu0 0.0
        %1481 = vmatprep.subr.mxu0 0.0
        %1482 = vmatpush1.msra.mxu0 0.0
        %1483 = vmatprep.subr.mxu0 0.0
        %1484 = vmatpush1.msra.mxu0 0.0
        %1485 = vmatprep.subr.mxu0 0.0
        %1486 = vmatpush1.msra.mxu0 0.0
        %1487 = vmatprep.subr.mxu0 0.0
        %1488 = vmatpush1.msra.mxu0 0.0
        %1489 = vmatprep.subr.mxu0 0.0
        %1490 = vmatpush1.msra.mxu0 0.0
        %1491 = vmatprep.subr.mxu0 0.0
        %1492 = vmatpush1.msra.mxu0 0.0
        %1493 = vmatprep.subr.mxu0 0.0
        %1494 = vmatpush1.msra.mxu0 0.0
        %1495 = vmatprep.subr.mxu0 0.0
        %1496 = vmatpush1.msra.mxu0 0.0
        %1497 = vmatprep.subr.mxu0 0.0
        %1498 = vmatpush1.msra.mxu0 0.0
        %1499 = vmatprep.subr.mxu0 0.0
        %1500 = vmatpush1.msra.mxu0 0.0
        %1501 = vmatprep.subr.mxu0 0.0
        %1502 = vmatpush1.msra.mxu0 0.0
        %1503 = vmatprep.subr.mxu0 0.0
        %1504 = vmatpush1.msra.mxu0 0.0
        %1505 = vmatprep.subr.mxu0 0.0
        %1506 = vmatpush1.msra.mxu0 0.0
        %1507 = vmatprep.subr.mxu0 0.0
        %1508 = vmatpush1.msra.mxu0 0.0
        %1509 = vmatprep.subr.mxu0 0.0
        %1510 = vmatpush1.msra.mxu0 0.0
        %1511 = vmatprep.subr.mxu0 0.0
        %1512 = vmatpush1.msra.mxu0 0.0
        %1513 = vmatprep.subr.mxu0 0.0
        %1514 = vmatpush1.msra.mxu0 0.0
        %1515 = vmatprep.subr.mxu0 0.0
        %1516 = vmatpush1.msra.mxu0 0.0
        %1517 = vmatprep.subr.mxu0 0.0
        %1518 = vmatpush1.msra.mxu0 0.0
        %1519 = vmatprep.mubr.f32.mxu0 0.0
        %1520 = vmatmul.mubr.f32.gmra.mrb[0].mxu0 %v1453
        %v1521 = vpop.f32.mrb[0].mxu0
        %v1522 = vadd.f32 0.0, %v1521
        %v1523 = vpop.f32.mrb[0].mxu0
        %1524 = vdwg.mxu0
        %1525 = vst.msk [vmem:[#allocation3] sm:$0xff] %vm1360, %v1522
        %1526 = vrot.lane.b32.xlu0 %v1348, 120
        %v1527 = vpop.permute.xlu0 %1526
        %1528 = vrot.lane.b32.xlu0 %v1348, 88
        %v1529 = vpop.permute.xlu0 %1528
        %v1530 = vsel %vm1360, %v1527, 0
        %v1532 = vsel %vm1360, %v1529, 0
        %1534 = vmatprep.subr.mxu0 0.0
        %1535 = vmatpush1.xpose.msra.mxu0 %v1532
        %1536 = vmatprep.subr.mxu0 0.0
        %1537 = vmatpush1.xpose.msra.mxu0 0.0
        %1538 = vmatprep.subr.mxu0 0.0
        %1539 = vmatpush1.xpose.msra.mxu0 0.0
        %1540 = vmatprep.subr.mxu0 0.0
        %1541 = vmatpush1.xpose.msra.mxu0 0.0
        %1542 = vmatprep.subr.mxu0 0.0
        %1543 = vmatpush1.xpose.msra.mxu0 0.0
        %1544 = vmatprep.subr.mxu0 0.0
        %1545 = vmatpush1.xpose.msra.mxu0 0.0
        %1546 = vmatprep.subr.mxu0 0.0
        %1547 = vmatpush1.xpose.msra.mxu0 0.0
        %1548 = vmatprep.subr.mxu0 0.0
        %1549 = vmatpush1.xpose.msra.mxu0 0.0
        %1550 = vmatprep.subr.mxu0 0.0
        %1551 = vmatpush1.xpose.msra.mxu0 0.0
        %1552 = vmatprep.subr.mxu0 0.0
        %1553 = vmatpush1.xpose.msra.mxu0 0.0
        %1554 = vmatprep.subr.mxu0 0.0
        %1555 = vmatpush1.xpose.msra.mxu0 0.0
        %1556 = vmatprep.subr.mxu0 0.0
        %1557 = vmatpush1.xpose.msra.mxu0 0.0
        %1558 = vmatprep.subr.mxu0 0.0
        %1559 = vmatpush1.xpose.msra.mxu0 0.0
        %1560 = vmatprep.subr.mxu0 0.0
        %1561 = vmatpush1.xpose.msra.mxu0 0.0
        %1562 = vmatprep.subr.mxu0 0.0
        %1563 = vmatpush1.xpose.msra.mxu0 0.0
        %1564 = vmatprep.subr.mxu0 0.0
        %1565 = vmatpush1.xpose.msra.mxu0 0.0
        %1566 = vmatprep.subr.mxu0 0.0
        %1567 = vmatpush1.xpose.msra.mxu0 0.0
        %1568 = vmatprep.subr.mxu0 0.0
        %1569 = vmatpush1.xpose.msra.mxu0 0.0
        %1570 = vmatprep.subr.mxu0 0.0
        %1571 = vmatpush1.xpose.msra.mxu0 0.0
        %1572 = vmatprep.subr.mxu0 0.0
        %1573 = vmatpush1.xpose.msra.mxu0 0.0
        %1574 = vmatprep.subr.mxu0 0.0
        %1575 = vmatpush1.xpose.msra.mxu0 0.0
        %1576 = vmatprep.subr.mxu0 0.0
        %1577 = vmatpush1.xpose.msra.mxu0 0.0
        %1578 = vmatprep.subr.mxu0 0.0
        %1579 = vmatpush1.xpose.msra.mxu0 0.0
        %1580 = vmatprep.subr.mxu0 0.0
        %1581 = vmatpush1.xpose.msra.mxu0 0.0
        %1582 = vmatprep.subr.mxu0 0.0
        %1583 = vmatpush1.xpose.msra.mxu0 0.0
        %1584 = vmatprep.subr.mxu0 0.0
        %1585 = vmatpush1.xpose.msra.mxu0 0.0
        %1586 = vmatprep.subr.mxu0 0.0
        %1587 = vmatpush1.xpose.msra.mxu0 0.0
        %1588 = vmatprep.subr.mxu0 0.0
        %1589 = vmatpush1.xpose.msra.mxu0 0.0
        %1590 = vmatprep.subr.mxu0 0.0
        %1591 = vmatpush1.xpose.msra.mxu0 0.0
        %1592 = vmatprep.subr.mxu0 0.0
        %1593 = vmatpush1.xpose.msra.mxu0 0.0
        %1594 = vmatprep.subr.mxu0 0.0
        %1595 = vmatpush1.xpose.msra.mxu0 0.0
        %1596 = vmatprep.subr.mxu0 0.0
        %1597 = vmatpush1.xpose.msra.mxu0 0.0
        %1598 = vmatprep.mubr.f32.mxu0 0.0
        %1599 = vmatmul.mubr.f32.gmra.mrb[0].mxu0 %v1530
        %v1600 = vpop.f32.mrb[0].mxu0
        %v1601 = vadd.f32 0.0, %v1600
        %v1602 = vpop.f32.mrb[0].mxu0
        %1603 = vdwg.mxu0
        %v1604 = vmul.f32 %v1601, 0.35355338
        %v1605 = vsel %vm1435, %v1604, -1e+10
        %v1606 = vsel %vm1360, %v1605, -inf
        %1607 = vmax.xlane.f32.xlu0 %v1606
        %v1608 = vpop.xlane.xlu0 %1607
        %v1609 = vsub.f32 %v1605, %v1608
        %v1610 = vmul.f32 %v1609, 1.442695
        %v1611 = vpow.pop %v1610
        %v1612 = vsel %vm1360, %v1611, 0.0
        %1613 = vadd.xlane.f32.xlu0 %v1612
        %v1614 = vpop.xlane.xlu0 %1613
        %v1615 = vrcp.pop %v1614
        %v1616 = vmul.f32 %v1611, %v1615
        %1617 = vrot.lane.b32.xlu0 %v1348, 56
        %v1618 = vpop.permute.xlu0 %1617
        %v1621 = vsel %vm1360, %v1616, 0
        %1623 = vmatprep.subr.mxu0 0.0
        %1624 = vmatpush1.msra.mxu0 %v1618
        %1625 = vmatprep.subr.mxu0 0.0
        %1626 = vmatpush1.msra.mxu0 0.0
        %1627 = vmatprep.subr.mxu0 0.0
        %1628 = vmatpush1.msra.mxu0 0.0
        %1629 = vmatprep.subr.mxu0 0.0
        %1630 = vmatpush1.msra.mxu0 0.0
        %1631 = vmatprep.subr.mxu0 0.0
        %1632 = vmatpush1.msra.mxu0 0.0
        %1633 = vmatprep.subr.mxu0 0.0
        %1634 = vmatpush1.msra.mxu0 0.0
        %1635 = vmatprep.subr.mxu0 0.0
        %1636 = vmatpush1.msra.mxu0 0.0
        %1637 = vmatprep.subr.mxu0 0.0
        %1638 = vmatpush1.msra.mxu0 0.0
        %1639 = vmatprep.subr.mxu0 0.0
        %1640 = vmatpush1.msra.mxu0 0.0
        %1641 = vmatprep.subr.mxu0 0.0
        %1642 = vmatpush1.msra.mxu0 0.0
        %1643 = vmatprep.subr.mxu0 0.0
        %1644 = vmatpush1.msra.mxu0 0.0
        %1645 = vmatprep.subr.mxu0 0.0
        %1646 = vmatpush1.msra.mxu0 0.0
        %1647 = vmatprep.subr.mxu0 0.0
        %1648 = vmatpush1.msra.mxu0 0.0
        %1649 = vmatprep.subr.mxu0 0.0
        %1650 = vmatpush1.msra.mxu0 0.0
        %1651 = vmatprep.subr.mxu0 0.0
        %1652 = vmatpush1.msra.mxu0 0.0
        %1653 = vmatprep.subr.mxu0 0.0
        %1654 = vmatpush1.msra.mxu0 0.0
        %1655 = vmatprep.subr.mxu0 0.0
        %1656 = vmatpush1.msra.mxu0 0.0
        %1657 = vmatprep.subr.mxu0 0.0
        %1658 = vmatpush1.msra.mxu0 0.0
        %1659 = vmatprep.subr.mxu0 0.0
        %1660 = vmatpush1.msra.mxu0 0.0
        %1661 = vmatprep.subr.mxu0 0.0
        %1662 = vmatpush1.msra.mxu0 0.0
        %1663 = vmatprep.subr.mxu0 0.0
        %1664 = vmatpush1.msra.mxu0 0.0
        %1665 = vmatprep.subr.mxu0 0.0
        %1666 = vmatpush1.msra.mxu0 0.0
        %1667 = vmatprep.subr.mxu0 0.0
        %1668 = vmatpush1.msra.mxu0 0.0
        %1669 = vmatprep.subr.mxu0 0.0
        %1670 = vmatpush1.msra.mxu0 0.0
        %1671 = vmatprep.subr.mxu0 0.0
        %1672 = vmatpush1.msra.mxu0 0.0
        %1673 = vmatprep.subr.mxu0 0.0
        %1674 = vmatpush1.msra.mxu0 0.0
        %1675 = vmatprep.subr.mxu0 0.0
        %1676 = vmatpush1.msra.mxu0 0.0
        %1677 = vmatprep.subr.mxu0 0.0
        %1678 = vmatpush1.msra.mxu0 0.0
        %1679 = vmatprep.subr.mxu0 0.0
        %1680 = vmatpush1.msra.mxu0 0.0
        %1681 = vmatprep.subr.mxu0 0.0
        %1682 = vmatpush1.msra.mxu0 0.0
        %1683 = vmatprep.subr.mxu0 0.0
        %1684 = vmatpush1.msra.mxu0 0.0
        %1685 = vmatprep.subr.mxu0 0.0
        %1686 = vmatpush1.msra.mxu0 0.0
        %1687 = vmatprep.mubr.f32.mxu0 0.0
        %1688 = vmatmul.mubr.f32.gmra.mrb[0].mxu0 %v1621
        %v1689 = vpop.f32.mrb[0].mxu0
        %v1690 = vadd.f32 0.0, %v1689
        %v1691 = vpop.f32.mrb[0].mxu0
        %1692 = vdwg.mxu0
        %1694 = vrot.lane.b32.xlu0 %v1690, 8
        %v1695 = vpop.permute.xlu0 %1694
        %vm1697 = vcmask 130112
        %1698 = vst.msk [vmem:[#allocation3] sm:$0xff] %vm1697, %v1695
        %1699 = vrot.lane.b32.xlu0 %v1348, 112
        %v1700 = vpop.permute.xlu0 %1699
        %1701 = vrot.lane.b32.xlu0 %v1348, 80
        %v1702 = vpop.permute.xlu0 %1701
        %v1703 = vsel %vm1360, %v1700, 0
        %v1705 = vsel %vm1360, %v1702, 0
        %1707 = vmatprep.subr.mxu0 0.0
        %1708 = vmatpush1.xpose.msra.mxu0 %v1705
        %1709 = vmatprep.subr.mxu0 0.0
        %1710 = vmatpush1.xpose.msra.mxu0 0.0
        %1711 = vmatprep.subr.mxu0 0.0
        %1712 = vmatpush1.xpose.msra.mxu0 0.0
        %1713 = vmatprep.subr.mxu0 0.0
        %1714 = vmatpush1.xpose.msra.mxu0 0.0
        %1715 = vmatprep.subr.mxu0 0.0
        %1716 = vmatpush1.xpose.msra.mxu0 0.0
        %1717 = vmatprep.subr.mxu0 0.0
        %1718 = vmatpush1.xpose.msra.mxu0 0.0
        %1719 = vmatprep.subr.mxu0 0.0
        %1720 = vmatpush1.xpose.msra.mxu0 0.0
        %1721 = vmatprep.subr.mxu0 0.0
        %1722 = vmatpush1.xpose.msra.mxu0 0.0
        %1723 = vmatprep.subr.mxu0 0.0
        %1724 = vmatpush1.xpose.msra.mxu0 0.0
        %1725 = vmatprep.subr.mxu0 0.0
        %1726 = vmatpush1.xpose.msra.mxu0 0.0
        %1727 = vmatprep.subr.mxu0 0.0
        %1728 = vmatpush1.xpose.msra.mxu0 0.0
        %1729 = vmatprep.subr.mxu0 0.0
        %1730 = vmatpush1.xpose.msra.mxu0 0.0
        %1731 = vmatprep.subr.mxu0 0.0
        %1732 = vmatpush1.xpose.msra.mxu0 0.0
        %1733 = vmatprep.subr.mxu0 0.0
        %1734 = vmatpush1.xpose.msra.mxu0 0.0
        %1735 = vmatprep.subr.mxu0 0.0
        %1736 = vmatpush1.xpose.msra.mxu0 0.0
        %1737 = vmatprep.subr.mxu0 0.0
        %1738 = vmatpush1.xpose.msra.mxu0 0.0
        %1739 = vmatprep.subr.mxu0 0.0
        %1740 = vmatpush1.xpose.msra.mxu0 0.0
        %1741 = vmatprep.subr.mxu0 0.0
        %1742 = vmatpush1.xpose.msra.mxu0 0.0
        %1743 = vmatprep.subr.mxu0 0.0
        %1744 = vmatpush1.xpose.msra.mxu0 0.0
        %1745 = vmatprep.subr.mxu0 0.0
        %1746 = vmatpush1.xpose.msra.mxu0 0.0
        %1747 = vmatprep.subr.mxu0 0.0
        %1748 = vmatpush1.xpose.msra.mxu0 0.0
        %1749 = vmatprep.subr.mxu0 0.0
        %1750 = vmatpush1.xpose.msra.mxu0 0.0
        %1751 = vmatprep.subr.mxu0 0.0
        %1752 = vmatpush1.xpose.msra.mxu0 0.0
        %1753 = vmatprep.subr.mxu0 0.0
        %1754 = vmatpush1.xpose.msra.mxu0 0.0
        %1755 = vmatprep.subr.mxu0 0.0
        %1756 = vmatpush1.xpose.msra.mxu0 0.0
        %1757 = vmatprep.subr.mxu0 0.0
        %1758 = vmatpush1.xpose.msra.mxu0 0.0
        %1759 = vmatprep.subr.mxu0 0.0
        %1760 = vmatpush1.xpose.msra.mxu0 0.0
        %1761 = vmatprep.subr.mxu0 0.0
        %1762 = vmatpush1.xpose.msra.mxu0 0.0
        %1763 = vmatprep.subr.mxu0 0.0
        %1764 = vmatpush1.xpose.msra.mxu0 0.0
        %1765 = vmatprep.subr.mxu0 0.0
        %1766 = vmatpush1.xpose.msra.mxu0 0.0
        %1767 = vmatprep.subr.mxu0 0.0
        %1768 = vmatpush1.xpose.msra.mxu0 0.0
        %1769 = vmatprep.subr.mxu0 0.0
        %1770 = vmatpush1.xpose.msra.mxu0 0.0
        %1771 = vmatprep.mubr.f32.mxu0 0.0
        %1772 = vmatmul.mubr.f32.gmra.mrb[0].mxu0 %v1703
        %v1773 = vpop.f32.mrb[0].mxu0
        %v1774 = vadd.f32 0.0, %v1773
        %v1775 = vpop.f32.mrb[0].mxu0
        %1776 = vdwg.mxu0
        %v1777 = vmul.f32 %v1774, 0.35355338
        %v1778 = vsel %vm1435, %v1777, -1e+10
        %v1779 = vsel %vm1360, %v1778, -inf
        %1780 = vmax.xlane.f32.xlu0 %v1779
        %v1781 = vpop.xlane.xlu0 %1780
        %v1782 = vsub.f32 %v1778, %v1781
        %v1783 = vmul.f32 %v1782, 1.442695
        %v1784 = vpow.pop %v1783
        %v1785 = vsel %vm1360, %v1784, 0.0
        %1786 = vadd.xlane.f32.xlu0 %v1785
        %v1787 = vpop.xlane.xlu0 %1786
        %v1788 = vrcp.pop %v1787
        %v1789 = vmul.f32 %v1784, %v1788
        %1790 = vrot.lane.b32.xlu0 %v1348, 48
        %v1791 = vpop.permute.xlu0 %1790
        %v1794 = vsel %vm1360, %v1789, 0
        %1796 = vmatprep.subr.mxu0 0.0
        %1797 = vmatpush1.msra.mxu0 %v1791
        %1798 = vmatprep.subr.mxu0 0.0
        %1799 = vmatpush1.msra.mxu0 0.0
        %1800 = vmatprep.subr.mxu0 0.0
        %1801 = vmatpush1.msra.mxu0 0.0
        %1802 = vmatprep.subr.mxu0 0.0
        %1803 = vmatpush1.msra.mxu0 0.0
        %1804 = vmatprep.subr.mxu0 0.0
        %1805 = vmatpush1.msra.mxu0 0.0
        %1806 = vmatprep.subr.mxu0 0.0
        %1807 = vmatpush1.msra.mxu0 0.0
        %1808 = vmatprep.subr.mxu0 0.0
        %1809 = vmatpush1.msra.mxu0 0.0
        %1810 = vmatprep.subr.mxu0 0.0
        %1811 = vmatpush1.msra.mxu0 0.0
        %1812 = vmatprep.subr.mxu0 0.0
        %1813 = vmatpush1.msra.mxu0 0.0
        %1814 = vmatprep.subr.mxu0 0.0
        %1815 = vmatpush1.msra.mxu0 0.0
        %1816 = vmatprep.subr.mxu0 0.0
        %1817 = vmatpush1.msra.mxu0 0.0
        %1818 = vmatprep.subr.mxu0 0.0
        %1819 = vmatpush1.msra.mxu0 0.0
        %1820 = vmatprep.subr.mxu0 0.0
        %1821 = vmatpush1.msra.mxu0 0.0
        %1822 = vmatprep.subr.mxu0 0.0
        %1823 = vmatpush1.msra.mxu0 0.0
        %1824 = vmatprep.subr.mxu0 0.0
        %1825 = vmatpush1.msra.mxu0 0.0
        %1826 = vmatprep.subr.mxu0 0.0
        %1827 = vmatpush1.msra.mxu0 0.0
        %1828 = vmatprep.subr.mxu0 0.0
        %1829 = vmatpush1.msra.mxu0 0.0
        %1830 = vmatprep.subr.mxu0 0.0
        %1831 = vmatpush1.msra.mxu0 0.0
        %1832 = vmatprep.subr.mxu0 0.0
        %1833 = vmatpush1.msra.mxu0 0.0
        %1834 = vmatprep.subr.mxu0 0.0
        %1835 = vmatpush1.msra.mxu0 0.0
        %1836 = vmatprep.subr.mxu0 0.0
        %1837 = vmatpush1.msra.mxu0 0.0
        %1838 = vmatprep.subr.mxu0 0.0
        %1839 = vmatpush1.msra.mxu0 0.0
        %1840 = vmatprep.subr.mxu0 0.0
        %1841 = vmatpush1.msra.mxu0 0.0
        %1842 = vmatprep.subr.mxu0 0.0
        %1843 = vmatpush1.msra.mxu0 0.0
        %1844 = vmatprep.subr.mxu0 0.0
        %1845 = vmatpush1.msra.mxu0 0.0
        %1846 = vmatprep.subr.mxu0 0.0
        %1847 = vmatpush1.msra.mxu0 0.0
        %1848 = vmatprep.subr.mxu0 0.0
        %1849 = vmatpush1.msra.mxu0 0.0
        %1850 = vmatprep.subr.mxu0 0.0
        %1851 = vmatpush1.msra.mxu0 0.0
        %1852 = vmatprep.subr.mxu0 0.0
        %1853 = vmatpush1.msra.mxu0 0.0
        %1854 = vmatprep.subr.mxu0 0.0
        %1855 = vmatpush1.msra.mxu0 0.0
        %1856 = vmatprep.subr.mxu0 0.0
        %1857 = vmatpush1.msra.mxu0 0.0
        %1858 = vmatprep.subr.mxu0 0.0
        %1859 = vmatpush1.msra.mxu0 0.0
        %1860 = vmatprep.mubr.f32.mxu0 0.0
        %1861 = vmatmul.mubr.f32.gmra.mrb[0].mxu0 %v1794
        %v1862 = vpop.f32.mrb[0].mxu0
        %v1863 = vadd.f32 0.0, %v1862
        %v1864 = vpop.f32.mrb[0].mxu0
        %1865 = vdwg.mxu0
        %1867 = vrot.lane.b32.xlu0 %v1863, 16
        %v1868 = vpop.permute.xlu0 %1867
        %vm1870 = vcmask 195712
        %1871 = vst.msk [vmem:[#allocation3] sm:$0xff] %vm1870, %v1868
        %1872 = vrot.lane.b32.xlu0 %v1348, 104
        %v1873 = vpop.permute.xlu0 %1872
        %1874 = vrot.lane.b32.xlu0 %v1348, 72
        %v1875 = vpop.permute.xlu0 %1874
        %v1876 = vsel %vm1360, %v1873, 0
        %v1878 = vsel %vm1360, %v1875, 0
        %1880 = vmatprep.subr.mxu0 0.0
        %1881 = vmatpush1.xpose.msra.mxu0 %v1878
        %1882 = vmatprep.subr.mxu0 0.0
        %1883 = vmatpush1.xpose.msra.mxu0 0.0
        %1884 = vmatprep.subr.mxu0 0.0
        %1885 = vmatpush1.xpose.msra.mxu0 0.0
        %1886 = vmatprep.subr.mxu0 0.0
        %1887 = vmatpush1.xpose.msra.mxu0 0.0
        %1888 = vmatprep.subr.mxu0 0.0
        %1889 = vmatpush1.xpose.msra.mxu0 0.0
        %1890 = vmatprep.subr.mxu0 0.0
        %1891 = vmatpush1.xpose.msra.mxu0 0.0
        %1892 = vmatprep.subr.mxu0 0.0
        %1893 = vmatpush1.xpose.msra.mxu0 0.0
        %1894 = vmatprep.subr.mxu0 0.0
        %1895 = vmatpush1.xpose.msra.mxu0 0.0
        %1896 = vmatprep.subr.mxu0 0.0
        %1897 = vmatpush1.xpose.msra.mxu0 0.0
        %1898 = vmatprep.subr.mxu0 0.0
        %1899 = vmatpush1.xpose.msra.mxu0 0.0
        %1900 = vmatprep.subr.mxu0 0.0
        %1901 = vmatpush1.xpose.msra.mxu0 0.0
        %1902 = vmatprep.subr.mxu0 0.0
        %1903 = vmatpush1.xpose.msra.mxu0 0.0
        %1904 = vmatprep.subr.mxu0 0.0
        %1905 = vmatpush1.xpose.msra.mxu0 0.0
        %1906 = vmatprep.subr.mxu0 0.0
        %1907 = vmatpush1.xpose.msra.mxu0 0.0
        %1908 = vmatprep.subr.mxu0 0.0
        %1909 = vmatpush1.xpose.msra.mxu0 0.0
        %1910 = vmatprep.subr.mxu0 0.0
        %1911 = vmatpush1.xpose.msra.mxu0 0.0
        %1912 = vmatprep.subr.mxu0 0.0
        %1913 = vmatpush1.xpose.msra.mxu0 0.0
        %1914 = vmatprep.subr.mxu0 0.0
        %1915 = vmatpush1.xpose.msra.mxu0 0.0
        %1916 = vmatprep.subr.mxu0 0.0
        %1917 = vmatpush1.xpose.msra.mxu0 0.0
        %1918 = vmatprep.subr.mxu0 0.0
        %1919 = vmatpush1.xpose.msra.mxu0 0.0
        %1920 = vmatprep.subr.mxu0 0.0
        %1921 = vmatpush1.xpose.msra.mxu0 0.0
        %1922 = vmatprep.subr.mxu0 0.0
        %1923 = vmatpush1.xpose.msra.mxu0 0.0
        %1924 = vmatprep.subr.mxu0 0.0
        %1925 = vmatpush1.xpose.msra.mxu0 0.0
        %1926 = vmatprep.subr.mxu0 0.0
        %1927 = vmatpush1.xpose.msra.mxu0 0.0
        %1928 = vmatprep.subr.mxu0 0.0
        %1929 = vmatpush1.xpose.msra.mxu0 0.0
        %1930 = vmatprep.subr.mxu0 0.0
        %1931 = vmatpush1.xpose.msra.mxu0 0.0
        %1932 = vmatprep.subr.mxu0 0.0
        %1933 = vmatpush1.xpose.msra.mxu0 0.0
        %1934 = vmatprep.subr.mxu0 0.0
        %1935 = vmatpush1.xpose.msra.mxu0 0.0
        %1936 = vmatprep.subr.mxu0 0.0
        %1937 = vmatpush1.xpose.msra.mxu0 0.0
        %1938 = vmatprep.subr.mxu0 0.0
        %1939 = vmatpush1.xpose.msra.mxu0 0.0
        %1940 = vmatprep.subr.mxu0 0.0
        %1941 = vmatpush1.xpose.msra.mxu0 0.0
        %1942 = vmatprep.subr.mxu0 0.0
        %1943 = vmatpush1.xpose.msra.mxu0 0.0
        %1944 = vmatprep.mubr.f32.mxu0 0.0
        %1945 = vmatmul.mubr.f32.gmra.mrb[0].mxu0 %v1876
        %v1946 = vpop.f32.mrb[0].mxu0
        %v1947 = vadd.f32 0.0, %v1946
        %v1948 = vpop.f32.mrb[0].mxu0
        %1949 = vdwg.mxu0
        %v1950 = vmul.f32 %v1947, 0.35355338
        %v1951 = vsel %vm1435, %v1950, -1e+10
        %v1952 = vsel %vm1360, %v1951, -inf
        %1953 = vmax.xlane.f32.xlu0 %v1952
        %v1954 = vpop.xlane.xlu0 %1953
        %v1955 = vsub.f32 %v1951, %v1954
        %v1956 = vmul.f32 %v1955, 1.442695
        %v1957 = vpow.pop %v1956
        %v1958 = vsel %vm1360, %v1957, 0.0
        %1959 = vadd.xlane.f32.xlu0 %v1958
        %v1960 = vpop.xlane.xlu0 %1959
        %v1961 = vrcp.pop %v1960
        %v1962 = vmul.f32 %v1957, %v1961
        %1963 = vrot.lane.b32.xlu0 %v1348, 40
        %v1964 = vpop.permute.xlu0 %1963
        %v1967 = vsel %vm1360, %v1962, 0
        %1969 = vmatprep.subr.mxu0 0.0
        %1970 = vmatpush1.msra.mxu0 %v1964
        %1971 = vmatprep.subr.mxu0 0.0
        %1972 = vmatpush1.msra.mxu0 0.0
        %1973 = vmatprep.subr.mxu0 0.0
        %1974 = vmatpush1.msra.mxu0 0.0
        %1975 = vmatprep.subr.mxu0 0.0
        %1976 = vmatpush1.msra.mxu0 0.0
        %1977 = vmatprep.subr.mxu0 0.0
        %1978 = vmatpush1.msra.mxu0 0.0
        %1979 = vmatprep.subr.mxu0 0.0
        %1980 = vmatpush1.msra.mxu0 0.0
        %1981 = vmatprep.subr.mxu0 0.0
        %1982 = vmatpush1.msra.mxu0 0.0
        %1983 = vmatprep.subr.mxu0 0.0
        %1984 = vmatpush1.msra.mxu0 0.0
        %1985 = vmatprep.subr.mxu0 0.0
        %1986 = vmatpush1.msra.mxu0 0.0
        %1987 = vmatprep.subr.mxu0 0.0
        %1988 = vmatpush1.msra.mxu0 0.0
        %1989 = vmatprep.subr.mxu0 0.0
        %1990 = vmatpush1.msra.mxu0 0.0
        %1991 = vmatprep.subr.mxu0 0.0
        %1992 = vmatpush1.msra.mxu0 0.0
        %1993 = vmatprep.subr.mxu0 0.0
        %1994 = vmatpush1.msra.mxu0 0.0
        %1995 = vmatprep.subr.mxu0 0.0
        %1996 = vmatpush1.msra.mxu0 0.0
        %1997 = vmatprep.subr.mxu0 0.0
        %1998 = vmatpush1.msra.mxu0 0.0
        %1999 = vmatprep.subr.mxu0 0.0
        %2000 = vmatpush1.msra.mxu0 0.0
        %2001 = vmatprep.subr.mxu0 0.0
        %2002 = vmatpush1.msra.mxu0 0.0
        %2003 = vmatprep.subr.mxu0 0.0
        %2004 = vmatpush1.msra.mxu0 0.0
        %2005 = vmatprep.subr.mxu0 0.0
        %2006 = vmatpush1.msra.mxu0 0.0
        %2007 = vmatprep.subr.mxu0 0.0
        %2008 = vmatpush1.msra.mxu0 0.0
        %2009 = vmatprep.subr.mxu0 0.0
        %2010 = vmatpush1.msra.mxu0 0.0
        %2011 = vmatprep.subr.mxu0 0.0
        %2012 = vmatpush1.msra.mxu0 0.0
        %2013 = vmatprep.subr.mxu0 0.0
        %2014 = vmatpush1.msra.mxu0 0.0
        %2015 = vmatprep.subr.mxu0 0.0
        %2016 = vmatpush1.msra.mxu0 0.0
        %2017 = vmatprep.subr.mxu0 0.0
        %2018 = vmatpush1.msra.mxu0 0.0
        %2019 = vmatprep.subr.mxu0 0.0
        %2020 = vmatpush1.msra.mxu0 0.0
        %2021 = vmatprep.subr.mxu0 0.0
        %2022 = vmatpush1.msra.mxu0 0.0
        %2023 = vmatprep.subr.mxu0 0.0
        %2024 = vmatpush1.msra.mxu0 0.0
        %2025 = vmatprep.subr.mxu0 0.0
        %2026 = vmatpush1.msra.mxu0 0.0
        %2027 = vmatprep.subr.mxu0 0.0
        %2028 = vmatpush1.msra.mxu0 0.0
        %2029 = vmatprep.subr.mxu0 0.0
        %2030 = vmatpush1.msra.mxu0 0.0
        %2031 = vmatprep.subr.mxu0 0.0
        %2032 = vmatpush1.msra.mxu0 0.0
        %2033 = vmatprep.mubr.f32.mxu0 0.0
        %2034 = vmatmul.mubr.f32.gmra.mrb[0].mxu0 %v1967
        %v2035 = vpop.f32.mrb[0].mxu0
        %v2036 = vadd.f32 0.0, %v2035
        %v2037 = vpop.f32.mrb[0].mxu0
        %2038 = vdwg.mxu0
        %2040 = vrot.lane.b32.xlu0 %v2036, 24
        %v2041 = vpop.permute.xlu0 %2040
        %vm2043 = vcmask 261312
        %2044 = vst.msk [vmem:[#allocation3] sm:$0xff] %vm2043, %v2041
        %s2045 = scalar_lea.vmem [#allocation4], 8
        %v2046 = vld [vmem:[%s2045] sm:$0xff]
        %2048 = vrot.lane.b32.xlu0 %v1353, 96
        %v2049 = vpop.permute.xlu0 %2048
        %v2050 = vsel %vm1360, %v1353, 0
        %v2052 = vsel %vm1360, %v2049, 0
        %2054 = vmatprep.subr.mxu0 0.0
        %2055 = vmatpush1.xpose.msra.mxu0 %v2052
        %2056 = vmatprep.subr.mxu0 0.0
        %2057 = vmatpush1.xpose.msra.mxu0 0.0
        %2058 = vmatprep.subr.mxu0 0.0
        %2059 = vmatpush1.xpose.msra.mxu0 0.0
        %2060 = vmatprep.subr.mxu0 0.0
        %2061 = vmatpush1.xpose.msra.mxu0 0.0
        %2062 = vmatprep.subr.mxu0 0.0
        %2063 = vmatpush1.xpose.msra.mxu0 0.0
        %2064 = vmatprep.subr.mxu0 0.0
        %2065 = vmatpush1.xpose.msra.mxu0 0.0
        %2066 = vmatprep.subr.mxu0 0.0
        %2067 = vmatpush1.xpose.msra.mxu0 0.0
        %2068 = vmatprep.subr.mxu0 0.0
        %2069 = vmatpush1.xpose.msra.mxu0 0.0
        %2070 = vmatprep.subr.mxu0 0.0
        %2071 = vmatpush1.xpose.msra.mxu0 0.0
        %2072 = vmatprep.subr.mxu0 0.0
        %2073 = vmatpush1.xpose.msra.mxu0 0.0
        %2074 = vmatprep.subr.mxu0 0.0
        %2075 = vmatpush1.xpose.msra.mxu0 0.0
        %2076 = vmatprep.subr.mxu0 0.0
        %2077 = vmatpush1.xpose.msra.mxu0 0.0
        %2078 = vmatprep.subr.mxu0 0.0
        %2079 = vmatpush1.xpose.msra.mxu0 0.0
        %2080 = vmatprep.subr.mxu0 0.0
        %2081 = vmatpush1.xpose.msra.mxu0 0.0
        %2082 = vmatprep.subr.mxu0 0.0
        %2083 = vmatpush1.xpose.msra.mxu0 0.0
        %2084 = vmatprep.subr.mxu0 0.0
        %2085 = vmatpush1.xpose.msra.mxu0 0.0
        %2086 = vmatprep.subr.mxu0 0.0
        %2087 = vmatpush1.xpose.msra.mxu0 0.0
        %2088 = vmatprep.subr.mxu0 0.0
        %2089 = vmatpush1.xpose.msra.mxu0 0.0
        %2090 = vmatprep.subr.mxu0 0.0
        %2091 = vmatpush1.xpose.msra.mxu0 0.0
        %2092 = vmatprep.subr.mxu0 0.0
        %2093 = vmatpush1.xpose.msra.mxu0 0.0
        %2094 = vmatprep.subr.mxu0 0.0
        %2095 = vmatpush1.xpose.msra.mxu0 0.0
        %2096 = vmatprep.subr.mxu0 0.0
        %2097 = vmatpush1.xpose.msra.mxu0 0.0
        %2098 = vmatprep.subr.mxu0 0.0
        %2099 = vmatpush1.xpose.msra.mxu0 0.0
        %2100 = vmatprep.subr.mxu0 0.0
        %2101 = vmatpush1.xpose.msra.mxu0 0.0
        %2102 = vmatprep.subr.mxu0 0.0
        %2103 = vmatpush1.xpose.msra.mxu0 0.0
        %2104 = vmatprep.subr.mxu0 0.0
        %2105 = vmatpush1.xpose.msra.mxu0 0.0
        %2106 = vmatprep.subr.mxu0 0.0
        %2107 = vmatpush1.xpose.msra.mxu0 0.0
        %2108 = vmatprep.subr.mxu0 0.0
        %2109 = vmatpush1.xpose.msra.mxu0 0.0
        %2110 = vmatprep.subr.mxu0 0.0
        %2111 = vmatpush1.xpose.msra.mxu0 0.0
        %2112 = vmatprep.subr.mxu0 0.0
        %2113 = vmatpush1.xpose.msra.mxu0 0.0
        %2114 = vmatprep.subr.mxu0 0.0
        %2115 = vmatpush1.xpose.msra.mxu0 0.0
        %2116 = vmatprep.subr.mxu0 0.0
        %2117 = vmatpush1.xpose.msra.mxu0 0.0
        %2118 = vmatprep.mubr.f32.mxu0 0.0
        %2119 = vmatmul.mubr.f32.gmra.mrb[0].mxu0 %v2050
        %v2120 = vpop.f32.mrb[0].mxu0
        %v2121 = vadd.f32 0.0, %v2120
        %v2122 = vpop.f32.mrb[0].mxu0
        %2123 = vdwg.mxu0
        %vm2124 = vcmp.gt.f32.partialorder %v2046, 0.0
        %v2125 = vmul.f32 %v2121, 0.35355338
        %v2126 = vsel %vm2124, %v2125, -1e+10
        %v2127 = vsel %vm1360, %v2126, -inf
        %2128 = vmax.xlane.f32.xlu0 %v2127
        %v2129 = vpop.xlane.xlu0 %2128
        %v2130 = vsub.f32 %v2126, %v2129
        %v2131 = vmul.f32 %v2130, 1.442695
        %v2132 = vpow.pop %v2131
        %v2133 = vsel %vm1360, %v2132, 0.0
        %2134 = vadd.xlane.f32.xlu0 %v2133
        %v2135 = vpop.xlane.xlu0 %2134
        %v2136 = vrcp.pop %v2135
        %v2137 = vmul.f32 %v2132, %v2136
        %2138 = vrot.lane.b32.xlu0 %v1353, 64
        %v2139 = vpop.permute.xlu0 %2138
        %v2142 = vsel %vm1360, %v2137, 0
        %2144 = vmatprep.subr.mxu0 0.0
        %2145 = vmatpush1.msra.mxu0 %v2139
        %2146 = vmatprep.subr.mxu0 0.0
        %2147 = vmatpush1.msra.mxu0 0.0
        %2148 = vmatprep.subr.mxu0 0.0
        %2149 = vmatpush1.msra.mxu0 0.0
        %2150 = vmatprep.subr.mxu0 0.0
        %2151 = vmatpush1.msra.mxu0 0.0
        %2152 = vmatprep.subr.mxu0 0.0
        %2153 = vmatpush1.msra.mxu0 0.0
        %2154 = vmatprep.subr.mxu0 0.0
        %2155 = vmatpush1.msra.mxu0 0.0
        %2156 = vmatprep.subr.mxu0 0.0
        %2157 = vmatpush1.msra.mxu0 0.0
        %2158 = vmatprep.subr.mxu0 0.0
        %2159 = vmatpush1.msra.mxu0 0.0
        %2160 = vmatprep.subr.mxu0 0.0
        %2161 = vmatpush1.msra.mxu0 0.0
        %2162 = vmatprep.subr.mxu0 0.0
        %2163 = vmatpush1.msra.mxu0 0.0
        %2164 = vmatprep.subr.mxu0 0.0
        %2165 = vmatpush1.msra.mxu0 0.0
        %2166 = vmatprep.subr.mxu0 0.0
        %2167 = vmatpush1.msra.mxu0 0.0
        %2168 = vmatprep.subr.mxu0 0.0
        %2169 = vmatpush1.msra.mxu0 0.0
        %2170 = vmatprep.subr.mxu0 0.0
        %2171 = vmatpush1.msra.mxu0 0.0
        %2172 = vmatprep.subr.mxu0 0.0
        %2173 = vmatpush1.msra.mxu0 0.0
        %2174 = vmatprep.subr.mxu0 0.0
        %2175 = vmatpush1.msra.mxu0 0.0
        %2176 = vmatprep.subr.mxu0 0.0
        %2177 = vmatpush1.msra.mxu0 0.0
        %2178 = vmatprep.subr.mxu0 0.0
        %2179 = vmatpush1.msra.mxu0 0.0
        %2180 = vmatprep.subr.mxu0 0.0
        %2181 = vmatpush1.msra.mxu0 0.0
        %2182 = vmatprep.subr.mxu0 0.0
        %2183 = vmatpush1.msra.mxu0 0.0
        %2184 = vmatprep.subr.mxu0 0.0
        %2185 = vmatpush1.msra.mxu0 0.0
        %2186 = vmatprep.subr.mxu0 0.0
        %2187 = vmatpush1.msra.mxu0 0.0
        %2188 = vmatprep.subr.mxu0 0.0
        %2189 = vmatpush1.msra.mxu0 0.0
        %2190 = vmatprep.subr.mxu0 0.0
        %2191 = vmatpush1.msra.mxu0 0.0
        %2192 = vmatprep.subr.mxu0 0.0
        %2193 = vmatpush1.msra.mxu0 0.0
        %2194 = vmatprep.subr.mxu0 0.0
        %2195 = vmatpush1.msra.mxu0 0.0
        %2196 = vmatprep.subr.mxu0 0.0
        %2197 = vmatpush1.msra.mxu0 0.0
        %2198 = vmatprep.subr.mxu0 0.0
        %2199 = vmatpush1.msra.mxu0 0.0
        %2200 = vmatprep.subr.mxu0 0.0
        %2201 = vmatpush1.msra.mxu0 0.0
        %2202 = vmatprep.subr.mxu0 0.0
        %2203 = vmatpush1.msra.mxu0 0.0
        %2204 = vmatprep.subr.mxu0 0.0
        %2205 = vmatpush1.msra.mxu0 0.0
        %2206 = vmatprep.subr.mxu0 0.0
        %2207 = vmatpush1.msra.mxu0 0.0
        %2208 = vmatprep.mubr.f32.mxu0 0.0
        %2209 = vmatmul.mubr.f32.gmra.mrb[0].mxu0 %v2142
        %v2210 = vpop.f32.mrb[0].mxu0
        %v2211 = vadd.f32 0.0, %v2210
        %v2212 = vpop.f32.mrb[0].mxu0
        %2213 = vdwg.mxu0
        %2214 = vst.msk [vmem:[#allocation3 + $0x8] sm:$0xff] %vm1360, %v2211
        %2215 = vrot.lane.b32.xlu0 %v1353, 120
        %v2216 = vpop.permute.xlu0 %2215
        %2217 = vrot.lane.b32.xlu0 %v1353, 88
        %v2218 = vpop.permute.xlu0 %2217
        %v2219 = vsel %vm1360, %v2216, 0
        %v2221 = vsel %vm1360, %v2218, 0
        %2223 = vmatprep.subr.mxu0 0.0
        %2224 = vmatpush1.xpose.msra.mxu0 %v2221
        %2225 = vmatprep.subr.mxu0 0.0
        %2226 = vmatpush1.xpose.msra.mxu0 0.0
        %2227 = vmatprep.subr.mxu0 0.0
        %2228 = vmatpush1.xpose.msra.mxu0 0.0
        %2229 = vmatprep.subr.mxu0 0.0
        %2230 = vmatpush1.xpose.msra.mxu0 0.0
        %2231 = vmatprep.subr.mxu0 0.0
        %2232 = vmatpush1.xpose.msra.mxu0 0.0
        %2233 = vmatprep.subr.mxu0 0.0
        %2234 = vmatpush1.xpose.msra.mxu0 0.0
        %2235 = vmatprep.subr.mxu0 0.0
        %2236 = vmatpush1.xpose.msra.mxu0 0.0
        %2237 = vmatprep.subr.mxu0 0.0
        %2238 = vmatpush1.xpose.msra.mxu0 0.0
        %2239 = vmatprep.subr.mxu0 0.0
        %2240 = vmatpush1.xpose.msra.mxu0 0.0
        %2241 = vmatprep.subr.mxu0 0.0
        %2242 = vmatpush1.xpose.msra.mxu0 0.0
        %2243 = vmatprep.subr.mxu0 0.0
        %2244 = vmatpush1.xpose.msra.mxu0 0.0
        %2245 = vmatprep.subr.mxu0 0.0
        %2246 = vmatpush1.xpose.msra.mxu0 0.0
        %2247 = vmatprep.subr.mxu0 0.0
        %2248 = vmatpush1.xpose.msra.mxu0 0.0
        %2249 = vmatprep.subr.mxu0 0.0
        %2250 = vmatpush1.xpose.msra.mxu0 0.0
        %2251 = vmatprep.subr.mxu0 0.0
        %2252 = vmatpush1.xpose.msra.mxu0 0.0
        %2253 = vmatprep.subr.mxu0 0.0
        %2254 = vmatpush1.xpose.msra.mxu0 0.0
        %2255 = vmatprep.subr.mxu0 0.0
        %2256 = vmatpush1.xpose.msra.mxu0 0.0
        %2257 = vmatprep.subr.mxu0 0.0
        %2258 = vmatpush1.xpose.msra.mxu0 0.0
        %2259 = vmatprep.subr.mxu0 0.0
        %2260 = vmatpush1.xpose.msra.mxu0 0.0
        %2261 = vmatprep.subr.mxu0 0.0
        %2262 = vmatpush1.xpose.msra.mxu0 0.0
        %2263 = vmatprep.subr.mxu0 0.0
        %2264 = vmatpush1.xpose.msra.mxu0 0.0
        %2265 = vmatprep.subr.mxu0 0.0
        %2266 = vmatpush1.xpose.msra.mxu0 0.0
        %2267 = vmatprep.subr.mxu0 0.0
        %2268 = vmatpush1.xpose.msra.mxu0 0.0
        %2269 = vmatprep.subr.mxu0 0.0
        %2270 = vmatpush1.xpose.msra.mxu0 0.0
        %2271 = vmatprep.subr.mxu0 0.0
        %2272 = vmatpush1.xpose.msra.mxu0 0.0
        %2273 = vmatprep.subr.mxu0 0.0
        %2274 = vmatpush1.xpose.msra.mxu0 0.0
        %2275 = vmatprep.subr.mxu0 0.0
        %2276 = vmatpush1.xpose.msra.mxu0 0.0
        %2277 = vmatprep.subr.mxu0 0.0
        %2278 = vmatpush1.xpose.msra.mxu0 0.0
        %2279 = vmatprep.subr.mxu0 0.0
        %2280 = vmatpush1.xpose.msra.mxu0 0.0
        %2281 = vmatprep.subr.mxu0 0.0
        %2282 = vmatpush1.xpose.msra.mxu0 0.0
        %2283 = vmatprep.subr.mxu0 0.0
        %2284 = vmatpush1.xpose.msra.mxu0 0.0
        %2285 = vmatprep.subr.mxu0 0.0
        %2286 = vmatpush1.xpose.msra.mxu0 0.0
        %2287 = vmatprep.mubr.f32.mxu0 0.0
        %2288 = vmatmul.mubr.f32.gmra.mrb[0].mxu0 %v2219
        %v2289 = vpop.f32.mrb[0].mxu0
        %v2290 = vadd.f32 0.0, %v2289
        %v2291 = vpop.f32.mrb[0].mxu0
        %2292 = vdwg.mxu0
        %v2293 = vmul.f32 %v2290, 0.35355338
        %v2294 = vsel %vm2124, %v2293, -1e+10
        %v2295 = vsel %vm1360, %v2294, -inf
        %2296 = vmax.xlane.f32.xlu0 %v2295
        %v2297 = vpop.xlane.xlu0 %2296
        %v2298 = vsub.f32 %v2294, %v2297
        %v2299 = vmul.f32 %v2298, 1.442695
        %v2300 = vpow.pop %v2299
        %v2301 = vsel %vm1360, %v2300, 0.0
        %2302 = vadd.xlane.f32.xlu0 %v2301
        %v2303 = vpop.xlane.xlu0 %2302
        %v2304 = vrcp.pop %v2303
        %v2305 = vmul.f32 %v2300, %v2304
        %2306 = vrot.lane.b32.xlu0 %v1353, 56
        %v2307 = vpop.permute.xlu0 %2306
        %v2310 = vsel %vm1360, %v2305, 0
        %2312 = vmatprep.subr.mxu0 0.0
        %2313 = vmatpush1.msra.mxu0 %v2307
        %2314 = vmatprep.subr.mxu0 0.0
        %2315 = vmatpush1.msra.mxu0 0.0
        %2316 = vmatprep.subr.mxu0 0.0
        %2317 = vmatpush1.msra.mxu0 0.0
        %2318 = vmatprep.subr.mxu0 0.0
        %2319 = vmatpush1.msra.mxu0 0.0
        %2320 = vmatprep.subr.mxu0 0.0
        %2321 = vmatpush1.msra.mxu0 0.0
        %2322 = vmatprep.subr.mxu0 0.0
        %2323 = vmatpush1.msra.mxu0 0.0
        %2324 = vmatprep.subr.mxu0 0.0
        %2325 = vmatpush1.msra.mxu0 0.0
        %2326 = vmatprep.subr.mxu0 0.0
        %2327 = vmatpush1.msra.mxu0 0.0
        %2328 = vmatprep.subr.mxu0 0.0
        %2329 = vmatpush1.msra.mxu0 0.0
        %2330 = vmatprep.subr.mxu0 0.0
        %2331 = vmatpush1.msra.mxu0 0.0
        %2332 = vmatprep.subr.mxu0 0.0
        %2333 = vmatpush1.msra.mxu0 0.0
        %2334 = vmatprep.subr.mxu0 0.0
        %2335 = vmatpush1.msra.mxu0 0.0
        %2336 = vmatprep.subr.mxu0 0.0
        %2337 = vmatpush1.msra.mxu0 0.0
        %2338 = vmatprep.subr.mxu0 0.0
        %2339 = vmatpush1.msra.mxu0 0.0
        %2340 = vmatprep.subr.mxu0 0.0
        %2341 = vmatpush1.msra.mxu0 0.0
        %2342 = vmatprep.subr.mxu0 0.0
        %2343 = vmatpush1.msra.mxu0 0.0
        %2344 = vmatprep.subr.mxu0 0.0
        %2345 = vmatpush1.msra.mxu0 0.0
        %2346 = vmatprep.subr.mxu0 0.0
        %2347 = vmatpush1.msra.mxu0 0.0
        %2348 = vmatprep.subr.mxu0 0.0
        %2349 = vmatpush1.msra.mxu0 0.0
        %2350 = vmatprep.subr.mxu0 0.0
        %2351 = vmatpush1.msra.mxu0 0.0
        %2352 = vmatprep.subr.mxu0 0.0
        %2353 = vmatpush1.msra.mxu0 0.0
        %2354 = vmatprep.subr.mxu0 0.0
        %2355 = vmatpush1.msra.mxu0 0.0
        %2356 = vmatprep.subr.mxu0 0.0
        %2357 = vmatpush1.msra.mxu0 0.0
        %2358 = vmatprep.subr.mxu0 0.0
        %2359 = vmatpush1.msra.mxu0 0.0
        %2360 = vmatprep.subr.mxu0 0.0
        %2361 = vmatpush1.msra.mxu0 0.0
        %2362 = vmatprep.subr.mxu0 0.0
        %2363 = vmatpush1.msra.mxu0 0.0
        %2364 = vmatprep.subr.mxu0 0.0
        %2365 = vmatpush1.msra.mxu0 0.0
        %2366 = vmatprep.subr.mxu0 0.0
        %2367 = vmatpush1.msra.mxu0 0.0
        %2368 = vmatprep.subr.mxu0 0.0
        %2369 = vmatpush1.msra.mxu0 0.0
        %2370 = vmatprep.subr.mxu0 0.0
        %2371 = vmatpush1.msra.mxu0 0.0
        %2372 = vmatprep.subr.mxu0 0.0
        %2373 = vmatpush1.msra.mxu0 0.0
        %2374 = vmatprep.subr.mxu0 0.0
        %2375 = vmatpush1.msra.mxu0 0.0
        %2376 = vmatprep.mubr.f32.mxu0 0.0
        %2377 = vmatmul.mubr.f32.gmra.mrb[0].mxu0 %v2310
        %v2378 = vpop.f32.mrb[0].mxu0
        %v2379 = vadd.f32 0.0, %v2378
        %v2380 = vpop.f32.mrb[0].mxu0
        %2381 = vdwg.mxu0
        %2383 = vrot.lane.b32.xlu0 %v2379, 8
        %v2384 = vpop.permute.xlu0 %2383
        %2386 = vst.msk [vmem:[#allocation3 + $0x8] sm:$0xff] %vm1697, %v2384
        %2387 = vrot.lane.b32.xlu0 %v1353, 112
        %v2388 = vpop.permute.xlu0 %2387
        %2389 = vrot.lane.b32.xlu0 %v1353, 80
        %v2390 = vpop.permute.xlu0 %2389
        %v2391 = vsel %vm1360, %v2388, 0
        %v2393 = vsel %vm1360, %v2390, 0
        %2395 = vmatprep.subr.mxu0 0.0
        %2396 = vmatpush1.xpose.msra.mxu0 %v2393
        %2397 = vmatprep.subr.mxu0 0.0
        %2398 = vmatpush1.xpose.msra.mxu0 0.0
        %2399 = vmatprep.subr.mxu0 0.0
        %2400 = vmatpush1.xpose.msra.mxu0 0.0
        %2401 = vmatprep.subr.mxu0 0.0
        %2402 = vmatpush1.xpose.msra.mxu0 0.0
        %2403 = vmatprep.subr.mxu0 0.0
        %2404 = vmatpush1.xpose.msra.mxu0 0.0
        %2405 = vmatprep.subr.mxu0 0.0
        %2406 = vmatpush1.xpose.msra.mxu0 0.0
        %2407 = vmatprep.subr.mxu0 0.0
        %2408 = vmatpush1.xpose.msra.mxu0 0.0
        %2409 = vmatprep.subr.mxu0 0.0
        %2410 = vmatpush1.xpose.msra.mxu0 0.0
        %2411 = vmatprep.subr.mxu0 0.0
        %2412 = vmatpush1.xpose.msra.mxu0 0.0
        %2413 = vmatprep.subr.mxu0 0.0
        %2414 = vmatpush1.xpose.msra.mxu0 0.0
        %2415 = vmatprep.subr.mxu0 0.0
        %2416 = vmatpush1.xpose.msra.mxu0 0.0
        %2417 = vmatprep.subr.mxu0 0.0
        %2418 = vmatpush1.xpose.msra.mxu0 0.0
        %2419 = vmatprep.subr.mxu0 0.0
        %2420 = vmatpush1.xpose.msra.mxu0 0.0
        %2421 = vmatprep.subr.mxu0 0.0
        %2422 = vmatpush1.xpose.msra.mxu0 0.0
        %2423 = vmatprep.subr.mxu0 0.0
        %2424 = vmatpush1.xpose.msra.mxu0 0.0
        %2425 = vmatprep.subr.mxu0 0.0
        %2426 = vmatpush1.xpose.msra.mxu0 0.0
        %2427 = vmatprep.subr.mxu0 0.0
        %2428 = vmatpush1.xpose.msra.mxu0 0.0
        %2429 = vmatprep.subr.mxu0 0.0
        %2430 = vmatpush1.xpose.msra.mxu0 0.0
        %2431 = vmatprep.subr.mxu0 0.0
        %2432 = vmatpush1.xpose.msra.mxu0 0.0
        %2433 = vmatprep.subr.mxu0 0.0
        %2434 = vmatpush1.xpose.msra.mxu0 0.0
        %2435 = vmatprep.subr.mxu0 0.0
        %2436 = vmatpush1.xpose.msra.mxu0 0.0
        %2437 = vmatprep.subr.mxu0 0.0
        %2438 = vmatpush1.xpose.msra.mxu0 0.0
        %2439 = vmatprep.subr.mxu0 0.0
        %2440 = vmatpush1.xpose.msra.mxu0 0.0
        %2441 = vmatprep.subr.mxu0 0.0
        %2442 = vmatpush1.xpose.msra.mxu0 0.0
        %2443 = vmatprep.subr.mxu0 0.0
        %2444 = vmatpush1.xpose.msra.mxu0 0.0
        %2445 = vmatprep.subr.mxu0 0.0
        %2446 = vmatpush1.xpose.msra.mxu0 0.0
        %2447 = vmatprep.subr.mxu0 0.0
        %2448 = vmatpush1.xpose.msra.mxu0 0.0
        %2449 = vmatprep.subr.mxu0 0.0
        %2450 = vmatpush1.xpose.msra.mxu0 0.0
        %2451 = vmatprep.subr.mxu0 0.0
        %2452 = vmatpush1.xpose.msra.mxu0 0.0
        %2453 = vmatprep.subr.mxu0 0.0
        %2454 = vmatpush1.xpose.msra.mxu0 0.0
        %2455 = vmatprep.subr.mxu0 0.0
        %2456 = vmatpush1.xpose.msra.mxu0 0.0
        %2457 = vmatprep.subr.mxu0 0.0
        %2458 = vmatpush1.xpose.msra.mxu0 0.0
        %2459 = vmatprep.mubr.f32.mxu0 0.0
        %2460 = vmatmul.mubr.f32.gmra.mrb[0].mxu0 %v2391
        %v2461 = vpop.f32.mrb[0].mxu0
        %v2462 = vadd.f32 0.0, %v2461
        %v2463 = vpop.f32.mrb[0].mxu0
        %2464 = vdwg.mxu0
        %v2465 = vmul.f32 %v2462, 0.35355338
        %v2466 = vsel %vm2124, %v2465, -1e+10
        %v2467 = vsel %vm1360, %v2466, -inf
        %2468 = vmax.xlane.f32.xlu0 %v2467
        %v2469 = vpop.xlane.xlu0 %2468
        %v2470 = vsub.f32 %v2466, %v2469
        %v2471 = vmul.f32 %v2470, 1.442695
        %v2472 = vpow.pop %v2471
        %v2473 = vsel %vm1360, %v2472, 0.0
        %2474 = vadd.xlane.f32.xlu0 %v2473
        %v2475 = vpop.xlane.xlu0 %2474
        %v2476 = vrcp.pop %v2475
        %v2477 = vmul.f32 %v2472, %v2476
        %2478 = vrot.lane.b32.xlu0 %v1353, 48
        %v2479 = vpop.permute.xlu0 %2478
        %v2482 = vsel %vm1360, %v2477, 0
        %2484 = vmatprep.subr.mxu0 0.0
        %2485 = vmatpush1.msra.mxu0 %v2479
        %2486 = vmatprep.subr.mxu0 0.0
        %2487 = vmatpush1.msra.mxu0 0.0
        %2488 = vmatprep.subr.mxu0 0.0
        %2489 = vmatpush1.msra.mxu0 0.0
        %2490 = vmatprep.subr.mxu0 0.0
        %2491 = vmatpush1.msra.mxu0 0.0
        %2492 = vmatprep.subr.mxu0 0.0
        %2493 = vmatpush1.msra.mxu0 0.0
        %2494 = vmatprep.subr.mxu0 0.0
        %2495 = vmatpush1.msra.mxu0 0.0
        %2496 = vmatprep.subr.mxu0 0.0
        %2497 = vmatpush1.msra.mxu0 0.0
        %2498 = vmatprep.subr.mxu0 0.0
        %2499 = vmatpush1.msra.mxu0 0.0
        %2500 = vmatprep.subr.mxu0 0.0
        %2501 = vmatpush1.msra.mxu0 0.0
        %2502 = vmatprep.subr.mxu0 0.0
        %2503 = vmatpush1.msra.mxu0 0.0
        %2504 = vmatprep.subr.mxu0 0.0
        %2505 = vmatpush1.msra.mxu0 0.0
        %2506 = vmatprep.subr.mxu0 0.0
        %2507 = vmatpush1.msra.mxu0 0.0
        %2508 = vmatprep.subr.mxu0 0.0
        %2509 = vmatpush1.msra.mxu0 0.0
        %2510 = vmatprep.subr.mxu0 0.0
        %2511 = vmatpush1.msra.mxu0 0.0
        %2512 = vmatprep.subr.mxu0 0.0
        %2513 = vmatpush1.msra.mxu0 0.0
        %2514 = vmatprep.subr.mxu0 0.0
        %2515 = vmatpush1.msra.mxu0 0.0
        %2516 = vmatprep.subr.mxu0 0.0
        %2517 = vmatpush1.msra.mxu0 0.0
        %2518 = vmatprep.subr.mxu0 0.0
        %2519 = vmatpush1.msra.mxu0 0.0
        %2520 = vmatprep.subr.mxu0 0.0
        %2521 = vmatpush1.msra.mxu0 0.0
        %2522 = vmatprep.subr.mxu0 0.0
        %2523 = vmatpush1.msra.mxu0 0.0
        %2524 = vmatprep.subr.mxu0 0.0
        %2525 = vmatpush1.msra.mxu0 0.0
        %2526 = vmatprep.subr.mxu0 0.0
        %2527 = vmatpush1.msra.mxu0 0.0
        %2528 = vmatprep.subr.mxu0 0.0
        %2529 = vmatpush1.msra.mxu0 0.0
        %2530 = vmatprep.subr.mxu0 0.0
        %2531 = vmatpush1.msra.mxu0 0.0
        %2532 = vmatprep.subr.mxu0 0.0
        %2533 = vmatpush1.msra.mxu0 0.0
        %2534 = vmatprep.subr.mxu0 0.0
        %2535 = vmatpush1.msra.mxu0 0.0
        %2536 = vmatprep.subr.mxu0 0.0
        %2537 = vmatpush1.msra.mxu0 0.0
        %2538 = vmatprep.subr.mxu0 0.0
        %2539 = vmatpush1.msra.mxu0 0.0
        %2540 = vmatprep.subr.mxu0 0.0
        %2541 = vmatpush1.msra.mxu0 0.0
        %2542 = vmatprep.subr.mxu0 0.0
        %2543 = vmatpush1.msra.mxu0 0.0
        %2544 = vmatprep.subr.mxu0 0.0
        %2545 = vmatpush1.msra.mxu0 0.0
        %2546 = vmatprep.subr.mxu0 0.0
        %2547 = vmatpush1.msra.mxu0 0.0
        %2548 = vmatprep.mubr.f32.mxu0 0.0
        %2549 = vmatmul.mubr.f32.gmra.mrb[0].mxu0 %v2482
        %v2550 = vpop.f32.mrb[0].mxu0
        %v2551 = vadd.f32 0.0, %v2550
        %v2552 = vpop.f32.mrb[0].mxu0
        %2553 = vdwg.mxu0
        %2555 = vrot.lane.b32.xlu0 %v2551, 16
        %v2556 = vpop.permute.xlu0 %2555
        %2558 = vst.msk [vmem:[#allocation3 + $0x8] sm:$0xff] %vm1870, %v2556
        %2559 = vrot.lane.b32.xlu0 %v1353, 104
        %v2560 = vpop.permute.xlu0 %2559
        %2561 = vrot.lane.b32.xlu0 %v1353, 72
        %v2562 = vpop.permute.xlu0 %2561
        %v2563 = vsel %vm1360, %v2560, 0
        %v2565 = vsel %vm1360, %v2562, 0
        %2567 = vmatprep.subr.mxu0 0.0
        %2568 = vmatpush1.xpose.msra.mxu0 %v2565
        %2569 = vmatprep.subr.mxu0 0.0
        %2570 = vmatpush1.xpose.msra.mxu0 0.0
        %2571 = vmatprep.subr.mxu0 0.0
        %2572 = vmatpush1.xpose.msra.mxu0 0.0
        %2573 = vmatprep.subr.mxu0 0.0
        %2574 = vmatpush1.xpose.msra.mxu0 0.0
        %2575 = vmatprep.subr.mxu0 0.0
        %2576 = vmatpush1.xpose.msra.mxu0 0.0
        %2577 = vmatprep.subr.mxu0 0.0
        %2578 = vmatpush1.xpose.msra.mxu0 0.0
        %2579 = vmatprep.subr.mxu0 0.0
        %2580 = vmatpush1.xpose.msra.mxu0 0.0
        %2581 = vmatprep.subr.mxu0 0.0
        %2582 = vmatpush1.xpose.msra.mxu0 0.0
        %2583 = vmatprep.subr.mxu0 0.0
        %2584 = vmatpush1.xpose.msra.mxu0 0.0
        %2585 = vmatprep.subr.mxu0 0.0
        %2586 = vmatpush1.xpose.msra.mxu0 0.0
        %2587 = vmatprep.subr.mxu0 0.0
        %2588 = vmatpush1.xpose.msra.mxu0 0.0
        %2589 = vmatprep.subr.mxu0 0.0
        %2590 = vmatpush1.xpose.msra.mxu0 0.0
        %2591 = vmatprep.subr.mxu0 0.0
        %2592 = vmatpush1.xpose.msra.mxu0 0.0
        %2593 = vmatprep.subr.mxu0 0.0
        %2594 = vmatpush1.xpose.msra.mxu0 0.0
        %2595 = vmatprep.subr.mxu0 0.0
        %2596 = vmatpush1.xpose.msra.mxu0 0.0
        %2597 = vmatprep.subr.mxu0 0.0
        %2598 = vmatpush1.xpose.msra.mxu0 0.0
        %2599 = vmatprep.subr.mxu0 0.0
        %2600 = vmatpush1.xpose.msra.mxu0 0.0
        %2601 = vmatprep.subr.mxu0 0.0
        %2602 = vmatpush1.xpose.msra.mxu0 0.0
        %2603 = vmatprep.subr.mxu0 0.0
        %2604 = vmatpush1.xpose.msra.mxu0 0.0
        %2605 = vmatprep.subr.mxu0 0.0
        %2606 = vmatpush1.xpose.msra.mxu0 0.0
        %2607 = vmatprep.subr.mxu0 0.0
        %2608 = vmatpush1.xpose.msra.mxu0 0.0
        %2609 = vmatprep.subr.mxu0 0.0
        %2610 = vmatpush1.xpose.msra.mxu0 0.0
        %2611 = vmatprep.subr.mxu0 0.0
        %2612 = vmatpush1.xpose.msra.mxu0 0.0
        %2613 = vmatprep.subr.mxu0 0.0
        %2614 = vmatpush1.xpose.msra.mxu0 0.0
        %2615 = vmatprep.subr.mxu0 0.0
        %2616 = vmatpush1.xpose.msra.mxu0 0.0
        %2617 = vmatprep.subr.mxu0 0.0
        %2618 = vmatpush1.xpose.msra.mxu0 0.0
        %2619 = vmatprep.subr.mxu0 0.0
        %2620 = vmatpush1.xpose.msra.mxu0 0.0
        %2621 = vmatprep.subr.mxu0 0.0
        %2622 = vmatpush1.xpose.msra.mxu0 0.0
        %2623 = vmatprep.subr.mxu0 0.0
        %2624 = vmatpush1.xpose.msra.mxu0 0.0
        %2625 = vmatprep.subr.mxu0 0.0
        %2626 = vmatpush1.xpose.msra.mxu0 0.0
        %2627 = vmatprep.subr.mxu0 0.0
        %2628 = vmatpush1.xpose.msra.mxu0 0.0
        %2629 = vmatprep.subr.mxu0 0.0
        %2630 = vmatpush1.xpose.msra.mxu0 0.0
        %2631 = vmatprep.mubr.f32.mxu0 0.0
        %2632 = vmatmul.mubr.f32.gmra.mrb[0].mxu0 %v2563
        %v2633 = vpop.f32.mrb[0].mxu0
        %v2634 = vadd.f32 0.0, %v2633
        %v2635 = vpop.f32.mrb[0].mxu0
        %2636 = vdwg.mxu0
        %v2637 = vmul.f32 %v2634, 0.35355338
        %v2638 = vsel %vm2124, %v2637, -1e+10
        %v2639 = vsel %vm1360, %v2638, -inf
        %2640 = vmax.xlane.f32.xlu0 %v2639
        %v2641 = vpop.xlane.xlu0 %2640
        %v2642 = vsub.f32 %v2638, %v2641
        %v2643 = vmul.f32 %v2642, 1.442695
        %v2644 = vpow.pop %v2643
        %v2645 = vsel %vm1360, %v2644, 0.0
        %2646 = vadd.xlane.f32.xlu0 %v2645
        %v2647 = vpop.xlane.xlu0 %2646
        %v2648 = vrcp.pop %v2647
        %v2649 = vmul.f32 %v2644, %v2648
        %2650 = vrot.lane.b32.xlu0 %v1353, 40
        %v2651 = vpop.permute.xlu0 %2650
        %v2654 = vsel %vm1360, %v2649, 0
        %2656 = vmatprep.subr.mxu0 0.0
        %2657 = vmatpush1.msra.mxu0 %v2651
        %2658 = vmatprep.subr.mxu0 0.0
        %2659 = vmatpush1.msra.mxu0 0.0
        %2660 = vmatprep.subr.mxu0 0.0
        %2661 = vmatpush1.msra.mxu0 0.0
        %2662 = vmatprep.subr.mxu0 0.0
        %2663 = vmatpush1.msra.mxu0 0.0
        %2664 = vmatprep.subr.mxu0 0.0
        %2665 = vmatpush1.msra.mxu0 0.0
        %2666 = vmatprep.subr.mxu0 0.0
        %2667 = vmatpush1.msra.mxu0 0.0
        %2668 = vmatprep.subr.mxu0 0.0
        %2669 = vmatpush1.msra.mxu0 0.0
        %2670 = vmatprep.subr.mxu0 0.0
        %2671 = vmatpush1.msra.mxu0 0.0
        %2672 = vmatprep.subr.mxu0 0.0
        %2673 = vmatpush1.msra.mxu0 0.0
        %2674 = vmatprep.subr.mxu0 0.0
        %2675 = vmatpush1.msra.mxu0 0.0
        %2676 = vmatprep.subr.mxu0 0.0
        %2677 = vmatpush1.msra.mxu0 0.0
        %2678 = vmatprep.subr.mxu0 0.0
        %2679 = vmatpush1.msra.mxu0 0.0
        %2680 = vmatprep.subr.mxu0 0.0
        %2681 = vmatpush1.msra.mxu0 0.0
        %2682 = vmatprep.subr.mxu0 0.0
        %2683 = vmatpush1.msra.mxu0 0.0
        %2684 = vmatprep.subr.mxu0 0.0
        %2685 = vmatpush1.msra.mxu0 0.0
        %2686 = vmatprep.subr.mxu0 0.0
        %2687 = vmatpush1.msra.mxu0 0.0
        %2688 = vmatprep.subr.mxu0 0.0
        %2689 = vmatpush1.msra.mxu0 0.0
        %2690 = vmatprep.subr.mxu0 0.0
        %2691 = vmatpush1.msra.mxu0 0.0
        %2692 = vmatprep.subr.mxu0 0.0
        %2693 = vmatpush1.msra.mxu0 0.0
        %2694 = vmatprep.subr.mxu0 0.0
        %2695 = vmatpush1.msra.mxu0 0.0
        %2696 = vmatprep.subr.mxu0 0.0
        %2697 = vmatpush1.msra.mxu0 0.0
        %2698 = vmatprep.subr.mxu0 0.0
        %2699 = vmatpush1.msra.mxu0 0.0
        %2700 = vmatprep.subr.mxu0 0.0
        %2701 = vmatpush1.msra.mxu0 0.0
        %2702 = vmatprep.subr.mxu0 0.0
        %2703 = vmatpush1.msra.mxu0 0.0
        %2704 = vmatprep.subr.mxu0 0.0
        %2705 = vmatpush1.msra.mxu0 0.0
        %2706 = vmatprep.subr.mxu0 0.0
        %2707 = vmatpush1.msra.mxu0 0.0
        %2708 = vmatprep.subr.mxu0 0.0
        %2709 = vmatpush1.msra.mxu0 0.0
        %2710 = vmatprep.subr.mxu0 0.0
        %2711 = vmatpush1.msra.mxu0 0.0
        %2712 = vmatprep.subr.mxu0 0.0
        %2713 = vmatpush1.msra.mxu0 0.0
        %2714 = vmatprep.subr.mxu0 0.0
        %2715 = vmatpush1.msra.mxu0 0.0
        %2716 = vmatprep.subr.mxu0 0.0
        %2717 = vmatpush1.msra.mxu0 0.0
        %2718 = vmatprep.subr.mxu0 0.0
        %2719 = vmatpush1.msra.mxu0 0.0
        %2720 = vmatprep.mubr.f32.mxu0 0.0
        %2721 = vmatmul.mubr.f32.gmra.mrb[0].mxu0 %v2654
        %v2722 = vpop.f32.mrb[0].mxu0
        %v2723 = vadd.f32 0.0, %v2722
        %v2724 = vpop.f32.mrb[0].mxu0
        %2725 = vdwg.mxu0
        %2727 = vrot.lane.b32.xlu0 %v2723, 24
        %v2728 = vpop.permute.xlu0 %2727
        %2730 = vst.msk [vmem:[#allocation3 + $0x8] sm:$0xff] %vm2043, %v2728
        %v2731 = vld [vmem:[#allocation3] sm:$0xff]
        %v2732 = vld [vmem:[#allocation3 + $0x8] sm:$0xff]
        %v2733 = vld [vmem:[%s1217] sm:$0xff]
        %v2734 = vld [vmem:[%s1217 + $0x8] sm:$0xff]
        %v2735 = vld [vmem:[%s1217 + $0x10] sm:$0xff]
        %v2736 = vld [vmem:[%s1217 + $0x18] sm:$0xff]
        %v2737 = vld [vmem:[%s1220] sm:$0x1]
        %v2739 = vlaneseq
        %v2740 = vshrl.u32 %v2739, 7
        %v2741 = vsub.s32 0, %v2740
        %v2742 = vrot.slane %v2737, %v2741
        %v2745 = vsel %vm1274, %v2731, 0
        %v2748 = vsel %vm1274, %v2732, 0
        %2750 = vmatprep.subr.mxu0 0.0
        %2751 = vmatpush1.msra.mxu0 %v2733
        %2752 = vmatprep.subr.mxu0 0.0
        %2753 = vmatpush1.msra.mxu0 %v2734
        %2754 = vmatprep.subr.mxu0 0.0
        %2755 = vmatpush1.msra.mxu0 %v2735
        %2756 = vmatprep.subr.mxu0 0.0
        %2757 = vmatpush1.msra.mxu0 %v2736
        %2758 = vmatprep.subr.mxu0 0.0
        %2759 = vmatpush1.msra.mxu0 0.0
        %2760 = vmatprep.subr.mxu0 0.0
        %2761 = vmatpush1.msra.mxu0 0.0
        %2762 = vmatprep.subr.mxu0 0.0
        %2763 = vmatpush1.msra.mxu0 0.0
        %2764 = vmatprep.subr.mxu0 0.0
        %2765 = vmatpush1.msra.mxu0 0.0
        %2766 = vmatprep.subr.mxu0 0.0
        %2767 = vmatpush1.msra.mxu0 0.0
        %2768 = vmatprep.subr.mxu0 0.0
        %2769 = vmatpush1.msra.mxu0 0.0
        %2770 = vmatprep.subr.mxu0 0.0
        %2771 = vmatpush1.msra.mxu0 0.0
        %2772 = vmatprep.subr.mxu0 0.0
        %2773 = vmatpush1.msra.mxu0 0.0
        %2774 = vmatprep.subr.mxu0 0.0
        %2775 = vmatpush1.msra.mxu0 0.0
        %2776 = vmatprep.subr.mxu0 0.0
        %2777 = vmatpush1.msra.mxu0 0.0
        %2778 = vmatprep.subr.mxu0 0.0
        %2779 = vmatpush1.msra.mxu0 0.0
        %2780 = vmatprep.subr.mxu0 0.0
        %2781 = vmatpush1.msra.mxu0 0.0
        %2782 = vmatprep.subr.mxu0 0.0
        %2783 = vmatpush1.msra.mxu0 0.0
        %2784 = vmatprep.subr.mxu0 0.0
        %2785 = vmatpush1.msra.mxu0 0.0
        %2786 = vmatprep.subr.mxu0 0.0
        %2787 = vmatpush1.msra.mxu0 0.0
        %2788 = vmatprep.subr.mxu0 0.0
        %2789 = vmatpush1.msra.mxu0 0.0
        %2790 = vmatprep.subr.mxu0 0.0
        %2791 = vmatpush1.msra.mxu0 0.0
        %2792 = vmatprep.subr.mxu0 0.0
        %2793 = vmatpush1.msra.mxu0 0.0
        %2794 = vmatprep.subr.mxu0 0.0
        %2795 = vmatpush1.msra.mxu0 0.0
        %2796 = vmatprep.subr.mxu0 0.0
        %2797 = vmatpush1.msra.mxu0 0.0
        %2798 = vmatprep.subr.mxu0 0.0
        %2799 = vmatpush1.msra.mxu0 0.0
        %2800 = vmatprep.subr.mxu0 0.0
        %2801 = vmatpush1.msra.mxu0 0.0
        %2802 = vmatprep.subr.mxu0 0.0
        %2803 = vmatpush1.msra.mxu0 0.0
        %2804 = vmatprep.subr.mxu0 0.0
        %2805 = vmatpush1.msra.mxu0 0.0
        %2806 = vmatprep.subr.mxu0 0.0
        %2807 = vmatpush1.msra.mxu0 0.0
        %2808 = vmatprep.subr.mxu0 0.0
        %2809 = vmatpush1.msra.mxu0 0.0
        %2810 = vmatprep.subr.mxu0 0.0
        %2811 = vmatpush1.msra.mxu0 0.0
        %2812 = vmatprep.subr.mxu0 0.0
        %2813 = vmatpush1.msra.mxu0 0.0
        %2814 = vmatprep.mubr.f32.mxu0 0.0
        %2815 = vmatmul.mubr.f32.gmra.mrb[0].mxu0 %v2745
        %v2816 = vpop.f32.mrb[0].mxu0
        %v2817 = vadd.f32 %v2742, %v2816
        %v2818 = vpop.f32.mrb[0].mxu0
        %2819 = vmatprep.mubr.f32.mxu0 0.0
        %2820 = vmatmul.mubr.f32.gmra.mrb[0].mxu0 %v2748
        %v2821 = vpop.f32.mrb[0].mxu0
        %v2822 = vadd.f32 %v2742, %v2821
        %v2823 = vpop.f32.mrb[0].mxu0
        %2824 = vdwg.mxu0
        %v2825 = vadd.f32 %v1261, %v2817
        %v2826 = vadd.f32 %v1262, %v2822
        %v2827 = vld [vmem:[%s1223] sm:$0x1]
        %v2828 = vld [vmem:[%s1226] sm:$0x1]
        %v2829 = vsel %vm1274, %v2825, 0.0
        %2830 = vadd.xlane.f32.xlu0 %v2829
        %v2831 = vpop.xlane.xlu0 %2830
        %v2832 = vsel %vm1274, %v2826, 0.0
        %2833 = vadd.xlane.f32.xlu0 %v2832
        %v2834 = vpop.xlane.xlu0 %2833
        %v2835 = vrcp.pop 32.0
        %v2836 = vmul.f32 %v2831, %v2835
        %v2837 = vmul.f32 %v2834, %v2835
        %v2838 = vsub.f32 %v2825, %v2836
        %v2839 = vsub.f32 %v2826, %v2837
        %v2840 = vmul.f32 %v2838, %v2838
        %v2841 = vmul.f32 %v2839, %v2839
        %v2842 = vsel %vm1274, %v2840, 0.0
        %2843 = vadd.xlane.f32.xlu0 %v2842
        %v2844 = vpop.xlane.xlu0 %2843
        %v2845 = vsel %vm1274, %v2841, 0.0
        %2846 = vadd.xlane.f32.xlu0 %v2845
        %v2847 = vpop.xlane.xlu0 %2846
        %v2848 = vmul.f32 %v2844, %v2835
        %v2849 = vmul.f32 %v2847, %v2835
        %v2850 = vadd.f32 %v2848, 1e-05
        %v2851 = vadd.f32 %v2849, 1e-05
        %v2852 = vrsqrt.pop %v2850
        %v2853 = vrsqrt.pop %v2851
        %v2854 = vmul.f32 %v2838, %v2852
        %v2855 = vmul.f32 %v2839, %v2853
        %v2857 = vlaneseq
        %v2858 = vshrl.u32 %v2857, 7
        %v2859 = vsub.s32 0, %v2858
        %v2860 = vrot.slane %v2827, %v2859
        %v2862 = vmul.f32 %v2854, %v2860
        %v2863 = vmul.f32 %v2855, %v2860
        %v2865 = vlaneseq
        %v2866 = vshrl.u32 %v2865, 7
        %v2867 = vsub.s32 0, %v2866
        %v2868 = vrot.slane %v2828, %v2867
        %v2870 = vadd.f32 %v2862, %v2868
        %v2871 = vadd.f32 %v2863, %v2868
        %v2872 = vld [vmem:[%s1231] sm:$0xff]
        %v2873 = vld [vmem:[%s1231 + $0x8] sm:$0xff]
        %v2874 = vld [vmem:[%s1231 + $0x10] sm:$0xff]
        %v2875 = vld [vmem:[%s1231 + $0x18] sm:$0xff]
        %v2876 = vld [vmem:[%s1234] sm:$0x1]
        %v2878 = vlaneseq
        %v2879 = vshrl.u32 %v2878, 7
        %v2880 = vsub.s32 0, %v2879
        %v2881 = vrot.slane %v2876, %v2880
        %v2884 = vsel %vm1274, %v2870, 0
        %v2887 = vsel %vm1274, %v2871, 0
        %2889 = vmatprep.subr.mxu0 0.0
        %2890 = vmatpush1.msra.mxu0 %v2872
        %2891 = vmatprep.subr.mxu0 0.0
        %2892 = vmatpush1.msra.mxu0 %v2873
        %2893 = vmatprep.subr.mxu0 0.0
        %2894 = vmatpush1.msra.mxu0 %v2874
        %2895 = vmatprep.subr.mxu0 0.0
        %2896 = vmatpush1.msra.mxu0 %v2875
        %2897 = vmatprep.subr.mxu0 0.0
        %2898 = vmatpush1.msra.mxu0 0.0
        %2899 = vmatprep.subr.mxu0 0.0
        %2900 = vmatpush1.msra.mxu0 0.0
        %2901 = vmatprep.subr.mxu0 0.0
        %2902 = vmatpush1.msra.mxu0 0.0
        %2903 = vmatprep.subr.mxu0 0.0
        %2904 = vmatpush1.msra.mxu0 0.0
        %2905 = vmatprep.subr.mxu0 0.0
        %2906 = vmatpush1.msra.mxu0 0.0
        %2907 = vmatprep.subr.mxu0 0.0
        %2908 = vmatpush1.msra.mxu0 0.0
        %2909 = vmatprep.subr.mxu0 0.0
        %2910 = vmatpush1.msra.mxu0 0.0
        %2911 = vmatprep.subr.mxu0 0.0
        %2912 = vmatpush1.msra.mxu0 0.0
        %2913 = vmatprep.subr.mxu0 0.0
        %2914 = vmatpush1.msra.mxu0 0.0
        %2915 = vmatprep.subr.mxu0 0.0
        %2916 = vmatpush1.msra.mxu0 0.0
        %2917 = vmatprep.subr.mxu0 0.0
        %2918 = vmatpush1.msra.mxu0 0.0
        %2919 = vmatprep.subr.mxu0 0.0
        %2920 = vmatpush1.msra.mxu0 0.0
        %2921 = vmatprep.subr.mxu0 0.0
        %2922 = vmatpush1.msra.mxu0 0.0
        %2923 = vmatprep.subr.mxu0 0.0
        %2924 = vmatpush1.msra.mxu0 0.0
        %2925 = vmatprep.subr.mxu0 0.0
        %2926 = vmatpush1.msra.mxu0 0.0
        %2927 = vmatprep.subr.mxu0 0.0
        %2928 = vmatpush1.msra.mxu0 0.0
        %2929 = vmatprep.subr.mxu0 0.0
        %2930 = vmatpush1.msra.mxu0 0.0
        %2931 = vmatprep.subr.mxu0 0.0
        %2932 = vmatpush1.msra.mxu0 0.0
        %2933 = vmatprep.subr.mxu0 0.0
        %2934 = vmatpush1.msra.mxu0 0.0
        %2935 = vmatprep.subr.mxu0 0.0
        %2936 = vmatpush1.msra.mxu0 0.0
        %2937 = vmatprep.subr.mxu0 0.0
        %2938 = vmatpush1.msra.mxu0 0.0
        %2939 = vmatprep.subr.mxu0 0.0
        %2940 = vmatpush1.msra.mxu0 0.0
        %2941 = vmatprep.subr.mxu0 0.0
        %2942 = vmatpush1.msra.mxu0 0.0
        %2943 = vmatprep.subr.mxu0 0.0
        %2944 = vmatpush1.msra.mxu0 0.0
        %2945 = vmatprep.subr.mxu0 0.0
        %2946 = vmatpush1.msra.mxu0 0.0
        %2947 = vmatprep.subr.mxu0 0.0
        %2948 = vmatpush1.msra.mxu0 0.0
        %2949 = vmatprep.subr.mxu0 0.0
        %2950 = vmatpush1.msra.mxu0 0.0
        %2951 = vmatprep.subr.mxu0 0.0
        %2952 = vmatpush1.msra.mxu0 0.0
        %2953 = vmatprep.mubr.f32.mxu0 0.0
        %2954 = vmatmul.mubr.f32.gmra.mrb[0].mxu0 %v2884
        %v2955 = vpop.f32.mrb[0].mxu0
        %v2956 = vadd.f32 %v2881, %v2955
        %v2957 = vpop.f32.mrb[0].mxu0
        %2958 = vmatprep.mubr.f32.mxu0 0.0
        %2959 = vmatmul.mubr.f32.gmra.mrb[0].mxu0 %v2887
        %v2960 = vpop.f32.mrb[0].mxu0
        %v2961 = vadd.f32 %v2881, %v2960
        %v2962 = vpop.f32.mrb[0].mxu0
        %2963 = vdwg.mxu0
        %v2964 = vld [vmem:[%s1] sm:$0xff]
        %v2965 = vld [vmem:[%s1 + $0x8] sm:$0x3]
        %v2966 = vld [vmem:[%s1016] sm:$0xff]
        %v2967 = vld [vmem:[%s1016 + $0x8] sm:$0xff]
        %v2968 = vld [vmem:[%s1016 + $0x10] sm:$0xff]
        %v2969 = vld [vmem:[%s1016 + $0x18] sm:$0xff]
        %v2970 = vld [vmem:[%s1237] sm:$0x1]
        %v2972 = vlaneseq
        %v2973 = vshrl.u32 %v2972, 7
        %v2974 = vsub.s32 0, %v2973
        %v2975 = vrot.slane %v2970, %v2974
        %v2978 = vsel %vm1274, %v2964, 0
        %v2981 = vsel %vm1274, %v2965, 0
        %2983 = vmatprep.subr.mxu0 0.0
        %2984 = vmatpush1.msra.mxu0 %v2966
        %2985 = vmatprep.subr.mxu0 0.0
        %2986 = vmatpush1.msra.mxu0 %v2967
        %2987 = vmatprep.subr.mxu0 0.0
        %2988 = vmatpush1.msra.mxu0 %v2968
        %2989 = vmatprep.subr.mxu0 0.0
        %2990 = vmatpush1.msra.mxu0 %v2969
        %2991 = vmatprep.subr.mxu0 0.0
        %2992 = vmatpush1.msra.mxu0 0.0
        %2993 = vmatprep.subr.mxu0 0.0
        %2994 = vmatpush1.msra.mxu0 0.0
        %2995 = vmatprep.subr.mxu0 0.0
        %2996 = vmatpush1.msra.mxu0 0.0
        %2997 = vmatprep.subr.mxu0 0.0
        %2998 = vmatpush1.msra.mxu0 0.0
        %2999 = vmatprep.subr.mxu0 0.0
        %3000 = vmatpush1.msra.mxu0 0.0
        %3001 = vmatprep.subr.mxu0 0.0
        %3002 = vmatpush1.msra.mxu0 0.0
        %3003 = vmatprep.subr.mxu0 0.0
        %3004 = vmatpush1.msra.mxu0 0.0
        %3005 = vmatprep.subr.mxu0 0.0
        %3006 = vmatpush1.msra.mxu0 0.0
        %3007 = vmatprep.subr.mxu0 0.0
        %3008 = vmatpush1.msra.mxu0 0.0
        %3009 = vmatprep.subr.mxu0 0.0
        %3010 = vmatpush1.msra.mxu0 0.0
        %3011 = vmatprep.subr.mxu0 0.0
        %3012 = vmatpush1.msra.mxu0 0.0
        %3013 = vmatprep.subr.mxu0 0.0
        %3014 = vmatpush1.msra.mxu0 0.0
        %3015 = vmatprep.subr.mxu0 0.0
        %3016 = vmatpush1.msra.mxu0 0.0
        %3017 = vmatprep.subr.mxu0 0.0
        %3018 = vmatpush1.msra.mxu0 0.0
        %3019 = vmatprep.subr.mxu0 0.0
        %3020 = vmatpush1.msra.mxu0 0.0
        %3021 = vmatprep.subr.mxu0 0.0
        %3022 = vmatpush1.msra.mxu0 0.0
        %3023 = vmatprep.subr.mxu0 0.0
        %3024 = vmatpush1.msra.mxu0 0.0
        %3025 = vmatprep.subr.mxu0 0.0
        %3026 = vmatpush1.msra.mxu0 0.0
        %3027 = vmatprep.subr.mxu0 0.0
        %3028 = vmatpush1.msra.mxu0 0.0
        %3029 = vmatprep.subr.mxu0 0.0
        %3030 = vmatpush1.msra.mxu0 0.0
        %3031 = vmatprep.subr.mxu0 0.0
        %3032 = vmatpush1.msra.mxu0 0.0
        %3033 = vmatprep.subr.mxu0 0.0
        %3034 = vmatpush1.msra.mxu0 0.0
        %3035 = vmatprep.subr.mxu0 0.0
        %3036 = vmatpush1.msra.mxu0 0.0
        %3037 = vmatprep.subr.mxu0 0.0
        %3038 = vmatpush1.msra.mxu0 0.0
        %3039 = vmatprep.subr.mxu0 0.0
        %3040 = vmatpush1.msra.mxu0 0.0
        %3041 = vmatprep.subr.mxu0 0.0
        %3042 = vmatpush1.msra.mxu0 0.0
        %3043 = vmatprep.subr.mxu0 0.0
        %3044 = vmatpush1.msra.mxu0 0.0
        %3045 = vmatprep.subr.mxu0 0.0
        %3046 = vmatpush1.msra.mxu0 0.0
        %3047 = vmatprep.mubr.f32.mxu0 0.0
        %3048 = vmatmul.mubr.f32.gmra.mrb[0].mxu0 %v2978
        %v3049 = vpop.f32.mrb[0].mxu0
        %v3050 = vadd.f32 %v2975, %v3049
        %v3051 = vpop.f32.mrb[0].mxu0
        %3052 = vmatprep.mubr.f32.mxu0 0.0
        %3053 = vmatmul.mubr.f32.gmra.mrb[0].mxu0 %v2981
        %v3054 = vpop.f32.mrb[0].mxu0
        %v3055 = vadd.f32 %v2975, %v3054
        %v3056 = vpop.f32.mrb[0].mxu0
        %3057 = vdwg.mxu0
        %v3058 = vld [vmem:[%s3] sm:$0x1]
        %v3060 = vsel %vm1360, %v2956, 0
        %v3063 = vsel %vm1360, %v3050, 0
        %v3066 = vsel %vm1360, %v3055, 0
        %3068 = vmatprep.subr.mxu0 0.0
        %3069 = vmatpush1.xpose.msra.mxu0 %v3063
        %3070 = vmatprep.subr.mxu0 0.0
        %3071 = vmatpush1.xpose.msra.mxu0 %v3066
        %3072 = vmatprep.subr.mxu0 0.0
        %3073 = vmatpush1.xpose.msra.mxu0 0.0
        %3074 = vmatprep.subr.mxu0 0.0
        %3075 = vmatpush1.xpose.msra.mxu0 0.0
        %3076 = vmatprep.subr.mxu0 0.0
        %3077 = vmatpush1.xpose.msra.mxu0 0.0
        %3078 = vmatprep.subr.mxu0 0.0
        %3079 = vmatpush1.xpose.msra.mxu0 0.0
        %3080 = vmatprep.subr.mxu0 0.0
        %3081 = vmatpush1.xpose.msra.mxu0 0.0
        %3082 = vmatprep.subr.mxu0 0.0
        %3083 = vmatpush1.xpose.msra.mxu0 0.0
        %3084 = vmatprep.subr.mxu0 0.0
        %3085 = vmatpush1.xpose.msra.mxu0 0.0
        %3086 = vmatprep.subr.mxu0 0.0
        %3087 = vmatpush1.xpose.msra.mxu0 0.0
        %3088 = vmatprep.subr.mxu0 0.0
        %3089 = vmatpush1.xpose.msra.mxu0 0.0
        %3090 = vmatprep.subr.mxu0 0.0
        %3091 = vmatpush1.xpose.msra.mxu0 0.0
        %3092 = vmatprep.subr.mxu0 0.0
        %3093 = vmatpush1.xpose.msra.mxu0 0.0
        %3094 = vmatprep.subr.mxu0 0.0
        %3095 = vmatpush1.xpose.msra.mxu0 0.0
        %3096 = vmatprep.subr.mxu0 0.0
        %3097 = vmatpush1.xpose.msra.mxu0 0.0
        %3098 = vmatprep.subr.mxu0 0.0
        %3099 = vmatpush1.xpose.msra.mxu0 0.0
        %3100 = vmatprep.subr.mxu0 0.0
        %3101 = vmatpush1.xpose.msra.mxu0 0.0
        %3102 = vmatprep.subr.mxu0 0.0
        %3103 = vmatpush1.xpose.msra.mxu0 0.0
        %3104 = vmatprep.subr.mxu0 0.0
        %3105 = vmatpush1.xpose.msra.mxu0 0.0
        %3106 = vmatprep.subr.mxu0 0.0
        %3107 = vmatpush1.xpose.msra.mxu0 0.0
        %3108 = vmatprep.subr.mxu0 0.0
        %3109 = vmatpush1.xpose.msra.mxu0 0.0
        %3110 = vmatprep.subr.mxu0 0.0
        %3111 = vmatpush1.xpose.msra.mxu0 0.0
        %3112 = vmatprep.subr.mxu0 0.0
        %3113 = vmatpush1.xpose.msra.mxu0 0.0
        %3114 = vmatprep.subr.mxu0 0.0
        %3115 = vmatpush1.xpose.msra.mxu0 0.0
        %3116 = vmatprep.subr.mxu0 0.0
        %3117 = vmatpush1.xpose.msra.mxu0 0.0
        %3118 = vmatprep.subr.mxu0 0.0
        %3119 = vmatpush1.xpose.msra.mxu0 0.0
        %3120 = vmatprep.subr.mxu0 0.0
        %3121 = vmatpush1.xpose.msra.mxu0 0.0
        %3122 = vmatprep.subr.mxu0 0.0
        %3123 = vmatpush1.xpose.msra.mxu0 0.0
        %3124 = vmatprep.subr.mxu0 0.0
        %3125 = vmatpush1.xpose.msra.mxu0 0.0
        %3126 = vmatprep.subr.mxu0 0.0
        %3127 = vmatpush1.xpose.msra.mxu0 0.0
        %3128 = vmatprep.subr.mxu0 0.0
        %3129 = vmatpush1.xpose.msra.mxu0 0.0
        %3130 = vmatprep.subr.mxu0 0.0
        %3131 = vmatpush1.xpose.msra.mxu0 0.0
        %3132 = vmatprep.mubr.f32.mxu0 0.0
        %3133 = vmatmul.mubr.f32.gmra.mrb[0].mxu0 %v3060
        %v3134 = vpop.f32.mrb[0].mxu0
        %v3135 = vadd.f32 0.0, %v3134
        %v3136 = vpop.f32.mrb[0].mxu0
        %3137 = vdwg.mxu0
        %vm3138 = vcmp.gt.f32.partialorder %v3058, 0.0
        %v3139 = vmul.f32 %v3135, 0.35355338
        %v3140 = vsel %vm3138, 1, 0
        %v3141 = vlaneseq
        %v3142 = vshrl.u32 %v3141, 7
        %v3143 = vsub.s32 0, %v3142
        %v3144 = vrot.slane %v3140, %v3143
        %vm3145 = vcmp.eq.s32.totalorder %v3144, 1
        %v3146 = vsel %vm3145, %v3139, -1e+10
        %vm3147 = vcmask 80896
        %v3148 = vsel %vm3147, %v3146, -inf
        %3149 = vmax.xlane.f32.xlu0 %v3148
        %v3150 = vpop.xlane.xlu0 %3149
        %v3151 = vsub.f32 %v3146, %v3150
        %v3152 = vmul.f32 %v3151, 1.442695
        %v3153 = vpow.pop %v3152
        %v3154 = vsel %vm3147, %v3153, 0.0
        %3155 = vadd.xlane.f32.xlu0 %v3154
        %v3156 = vpop.xlane.xlu0 %3155
        %v3157 = vrcp.pop %v3156
        %v3158 = vmul.f32 %v3153, %v3157
        %3159 = vst.msk [vmem:[#allocation19] sm:$0xff] %vm3147, %v3158
        %3160 = vrot.lane.b32.xlu0 %v3050, 96
        %v3161 = vpop.permute.xlu0 %3160
        %3162 = vrot.lane.b32.xlu0 %v3055, 96
        %v3163 = vpop.permute.xlu0 %3162
        %v3166 = vsel %vm3147, %v3158, 0
        %vm3168 = vcmask 1041408
        %v3169 = vsel %vm3168, %v3163, 0
        %3171 = vmatprep.subr.mxu0 0.0
        %3172 = vmatpush1.msra.mxu0 %v3161
        %3173 = vmatprep.subr.mxu0 0.0
        %3174 = vmatpush1.msra.mxu0 %v3169
        %3175 = vmatprep.subr.mxu0 0.0
        %3176 = vmatpush1.msra.mxu0 0.0
        %3177 = vmatprep.subr.mxu0 0.0
        %3178 = vmatpush1.msra.mxu0 0.0
        %3179 = vmatprep.subr.mxu0 0.0
        %3180 = vmatpush1.msra.mxu0 0.0
        %3181 = vmatprep.subr.mxu0 0.0
        %3182 = vmatpush1.msra.mxu0 0.0
        %3183 = vmatprep.subr.mxu0 0.0
        %3184 = vmatpush1.msra.mxu0 0.0
        %3185 = vmatprep.subr.mxu0 0.0
        %3186 = vmatpush1.msra.mxu0 0.0
        %3187 = vmatprep.subr.mxu0 0.0
        %3188 = vmatpush1.msra.mxu0 0.0
        %3189 = vmatprep.subr.mxu0 0.0
        %3190 = vmatpush1.msra.mxu0 0.0
        %3191 = vmatprep.subr.mxu0 0.0
        %3192 = vmatpush1.msra.mxu0 0.0
        %3193 = vmatprep.subr.mxu0 0.0
        %3194 = vmatpush1.msra.mxu0 0.0
        %3195 = vmatprep.subr.mxu0 0.0
        %3196 = vmatpush1.msra.mxu0 0.0
        %3197 = vmatprep.subr.mxu0 0.0
        %3198 = vmatpush1.msra.mxu0 0.0
        %3199 = vmatprep.subr.mxu0 0.0
        %3200 = vmatpush1.msra.mxu0 0.0
        %3201 = vmatprep.subr.mxu0 0.0
        %3202 = vmatpush1.msra.mxu0 0.0
        %3203 = vmatprep.subr.mxu0 0.0
        %3204 = vmatpush1.msra.mxu0 0.0
        %3205 = vmatprep.subr.mxu0 0.0
        %3206 = vmatpush1.msra.mxu0 0.0
        %3207 = vmatprep.subr.mxu0 0.0
        %3208 = vmatpush1.msra.mxu0 0.0
        %3209 = vmatprep.subr.mxu0 0.0
        %3210 = vmatpush1.msra.mxu0 0.0
        %3211 = vmatprep.subr.mxu0 0.0
        %3212 = vmatpush1.msra.mxu0 0.0
        %3213 = vmatprep.subr.mxu0 0.0
        %3214 = vmatpush1.msra.mxu0 0.0
        %3215 = vmatprep.subr.mxu0 0.0
        %3216 = vmatpush1.msra.mxu0 0.0
        %3217 = vmatprep.subr.mxu0 0.0
        %3218 = vmatpush1.msra.mxu0 0.0
        %3219 = vmatprep.subr.mxu0 0.0
        %3220 = vmatpush1.msra.mxu0 0.0
        %3221 = vmatprep.subr.mxu0 0.0
        %3222 = vmatpush1.msra.mxu0 0.0
        %3223 = vmatprep.subr.mxu0 0.0
        %3224 = vmatpush1.msra.mxu0 0.0
        %3225 = vmatprep.subr.mxu0 0.0
        %3226 = vmatpush1.msra.mxu0 0.0
        %3227 = vmatprep.subr.mxu0 0.0
        %3228 = vmatpush1.msra.mxu0 0.0
        %3229 = vmatprep.subr.mxu0 0.0
        %3230 = vmatpush1.msra.mxu0 0.0
        %3231 = vmatprep.subr.mxu0 0.0
        %3232 = vmatpush1.msra.mxu0 0.0
        %3233 = vmatprep.subr.mxu0 0.0
        %3234 = vmatpush1.msra.mxu0 0.0
        %3235 = vmatprep.mubr.f32.mxu0 0.0
        %3236 = vmatmul.mubr.f32.gmra.mrb[0].mxu0 %v3166
        %v3237 = vpop.f32.mrb[0].mxu0
        %v3238 = vadd.f32 0.0, %v3237
        %v3239 = vpop.f32.mrb[0].mxu0
        %3240 = vdwg.mxu0
        %3241 = vst.msk [vmem:[#allocation3] sm:$0xff] %vm1360, %v3238
        %3242 = vrot.lane.b32.xlu0 %v2956, 120
        %v3243 = vpop.permute.xlu0 %3242
        %3244 = vrot.lane.b32.xlu0 %v3050, 120
        %v3245 = vpop.permute.xlu0 %3244
        %3246 = vrot.lane.b32.xlu0 %v3055, 120
        %v3247 = vpop.permute.xlu0 %3246
        %v3248 = vsel %vm1360, %v3243, 0
        %v3250 = vsel %vm1360, %v3245, 0
        %v3252 = vsel %vm1360, %v3247, 0
        %3254 = vmatprep.subr.mxu0 0.0
        %3255 = vmatpush1.xpose.msra.mxu0 %v3250
        %3256 = vmatprep.subr.mxu0 0.0
        %3257 = vmatpush1.xpose.msra.mxu0 %v3252
        %3258 = vmatprep.subr.mxu0 0.0
        %3259 = vmatpush1.xpose.msra.mxu0 0.0
        %3260 = vmatprep.subr.mxu0 0.0
        %3261 = vmatpush1.xpose.msra.mxu0 0.0
        %3262 = vmatprep.subr.mxu0 0.0
        %3263 = vmatpush1.xpose.msra.mxu0 0.0
        %3264 = vmatprep.subr.mxu0 0.0
        %3265 = vmatpush1.xpose.msra.mxu0 0.0
        %3266 = vmatprep.subr.mxu0 0.0
        %3267 = vmatpush1.xpose.msra.mxu0 0.0
        %3268 = vmatprep.subr.mxu0 0.0
        %3269 = vmatpush1.xpose.msra.mxu0 0.0
        %3270 = vmatprep.subr.mxu0 0.0
        %3271 = vmatpush1.xpose.msra.mxu0 0.0
        %3272 = vmatprep.subr.mxu0 0.0
        %3273 = vmatpush1.xpose.msra.mxu0 0.0
        %3274 = vmatprep.subr.mxu0 0.0
        %3275 = vmatpush1.xpose.msra.mxu0 0.0
        %3276 = vmatprep.subr.mxu0 0.0
        %3277 = vmatpush1.xpose.msra.mxu0 0.0
        %3278 = vmatprep.subr.mxu0 0.0
        %3279 = vmatpush1.xpose.msra.mxu0 0.0
        %3280 = vmatprep.subr.mxu0 0.0
        %3281 = vmatpush1.xpose.msra.mxu0 0.0
        %3282 = vmatprep.subr.mxu0 0.0
        %3283 = vmatpush1.xpose.msra.mxu0 0.0
        %3284 = vmatprep.subr.mxu0 0.0
        %3285 = vmatpush1.xpose.msra.mxu0 0.0
        %3286 = vmatprep.subr.mxu0 0.0
        %3287 = vmatpush1.xpose.msra.mxu0 0.0
        %3288 = vmatprep.subr.mxu0 0.0
        %3289 = vmatpush1.xpose.msra.mxu0 0.0
        %3290 = vmatprep.subr.mxu0 0.0
        %3291 = vmatpush1.xpose.msra.mxu0 0.0
        %3292 = vmatprep.subr.mxu0 0.0
        %3293 = vmatpush1.xpose.msra.mxu0 0.0
        %3294 = vmatprep.subr.mxu0 0.0
        %3295 = vmatpush1.xpose.msra.mxu0 0.0
        %3296 = vmatprep.subr.mxu0 0.0
        %3297 = vmatpush1.xpose.msra.mxu0 0.0
        %3298 = vmatprep.subr.mxu0 0.0
        %3299 = vmatpush1.xpose.msra.mxu0 0.0
        %3300 = vmatprep.subr.mxu0 0.0
        %3301 = vmatpush1.xpose.msra.mxu0 0.0
        %3302 = vmatprep.subr.mxu0 0.0
        %3303 = vmatpush1.xpose.msra.mxu0 0.0
        %3304 = vmatprep.subr.mxu0 0.0
        %3305 = vmatpush1.xpose.msra.mxu0 0.0
        %3306 = vmatprep.subr.mxu0 0.0
        %3307 = vmatpush1.xpose.msra.mxu0 0.0
        %3308 = vmatprep.subr.mxu0 0.0
        %3309 = vmatpush1.xpose.msra.mxu0 0.0
        %3310 = vmatprep.subr.mxu0 0.0
        %3311 = vmatpush1.xpose.msra.mxu0 0.0
        %3312 = vmatprep.subr.mxu0 0.0
        %3313 = vmatpush1.xpose.msra.mxu0 0.0
        %3314 = vmatprep.subr.mxu0 0.0
        %3315 = vmatpush1.xpose.msra.mxu0 0.0
        %3316 = vmatprep.subr.mxu0 0.0
        %3317 = vmatpush1.xpose.msra.mxu0 0.0
        %3318 = vmatprep.mubr.f32.mxu0 0.0
        %3319 = vmatmul.mubr.f32.gmra.mrb[0].mxu0 %v3248
        %v3320 = vpop.f32.mrb[0].mxu0
        %v3321 = vadd.f32 0.0, %v3320
        %v3322 = vpop.f32.mrb[0].mxu0
        %3323 = vdwg.mxu0
        %v3324 = vmul.f32 %v3321, 0.35355338
        %v3325 = vsel %vm3145, %v3324, -1e+10
        %v3326 = vsel %vm3147, %v3325, -inf
        %3327 = vmax.xlane.f32.xlu0 %v3326
        %v3328 = vpop.xlane.xlu0 %3327
        %v3329 = vsub.f32 %v3325, %v3328
        %v3330 = vmul.f32 %v3329, 1.442695
        %v3331 = vpow.pop %v3330
        %v3332 = vsel %vm3147, %v3331, 0.0
        %3333 = vadd.xlane.f32.xlu0 %v3332
        %v3334 = vpop.xlane.xlu0 %3333
        %v3335 = vrcp.pop %v3334
        %v3336 = vmul.f32 %v3331, %v3335
        %s3337 = scalar_lea.vmem [#allocation19], 8
        %3338 = vst.msk [vmem:[%s3337] sm:$0xff] %vm3147, %v3336
        %3339 = vrot.lane.b32.xlu0 %v3050, 88
        %v3340 = vpop.permute.xlu0 %3339
        %3341 = vrot.lane.b32.xlu0 %v3055, 88
        %v3342 = vpop.permute.xlu0 %3341
        %v3345 = vsel %vm3147, %v3336, 0
        %v3347 = vsel %vm3168, %v3342, 0
        %3349 = vmatprep.subr.mxu0 0.0
        %3350 = vmatpush1.msra.mxu0 %v3340
        %3351 = vmatprep.subr.mxu0 0.0
        %3352 = vmatpush1.msra.mxu0 %v3347
        %3353 = vmatprep.subr.mxu0 0.0
        %3354 = vmatpush1.msra.mxu0 0.0
        %3355 = vmatprep.subr.mxu0 0.0
        %3356 = vmatpush1.msra.mxu0 0.0
        %3357 = vmatprep.subr.mxu0 0.0
        %3358 = vmatpush1.msra.mxu0 0.0
        %3359 = vmatprep.subr.mxu0 0.0
        %3360 = vmatpush1.msra.mxu0 0.0
        %3361 = vmatprep.subr.mxu0 0.0
        %3362 = vmatpush1.msra.mxu0 0.0
        %3363 = vmatprep.subr.mxu0 0.0
        %3364 = vmatpush1.msra.mxu0 0.0
        %3365 = vmatprep.subr.mxu0 0.0
        %3366 = vmatpush1.msra.mxu0 0.0
        %3367 = vmatprep.subr.mxu0 0.0
        %3368 = vmatpush1.msra.mxu0 0.0
        %3369 = vmatprep.subr.mxu0 0.0
        %3370 = vmatpush1.msra.mxu0 0.0
        %3371 = vmatprep.subr.mxu0 0.0
        %3372 = vmatpush1.msra.mxu0 0.0
        %3373 = vmatprep.subr.mxu0 0.0
        %3374 = vmatpush1.msra.mxu0 0.0
        %3375 = vmatprep.subr.mxu0 0.0
        %3376 = vmatpush1.msra.mxu0 0.0
        %3377 = vmatprep.subr.mxu0 0.0
        %3378 = vmatpush1.msra.mxu0 0.0
        %3379 = vmatprep.subr.mxu0 0.0
        %3380 = vmatpush1.msra.mxu0 0.0
        %3381 = vmatprep.subr.mxu0 0.0
        %3382 = vmatpush1.msra.mxu0 0.0
        %3383 = vmatprep.subr.mxu0 0.0
        %3384 = vmatpush1.msra.mxu0 0.0
        %3385 = vmatprep.subr.mxu0 0.0
        %3386 = vmatpush1.msra.mxu0 0.0
        %3387 = vmatprep.subr.mxu0 0.0
        %3388 = vmatpush1.msra.mxu0 0.0
        %3389 = vmatprep.subr.mxu0 0.0
        %3390 = vmatpush1.msra.mxu0 0.0
        %3391 = vmatprep.subr.mxu0 0.0
        %3392 = vmatpush1.msra.mxu0 0.0
        %3393 = vmatprep.subr.mxu0 0.0
        %3394 = vmatpush1.msra.mxu0 0.0
        %3395 = vmatprep.subr.mxu0 0.0
        %3396 = vmatpush1.msra.mxu0 0.0
        %3397 = vmatprep.subr.mxu0 0.0
        %3398 = vmatpush1.msra.mxu0 0.0
        %3399 = vmatprep.subr.mxu0 0.0
        %3400 = vmatpush1.msra.mxu0 0.0
        %3401 = vmatprep.subr.mxu0 0.0
        %3402 = vmatpush1.msra.mxu0 0.0
        %3403 = vmatprep.subr.mxu0 0.0
        %3404 = vmatpush1.msra.mxu0 0.0
        %3405 = vmatprep.subr.mxu0 0.0
        %3406 = vmatpush1.msra.mxu0 0.0
        %3407 = vmatprep.subr.mxu0 0.0
        %3408 = vmatpush1.msra.mxu0 0.0
        %3409 = vmatprep.subr.mxu0 0.0
        %3410 = vmatpush1.msra.mxu0 0.0
        %3411 = vmatprep.subr.mxu0 0.0
        %3412 = vmatpush1.msra.mxu0 0.0
        %3413 = vmatprep.mubr.f32.mxu0 0.0
        %3414 = vmatmul.mubr.f32.gmra.mrb[0].mxu0 %v3345
        %v3415 = vpop.f32.mrb[0].mxu0
        %v3416 = vadd.f32 0.0, %v3415
        %v3417 = vpop.f32.mrb[0].mxu0
        %3418 = vdwg.mxu0
        %3420 = vrot.lane.b32.xlu0 %v3416, 8
        %v3421 = vpop.permute.xlu0 %3420
        %3423 = vst.msk [vmem:[#allocation3] sm:$0xff] %vm1697, %v3421
        %3424 = vrot.lane.b32.xlu0 %v2956, 112
        %v3425 = vpop.permute.xlu0 %3424
        %3426 = vrot.lane.b32.xlu0 %v3050, 112
        %v3427 = vpop.permute.xlu0 %3426
        %3428 = vrot.lane.b32.xlu0 %v3055, 112
        %v3429 = vpop.permute.xlu0 %3428
        %v3430 = vsel %vm1360, %v3425, 0
        %v3432 = vsel %vm1360, %v3427, 0
        %v3434 = vsel %vm1360, %v3429, 0
        %3436 = vmatprep.subr.mxu0 0.0
        %3437 = vmatpush1.xpose.msra.mxu0 %v3432
        %3438 = vmatprep.subr.mxu0 0.0
        %3439 = vmatpush1.xpose.msra.mxu0 %v3434
        %3440 = vmatprep.subr.mxu0 0.0
        %3441 = vmatpush1.xpose.msra.mxu0 0.0
        %3442 = vmatprep.subr.mxu0 0.0
        %3443 = vmatpush1.xpose.msra.mxu0 0.0
        %3444 = vmatprep.subr.mxu0 0.0
        %3445 = vmatpush1.xpose.msra.mxu0 0.0
        %3446 = vmatprep.subr.mxu0 0.0
        %3447 = vmatpush1.xpose.msra.mxu0 0.0
        %3448 = vmatprep.subr.mxu0 0.0
        %3449 = vmatpush1.xpose.msra.mxu0 0.0
        %3450 = vmatprep.subr.mxu0 0.0
        %3451 = vmatpush1.xpose.msra.mxu0 0.0
        %3452 = vmatprep.subr.mxu0 0.0
        %3453 = vmatpush1.xpose.msra.mxu0 0.0
        %3454 = vmatprep.subr.mxu0 0.0
        %3455 = vmatpush1.xpose.msra.mxu0 0.0
        %3456 = vmatprep.subr.mxu0 0.0
        %3457 = vmatpush1.xpose.msra.mxu0 0.0
        %3458 = vmatprep.subr.mxu0 0.0
        %3459 = vmatpush1.xpose.msra.mxu0 0.0
        %3460 = vmatprep.subr.mxu0 0.0
        %3461 = vmatpush1.xpose.msra.mxu0 0.0
        %3462 = vmatprep.subr.mxu0 0.0
        %3463 = vmatpush1.xpose.msra.mxu0 0.0
        %3464 = vmatprep.subr.mxu0 0.0
        %3465 = vmatpush1.xpose.msra.mxu0 0.0
        %3466 = vmatprep.subr.mxu0 0.0
        %3467 = vmatpush1.xpose.msra.mxu0 0.0
        %3468 = vmatprep.subr.mxu0 0.0
        %3469 = vmatpush1.xpose.msra.mxu0 0.0
        %3470 = vmatprep.subr.mxu0 0.0
        %3471 = vmatpush1.xpose.msra.mxu0 0.0
        %3472 = vmatprep.subr.mxu0 0.0
        %3473 = vmatpush1.xpose.msra.mxu0 0.0
        %3474 = vmatprep.subr.mxu0 0.0
        %3475 = vmatpush1.xpose.msra.mxu0 0.0
        %3476 = vmatprep.subr.mxu0 0.0
        %3477 = vmatpush1.xpose.msra.mxu0 0.0
        %3478 = vmatprep.subr.mxu0 0.0
        %3479 = vmatpush1.xpose.msra.mxu0 0.0
        %3480 = vmatprep.subr.mxu0 0.0
        %3481 = vmatpush1.xpose.msra.mxu0 0.0
        %3482 = vmatprep.subr.mxu0 0.0
        %3483 = vmatpush1.xpose.msra.mxu0 0.0
        %3484 = vmatprep.subr.mxu0 0.0
        %3485 = vmatpush1.xpose.msra.mxu0 0.0
        %3486 = vmatprep.subr.mxu0 0.0
        %3487 = vmatpush1.xpose.msra.mxu0 0.0
        %3488 = vmatprep.subr.mxu0 0.0
        %3489 = vmatpush1.xpose.msra.mxu0 0.0
        %3490 = vmatprep.subr.mxu0 0.0
        %3491 = vmatpush1.xpose.msra.mxu0 0.0
        %3492 = vmatprep.subr.mxu0 0.0
        %3493 = vmatpush1.xpose.msra.mxu0 0.0
        %3494 = vmatprep.subr.mxu0 0.0
        %3495 = vmatpush1.xpose.msra.mxu0 0.0
        %3496 = vmatprep.subr.mxu0 0.0
        %3497 = vmatpush1.xpose.msra.mxu0 0.0
        %3498 = vmatprep.subr.mxu0 0.0
        %3499 = vmatpush1.xpose.msra.mxu0 0.0
        %3500 = vmatprep.mubr.f32.mxu0 0.0
        %3501 = vmatmul.mubr.f32.gmra.mrb[0].mxu0 %v3430
        %v3502 = vpop.f32.mrb[0].mxu0
        %v3503 = vadd.f32 0.0, %v3502
        %v3504 = vpop.f32.mrb[0].mxu0
        %3505 = vdwg.mxu0
        %v3506 = vmul.f32 %v3503, 0.35355338
        %v3507 = vsel %vm3145, %v3506, -1e+10
        %v3508 = vsel %vm3147, %v3507, -inf
        %3509 = vmax.xlane.f32.xlu0 %v3508
        %v3510 = vpop.xlane.xlu0 %3509
        %v3511 = vsub.f32 %v3507, %v3510
        %v3512 = vmul.f32 %v3511, 1.442695
        %v3513 = vpow.pop %v3512
        %v3514 = vsel %vm3147, %v3513, 0.0
        %3515 = vadd.xlane.f32.xlu0 %v3514
        %v3516 = vpop.xlane.xlu0 %3515
        %v3517 = vrcp.pop %v3516
        %v3518 = vmul.f32 %v3513, %v3517
        %s3519 = scalar_lea.vmem [#allocation19], 16
        %3520 = vst.msk [vmem:[%s3519] sm:$0xff] %vm3147, %v3518
        %3521 = vrot.lane.b32.xlu0 %v3050, 80
        %v3522 = vpop.permute.xlu0 %3521
        %3523 = vrot.lane.b32.xlu0 %v3055, 80
        %v3524 = vpop.permute.xlu0 %3523
        %v3527 = vsel %vm3147, %v3518, 0
        %v3529 = vsel %vm3168, %v3524, 0
        %3531 = vmatprep.subr.mxu0 0.0
        %3532 = vmatpush1.msra.mxu0 %v3522
        %3533 = vmatprep.subr.mxu0 0.0
        %3534 = vmatpush1.msra.mxu0 %v3529
        %3535 = vmatprep.subr.mxu0 0.0
        %3536 = vmatpush1.msra.mxu0 0.0
        %3537 = vmatprep.subr.mxu0 0.0
        %3538 = vmatpush1.msra.mxu0 0.0
        %3539 = vmatprep.subr.mxu0 0.0
        %3540 = vmatpush1.msra.mxu0 0.0
        %3541 = vmatprep.subr.mxu0 0.0
        %3542 = vmatpush1.msra.mxu0 0.0
        %3543 = vmatprep.subr.mxu0 0.0
        %3544 = vmatpush1.msra.mxu0 0.0
        %3545 = vmatprep.subr.mxu0 0.0
        %3546 = vmatpush1.msra.mxu0 0.0
        %3547 = vmatprep.subr.mxu0 0.0
        %3548 = vmatpush1.msra.mxu0 0.0
        %3549 = vmatprep.subr.mxu0 0.0
        %3550 = vmatpush1.msra.mxu0 0.0
        %3551 = vmatprep.subr.mxu0 0.0
        %3552 = vmatpush1.msra.mxu0 0.0
        %3553 = vmatprep.subr.mxu0 0.0
        %3554 = vmatpush1.msra.mxu0 0.0
        %3555 = vmatprep.subr.mxu0 0.0
        %3556 = vmatpush1.msra.mxu0 0.0
        %3557 = vmatprep.subr.mxu0 0.0
        %3558 = vmatpush1.msra.mxu0 0.0
        %3559 = vmatprep.subr.mxu0 0.0
        %3560 = vmatpush1.msra.mxu0 0.0
        %3561 = vmatprep.subr.mxu0 0.0
        %3562 = vmatpush1.msra.mxu0 0.0
        %3563 = vmatprep.subr.mxu0 0.0
        %3564 = vmatpush1.msra.mxu0 0.0
        %3565 = vmatprep.subr.mxu0 0.0
        %3566 = vmatpush1.msra.mxu0 0.0
        %3567 = vmatprep.subr.mxu0 0.0
        %3568 = vmatpush1.msra.mxu0 0.0
        %3569 = vmatprep.subr.mxu0 0.0
        %3570 = vmatpush1.msra.mxu0 0.0
        %3571 = vmatprep.subr.mxu0 0.0
        %3572 = vmatpush1.msra.mxu0 0.0
        %3573 = vmatprep.subr.mxu0 0.0
        %3574 = vmatpush1.msra.mxu0 0.0
        %3575 = vmatprep.subr.mxu0 0.0
        %3576 = vmatpush1.msra.mxu0 0.0
        %3577 = vmatprep.subr.mxu0 0.0
        %3578 = vmatpush1.msra.mxu0 0.0
        %3579 = vmatprep.subr.mxu0 0.0
        %3580 = vmatpush1.msra.mxu0 0.0
        %3581 = vmatprep.subr.mxu0 0.0
        %3582 = vmatpush1.msra.mxu0 0.0
        %3583 = vmatprep.subr.mxu0 0.0
        %3584 = vmatpush1.msra.mxu0 0.0
        %3585 = vmatprep.subr.mxu0 0.0
        %3586 = vmatpush1.msra.mxu0 0.0
        %3587 = vmatprep.subr.mxu0 0.0
        %3588 = vmatpush1.msra.mxu0 0.0
        %3589 = vmatprep.subr.mxu0 0.0
        %3590 = vmatpush1.msra.mxu0 0.0
        %3591 = vmatprep.subr.mxu0 0.0
        %3592 = vmatpush1.msra.mxu0 0.0
        %3593 = vmatprep.subr.mxu0 0.0
        %3594 = vmatpush1.msra.mxu0 0.0
        %3595 = vmatprep.mubr.f32.mxu0 0.0
        %3596 = vmatmul.mubr.f32.gmra.mrb[0].mxu0 %v3527
        %v3597 = vpop.f32.mrb[0].mxu0
        %v3598 = vadd.f32 0.0, %v3597
        %v3599 = vpop.f32.mrb[0].mxu0
        %3600 = vdwg.mxu0
        %3602 = vrot.lane.b32.xlu0 %v3598, 16
        %v3603 = vpop.permute.xlu0 %3602
        %3605 = vst.msk [vmem:[#allocation3] sm:$0xff] %vm1870, %v3603
        %3606 = vrot.lane.b32.xlu0 %v2956, 104
        %v3607 = vpop.permute.xlu0 %3606
        %3608 = vrot.lane.b32.xlu0 %v3050, 104
        %v3609 = vpop.permute.xlu0 %3608
        %3610 = vrot.lane.b32.xlu0 %v3055, 104
        %v3611 = vpop.permute.xlu0 %3610
        %v3612 = vsel %vm1360, %v3607, 0
        %v3614 = vsel %vm1360, %v3609, 0
        %v3616 = vsel %vm1360, %v3611, 0
        %3618 = vmatprep.subr.mxu0 0.0
        %3619 = vmatpush1.xpose.msra.mxu0 %v3614
        %3620 = vmatprep.subr.mxu0 0.0
        %3621 = vmatpush1.xpose.msra.mxu0 %v3616
        %3622 = vmatprep.subr.mxu0 0.0
        %3623 = vmatpush1.xpose.msra.mxu0 0.0
        %3624 = vmatprep.subr.mxu0 0.0
        %3625 = vmatpush1.xpose.msra.mxu0 0.0
        %3626 = vmatprep.subr.mxu0 0.0
        %3627 = vmatpush1.xpose.msra.mxu0 0.0
        %3628 = vmatprep.subr.mxu0 0.0
        %3629 = vmatpush1.xpose.msra.mxu0 0.0
        %3630 = vmatprep.subr.mxu0 0.0
        %3631 = vmatpush1.xpose.msra.mxu0 0.0
        %3632 = vmatprep.subr.mxu0 0.0
        %3633 = vmatpush1.xpose.msra.mxu0 0.0
        %3634 = vmatprep.subr.mxu0 0.0
        %3635 = vmatpush1.xpose.msra.mxu0 0.0
        %3636 = vmatprep.subr.mxu0 0.0
        %3637 = vmatpush1.xpose.msra.mxu0 0.0
        %3638 = vmatprep.subr.mxu0 0.0
        %3639 = vmatpush1.xpose.msra.mxu0 0.0
        %3640 = vmatprep.subr.mxu0 0.0
        %3641 = vmatpush1.xpose.msra.mxu0 0.0
        %3642 = vmatprep.subr.mxu0 0.0
        %3643 = vmatpush1.xpose.msra.mxu0 0.0
        %3644 = vmatprep.subr.mxu0 0.0
        %3645 = vmatpush1.xpose.msra.mxu0 0.0
        %3646 = vmatprep.subr.mxu0 0.0
        %3647 = vmatpush1.xpose.msra.mxu0 0.0
        %3648 = vmatprep.subr.mxu0 0.0
        %3649 = vmatpush1.xpose.msra.mxu0 0.0
        %3650 = vmatprep.subr.mxu0 0.0
        %3651 = vmatpush1.xpose.msra.mxu0 0.0
        %3652 = vmatprep.subr.mxu0 0.0
        %3653 = vmatpush1.xpose.msra.mxu0 0.0
        %3654 = vmatprep.subr.mxu0 0.0
        %3655 = vmatpush1.xpose.msra.mxu0 0.0
        %3656 = vmatprep.subr.mxu0 0.0
        %3657 = vmatpush1.xpose.msra.mxu0 0.0
        %3658 = vmatprep.subr.mxu0 0.0
        %3659 = vmatpush1.xpose.msra.mxu0 0.0
        %3660 = vmatprep.subr.mxu0 0.0
        %3661 = vmatpush1.xpose.msra.mxu0 0.0
        %3662 = vmatprep.subr.mxu0 0.0
        %3663 = vmatpush1.xpose.msra.mxu0 0.0
        %3664 = vmatprep.subr.mxu0 0.0
        %3665 = vmatpush1.xpose.msra.mxu0 0.0
        %3666 = vmatprep.subr.mxu0 0.0
        %3667 = vmatpush1.xpose.msra.mxu0 0.0
        %3668 = vmatprep.subr.mxu0 0.0
        %3669 = vmatpush1.xpose.msra.mxu0 0.0
        %3670 = vmatprep.subr.mxu0 0.0
        %3671 = vmatpush1.xpose.msra.mxu0 0.0
        %3672 = vmatprep.subr.mxu0 0.0
        %3673 = vmatpush1.xpose.msra.mxu0 0.0
        %3674 = vmatprep.subr.mxu0 0.0
        %3675 = vmatpush1.xpose.msra.mxu0 0.0
        %3676 = vmatprep.subr.mxu0 0.0
        %3677 = vmatpush1.xpose.msra.mxu0 0.0
        %3678 = vmatprep.subr.mxu0 0.0
        %3679 = vmatpush1.xpose.msra.mxu0 0.0
        %3680 = vmatprep.subr.mxu0 0.0
        %3681 = vmatpush1.xpose.msra.mxu0 0.0
        %3682 = vmatprep.mubr.f32.mxu0 0.0
        %3683 = vmatmul.mubr.f32.gmra.mrb[0].mxu0 %v3612
        %v3684 = vpop.f32.mrb[0].mxu0
        %v3685 = vadd.f32 0.0, %v3684
        %v3686 = vpop.f32.mrb[0].mxu0
        %3687 = vdwg.mxu0
        %v3688 = vmul.f32 %v3685, 0.35355338
        %v3689 = vsel %vm3145, %v3688, -1e+10
        %v3690 = vsel %vm3147, %v3689, -inf
        %3691 = vmax.xlane.f32.xlu0 %v3690
        %v3692 = vpop.xlane.xlu0 %3691
        %v3693 = vsub.f32 %v3689, %v3692
        %v3694 = vmul.f32 %v3693, 1.442695
        %v3695 = vpow.pop %v3694
        %v3696 = vsel %vm3147, %v3695, 0.0
        %3697 = vadd.xlane.f32.xlu0 %v3696
        %v3698 = vpop.xlane.xlu0 %3697
        %v3699 = vrcp.pop %v3698
        %v3700 = vmul.f32 %v3695, %v3699
        %s3701 = scalar_lea.vmem [#allocation19], 24
        %3702 = vst.msk [vmem:[%s3701] sm:$0xff] %vm3147, %v3700
        %3703 = vrot.lane.b32.xlu0 %v3050, 72
        %v3704 = vpop.permute.xlu0 %3703
        %3705 = vrot.lane.b32.xlu0 %v3055, 72
        %v3706 = vpop.permute.xlu0 %3705
        %v3709 = vsel %vm3147, %v3700, 0
        %v3711 = vsel %vm3168, %v3706, 0
        %3713 = vmatprep.subr.mxu0 0.0
        %3714 = vmatpush1.msra.mxu0 %v3704
        %3715 = vmatprep.subr.mxu0 0.0
        %3716 = vmatpush1.msra.mxu0 %v3711
        %3717 = vmatprep.subr.mxu0 0.0
        %3718 = vmatpush1.msra.mxu0 0.0
        %3719 = vmatprep.subr.mxu0 0.0
        %3720 = vmatpush1.msra.mxu0 0.0
        %3721 = vmatprep.subr.mxu0 0.0
        %3722 = vmatpush1.msra.mxu0 0.0
        %3723 = vmatprep.subr.mxu0 0.0
        %3724 = vmatpush1.msra.mxu0 0.0
        %3725 = vmatprep.subr.mxu0 0.0
        %3726 = vmatpush1.msra.mxu0 0.0
        %3727 = vmatprep.subr.mxu0 0.0
        %3728 = vmatpush1.msra.mxu0 0.0
        %3729 = vmatprep.subr.mxu0 0.0
        %3730 = vmatpush1.msra.mxu0 0.0
        %3731 = vmatprep.subr.mxu0 0.0
        %3732 = vmatpush1.msra.mxu0 0.0
        %3733 = vmatprep.subr.mxu0 0.0
        %3734 = vmatpush1.msra.mxu0 0.0
        %3735 = vmatprep.subr.mxu0 0.0
        %3736 = vmatpush1.msra.mxu0 0.0
        %3737 = vmatprep.subr.mxu0 0.0
        %3738 = vmatpush1.msra.mxu0 0.0
        %3739 = vmatprep.subr.mxu0 0.0
        %3740 = vmatpush1.msra.mxu0 0.0
        %3741 = vmatprep.subr.mxu0 0.0
        %3742 = vmatpush1.msra.mxu0 0.0
        %3743 = vmatprep.subr.mxu0 0.0
        %3744 = vmatpush1.msra.mxu0 0.0
        %3745 = vmatprep.subr.mxu0 0.0
        %3746 = vmatpush1.msra.mxu0 0.0
        %3747 = vmatprep.subr.mxu0 0.0
        %3748 = vmatpush1.msra.mxu0 0.0
        %3749 = vmatprep.subr.mxu0 0.0
        %3750 = vmatpush1.msra.mxu0 0.0
        %3751 = vmatprep.subr.mxu0 0.0
        %3752 = vmatpush1.msra.mxu0 0.0
        %3753 = vmatprep.subr.mxu0 0.0
        %3754 = vmatpush1.msra.mxu0 0.0
        %3755 = vmatprep.subr.mxu0 0.0
        %3756 = vmatpush1.msra.mxu0 0.0
        %3757 = vmatprep.subr.mxu0 0.0
        %3758 = vmatpush1.msra.mxu0 0.0
        %3759 = vmatprep.subr.mxu0 0.0
        %3760 = vmatpush1.msra.mxu0 0.0
        %3761 = vmatprep.subr.mxu0 0.0
        %3762 = vmatpush1.msra.mxu0 0.0
        %3763 = vmatprep.subr.mxu0 0.0
        %3764 = vmatpush1.msra.mxu0 0.0
        %3765 = vmatprep.subr.mxu0 0.0
        %3766 = vmatpush1.msra.mxu0 0.0
        %3767 = vmatprep.subr.mxu0 0.0
        %3768 = vmatpush1.msra.mxu0 0.0
        %3769 = vmatprep.subr.mxu0 0.0
        %3770 = vmatpush1.msra.mxu0 0.0
        %3771 = vmatprep.subr.mxu0 0.0
        %3772 = vmatpush1.msra.mxu0 0.0
        %3773 = vmatprep.subr.mxu0 0.0
        %3774 = vmatpush1.msra.mxu0 0.0
        %3775 = vmatprep.subr.mxu0 0.0
        %3776 = vmatpush1.msra.mxu0 0.0
        %3777 = vmatprep.mubr.f32.mxu0 0.0
        %3778 = vmatmul.mubr.f32.gmra.mrb[0].mxu0 %v3709
        %v3779 = vpop.f32.mrb[0].mxu0
        %v3780 = vadd.f32 0.0, %v3779
        %v3781 = vpop.f32.mrb[0].mxu0
        %3782 = vdwg.mxu0
        %3784 = vrot.lane.b32.xlu0 %v3780, 24
        %v3785 = vpop.permute.xlu0 %3784
        %3787 = vst.msk [vmem:[#allocation3] sm:$0xff] %vm2043, %v3785
        %s3788 = scalar_lea.vmem %s1, 16
        %v3789 = vld [vmem:[%s3788] sm:$0xff]
        %v3790 = vld [vmem:[%s3788 + $0x8] sm:$0x3]
        %v3791 = vld [vmem:[%s1016] sm:$0xff]
        %v3792 = vld [vmem:[%s1016 + $0x8] sm:$0xff]
        %v3793 = vld [vmem:[%s1016 + $0x10] sm:$0xff]
        %v3794 = vld [vmem:[%s1016 + $0x18] sm:$0xff]
        %v3795 = vld [vmem:[%s1237] sm:$0x1]
        %v3797 = vlaneseq
        %v3798 = vshrl.u32 %v3797, 7
        %v3799 = vsub.s32 0, %v3798
        %v3800 = vrot.slane %v3795, %v3799
        %v3803 = vsel %vm1274, %v3789, 0
        %v3806 = vsel %vm1274, %v3790, 0
        %3808 = vmatprep.subr.mxu0 0.0
        %3809 = vmatpush1.msra.mxu0 %v3791
        %3810 = vmatprep.subr.mxu0 0.0
        %3811 = vmatpush1.msra.mxu0 %v3792
        %3812 = vmatprep.subr.mxu0 0.0
        %3813 = vmatpush1.msra.mxu0 %v3793
        %3814 = vmatprep.subr.mxu0 0.0
        %3815 = vmatpush1.msra.mxu0 %v3794
        %3816 = vmatprep.subr.mxu0 0.0
        %3817 = vmatpush1.msra.mxu0 0.0
        %3818 = vmatprep.subr.mxu0 0.0
        %3819 = vmatpush1.msra.mxu0 0.0
        %3820 = vmatprep.subr.mxu0 0.0
        %3821 = vmatpush1.msra.mxu0 0.0
        %3822 = vmatprep.subr.mxu0 0.0
        %3823 = vmatpush1.msra.mxu0 0.0
        %3824 = vmatprep.subr.mxu0 0.0
        %3825 = vmatpush1.msra.mxu0 0.0
        %3826 = vmatprep.subr.mxu0 0.0
        %3827 = vmatpush1.msra.mxu0 0.0
        %3828 = vmatprep.subr.mxu0 0.0
        %3829 = vmatpush1.msra.mxu0 0.0
        %3830 = vmatprep.subr.mxu0 0.0
        %3831 = vmatpush1.msra.mxu0 0.0
        %3832 = vmatprep.subr.mxu0 0.0
        %3833 = vmatpush1.msra.mxu0 0.0
        %3834 = vmatprep.subr.mxu0 0.0
        %3835 = vmatpush1.msra.mxu0 0.0
        %3836 = vmatprep.subr.mxu0 0.0
        %3837 = vmatpush1.msra.mxu0 0.0
        %3838 = vmatprep.subr.mxu0 0.0
        %3839 = vmatpush1.msra.mxu0 0.0
        %3840 = vmatprep.subr.mxu0 0.0
        %3841 = vmatpush1.msra.mxu0 0.0
        %3842 = vmatprep.subr.mxu0 0.0
        %3843 = vmatpush1.msra.mxu0 0.0
        %3844 = vmatprep.subr.mxu0 0.0
        %3845 = vmatpush1.msra.mxu0 0.0
        %3846 = vmatprep.subr.mxu0 0.0
        %3847 = vmatpush1.msra.mxu0 0.0
        %3848 = vmatprep.subr.mxu0 0.0
        %3849 = vmatpush1.msra.mxu0 0.0
        %3850 = vmatprep.subr.mxu0 0.0
        %3851 = vmatpush1.msra.mxu0 0.0
        %3852 = vmatprep.subr.mxu0 0.0
        %3853 = vmatpush1.msra.mxu0 0.0
        %3854 = vmatprep.subr.mxu0 0.0
        %3855 = vmatpush1.msra.mxu0 0.0
        %3856 = vmatprep.subr.mxu0 0.0
        %3857 = vmatpush1.msra.mxu0 0.0
        %3858 = vmatprep.subr.mxu0 0.0
        %3859 = vmatpush1.msra.mxu0 0.0
        %3860 = vmatprep.subr.mxu0 0.0
        %3861 = vmatpush1.msra.mxu0 0.0
        %3862 = vmatprep.subr.mxu0 0.0
        %3863 = vmatpush1.msra.mxu0 0.0
        %3864 = vmatprep.subr.mxu0 0.0
        %3865 = vmatpush1.msra.mxu0 0.0
        %3866 = vmatprep.subr.mxu0 0.0
        %3867 = vmatpush1.msra.mxu0 0.0
        %3868 = vmatprep.subr.mxu0 0.0
        %3869 = vmatpush1.msra.mxu0 0.0
        %3870 = vmatprep.subr.mxu0 0.0
        %3871 = vmatpush1.msra.mxu0 0.0
        %3872 = vmatprep.mubr.f32.mxu0 0.0
        %3873 = vmatmul.mubr.f32.gmra.mrb[0].mxu0 %v3803
        %v3874 = vpop.f32.mrb[0].mxu0
        %v3875 = vadd.f32 %v3800, %v3874
        %v3876 = vpop.f32.mrb[0].mxu0
        %3877 = vmatprep.mubr.f32.mxu0 0.0
        %3878 = vmatmul.mubr.f32.gmra.mrb[0].mxu0 %v3806
        %v3879 = vpop.f32.mrb[0].mxu0
        %v3880 = vadd.f32 %v3800, %v3879
        %v3881 = vpop.f32.mrb[0].mxu0
        %3882 = vdwg.mxu0
        %s3883 = scalar_lea.vmem %s3, 1
        %v3884 = vld [vmem:[%s3883] sm:$0x1]
        %v3886 = vsel %vm1360, %v2961, 0
        %v3889 = vsel %vm1360, %v3875, 0
        %v3892 = vsel %vm1360, %v3880, 0
        %3894 = vmatprep.subr.mxu0 0.0
        %3895 = vmatpush1.xpose.msra.mxu0 %v3889
        %3896 = vmatprep.subr.mxu0 0.0
        %3897 = vmatpush1.xpose.msra.mxu0 %v3892
        %3898 = vmatprep.subr.mxu0 0.0
        %3899 = vmatpush1.xpose.msra.mxu0 0.0
        %3900 = vmatprep.subr.mxu0 0.0
        %3901 = vmatpush1.xpose.msra.mxu0 0.0
        %3902 = vmatprep.subr.mxu0 0.0
        %3903 = vmatpush1.xpose.msra.mxu0 0.0
        %3904 = vmatprep.subr.mxu0 0.0
        %3905 = vmatpush1.xpose.msra.mxu0 0.0
        %3906 = vmatprep.subr.mxu0 0.0
        %3907 = vmatpush1.xpose.msra.mxu0 0.0
        %3908 = vmatprep.subr.mxu0 0.0
        %3909 = vmatpush1.xpose.msra.mxu0 0.0
        %3910 = vmatprep.subr.mxu0 0.0
        %3911 = vmatpush1.xpose.msra.mxu0 0.0
        %3912 = vmatprep.subr.mxu0 0.0
        %3913 = vmatpush1.xpose.msra.mxu0 0.0
        %3914 = vmatprep.subr.mxu0 0.0
        %3915 = vmatpush1.xpose.msra.mxu0 0.0
        %3916 = vmatprep.subr.mxu0 0.0
        %3917 = vmatpush1.xpose.msra.mxu0 0.0
        %3918 = vmatprep.subr.mxu0 0.0
        %3919 = vmatpush1.xpose.msra.mxu0 0.0
        %3920 = vmatprep.subr.mxu0 0.0
        %3921 = vmatpush1.xpose.msra.mxu0 0.0
        %3922 = vmatprep.subr.mxu0 0.0
        %3923 = vmatpush1.xpose.msra.mxu0 0.0
        %3924 = vmatprep.subr.mxu0 0.0
        %3925 = vmatpush1.xpose.msra.mxu0 0.0
        %3926 = vmatprep.subr.mxu0 0.0
        %3927 = vmatpush1.xpose.msra.mxu0 0.0
        %3928 = vmatprep.subr.mxu0 0.0
        %3929 = vmatpush1.xpose.msra.mxu0 0.0
        %3930 = vmatprep.subr.mxu0 0.0
        %3931 = vmatpush1.xpose.msra.mxu0 0.0
        %3932 = vmatprep.subr.mxu0 0.0
        %3933 = vmatpush1.xpose.msra.mxu0 0.0
        %3934 = vmatprep.subr.mxu0 0.0
        %3935 = vmatpush1.xpose.msra.mxu0 0.0
        %3936 = vmatprep.subr.mxu0 0.0
        %3937 = vmatpush1.xpose.msra.mxu0 0.0
        %3938 = vmatprep.subr.mxu0 0.0
        %3939 = vmatpush1.xpose.msra.mxu0 0.0
        %3940 = vmatprep.subr.mxu0 0.0
        %3941 = vmatpush1.xpose.msra.mxu0 0.0
        %3942 = vmatprep.subr.mxu0 0.0
        %3943 = vmatpush1.xpose.msra.mxu0 0.0
        %3944 = vmatprep.subr.mxu0 0.0
        %3945 = vmatpush1.xpose.msra.mxu0 0.0
        %3946 = vmatprep.subr.mxu0 0.0
        %3947 = vmatpush1.xpose.msra.mxu0 0.0
        %3948 = vmatprep.subr.mxu0 0.0
        %3949 = vmatpush1.xpose.msra.mxu0 0.0
        %3950 = vmatprep.subr.mxu0 0.0
        %3951 = vmatpush1.xpose.msra.mxu0 0.0
        %3952 = vmatprep.subr.mxu0 0.0
        %3953 = vmatpush1.xpose.msra.mxu0 0.0
        %3954 = vmatprep.subr.mxu0 0.0
        %3955 = vmatpush1.xpose.msra.mxu0 0.0
        %3956 = vmatprep.subr.mxu0 0.0
        %3957 = vmatpush1.xpose.msra.mxu0 0.0
        %3958 = vmatprep.mubr.f32.mxu0 0.0
        %3959 = vmatmul.mubr.f32.gmra.mrb[0].mxu0 %v3886
        %v3960 = vpop.f32.mrb[0].mxu0
        %v3961 = vadd.f32 0.0, %v3960
        %v3962 = vpop.f32.mrb[0].mxu0
        %3963 = vdwg.mxu0
        %vm3964 = vcmp.gt.f32.partialorder %v3884, 0.0
        %v3965 = vmul.f32 %v3961, 0.35355338
        %v3966 = vsel %vm3964, 1, 0
        %v3967 = vlaneseq
        %v3968 = vshrl.u32 %v3967, 7
        %v3969 = vsub.s32 0, %v3968
        %v3970 = vrot.slane %v3966, %v3969
        %vm3971 = vcmp.eq.s32.totalorder %v3970, 1
        %v3972 = vsel %vm3971, %v3965, -1e+10
        %v3973 = vsel %vm3147, %v3972, -inf
        %3974 = vmax.xlane.f32.xlu0 %v3973
        %v3975 = vpop.xlane.xlu0 %3974
        %v3976 = vsub.f32 %v3972, %v3975
        %v3977 = vmul.f32 %v3976, 1.442695
        %v3978 = vpow.pop %v3977
        %v3979 = vsel %vm3147, %v3978, 0.0
        %3980 = vadd.xlane.f32.xlu0 %v3979
        %v3981 = vpop.xlane.xlu0 %3980
        %v3982 = vrcp.pop %v3981
        %v3983 = vmul.f32 %v3978, %v3982
        %s3984 = scalar_lea.vmem [#allocation19], 32
        %3985 = vst.msk [vmem:[%s3984] sm:$0xff] %vm3147, %v3983
        %3986 = vrot.lane.b32.xlu0 %v3875, 96
        %v3987 = vpop.permute.xlu0 %3986
        %3988 = vrot.lane.b32.xlu0 %v3880, 96
        %v3989 = vpop.permute.xlu0 %3988
        %v3992 = vsel %vm3147, %v3983, 0
        %v3994 = vsel %vm3168, %v3989, 0
        %3996 = vmatprep.subr.mxu0 0.0
        %3997 = vmatpush1.msra.mxu0 %v3987
        %3998 = vmatprep.subr.mxu0 0.0
        %3999 = vmatpush1.msra.mxu0 %v3994
        %4000 = vmatprep.subr.mxu0 0.0
        %4001 = vmatpush1.msra.mxu0 0.0
        %4002 = vmatprep.subr.mxu0 0.0
        %4003 = vmatpush1.msra.mxu0 0.0
        %4004 = vmatprep.subr.mxu0 0.0
        %4005 = vmatpush1.msra.mxu0 0.0
        %4006 = vmatprep.subr.mxu0 0.0
        %4007 = vmatpush1.msra.mxu0 0.0
        %4008 = vmatprep.subr.mxu0 0.0
        %4009 = vmatpush1.msra.mxu0 0.0
        %4010 = vmatprep.subr.mxu0 0.0
        %4011 = vmatpush1.msra.mxu0 0.0
        %4012 = vmatprep.subr.mxu0 0.0
        %4013 = vmatpush1.msra.mxu0 0.0
        %4014 = vmatprep.subr.mxu0 0.0
        %4015 = vmatpush1.msra.mxu0 0.0
        %4016 = vmatprep.subr.mxu0 0.0
        %4017 = vmatpush1.msra.mxu0 0.0
        %4018 = vmatprep.subr.mxu0 0.0
        %4019 = vmatpush1.msra.mxu0 0.0
        %4020 = vmatprep.subr.mxu0 0.0
        %4021 = vmatpush1.msra.mxu0 0.0
        %4022 = vmatprep.subr.mxu0 0.0
        %4023 = vmatpush1.msra.mxu0 0.0
        %4024 = vmatprep.subr.mxu0 0.0
        %4025 = vmatpush1.msra.mxu0 0.0
        %4026 = vmatprep.subr.mxu0 0.0
        %4027 = vmatpush1.msra.mxu0 0.0
        %4028 = vmatprep.subr.mxu0 0.0
        %4029 = vmatpush1.msra.mxu0 0.0
        %4030 = vmatprep.subr.mxu0 0.0
        %4031 = vmatpush1.msra.mxu0 0.0
        %4032 = vmatprep.subr.mxu0 0.0
        %4033 = vmatpush1.msra.mxu0 0.0
        %4034 = vmatprep.subr.mxu0 0.0
        %4035 = vmatpush1.msra.mxu0 0.0
        %4036 = vmatprep.subr.mxu0 0.0
        %4037 = vmatpush1.msra.mxu0 0.0
        %4038 = vmatprep.subr.mxu0 0.0
        %4039 = vmatpush1.msra.mxu0 0.0
        %4040 = vmatprep.subr.mxu0 0.0
        %4041 = vmatpush1.msra.mxu0 0.0
        %4042 = vmatprep.subr.mxu0 0.0
        %4043 = vmatpush1.msra.mxu0 0.0
        %4044 = vmatprep.subr.mxu0 0.0
        %4045 = vmatpush1.msra.mxu0 0.0
        %4046 = vmatprep.subr.mxu0 0.0
        %4047 = vmatpush1.msra.mxu0 0.0
        %4048 = vmatprep.subr.mxu0 0.0
        %4049 = vmatpush1.msra.mxu0 0.0
        %4050 = vmatprep.subr.mxu0 0.0
        %4051 = vmatpush1.msra.mxu0 0.0
        %4052 = vmatprep.subr.mxu0 0.0
        %4053 = vmatpush1.msra.mxu0 0.0
        %4054 = vmatprep.subr.mxu0 0.0
        %4055 = vmatpush1.msra.mxu0 0.0
        %4056 = vmatprep.subr.mxu0 0.0
        %4057 = vmatpush1.msra.mxu0 0.0
        %4058 = vmatprep.subr.mxu0 0.0
        %4059 = vmatpush1.msra.mxu0 0.0
        %4060 = vmatprep.mubr.f32.mxu0 0.0
        %4061 = vmatmul.mubr.f32.gmra.mrb[0].mxu0 %v3992
        %v4062 = vpop.f32.mrb[0].mxu0
        %v4063 = vadd.f32 0.0, %v4062
        %v4064 = vpop.f32.mrb[0].mxu0
        %4065 = vdwg.mxu0
        %4066 = vst.msk [vmem:[#allocation3 + $0x8] sm:$0xff] %vm1360, %v4063
        %4067 = vrot.lane.b32.xlu0 %v2961, 120
        %v4068 = vpop.permute.xlu0 %4067
        %4069 = vrot.lane.b32.xlu0 %v3875, 120
        %v4070 = vpop.permute.xlu0 %4069
        %4071 = vrot.lane.b32.xlu0 %v3880, 120
        %v4072 = vpop.permute.xlu0 %4071
        %v4073 = vsel %vm1360, %v4068, 0
        %v4075 = vsel %vm1360, %v4070, 0
        %v4077 = vsel %vm1360, %v4072, 0
        %4079 = vmatprep.subr.mxu0 0.0
        %4080 = vmatpush1.xpose.msra.mxu0 %v4075
        %4081 = vmatprep.subr.mxu0 0.0
        %4082 = vmatpush1.xpose.msra.mxu0 %v4077
        %4083 = vmatprep.subr.mxu0 0.0
        %4084 = vmatpush1.xpose.msra.mxu0 0.0
        %4085 = vmatprep.subr.mxu0 0.0
        %4086 = vmatpush1.xpose.msra.mxu0 0.0
        %4087 = vmatprep.subr.mxu0 0.0
        %4088 = vmatpush1.xpose.msra.mxu0 0.0
        %4089 = vmatprep.subr.mxu0 0.0
        %4090 = vmatpush1.xpose.msra.mxu0 0.0
        %4091 = vmatprep.subr.mxu0 0.0
        %4092 = vmatpush1.xpose.msra.mxu0 0.0
        %4093 = vmatprep.subr.mxu0 0.0
        %4094 = vmatpush1.xpose.msra.mxu0 0.0
        %4095 = vmatprep.subr.mxu0 0.0
        %4096 = vmatpush1.xpose.msra.mxu0 0.0
        %4097 = vmatprep.subr.mxu0 0.0
        %4098 = vmatpush1.xpose.msra.mxu0 0.0
        %4099 = vmatprep.subr.mxu0 0.0
        %4100 = vmatpush1.xpose.msra.mxu0 0.0
        %4101 = vmatprep.subr.mxu0 0.0
        %4102 = vmatpush1.xpose.msra.mxu0 0.0
        %4103 = vmatprep.subr.mxu0 0.0
        %4104 = vmatpush1.xpose.msra.mxu0 0.0
        %4105 = vmatprep.subr.mxu0 0.0
        %4106 = vmatpush1.xpose.msra.mxu0 0.0
        %4107 = vmatprep.subr.mxu0 0.0
        %4108 = vmatpush1.xpose.msra.mxu0 0.0
        %4109 = vmatprep.subr.mxu0 0.0
        %4110 = vmatpush1.xpose.msra.mxu0 0.0
        %4111 = vmatprep.subr.mxu0 0.0
        %4112 = vmatpush1.xpose.msra.mxu0 0.0
        %4113 = vmatprep.subr.mxu0 0.0
        %4114 = vmatpush1.xpose.msra.mxu0 0.0
        %4115 = vmatprep.subr.mxu0 0.0
        %4116 = vmatpush1.xpose.msra.mxu0 0.0
        %4117 = vmatprep.subr.mxu0 0.0
        %4118 = vmatpush1.xpose.msra.mxu0 0.0
        %4119 = vmatprep.subr.mxu0 0.0
        %4120 = vmatpush1.xpose.msra.mxu0 0.0
        %4121 = vmatprep.subr.mxu0 0.0
        %4122 = vmatpush1.xpose.msra.mxu0 0.0
        %4123 = vmatprep.subr.mxu0 0.0
        %4124 = vmatpush1.xpose.msra.mxu0 0.0
        %4125 = vmatprep.subr.mxu0 0.0
        %4126 = vmatpush1.xpose.msra.mxu0 0.0
        %4127 = vmatprep.subr.mxu0 0.0
        %4128 = vmatpush1.xpose.msra.mxu0 0.0
        %4129 = vmatprep.subr.mxu0 0.0
        %4130 = vmatpush1.xpose.msra.mxu0 0.0
        %4131 = vmatprep.subr.mxu0 0.0
        %4132 = vmatpush1.xpose.msra.mxu0 0.0
        %4133 = vmatprep.subr.mxu0 0.0
        %4134 = vmatpush1.xpose.msra.mxu0 0.0
        %4135 = vmatprep.subr.mxu0 0.0
        %4136 = vmatpush1.xpose.msra.mxu0 0.0
        %4137 = vmatprep.subr.mxu0 0.0
        %4138 = vmatpush1.xpose.msra.mxu0 0.0
        %4139 = vmatprep.subr.mxu0 0.0
        %4140 = vmatpush1.xpose.msra.mxu0 0.0
        %4141 = vmatprep.subr.mxu0 0.0
        %4142 = vmatpush1.xpose.msra.mxu0 0.0
        %4143 = vmatprep.mubr.f32.mxu0 0.0
        %4144 = vmatmul.mubr.f32.gmra.mrb[0].mxu0 %v4073
        %v4145 = vpop.f32.mrb[0].mxu0
        %v4146 = vadd.f32 0.0, %v4145
        %v4147 = vpop.f32.mrb[0].mxu0
        %4148 = vdwg.mxu0
        %v4149 = vmul.f32 %v4146, 0.35355338
        %v4150 = vsel %vm3971, %v4149, -1e+10
        %v4151 = vsel %vm3147, %v4150, -inf
        %4152 = vmax.xlane.f32.xlu0 %v4151
        %v4153 = vpop.xlane.xlu0 %4152
        %v4154 = vsub.f32 %v4150, %v4153
        %v4155 = vmul.f32 %v4154, 1.442695
        %v4156 = vpow.pop %v4155
        %v4157 = vsel %vm3147, %v4156, 0.0
        %4158 = vadd.xlane.f32.xlu0 %v4157
        %v4159 = vpop.xlane.xlu0 %4158
        %v4160 = vrcp.pop %v4159
        %v4161 = vmul.f32 %v4156, %v4160
        %s4162 = scalar_lea.vmem [#allocation19], 40
        %4163 = vst.msk [vmem:[%s4162] sm:$0xff] %vm3147, %v4161
        %4164 = vrot.lane.b32.xlu0 %v3875, 88
        %v4165 = vpop.permute.xlu0 %4164
        %4166 = vrot.lane.b32.xlu0 %v3880, 88
        %v4167 = vpop.permute.xlu0 %4166
        %v4170 = vsel %vm3147, %v4161, 0
        %v4172 = vsel %vm3168, %v4167, 0
        %4174 = vmatprep.subr.mxu0 0.0
        %4175 = vmatpush1.msra.mxu0 %v4165
        %4176 = vmatprep.subr.mxu0 0.0
        %4177 = vmatpush1.msra.mxu0 %v4172
        %4178 = vmatprep.subr.mxu0 0.0
        %4179 = vmatpush1.msra.mxu0 0.0
        %4180 = vmatprep.subr.mxu0 0.0
        %4181 = vmatpush1.msra.mxu0 0.0
        %4182 = vmatprep.subr.mxu0 0.0
        %4183 = vmatpush1.msra.mxu0 0.0
        %4184 = vmatprep.subr.mxu0 0.0
        %4185 = vmatpush1.msra.mxu0 0.0
        %4186 = vmatprep.subr.mxu0 0.0
        %4187 = vmatpush1.msra.mxu0 0.0
        %4188 = vmatprep.subr.mxu0 0.0
        %4189 = vmatpush1.msra.mxu0 0.0
        %4190 = vmatprep.subr.mxu0 0.0
        %4191 = vmatpush1.msra.mxu0 0.0
        %4192 = vmatprep.subr.mxu0 0.0
        %4193 = vmatpush1.msra.mxu0 0.0
        %4194 = vmatprep.subr.mxu0 0.0
        %4195 = vmatpush1.msra.mxu0 0.0
        %4196 = vmatprep.subr.mxu0 0.0
        %4197 = vmatpush1.msra.mxu0 0.0
        %4198 = vmatprep.subr.mxu0 0.0
        %4199 = vmatpush1.msra.mxu0 0.0
        %4200 = vmatprep.subr.mxu0 0.0
        %4201 = vmatpush1.msra.mxu0 0.0
        %4202 = vmatprep.subr.mxu0 0.0
        %4203 = vmatpush1.msra.mxu0 0.0
        %4204 = vmatprep.subr.mxu0 0.0
        %4205 = vmatpush1.msra.mxu0 0.0
        %4206 = vmatprep.subr.mxu0 0.0
        %4207 = vmatpush1.msra.mxu0 0.0
        %4208 = vmatprep.subr.mxu0 0.0
        %4209 = vmatpush1.msra.mxu0 0.0
        %4210 = vmatprep.subr.mxu0 0.0
        %4211 = vmatpush1.msra.mxu0 0.0
        %4212 = vmatprep.subr.mxu0 0.0
        %4213 = vmatpush1.msra.mxu0 0.0
        %4214 = vmatprep.subr.mxu0 0.0
        %4215 = vmatpush1.msra.mxu0 0.0
        %4216 = vmatprep.subr.mxu0 0.0
        %4217 = vmatpush1.msra.mxu0 0.0
        %4218 = vmatprep.subr.mxu0 0.0
        %4219 = vmatpush1.msra.mxu0 0.0
        %4220 = vmatprep.subr.mxu0 0.0
        %4221 = vmatpush1.msra.mxu0 0.0
        %4222 = vmatprep.subr.mxu0 0.0
        %4223 = vmatpush1.msra.mxu0 0.0
        %4224 = vmatprep.subr.mxu0 0.0
        %4225 = vmatpush1.msra.mxu0 0.0
        %4226 = vmatprep.subr.mxu0 0.0
        %4227 = vmatpush1.msra.mxu0 0.0
        %4228 = vmatprep.subr.mxu0 0.0
        %4229 = vmatpush1.msra.mxu0 0.0
        %4230 = vmatprep.subr.mxu0 0.0
        %4231 = vmatpush1.msra.mxu0 0.0
        %4232 = vmatprep.subr.mxu0 0.0
        %4233 = vmatpush1.msra.mxu0 0.0
        %4234 = vmatprep.subr.mxu0 0.0
        %4235 = vmatpush1.msra.mxu0 0.0
        %4236 = vmatprep.subr.mxu0 0.0
        %4237 = vmatpush1.msra.mxu0 0.0
        %4238 = vmatprep.mubr.f32.mxu0 0.0
        %4239 = vmatmul.mubr.f32.gmra.mrb[0].mxu0 %v4170
        %v4240 = vpop.f32.mrb[0].mxu0
        %v4241 = vadd.f32 0.0, %v4240
        %v4242 = vpop.f32.mrb[0].mxu0
        %4243 = vdwg.mxu0
        %4245 = vrot.lane.b32.xlu0 %v4241, 8
        %v4246 = vpop.permute.xlu0 %4245
        %4248 = vst.msk [vmem:[#allocation3 + $0x8] sm:$0xff] %vm1697, %v4246
        %4249 = vrot.lane.b32.xlu0 %v2961, 112
        %v4250 = vpop.permute.xlu0 %4249
        %4251 = vrot.lane.b32.xlu0 %v3875, 112
        %v4252 = vpop.permute.xlu0 %4251
        %4253 = vrot.lane.b32.xlu0 %v3880, 112
        %v4254 = vpop.permute.xlu0 %4253
        %v4255 = vsel %vm1360, %v4250, 0
        %v4257 = vsel %vm1360, %v4252, 0
        %v4259 = vsel %vm1360, %v4254, 0
        %4261 = vmatprep.subr.mxu0 0.0
        %4262 = vmatpush1.xpose.msra.mxu0 %v4257
        %4263 = vmatprep.subr.mxu0 0.0
        %4264 = vmatpush1.xpose.msra.mxu0 %v4259
        %4265 = vmatprep.subr.mxu0 0.0
        %4266 = vmatpush1.xpose.msra.mxu0 0.0
        %4267 = vmatprep.subr.mxu0 0.0
        %4268 = vmatpush1.xpose.msra.mxu0 0.0
        %4269 = vmatprep.subr.mxu0 0.0
        %4270 = vmatpush1.xpose.msra.mxu0 0.0
        %4271 = vmatprep.subr.mxu0 0.0
        %4272 = vmatpush1.xpose.msra.mxu0 0.0
        %4273 = vmatprep.subr.mxu0 0.0
        %4274 = vmatpush1.xpose.msra.mxu0 0.0
        %4275 = vmatprep.subr.mxu0 0.0
        %4276 = vmatpush1.xpose.msra.mxu0 0.0
        %4277 = vmatprep.subr.mxu0 0.0
        %4278 = vmatpush1.xpose.msra.mxu0 0.0
        %4279 = vmatprep.subr.mxu0 0.0
        %4280 = vmatpush1.xpose.msra.mxu0 0.0
        %4281 = vmatprep.subr.mxu0 0.0
        %4282 = vmatpush1.xpose.msra.mxu0 0.0
        %4283 = vmatprep.subr.mxu0 0.0
        %4284 = vmatpush1.xpose.msra.mxu0 0.0
        %4285 = vmatprep.subr.mxu0 0.0
        %4286 = vmatpush1.xpose.msra.mxu0 0.0
        %4287 = vmatprep.subr.mxu0 0.0
        %4288 = vmatpush1.xpose.msra.mxu0 0.0
        %4289 = vmatprep.subr.mxu0 0.0
        %4290 = vmatpush1.xpose.msra.mxu0 0.0
        %4291 = vmatprep.subr.mxu0 0.0
        %4292 = vmatpush1.xpose.msra.mxu0 0.0
        %4293 = vmatprep.subr.mxu0 0.0
        %4294 = vmatpush1.xpose.msra.mxu0 0.0
        %4295 = vmatprep.subr.mxu0 0.0
        %4296 = vmatpush1.xpose.msra.mxu0 0.0
        %4297 = vmatprep.subr.mxu0 0.0
        %4298 = vmatpush1.xpose.msra.mxu0 0.0
        %4299 = vmatprep.subr.mxu0 0.0
        %4300 = vmatpush1.xpose.msra.mxu0 0.0
        %4301 = vmatprep.subr.mxu0 0.0
        %4302 = vmatpush1.xpose.msra.mxu0 0.0
        %4303 = vmatprep.subr.mxu0 0.0
        %4304 = vmatpush1.xpose.msra.mxu0 0.0
        %4305 = vmatprep.subr.mxu0 0.0
        %4306 = vmatpush1.xpose.msra.mxu0 0.0
        %4307 = vmatprep.subr.mxu0 0.0
        %4308 = vmatpush1.xpose.msra.mxu0 0.0
        %4309 = vmatprep.subr.mxu0 0.0
        %4310 = vmatpush1.xpose.msra.mxu0 0.0
        %4311 = vmatprep.subr.mxu0 0.0
        %4312 = vmatpush1.xpose.msra.mxu0 0.0
        %4313 = vmatprep.subr.mxu0 0.0
        %4314 = vmatpush1.xpose.msra.mxu0 0.0
        %4315 = vmatprep.subr.mxu0 0.0
        %4316 = vmatpush1.xpose.msra.mxu0 0.0
        %4317 = vmatprep.subr.mxu0 0.0
        %4318 = vmatpush1.xpose.msra.mxu0 0.0
        %4319 = vmatprep.subr.mxu0 0.0
        %4320 = vmatpush1.xpose.msra.mxu0 0.0
        %4321 = vmatprep.subr.mxu0 0.0
        %4322 = vmatpush1.xpose.msra.mxu0 0.0
        %4323 = vmatprep.subr.mxu0 0.0
        %4324 = vmatpush1.xpose.msra.mxu0 0.0
        %4325 = vmatprep.mubr.f32.mxu0 0.0
        %4326 = vmatmul.mubr.f32.gmra.mrb[0].mxu0 %v4255
        %v4327 = vpop.f32.mrb[0].mxu0
        %v4328 = vadd.f32 0.0, %v4327
        %v4329 = vpop.f32.mrb[0].mxu0
        %4330 = vdwg.mxu0
        %v4331 = vmul.f32 %v4328, 0.35355338
        %v4332 = vsel %vm3971, %v4331, -1e+10
        %v4333 = vsel %vm3147, %v4332, -inf
        %4334 = vmax.xlane.f32.xlu0 %v4333
        %v4335 = vpop.xlane.xlu0 %4334
        %v4336 = vsub.f32 %v4332, %v4335
        %v4337 = vmul.f32 %v4336, 1.442695
        %v4338 = vpow.pop %v4337
        %v4339 = vsel %vm3147, %v4338, 0.0
        %4340 = vadd.xlane.f32.xlu0 %v4339
        %v4341 = vpop.xlane.xlu0 %4340
        %v4342 = vrcp.pop %v4341
        %v4343 = vmul.f32 %v4338, %v4342
        %s4344 = scalar_lea.vmem [#allocation19], 48
        %4345 = vst.msk [vmem:[%s4344] sm:$0xff] %vm3147, %v4343
        %4346 = vrot.lane.b32.xlu0 %v3875, 80
        %v4347 = vpop.permute.xlu0 %4346
        %4348 = vrot.lane.b32.xlu0 %v3880, 80
        %v4349 = vpop.permute.xlu0 %4348
        %v4352 = vsel %vm3147, %v4343, 0
        %v4354 = vsel %vm3168, %v4349, 0
        %4356 = vmatprep.subr.mxu0 0.0
        %4357 = vmatpush1.msra.mxu0 %v4347
        %4358 = vmatprep.subr.mxu0 0.0
        %4359 = vmatpush1.msra.mxu0 %v4354
        %4360 = vmatprep.subr.mxu0 0.0
        %4361 = vmatpush1.msra.mxu0 0.0
        %4362 = vmatprep.subr.mxu0 0.0
        %4363 = vmatpush1.msra.mxu0 0.0
        %4364 = vmatprep.subr.mxu0 0.0
        %4365 = vmatpush1.msra.mxu0 0.0
        %4366 = vmatprep.subr.mxu0 0.0
        %4367 = vmatpush1.msra.mxu0 0.0
        %4368 = vmatprep.subr.mxu0 0.0
        %4369 = vmatpush1.msra.mxu0 0.0
        %4370 = vmatprep.subr.mxu0 0.0
        %4371 = vmatpush1.msra.mxu0 0.0
        %4372 = vmatprep.subr.mxu0 0.0
        %4373 = vmatpush1.msra.mxu0 0.0
        %4374 = vmatprep.subr.mxu0 0.0
        %4375 = vmatpush1.msra.mxu0 0.0
        %4376 = vmatprep.subr.mxu0 0.0
        %4377 = vmatpush1.msra.mxu0 0.0
        %4378 = vmatprep.subr.mxu0 0.0
        %4379 = vmatpush1.msra.mxu0 0.0
        %4380 = vmatprep.subr.mxu0 0.0
        %4381 = vmatpush1.msra.mxu0 0.0
        %4382 = vmatprep.subr.mxu0 0.0
        %4383 = vmatpush1.msra.mxu0 0.0
        %4384 = vmatprep.subr.mxu0 0.0
        %4385 = vmatpush1.msra.mxu0 0.0
        %4386 = vmatprep.subr.mxu0 0.0
        %4387 = vmatpush1.msra.mxu0 0.0
        %4388 = vmatprep.subr.mxu0 0.0
        %4389 = vmatpush1.msra.mxu0 0.0
        %4390 = vmatprep.subr.mxu0 0.0
        %4391 = vmatpush1.msra.mxu0 0.0
        %4392 = vmatprep.subr.mxu0 0.0
        %4393 = vmatpush1.msra.mxu0 0.0
        %4394 = vmatprep.subr.mxu0 0.0
        %4395 = vmatpush1.msra.mxu0 0.0
        %4396 = vmatprep.subr.mxu0 0.0
        %4397 = vmatpush1.msra.mxu0 0.0
        %4398 = vmatprep.subr.mxu0 0.0
        %4399 = vmatpush1.msra.mxu0 0.0
        %4400 = vmatprep.subr.mxu0 0.0
        %4401 = vmatpush1.msra.mxu0 0.0
        %4402 = vmatprep.subr.mxu0 0.0
        %4403 = vmatpush1.msra.mxu0 0.0
        %4404 = vmatprep.subr.mxu0 0.0
        %4405 = vmatpush1.msra.mxu0 0.0
        %4406 = vmatprep.subr.mxu0 0.0
        %4407 = vmatpush1.msra.mxu0 0.0
        %4408 = vmatprep.subr.mxu0 0.0
        %4409 = vmatpush1.msra.mxu0 0.0
        %4410 = vmatprep.subr.mxu0 0.0
        %4411 = vmatpush1.msra.mxu0 0.0
        %4412 = vmatprep.subr.mxu0 0.0
        %4413 = vmatpush1.msra.mxu0 0.0
        %4414 = vmatprep.subr.mxu0 0.0
        %4415 = vmatpush1.msra.mxu0 0.0
        %4416 = vmatprep.subr.mxu0 0.0
        %4417 = vmatpush1.msra.mxu0 0.0
        %4418 = vmatprep.subr.mxu0 0.0
        %4419 = vmatpush1.msra.mxu0 0.0
        %4420 = vmatprep.mubr.f32.mxu0 0.0
        %4421 = vmatmul.mubr.f32.gmra.mrb[0].mxu0 %v4352
        %v4422 = vpop.f32.mrb[0].mxu0
        %v4423 = vadd.f32 0.0, %v4422
        %v4424 = vpop.f32.mrb[0].mxu0
        %4425 = vdwg.mxu0
        %4427 = vrot.lane.b32.xlu0 %v4423, 16
        %v4428 = vpop.permute.xlu0 %4427
        %4430 = vst.msk [vmem:[#allocation3 + $0x8] sm:$0xff] %vm1870, %v4428
        %4431 = vrot.lane.b32.xlu0 %v2961, 104
        %v4432 = vpop.permute.xlu0 %4431
        %4433 = vrot.lane.b32.xlu0 %v3875, 104
        %v4434 = vpop.permute.xlu0 %4433
        %4435 = vrot.lane.b32.xlu0 %v3880, 104
        %v4436 = vpop.permute.xlu0 %4435
        %v4437 = vsel %vm1360, %v4432, 0
        %v4439 = vsel %vm1360, %v4434, 0
        %v4441 = vsel %vm1360, %v4436, 0
        %4443 = vmatprep.subr.mxu0 0.0
        %4444 = vmatpush1.xpose.msra.mxu0 %v4439
        %4445 = vmatprep.subr.mxu0 0.0
        %4446 = vmatpush1.xpose.msra.mxu0 %v4441
        %4447 = vmatprep.subr.mxu0 0.0
        %4448 = vmatpush1.xpose.msra.mxu0 0.0
        %4449 = vmatprep.subr.mxu0 0.0
        %4450 = vmatpush1.xpose.msra.mxu0 0.0
        %4451 = vmatprep.subr.mxu0 0.0
        %4452 = vmatpush1.xpose.msra.mxu0 0.0
        %4453 = vmatprep.subr.mxu0 0.0
        %4454 = vmatpush1.xpose.msra.mxu0 0.0
        %4455 = vmatprep.subr.mxu0 0.0
        %4456 = vmatpush1.xpose.msra.mxu0 0.0
        %4457 = vmatprep.subr.mxu0 0.0
        %4458 = vmatpush1.xpose.msra.mxu0 0.0
        %4459 = vmatprep.subr.mxu0 0.0
        %4460 = vmatpush1.xpose.msra.mxu0 0.0
        %4461 = vmatprep.subr.mxu0 0.0
        %4462 = vmatpush1.xpose.msra.mxu0 0.0
        %4463 = vmatprep.subr.mxu0 0.0
        %4464 = vmatpush1.xpose.msra.mxu0 0.0
        %4465 = vmatprep.subr.mxu0 0.0
        %4466 = vmatpush1.xpose.msra.mxu0 0.0
        %4467 = vmatprep.subr.mxu0 0.0
        %4468 = vmatpush1.xpose.msra.mxu0 0.0
        %4469 = vmatprep.subr.mxu0 0.0
        %4470 = vmatpush1.xpose.msra.mxu0 0.0
        %4471 = vmatprep.subr.mxu0 0.0
        %4472 = vmatpush1.xpose.msra.mxu0 0.0
        %4473 = vmatprep.subr.mxu0 0.0
        %4474 = vmatpush1.xpose.msra.mxu0 0.0
        %4475 = vmatprep.subr.mxu0 0.0
        %4476 = vmatpush1.xpose.msra.mxu0 0.0
        %4477 = vmatprep.subr.mxu0 0.0
        %4478 = vmatpush1.xpose.msra.mxu0 0.0
        %4479 = vmatprep.subr.mxu0 0.0
        %4480 = vmatpush1.xpose.msra.mxu0 0.0
        %4481 = vmatprep.subr.mxu0 0.0
        %4482 = vmatpush1.xpose.msra.mxu0 0.0
        %4483 = vmatprep.subr.mxu0 0.0
        %4484 = vmatpush1.xpose.msra.mxu0 0.0
        %4485 = vmatprep.subr.mxu0 0.0
        %4486 = vmatpush1.xpose.msra.mxu0 0.0
        %4487 = vmatprep.subr.mxu0 0.0
        %4488 = vmatpush1.xpose.msra.mxu0 0.0
        %4489 = vmatprep.subr.mxu0 0.0
        %4490 = vmatpush1.xpose.msra.mxu0 0.0
        %4491 = vmatprep.subr.mxu0 0.0
        %4492 = vmatpush1.xpose.msra.mxu0 0.0
        %4493 = vmatprep.subr.mxu0 0.0
        %4494 = vmatpush1.xpose.msra.mxu0 0.0
        %4495 = vmatprep.subr.mxu0 0.0
        %4496 = vmatpush1.xpose.msra.mxu0 0.0
        %4497 = vmatprep.subr.mxu0 0.0
        %4498 = vmatpush1.xpose.msra.mxu0 0.0
        %4499 = vmatprep.subr.mxu0 0.0
        %4500 = vmatpush1.xpose.msra.mxu0 0.0
        %4501 = vmatprep.subr.mxu0 0.0
        %4502 = vmatpush1.xpose.msra.mxu0 0.0
        %4503 = vmatprep.subr.mxu0 0.0
        %4504 = vmatpush1.xpose.msra.mxu0 0.0
        %4505 = vmatprep.subr.mxu0 0.0
        %4506 = vmatpush1.xpose.msra.mxu0 0.0
        %4507 = vmatprep.mubr.f32.mxu0 0.0
        %4508 = vmatmul.mubr.f32.gmra.mrb[0].mxu0 %v4437
        %v4509 = vpop.f32.mrb[0].mxu0
        %v4510 = vadd.f32 0.0, %v4509
        %v4511 = vpop.f32.mrb[0].mxu0
        %4512 = vdwg.mxu0
        %v4513 = vmul.f32 %v4510, 0.35355338
        %v4514 = vsel %vm3971, %v4513, -1e+10
        %v4515 = vsel %vm3147, %v4514, -inf
        %4516 = vmax.xlane.f32.xlu0 %v4515
        %v4517 = vpop.xlane.xlu0 %4516
        %v4518 = vsub.f32 %v4514, %v4517
        %v4519 = vmul.f32 %v4518, 1.442695
        %v4520 = vpow.pop %v4519
        %v4521 = vsel %vm3147, %v4520, 0.0
        %4522 = vadd.xlane.f32.xlu0 %v4521
        %v4523 = vpop.xlane.xlu0 %4522
        %v4524 = vrcp.pop %v4523
        %v4525 = vmul.f32 %v4520, %v4524
        %s4526 = scalar_lea.vmem [#allocation19], 56
        %4527 = vst.msk [vmem:[%s4526] sm:$0xff] %vm3147, %v4525
        %4528 = vrot.lane.b32.xlu0 %v3875, 72
        %v4529 = vpop.permute.xlu0 %4528
        %4530 = vrot.lane.b32.xlu0 %v3880, 72
        %v4531 = vpop.permute.xlu0 %4530
        %v4534 = vsel %vm3147, %v4525, 0
        %v4536 = vsel %vm3168, %v4531, 0
        %4538 = vmatprep.subr.mxu0 0.0
        %4539 = vmatpush1.msra.mxu0 %v4529
        %4540 = vmatprep.subr.mxu0 0.0
        %4541 = vmatpush1.msra.mxu0 %v4536
        %4542 = vmatprep.subr.mxu0 0.0
        %4543 = vmatpush1.msra.mxu0 0.0
        %4544 = vmatprep.subr.mxu0 0.0
        %4545 = vmatpush1.msra.mxu0 0.0
        %4546 = vmatprep.subr.mxu0 0.0
        %4547 = vmatpush1.msra.mxu0 0.0
        %4548 = vmatprep.subr.mxu0 0.0
        %4549 = vmatpush1.msra.mxu0 0.0
        %4550 = vmatprep.subr.mxu0 0.0
        %4551 = vmatpush1.msra.mxu0 0.0
        %4552 = vmatprep.subr.mxu0 0.0
        %4553 = vmatpush1.msra.mxu0 0.0
        %4554 = vmatprep.subr.mxu0 0.0
        %4555 = vmatpush1.msra.mxu0 0.0
        %4556 = vmatprep.subr.mxu0 0.0
        %4557 = vmatpush1.msra.mxu0 0.0
        %4558 = vmatprep.subr.mxu0 0.0
        %4559 = vmatpush1.msra.mxu0 0.0
        %4560 = vmatprep.subr.mxu0 0.0
        %4561 = vmatpush1.msra.mxu0 0.0
        %4562 = vmatprep.subr.mxu0 0.0
        %4563 = vmatpush1.msra.mxu0 0.0
        %4564 = vmatprep.subr.mxu0 0.0
        %4565 = vmatpush1.msra.mxu0 0.0
        %4566 = vmatprep.subr.mxu0 0.0
        %4567 = vmatpush1.msra.mxu0 0.0
        %4568 = vmatprep.subr.mxu0 0.0
        %4569 = vmatpush1.msra.mxu0 0.0
        %4570 = vmatprep.subr.mxu0 0.0
        %4571 = vmatpush1.msra.mxu0 0.0
        %4572 = vmatprep.subr.mxu0 0.0
        %4573 = vmatpush1.msra.mxu0 0.0
        %4574 = vmatprep.subr.mxu0 0.0
        %4575 = vmatpush1.msra.mxu0 0.0
        %4576 = vmatprep.subr.mxu0 0.0
        %4577 = vmatpush1.msra.mxu0 0.0
        %4578 = vmatprep.subr.mxu0 0.0
        %4579 = vmatpush1.msra.mxu0 0.0
        %4580 = vmatprep.subr.mxu0 0.0
        %4581 = vmatpush1.msra.mxu0 0.0
        %4582 = vmatprep.subr.mxu0 0.0
        %4583 = vmatpush1.msra.mxu0 0.0
        %4584 = vmatprep.subr.mxu0 0.0
        %4585 = vmatpush1.msra.mxu0 0.0
        %4586 = vmatprep.subr.mxu0 0.0
        %4587 = vmatpush1.msra.mxu0 0.0
        %4588 = vmatprep.subr.mxu0 0.0
        %4589 = vmatpush1.msra.mxu0 0.0
        %4590 = vmatprep.subr.mxu0 0.0
        %4591 = vmatpush1.msra.mxu0 0.0
        %4592 = vmatprep.subr.mxu0 0.0
        %4593 = vmatpush1.msra.mxu0 0.0
        %4594 = vmatprep.subr.mxu0 0.0
        %4595 = vmatpush1.msra.mxu0 0.0
        %4596 = vmatprep.subr.mxu0 0.0
        %4597 = vmatpush1.msra.mxu0 0.0
        %4598 = vmatprep.subr.mxu0 0.0
        %4599 = vmatpush1.msra.mxu0 0.0
        %4600 = vmatprep.subr.mxu0 0.0
        %4601 = vmatpush1.msra.mxu0 0.0
        %4602 = vmatprep.mubr.f32.mxu0 0.0
        %4603 = vmatmul.mubr.f32.gmra.mrb[0].mxu0 %v4534
        %v4604 = vpop.f32.mrb[0].mxu0
        %v4605 = vadd.f32 0.0, %v4604
        %v4606 = vpop.f32.mrb[0].mxu0
        %4607 = vdwg.mxu0
        %4609 = vrot.lane.b32.xlu0 %v4605, 24
        %v4610 = vpop.permute.xlu0 %4609
        %4612 = vst.msk [vmem:[#allocation3 + $0x8] sm:$0xff] %vm2043, %v4610
        %v4613 = vld [vmem:[#allocation3] sm:$0xff]
        %v4614 = vld [vmem:[#allocation3 + $0x8] sm:$0xff]
        %v4615 = vld [vmem:[%s1025] sm:$0xff]
        %v4616 = vld [vmem:[%s1025 + $0x8] sm:$0xff]
        %v4617 = vld [vmem:[%s1025 + $0x10] sm:$0xff]
        %v4618 = vld [vmem:[%s1025 + $0x18] sm:$0xff]
        %v4619 = vld [vmem:[%s1033] sm:$0x1]
        %v4621 = vlaneseq
        %v4622 = vshrl.u32 %v4621, 7
        %v4623 = vsub.s32 0, %v4622
        %v4624 = vrot.slane %v4619, %v4623
        %v4627 = vsel %vm1274, %v4613, 0
        %v4630 = vsel %vm1274, %v4614, 0
        %4632 = vmatprep.subr.mxu0 0.0
        %4633 = vmatpush1.msra.mxu0 %v4615
        %4634 = vmatprep.subr.mxu0 0.0
        %4635 = vmatpush1.msra.mxu0 %v4616
        %4636 = vmatprep.subr.mxu0 0.0
        %4637 = vmatpush1.msra.mxu0 %v4617
        %4638 = vmatprep.subr.mxu0 0.0
        %4639 = vmatpush1.msra.mxu0 %v4618
        %4640 = vmatprep.subr.mxu0 0.0
        %4641 = vmatpush1.msra.mxu0 0.0
        %4642 = vmatprep.subr.mxu0 0.0
        %4643 = vmatpush1.msra.mxu0 0.0
        %4644 = vmatprep.subr.mxu0 0.0
        %4645 = vmatpush1.msra.mxu0 0.0
        %4646 = vmatprep.subr.mxu0 0.0
        %4647 = vmatpush1.msra.mxu0 0.0
        %4648 = vmatprep.subr.mxu0 0.0
        %4649 = vmatpush1.msra.mxu0 0.0
        %4650 = vmatprep.subr.mxu0 0.0
        %4651 = vmatpush1.msra.mxu0 0.0
        %4652 = vmatprep.subr.mxu0 0.0
        %4653 = vmatpush1.msra.mxu0 0.0
        %4654 = vmatprep.subr.mxu0 0.0
        %4655 = vmatpush1.msra.mxu0 0.0
        %4656 = vmatprep.subr.mxu0 0.0
        %4657 = vmatpush1.msra.mxu0 0.0
        %4658 = vmatprep.subr.mxu0 0.0
        %4659 = vmatpush1.msra.mxu0 0.0
        %4660 = vmatprep.subr.mxu0 0.0
        %4661 = vmatpush1.msra.mxu0 0.0
        %4662 = vmatprep.subr.mxu0 0.0
        %4663 = vmatpush1.msra.mxu0 0.0
        %4664 = vmatprep.subr.mxu0 0.0
        %4665 = vmatpush1.msra.mxu0 0.0
        %4666 = vmatprep.subr.mxu0 0.0
        %4667 = vmatpush1.msra.mxu0 0.0
        %4668 = vmatprep.subr.mxu0 0.0
        %4669 = vmatpush1.msra.mxu0 0.0
        %4670 = vmatprep.subr.mxu0 0.0
        %4671 = vmatpush1.msra.mxu0 0.0
        %4672 = vmatprep.subr.mxu0 0.0
        %4673 = vmatpush1.msra.mxu0 0.0
        %4674 = vmatprep.subr.mxu0 0.0
        %4675 = vmatpush1.msra.mxu0 0.0
        %4676 = vmatprep.subr.mxu0 0.0
        %4677 = vmatpush1.msra.mxu0 0.0
        %4678 = vmatprep.subr.mxu0 0.0
        %4679 = vmatpush1.msra.mxu0 0.0
        %4680 = vmatprep.subr.mxu0 0.0
        %4681 = vmatpush1.msra.mxu0 0.0
        %4682 = vmatprep.subr.mxu0 0.0
        %4683 = vmatpush1.msra.mxu0 0.0
        %4684 = vmatprep.subr.mxu0 0.0
        %4685 = vmatpush1.msra.mxu0 0.0
        %4686 = vmatprep.subr.mxu0 0.0
        %4687 = vmatpush1.msra.mxu0 0.0
        %4688 = vmatprep.subr.mxu0 0.0
        %4689 = vmatpush1.msra.mxu0 0.0
        %4690 = vmatprep.subr.mxu0 0.0
        %4691 = vmatpush1.msra.mxu0 0.0
        %4692 = vmatprep.subr.mxu0 0.0
        %4693 = vmatpush1.msra.mxu0 0.0
        %4694 = vmatprep.subr.mxu0 0.0
        %4695 = vmatpush1.msra.mxu0 0.0
        %4696 = vmatprep.mubr.f32.mxu0 0.0
        %4697 = vmatmul.mubr.f32.gmra.mrb[0].mxu0 %v4627
        %v4698 = vpop.f32.mrb[0].mxu0
        %v4699 = vadd.f32 %v4624, %v4698
        %v4700 = vpop.f32.mrb[0].mxu0
        %4701 = vmatprep.mubr.f32.mxu0 0.0
        %4702 = vmatmul.mubr.f32.gmra.mrb[0].mxu0 %v4630
        %v4703 = vpop.f32.mrb[0].mxu0
        %v4704 = vadd.f32 %v4624, %v4703
        %v4705 = vpop.f32.mrb[0].mxu0
        %4706 = vdwg.mxu0
        %v4707 = vadd.f32 %v2870, %v4699
        %v4708 = vadd.f32 %v2871, %v4704
        %v4709 = vld [vmem:[%s1041] sm:$0x1]
        %v4710 = vld [vmem:[%s1049] sm:$0x1]
        %v4711 = vsel %vm1274, %v4707, 0.0
        %4712 = vadd.xlane.f32.xlu0 %v4711
        %v4713 = vpop.xlane.xlu0 %4712
        %v4714 = vsel %vm1274, %v4708, 0.0
        %4715 = vadd.xlane.f32.xlu0 %v4714
        %v4716 = vpop.xlane.xlu0 %4715
        %v4717 = vmul.f32 %v4713, %v2835
        %v4718 = vmul.f32 %v4716, %v2835
        %v4719 = vsub.f32 %v4707, %v4717
        %v4720 = vsub.f32 %v4708, %v4718
        %v4721 = vmul.f32 %v4719, %v4719
        %v4722 = vmul.f32 %v4720, %v4720
        %v4723 = vsel %vm1274, %v4721, 0.0
        %4724 = vadd.xlane.f32.xlu0 %v4723
        %v4725 = vpop.xlane.xlu0 %4724
        %v4726 = vsel %vm1274, %v4722, 0.0
        %4727 = vadd.xlane.f32.xlu0 %v4726
        %v4728 = vpop.xlane.xlu0 %4727
        %v4729 = vmul.f32 %v4725, %v2835
        %v4730 = vmul.f32 %v4728, %v2835
        %v4731 = vadd.f32 %v4729, 1e-05
        %v4732 = vadd.f32 %v4730, 1e-05
        %v4733 = vrsqrt.pop %v4731
        %v4734 = vrsqrt.pop %v4732
        %v4735 = vmul.f32 %v4719, %v4733
        %v4736 = vmul.f32 %v4720, %v4734
        %v4738 = vlaneseq
        %v4739 = vshrl.u32 %v4738, 7
        %v4740 = vsub.s32 0, %v4739
        %v4741 = vrot.slane %v4709, %v4740
        %v4743 = vmul.f32 %v4735, %v4741
        %v4744 = vmul.f32 %v4736, %v4741
        %v4746 = vlaneseq
        %v4747 = vshrl.u32 %v4746, 7
        %v4748 = vsub.s32 0, %v4747
        %v4749 = vrot.slane %v4710, %v4748
        %v4751 = vadd.f32 %v4743, %v4749
        %v4752 = vadd.f32 %v4744, %v4749
        %v4753 = vld [vmem:[%s1058] sm:$0xff]
        %v4754 = vld [vmem:[%s1058 + $0x8] sm:$0xff]
        %v4755 = vld [vmem:[%s1058 + $0x10] sm:$0xff]
        %v4756 = vld [vmem:[%s1058 + $0x18] sm:$0xff]
        %v4757 = vld [vmem:[%s1066] sm:$0x1]
        %v4759 = vlaneseq
        %v4760 = vshrl.u32 %v4759, 7
        %v4761 = vsub.s32 0, %v4760
        %v4762 = vrot.slane %v4757, %v4761
        %v4765 = vsel %vm1274, %v4751, 0
        %v4768 = vsel %vm1274, %v4752, 0
        %4770 = vmatprep.subr.mxu0 0.0
        %4771 = vmatpush1.msra.mxu0 %v4753
        %4772 = vmatprep.subr.mxu0 0.0
        %4773 = vmatpush1.msra.mxu0 %v4754
        %4774 = vmatprep.subr.mxu0 0.0
        %4775 = vmatpush1.msra.mxu0 %v4755
        %4776 = vmatprep.subr.mxu0 0.0
        %4777 = vmatpush1.msra.mxu0 %v4756
        %4778 = vmatprep.subr.mxu0 0.0
        %4779 = vmatpush1.msra.mxu0 0.0
        %4780 = vmatprep.subr.mxu0 0.0
        %4781 = vmatpush1.msra.mxu0 0.0
        %4782 = vmatprep.subr.mxu0 0.0
        %4783 = vmatpush1.msra.mxu0 0.0
        %4784 = vmatprep.subr.mxu0 0.0
        %4785 = vmatpush1.msra.mxu0 0.0
        %4786 = vmatprep.subr.mxu0 0.0
        %4787 = vmatpush1.msra.mxu0 0.0
        %4788 = vmatprep.subr.mxu0 0.0
        %4789 = vmatpush1.msra.mxu0 0.0
        %4790 = vmatprep.subr.mxu0 0.0
        %4791 = vmatpush1.msra.mxu0 0.0
        %4792 = vmatprep.subr.mxu0 0.0
        %4793 = vmatpush1.msra.mxu0 0.0
        %4794 = vmatprep.subr.mxu0 0.0
        %4795 = vmatpush1.msra.mxu0 0.0
        %4796 = vmatprep.subr.mxu0 0.0
        %4797 = vmatpush1.msra.mxu0 0.0
        %4798 = vmatprep.subr.mxu0 0.0
        %4799 = vmatpush1.msra.mxu0 0.0
        %4800 = vmatprep.subr.mxu0 0.0
        %4801 = vmatpush1.msra.mxu0 0.0
        %4802 = vmatprep.subr.mxu0 0.0
        %4803 = vmatpush1.msra.mxu0 0.0
        %4804 = vmatprep.subr.mxu0 0.0
        %4805 = vmatpush1.msra.mxu0 0.0
        %4806 = vmatprep.subr.mxu0 0.0
        %4807 = vmatpush1.msra.mxu0 0.0
        %4808 = vmatprep.subr.mxu0 0.0
        %4809 = vmatpush1.msra.mxu0 0.0
        %4810 = vmatprep.subr.mxu0 0.0
        %4811 = vmatpush1.msra.mxu0 0.0
        %4812 = vmatprep.subr.mxu0 0.0
        %4813 = vmatpush1.msra.mxu0 0.0
        %4814 = vmatprep.subr.mxu0 0.0
        %4815 = vmatpush1.msra.mxu0 0.0
        %4816 = vmatprep.subr.mxu0 0.0
        %4817 = vmatpush1.msra.mxu0 0.0
        %4818 = vmatprep.subr.mxu0 0.0
        %4819 = vmatpush1.msra.mxu0 0.0
        %4820 = vmatprep.subr.mxu0 0.0
        %4821 = vmatpush1.msra.mxu0 0.0
        %4822 = vmatprep.subr.mxu0 0.0
        %4823 = vmatpush1.msra.mxu0 0.0
        %4824 = vmatprep.subr.mxu0 0.0
        %4825 = vmatpush1.msra.mxu0 0.0
        %4826 = vmatprep.subr.mxu0 0.0
        %4827 = vmatpush1.msra.mxu0 0.0
        %4828 = vmatprep.subr.mxu0 0.0
        %4829 = vmatpush1.msra.mxu0 0.0
        %4830 = vmatprep.subr.mxu0 0.0
        %4831 = vmatpush1.msra.mxu0 0.0
        %4832 = vmatprep.subr.mxu0 0.0
        %4833 = vmatpush1.msra.mxu0 0.0
        %4834 = vmatprep.mubr.f32.mxu0 0.0
        %4835 = vmatmul.mubr.f32.gmra.mrb[0].mxu0 %v4765
        %v4836 = vpop.f32.mrb[0].mxu0
        %v4837 = vadd.f32 %v4762, %v4836
        %v4838 = vpop.f32.mrb[0].mxu0
        %4839 = vmatprep.mubr.f32.mxu0 0.0
        %4840 = vmatmul.mubr.f32.gmra.mrb[0].mxu0 %v4768
        %v4841 = vpop.f32.mrb[0].mxu0
        %v4842 = vadd.f32 %v4762, %v4841
        %v4843 = vpop.f32.mrb[0].mxu0
        %4844 = vdwg.mxu0
        %v4845 = vmax.f32 %v4837, 0.0
        %v4846 = vmax.f32 %v4842, 0.0
        %v4847 = vld [vmem:[%s1242] sm:$0xff]
        %v4848 = vld [vmem:[%s1242 + $0x8] sm:$0xff]
        %v4849 = vld [vmem:[%s1242 + $0x10] sm:$0xff]
        %v4850 = vld [vmem:[%s1242 + $0x18] sm:$0xff]
        %v4851 = vld [vmem:[%s1242 + $0x20] sm:$0xff]
        %v4852 = vld [vmem:[%s1242 + $0x28] sm:$0xff]
        %v4853 = vld [vmem:[%s1242 + $0x30] sm:$0xff]
        %v4854 = vld [vmem:[%s1242 + $0x38] sm:$0xff]
        %v4855 = vld [vmem:[%s1245] sm:$0x1]
        %v4857 = vlaneseq
        %v4858 = vshrl.u32 %v4857, 7
        %v4859 = vsub.s32 0, %v4858
        %v4860 = vrot.slane %v4855, %v4859
        %vm4862 = vcmask 523264
        %v4864 = vsel %vm4862, %v4845, 0
        %v4867 = vsel %vm4862, %v4846, 0
        %4869 = vmatprep.subr.mxu0 0.0
        %4870 = vmatpush1.msra.mxu0 %v4847
        %4871 = vmatprep.subr.mxu0 0.0
        %4872 = vmatpush1.msra.mxu0 %v4848
        %4873 = vmatprep.subr.mxu0 0.0
        %4874 = vmatpush1.msra.mxu0 %v4849
        %4875 = vmatprep.subr.mxu0 0.0
        %4876 = vmatpush1.msra.mxu0 %v4850
        %4877 = vmatprep.subr.mxu0 0.0
        %4878 = vmatpush1.msra.mxu0 %v4851
        %4879 = vmatprep.subr.mxu0 0.0
        %4880 = vmatpush1.msra.mxu0 %v4852
        %4881 = vmatprep.subr.mxu0 0.0
        %4882 = vmatpush1.msra.mxu0 %v4853
        %4883 = vmatprep.subr.mxu0 0.0
        %4884 = vmatpush1.msra.mxu0 %v4854
        %4885 = vmatprep.subr.mxu0 0.0
        %4886 = vmatpush1.msra.mxu0 0.0
        %4887 = vmatprep.subr.mxu0 0.0
        %4888 = vmatpush1.msra.mxu0 0.0
        %4889 = vmatprep.subr.mxu0 0.0
        %4890 = vmatpush1.msra.mxu0 0.0
        %4891 = vmatprep.subr.mxu0 0.0
        %4892 = vmatpush1.msra.mxu0 0.0
        %4893 = vmatprep.subr.mxu0 0.0
        %4894 = vmatpush1.msra.mxu0 0.0
        %4895 = vmatprep.subr.mxu0 0.0
        %4896 = vmatpush1.msra.mxu0 0.0
        %4897 = vmatprep.subr.mxu0 0.0
        %4898 = vmatpush1.msra.mxu0 0.0
        %4899 = vmatprep.subr.mxu0 0.0
        %4900 = vmatpush1.msra.mxu0 0.0
        %4901 = vmatprep.subr.mxu0 0.0
        %4902 = vmatpush1.msra.mxu0 0.0
        %4903 = vmatprep.subr.mxu0 0.0
        %4904 = vmatpush1.msra.mxu0 0.0
        %4905 = vmatprep.subr.mxu0 0.0
        %4906 = vmatpush1.msra.mxu0 0.0
        %4907 = vmatprep.subr.mxu0 0.0
        %4908 = vmatpush1.msra.mxu0 0.0
        %4909 = vmatprep.subr.mxu0 0.0
        %4910 = vmatpush1.msra.mxu0 0.0
        %4911 = vmatprep.subr.mxu0 0.0
        %4912 = vmatpush1.msra.mxu0 0.0
        %4913 = vmatprep.subr.mxu0 0.0
        %4914 = vmatpush1.msra.mxu0 0.0
        %4915 = vmatprep.subr.mxu0 0.0
        %4916 = vmatpush1.msra.mxu0 0.0
        %4917 = vmatprep.subr.mxu0 0.0
        %4918 = vmatpush1.msra.mxu0 0.0
        %4919 = vmatprep.subr.mxu0 0.0
        %4920 = vmatpush1.msra.mxu0 0.0
        %4921 = vmatprep.subr.mxu0 0.0
        %4922 = vmatpush1.msra.mxu0 0.0
        %4923 = vmatprep.subr.mxu0 0.0
        %4924 = vmatpush1.msra.mxu0 0.0
        %4925 = vmatprep.subr.mxu0 0.0
        %4926 = vmatpush1.msra.mxu0 0.0
        %4927 = vmatprep.subr.mxu0 0.0
        %4928 = vmatpush1.msra.mxu0 0.0
        %4929 = vmatprep.subr.mxu0 0.0
        %4930 = vmatpush1.msra.mxu0 0.0
        %4931 = vmatprep.subr.mxu0 0.0
        %4932 = vmatpush1.msra.mxu0 0.0
        %4933 = vmatprep.mubr.f32.mxu0 0.0
        %4934 = vmatmul.mubr.f32.gmra.mrb[0].mxu0 %v4864
        %v4935 = vpop.f32.mrb[0].mxu0
        %v4936 = vadd.f32 %v4860, %v4935
        %v4937 = vpop.f32.mrb[0].mxu0
        %4938 = vmatprep.mubr.f32.mxu0 0.0
        %4939 = vmatmul.mubr.f32.gmra.mrb[0].mxu0 %v4867
        %v4940 = vpop.f32.mrb[0].mxu0
        %v4941 = vadd.f32 %v4860, %v4940
        %v4942 = vpop.f32.mrb[0].mxu0
        %4943 = vdwg.mxu0
        %v4944 = vadd.f32 %v4751, %v4936
        %v4945 = vadd.f32 %v4752, %v4941
        %v4946 = vld [vmem:[%s1248] sm:$0x1]
        %v4947 = vld [vmem:[%s1251] sm:$0x1]
        %v4948 = vsel %vm1274, %v4944, 0.0
        %4949 = vadd.xlane.f32.xlu0 %v4948
        %v4950 = vpop.xlane.xlu0 %4949
        %v4951 = vsel %vm1274, %v4945, 0.0
        %4952 = vadd.xlane.f32.xlu0 %v4951
        %v4953 = vpop.xlane.xlu0 %4952
        %v4954 = vmul.f32 %v4950, %v2835
        %v4955 = vmul.f32 %v4953, %v2835
        %v4956 = vsub.f32 %v4944, %v4954
        %v4957 = vsub.f32 %v4945, %v4955
        %v4958 = vmul.f32 %v4956, %v4956
        %v4959 = vmul.f32 %v4957, %v4957
        %v4960 = vsel %vm1274, %v4958, 0.0
        %4961 = vadd.xlane.f32.xlu0 %v4960
        %v4962 = vpop.xlane.xlu0 %4961
        %v4963 = vsel %vm1274, %v4959, 0.0
        %4964 = vadd.xlane.f32.xlu0 %v4963
        %v4965 = vpop.xlane.xlu0 %4964
        %v4966 = vmul.f32 %v4962, %v2835
        %v4967 = vmul.f32 %v4965, %v2835
        %v4968 = vadd.f32 %v4966, 1e-05
        %v4969 = vadd.f32 %v4967, 1e-05
        %v4970 = vrsqrt.pop %v4968
        %v4971 = vrsqrt.pop %v4969
        %v4972 = vmul.f32 %v4956, %v4970
        %v4973 = vmul.f32 %v4957, %v4971
        %v4975 = vlaneseq
        %v4976 = vshrl.u32 %v4975, 7
        %v4977 = vsub.s32 0, %v4976
        %v4978 = vrot.slane %v4946, %v4977
        %v4980 = vmul.f32 %v4972, %v4978
        %v4981 = vmul.f32 %v4973, %v4978
        %v4983 = vlaneseq
        %v4984 = vshrl.u32 %v4983, 7
        %v4985 = vsub.s32 0, %v4984
        %v4986 = vrot.slane %v4947, %v4985
        %v4988 = vadd.f32 %v4980, %v4986
        %v4989 = vadd.f32 %v4981, %v4986
        %4990 = vst.msk [vmem:[#allocation2] sm:$0xff] %vm1274, %v4988
        %4991 = vst.msk [vmem:[#allocation2 + $0x8] sm:$0xff] %vm1274, %v4989
        %p4992 = scmp.eq.s32.totalorder %s54, 1
        // Predicated region
        $region161: #{tpu_custom_call.1} parent=123 // pred_check
          %p4993 = pneg %p4992
        $region162: #{tpu_custom_call.1} parent=123 // pred_check_branch
          %4995 = sbr.rel (%p4993) target = $region164
        $region163: #{tpu_custom_call.1} parent=123 // pred_region
          %v4996 = vld [vmem:[%s24] sm:$0xff]
          %v4997 = vld [vmem:[%s24 + $0x8] sm:$0xff]
          %v4998 = vld [vmem:[%s24 + $0x10] sm:$0xff]
          %v4999 = vld [vmem:[%s24 + $0x18] sm:$0xff]
          %v5000 = vld [vmem:[%s25] sm:$0x1]
          %v5002 = vlaneseq
          %v5003 = vshrl.u32 %v5002, 7
          %v5004 = vsub.s32 0, %v5003
          %v5005 = vrot.slane %v5000, %v5004
          %v5008 = vsel %vm1274, %v4988, 0
          %v5011 = vsel %vm1274, %v4989, 0
          %5013 = vmatprep.subr.mxu0 0.0
          %5014 = vmatpush1.msra.mxu0 %v4996
          %5015 = vmatprep.subr.mxu0 0.0
          %5016 = vmatpush1.msra.mxu0 %v4997
          %5017 = vmatprep.subr.mxu0 0.0
          %5018 = vmatpush1.msra.mxu0 %v4998
          %5019 = vmatprep.subr.mxu0 0.0
          %5020 = vmatpush1.msra.mxu0 %v4999
          %5021 = vmatprep.subr.mxu0 0.0
          %5022 = vmatpush1.msra.mxu0 0.0
          %5023 = vmatprep.subr.mxu0 0.0
          %5024 = vmatpush1.msra.mxu0 0.0
          %5025 = vmatprep.subr.mxu0 0.0
          %5026 = vmatpush1.msra.mxu0 0.0
          %5027 = vmatprep.subr.mxu0 0.0
          %5028 = vmatpush1.msra.mxu0 0.0
          %5029 = vmatprep.subr.mxu0 0.0
          %5030 = vmatpush1.msra.mxu0 0.0
          %5031 = vmatprep.subr.mxu0 0.0
          %5032 = vmatpush1.msra.mxu0 0.0
          %5033 = vmatprep.subr.mxu0 0.0
          %5034 = vmatpush1.msra.mxu0 0.0
          %5035 = vmatprep.subr.mxu0 0.0
          %5036 = vmatpush1.msra.mxu0 0.0
          %5037 = vmatprep.subr.mxu0 0.0
          %5038 = vmatpush1.msra.mxu0 0.0
          %5039 = vmatprep.subr.mxu0 0.0
          %5040 = vmatpush1.msra.mxu0 0.0
          %5041 = vmatprep.subr.mxu0 0.0
          %5042 = vmatpush1.msra.mxu0 0.0
          %5043 = vmatprep.subr.mxu0 0.0
          %5044 = vmatpush1.msra.mxu0 0.0
          %5045 = vmatprep.subr.mxu0 0.0
          %5046 = vmatpush1.msra.mxu0 0.0
          %5047 = vmatprep.subr.mxu0 0.0
          %5048 = vmatpush1.msra.mxu0 0.0
          %5049 = vmatprep.subr.mxu0 0.0
          %5050 = vmatpush1.msra.mxu0 0.0
          %5051 = vmatprep.subr.mxu0 0.0
          %5052 = vmatpush1.msra.mxu0 0.0
          %5053 = vmatprep.subr.mxu0 0.0
          %5054 = vmatpush1.msra.mxu0 0.0
          %5055 = vmatprep.subr.mxu0 0.0
          %5056 = vmatpush1.msra.mxu0 0.0
          %5057 = vmatprep.subr.mxu0 0.0
          %5058 = vmatpush1.msra.mxu0 0.0
          %5059 = vmatprep.subr.mxu0 0.0
          %5060 = vmatpush1.msra.mxu0 0.0
          %5061 = vmatprep.subr.mxu0 0.0
          %5062 = vmatpush1.msra.mxu0 0.0
          %5063 = vmatprep.subr.mxu0 0.0
          %5064 = vmatpush1.msra.mxu0 0.0
          %5065 = vmatprep.subr.mxu0 0.0
          %5066 = vmatpush1.msra.mxu0 0.0
          %5067 = vmatprep.subr.mxu0 0.0
          %5068 = vmatpush1.msra.mxu0 0.0
          %5069 = vmatprep.subr.mxu0 0.0
          %5070 = vmatpush1.msra.mxu0 0.0
          %5071 = vmatprep.subr.mxu0 0.0
          %5072 = vmatpush1.msra.mxu0 0.0
          %5073 = vmatprep.subr.mxu0 0.0
          %5074 = vmatpush1.msra.mxu0 0.0
          %5075 = vmatprep.subr.mxu0 0.0
          %5076 = vmatpush1.msra.mxu0 0.0
          %5077 = vmatprep.mubr.f32.mxu0 0.0
          %5078 = vmatmul.mubr.f32.gmra.mrb[0].mxu0 %v5008
          %v5079 = vpop.f32.mrb[0].mxu0
          %v5080 = vadd.f32 %v5005, %v5079
          %v5081 = vpop.f32.mrb[0].mxu0
          %5082 = vmatprep.mubr.f32.mxu0 0.0
          %5083 = vmatmul.mubr.f32.gmra.mrb[0].mxu0 %v5011
          %v5084 = vpop.f32.mrb[0].mxu0
          %v5085 = vadd.f32 %v5005, %v5084
          %v5086 = vpop.f32.mrb[0].mxu0
          %5087 = vdwg.mxu0
          %5088 = vst [vmem:[#allocation18] sm:$0xff] %v5080
          %5089 = vst [vmem:[#allocation18 + $0x8] sm:$0xff] %v5085
        $region164: #{tpu_custom_call.1} parent=123 // pred_fallthru
          _
        // Predicated region
        $region165: #{tpu_custom_call.1} parent=123 // pred_check
          %p5090 = pneg %p713
        $region166: #{tpu_custom_call.1} parent=123 // pred_check_branch
          %5092 = sbr.rel (%p5090) target = $region168
        $region167: #{tpu_custom_call.1} parent=123 // pred_region
          %s5094 = ssub.s32 256, 256
          %5095 = vsyncadd [#allocation6], %s5094
          %s5096 = sshll.u32 [#allocation18], 4
          %s5097 = int_to_ptr.vmem [resolvable:$true] %s5096
          %5102 = dma.vmem_to_hbm [thread:$0]  %s5097, 256, %s26, [#allocation6], 128, 128, 8
        $region168: #{tpu_custom_call.1} parent=123 // pred_fallthru
          _
        // Predicated region
        $region169: #{tpu_custom_call.1} parent=123 // pred_check
          %p5103 = pneg %p734
        $region170: #{tpu_custom_call.1} parent=123 // pred_check_branch
          %5105 = sbr.rel (%p5103) target = $region172
        $region171: #{tpu_custom_call.1} parent=123 // pred_region
          %s5107 = ssub.s32 1024, 1024
          %5108 = vsyncadd [#allocation20], %s5107
          %s5109 = sshll.u32 [#allocation19], 4
          %s5110 = int_to_ptr.vmem [resolvable:$true] %s5109
          %5115 = dma.vmem_to_hbm [thread:$0]  %s5110, 1024, %s27, [#allocation20], 128, 128, 8
        $region172: #{tpu_custom_call.1} parent=123 // pred_fallthru
          _
        // Predicated region
        $region173: #{tpu_custom_call.1} parent=123 // pred_check
          %p5116 = pneg %p713
        $region174: #{tpu_custom_call.1} parent=123 // pred_check_branch
          %5118 = sbr.rel (%p5116) target = $region176
        $region175: #{tpu_custom_call.1} parent=123 // pred_region
          %5119 = dma.done [#allocation6], 256
        $region176: #{tpu_custom_call.1} parent=123 // pred_fallthru
          _
        // Predicated region
        $region177: #{tpu_custom_call.1} parent=123 // pred_check
          %p5120 = pneg %p734
        $region178: #{tpu_custom_call.1} parent=123 // pred_check_branch
          %5122 = sbr.rel (%p5120) target = $region180
        $region179: #{tpu_custom_call.1} parent=123 // pred_region
          %5123 = dma.done [#allocation20], 1024
        $region180: #{tpu_custom_call.1} parent=123 // pred_fallthru
          _
      $region124: #{tpu_custom_call.1} parent=5 // pred_fallthru
        _
      %p5124 = scmp.le.s32.totalorder 2, %s49
      // Predicated region
      $region181: #{tpu_custom_call.1} parent=5 // pred_check
        %p5125 = pneg %p5124
      $region182: #{tpu_custom_call.1} parent=5 // pred_check_branch
        %5127 = sbr.rel (%p5125) target = $region184
      $region183: #{tpu_custom_call.1} parent=5 // pred_region
        %s5128 = ssub.s32 %s49, 2
      $region184: #{tpu_custom_call.1} parent=5 // pred_fallthru
        _
    $region6: #{tpu_custom_call.1} parent=1 // loop_footer
      %s53 = sadd.s32 1, %s49
    $region7: #{tpu_custom_call.1} parent=1 // loop_footer_branch
      %48 = sbr.rel target = $region3
    $region8: #{tpu_custom_call.1} parent=1 // loop_exit
      _
    %5129 = vsyncpa [#allocation5], 1
    %s5130 = scalar_lea.sflag [#allocation5], 1
    %5131 = vsyncpa %s5130, 1
    %5132 = vsyncpa [#allocation8], 1
    %s5133 = scalar_lea.sflag [#allocation8], 1
    %5134 = vsyncpa %s5133, 1
    %5135 = vsyncpa [#allocation11], 1
    %s5136 = scalar_lea.sflag [#allocation11], 1
    %5137 = vsyncpa %s5136, 1
    %5138 = vsyncpa [#allocation14], 1
    %s5139 = scalar_lea.sflag [#allocation14], 1
    %5140 = vsyncpa %s5139, 1
    %5141 = vsyncpa [#allocation17], 1
    %s5142 = scalar_lea.sflag [#allocation17], 1
    %5143 = vsyncpa %s5142, 1
    %5144 = vsyncpa [#allocation6], 1
    %s5145 = scalar_lea.sflag [#allocation6], 1
    %5146 = vsyncpa %s5145, 1
    %5147 = vsyncpa [#allocation20], 1

</llo_original>
